<compile_context>
chip_gen: v7x
topology: tpu7x:2x2x1
jax: 0.10.0
libtpu: 0.0.40
codegen_flags: <defaults>
</compile_context>

<pallas_src>
import functools

import jax
import jax.numpy as jnp
from jax import lax
from jax.experimental import pallas as pl
from jax.experimental.pallas import tpu as pltpu


def _round_up(x, m):
    return (x + m - 1) // m * m


# ---------------------------------------------------------------------------
# Fused Pallas kernel: the entire MultimodalLSTM forward in one invocation.
# ---------------------------------------------------------------------------
def _fused_multimodal_kernel(x_ref, wih_ref, whh_ref, b_ref, y_ref, gx_ref,
                             *, Bp, T, Hp, n_mid, n_out):
    """x_ref  : (T*Bp, Hp)    time-major flattened concat(d1, d2), zero padded
       wih_ref: (L, Hp, 4Hp)  padded / block-diagonal W_ih^T per layer
       whh_ref: (L, Hp, 4Hp)  padded / block-diagonal W_hh^T per layer
       b_ref  : (L, 1, 4Hp)   padded b_ih + b_hh per layer
       y_ref  : (T*Bp, Hp)    last layer's output (also the inter-layer buffer)
       gx_ref : (T*Bp, 4Hp)   VMEM scratch for the hoisted input projection"""
    zeros = jnp.zeros((Bp, Hp), jnp.float32)
    unroll = T if T <= 16 else 8           # full unroll small T, partial else

    def run_layer(l, x_all, h0, c0):
        w_hh = whh_ref[l]                  # (Hp, 4Hp), loop-invariant load
        # Hoisted input projection for ALL timesteps: one big MXU matmul.
        gx_ref[...] = (jnp.dot(x_all, wih_ref[l],
                               preferred_element_type=jnp.float32)
                       + b_ref[l])

        def step(t, carry):
            h, c = carry
            row = pl.multiple_of(t * Bp, Bp)
            # Only h @ W_hh^T sits on the serial critical path.
            # NOTE: jnp.dot kept (instead of pltpu.matmul_push_rhs /
            # matmul_acc_lhs weight-resident driving) for portability.
            g = gx_ref[pl.ds(row, Bp), :] + jnp.dot(
                h, w_hh, preferred_element_type=jnp.float32)       # (Bp, 4Hp)
            sg = jax.nn.sigmoid(g)                 # 1 EUP launch, full width
            i_g = sg[:, 0 * Hp:1 * Hp]             # aligned lane slices
            f_g = sg[:, 1 * Hp:2 * Hp]
            o_g = sg[:, 3 * Hp:4 * Hp]
            g_g = jnp.tanh(g[:, 2 * Hp:3 * Hp])    # 1 EUP launch
            c_new = f_g * c + i_g * g_g
            h_new = o_g * jnp.tanh(c_new)
            y_ref[pl.ds(row, Bp), :] = h_new
            return (h_new, c_new)

        return lax.fori_loop(0, T, step, (h0, c0), unroll=unroll)

    # Stack A: merged lstm_d1 + lstm_d2 (1 layer), zero initial state.
    hA, cA = run_layer(0, x_ref[...], zeros, zeros)

    # Stack B: lstm_middle; every layer starts from (hA, cA) == h3.repeat(L).
    for l in range(1, 1 + n_mid):
        run_layer(l, y_ref[...], hA, cA)

    # Stack C: merged lstm_o1 + lstm_o2; default zero initial state per layer.
    for l in range(1 + n_mid, 1 + n_mid + n_out):
        run_layer(l, y_ref[...], zeros, zeros)


# ---------------------------------------------------------------------------
# Host wrapper: one pallas_call for the whole forward.
# ---------------------------------------------------------------------------
def multimodal_lstm_pallas(packed, d1, d2):
    """d1: (B, T, N), d2: (B, T, 1)  ->  predict_d1 (B,T,N), predict_d2 (B,T,1)."""
    wih, whh, b = packed["wih"], packed["whh"], packed["b"]
    N, H, Hp = packed["N"], packed["H"], packed["Hp"]
    n_mid, n_out = packed["n_mid"], packed["n_out"]
    L = wih.shape[0]
    G = 4 * Hp
    B, T, _ = d1.shape
    Bp = _round_up(max(B, 8), 8)            # batch padded to sublane multiple

    # Host glue (once for the whole forward): concat d1|d2, time-major, pad.
    x = jnp.concatenate([d1, d2], axis=-1).astype(jnp.float32)     # (B, T, H)
    x_tm = jnp.transpose(x, (1, 0, 2))                             # (T, B, H)
    x_flat = jnp.zeros((T, Bp, Hp), jnp.float32).at[:, :B, :H].set(x_tm)
    x_flat = x_flat.reshape(T * Bp, Hp)

    kernel = functools.partial(_fused_multimodal_kernel, Bp=Bp, T=T, Hp=Hp,
                               n_mid=n_mid, n_out=n_out)

    grid_spec = pltpu.PrefetchScalarGridSpec(
        num_scalar_prefetch=0,
        grid=(1,),                                   # single invocation
        in_specs=[
            pl.BlockSpec((T * Bp, Hp), lambda i: (0, 0)),     # x (all t)
            pl.BlockSpec((L, Hp, G), lambda i: (0, 0, 0)),    # W_ih^T (all L)
            pl.BlockSpec((L, Hp, G), lambda i: (0, 0, 0)),    # W_hh^T (all L)
            pl.BlockSpec((L, 1, G), lambda i: (0, 0, 0)),     # biases
        ],
        out_specs=pl.BlockSpec((T * Bp, Hp), lambda i: (0, 0)),
        scratch_shapes=[pltpu.VMEM((T * Bp, G), jnp.float32)],   # gate slab
    )

    y_flat = pl.pallas_call(
        kernel,
        out_shape=jax.ShapeDtypeStruct((T * Bp, Hp), jnp.float32),
        grid_spec=grid_spec,
        compiler_params=pltpu.CompilerParams(
            dimension_semantics=("arbitrary",),
            vmem_limit_bytes=32 * 1024 * 1024),
    )(x_flat, wih, whh, b)

    y = y_flat.reshape(T, Bp, Hp)
    predict_d1 = jnp.transpose(y[:, :B, :N], (1, 0, 2))            # (B, T, N)
    predict_d2 = jnp.transpose(y[:, :B, N:N + 1], (1, 0, 2))       # (B, T, 1)
    return predict_d1, predict_d2


# ---------------------------------------------------------------------------
# Parameter init (PyTorch nn.LSTM layout: W_ih (4H, in), W_hh (4H, H),
# b_ih / b_hh (4H,), uniform(-1/sqrt(H), 1/sqrt(H)), gate order i,f,g,o).
# ---------------------------------------------------------------------------
def init_lstm_raw(key, input_size, hidden_size, num_layers):
    H = hidden_size
    bound = 1.0 / float(H) ** 0.5
    layers = []
    for layer in range(num_layers):
        in_sz = input_size if layer == 0 else H
        key, k1, k2, k3, k4 = jax.random.split(key, 5)
        layers.append(dict(
            w_ih=jax.random.uniform(k1, (4 * H, in_sz), jnp.float32, -bound, bound),
            w_hh=jax.random.uniform(k2, (4 * H, H), jnp.float32, -bound, bound),
            b_ih=jax.random.uniform(k3, (4 * H,), jnp.float32, -bound, bound),
            b_hh=jax.random.uniform(k4, (4 * H,), jnp.float32, -bound, bound)))
    return key, layers


def init_multimodal_raw(key, N_l, num_layers=3):
    key, d1 = init_lstm_raw(key, N_l, N_l, 1)
    key, d2 = init_lstm_raw(key, 1, 1, 1)
    key, mid = init_lstm_raw(key, N_l + 1, N_l + 1, num_layers)
    key, o1 = init_lstm_raw(key, N_l, N_l, num_layers)
    key, o2 = init_lstm_raw(key, 1, 1, num_layers)
    return {"d1": d1, "d2": d2, "middle": mid, "o1": o1, "o2": o2}


def _pack_blockdiag_layer(blocks, Hp):
    """Merge one layer of independent LSTMs (input size == hidden size per
    block) into one padded block-diagonal layer of hidden width Hp."""
    wih = jnp.zeros((Hp, 4 * Hp), jnp.float32)
    whh = jnp.zeros((Hp, 4 * Hp), jnp.float32)
    b = jnp.zeros((4 * Hp,), jnp.float32)
    off = 0
    for p in blocks:
        h = p["w_hh"].shape[1]
        assert p["w_ih"].shape[1] == h          # holds for every stack here
        for g in range(4):
            cols = slice(g * Hp + off, g * Hp + off + h)
            wih = wih.at[off:off + h, cols].set(p["w_ih"][g * h:(g + 1) * h, :].T)
            whh = whh.at[off:off + h, cols].set(p["w_hh"][g * h:(g + 1) * h, :].T)
            b = b.at[cols].set(p["b_ih"][g * h:(g + 1) * h]
                               + p["b_hh"][g * h:(g + 1) * h])
        off += h
    return wih, whh, b[None, :]


def pack_fused_params(raw, N_l):
    """Build the (L, Hp, 4Hp) / (L, 1, 4Hp) padded, block-diagonal layer stack
    consumed by the fused kernel (L = 1 + num_layers_middle + num_layers_out)."""
    H = N_l + 1
    Hp = _round_up(max(H, 8), 8)                # aligned per-gate column width
    layers = [_pack_blockdiag_layer([raw["d1"][0], raw["d2"][0]], Hp)]
    layers += [_pack_blockdiag_layer([p], Hp) for p in raw["middle"]]
    layers += [_pack_blockdiag_layer([p1, p2], Hp)
               for p1, p2 in zip(raw["o1"], raw["o2"])]
    return {"wih": jnp.stack([l[0] for l in layers]),
            "whh": jnp.stack([l[1] for l in layers]),
            "b": jnp.stack([l[2] for l in layers]),
            "N": N_l, "H": H, "Hp": Hp,
            "n_mid": len(raw["middle"]), "n_out": len(raw["o1"])}


# ---------------------------------------------------------------------------
# Pure-JAX reference (unmerged, follows the PyTorch forward exactly).
# ---------------------------------------------------------------------------
def _lstm_stack_ref(x, layers, h0, c0):
    """Multi-layer LSTM; every layer starts from the same (h0, c0), matching
    h0.repeat(num_layers, 1, 1) / the default all-zero initial state."""
    y = x.astype(jnp.float32)
    hT = cT = None
    for p in layers:
        wih_t, whh_t = p["w_ih"].T, p["w_hh"].T
        b = p["b_ih"] + p["b_hh"]
        H = p["w_hh"].shape[1]

        def step(carry, x_t, wih_t=wih_t, whh_t=whh_t, b=b, H=H):
            h, c = carry
            g = x_t @ wih_t + h @ whh_t + b
            i = jax.nn.sigmoid(g[:, 0:H])
            f = jax.nn.sigmoid(g[:, H:2 * H])
            gg = jnp.tanh(g[:, 2 * H:3 * H])
            o = jax.nn.sigmoid(g[:, 3 * H:4 * H])
            c = f * c + i * gg
            h = o * jnp.tanh(c)
            return (h, c), h

        (hT, cT), ys = lax.scan(step, (h0, c0), jnp.transpose(y, (1, 0, 2)))
        y = jnp.transpose(ys, (1, 0, 2))
    return y, hT, cT


def multimodal_lstm_ref(raw, d1, d2):
    B, _, N = d1.shape
    z = lambda w: jnp.zeros((B, w), jnp.float32)
    out1, h1, c1 = _lstm_stack_ref(d1, raw["d1"], z(N), z(N))
    out2, h2, c2 = _lstm_stack_ref(d2, raw["d2"], z(1), z(1))
    h3 = jnp.concatenate([h1, h2], axis=-1)
    c3 = jnp.concatenate([c1, c2], axis=-1)
    out3 = jnp.concatenate([out1, out2], axis=-1)
    output, _, _ = _lstm_stack_ref(out3, raw["middle"], h3, c3)
    p1, _, _ = _lstm_stack_ref(output[:, :, :-1], raw["o1"], z(N), z(N))
    p2, _, _ = _lstm_stack_ref(output[:, :, -1:], raw["o2"], z(1), z(1))
    return p1, p2


if __name__ == "__main__":
    B, T_l, N_l = 2, 8, 8              # small shapes consistent with the module
    key = jax.random.PRNGKey(0)
    key, kd1, kd2, kp = jax.random.split(key, 4)
    d1 = jax.random.normal(kd1, (B, T_l, N_l), jnp.float32)
    d2 = jax.random.normal(kd2, (B, T_l, 1), jnp.float32)

    raw = init_multimodal_raw(kp, N_l, num_layers=3)
    packed = pack_fused_params(raw, N_l)

    fwd = jax.jit(lambda a, b: multimodal_lstm_pallas(packed, a, b))
    pred_d1, pred_d2 = jax.block_until_ready(fwd(d1, d2))

    ref_d1, ref_d2 = multimodal_lstm_ref(raw, d1, d2)

    assert pred_d1.shape == (B, T_l, N_l) and pred_d2.shape == (B, T_l, 1)
    assert jnp.allclose(pred_d1, ref_d1, atol=5e-4, rtol=5e-4)
    assert jnp.allclose(pred_d2, ref_d2, atol=5e-4, rtol=5e-4)
    print("KERNEL_OK")
</pallas_src>

<mosaic_0001>
module attributes {stable_mosaic.version = 11 : i64} {
  func.func @_fused_multimodal_kernel(%arg0: i32, %arg1: memref<64x16xf32, #tpu.memory_space<vmem>>, %arg2: memref<7x16x64xf32, #tpu.memory_space<vmem>>, %arg3: memref<7x16x64xf32, #tpu.memory_space<vmem>>, %arg4: memref<7x1x64xf32, #tpu.memory_space<vmem>>, %arg5: memref<64x16xf32, #tpu.memory_space<vmem>>, %arg6: memref<64x64xf32, #tpu.memory_space<vmem>>) attributes {dimension_semantics = [#tpu.dimension_semantics<arbitrary>], iteration_bounds = array<i64: 1>, scalar_prefetch = 0 : i64, scratch_operands = 1 : i64, tpu.core_type = #tpu.core_type<tc>, window_params = [{pipeline_mode = #tpu.pipeline_mode<synchronous>, transform_indices = @transform_0, window_bounds = array<i64: 64, 16>}, {pipeline_mode = #tpu.pipeline_mode<synchronous>, transform_indices = @transform_1, window_bounds = array<i64: 7, 16, 64>}, {pipeline_mode = #tpu.pipeline_mode<synchronous>, transform_indices = @transform_2, window_bounds = array<i64: 7, 16, 64>}, {pipeline_mode = #tpu.pipeline_mode<synchronous>, transform_indices = @transform_3, window_bounds = array<i64: 7, 1, 64>}, {pipeline_mode = #tpu.pipeline_mode<synchronous>, transform_indices = @transform_4, window_bounds = array<i64: 64, 16>}]} {
    %cst = arith.constant 0.000000e+00 : f32
    %0 = vector.broadcast %cst : f32 to vector<8x16xf32>
    %c0 = arith.constant 0 : index
    %c0_0 = arith.constant 0 : index
    %1 = vector.load %arg1[%c0, %c0_0] : memref<64x16xf32, #tpu.memory_space<vmem>>, vector<64x16xf32>
    %c0_1 = arith.constant 0 : index
    %c0_2 = arith.constant 0 : index
    %c0_3 = arith.constant 0 : index
    %2 = vector.load %arg3[%c0_1, %c0_2, %c0_3] : memref<7x16x64xf32, #tpu.memory_space<vmem>>, vector<1x16x64xf32>
    %3 = vector.shape_cast %2 : vector<1x16x64xf32> to vector<16x64xf32>
    %c0_4 = arith.constant 0 : index
    %c0_5 = arith.constant 0 : index
    %c0_6 = arith.constant 0 : index
    %4 = vector.load %arg2[%c0_4, %c0_5, %c0_6] : memref<7x16x64xf32, #tpu.memory_space<vmem>>, vector<1x16x64xf32>
    %5 = vector.shape_cast %4 : vector<1x16x64xf32> to vector<16x64xf32>
    %cst_7 = arith.constant dense<0.000000e+00> : vector<64x64xf32>
    %6 = tpu.matmul %1, %5, %cst_7 {dimension_numbers = #tpu.dot_dimension_numbers<[1], [0], [0], [1], [0, 0, 1, 1], [], []>} : vector<64x16xf32>, vector<16x64xf32>, vector<64x64xf32> -> vector<64x64xf32>
    %c0_8 = arith.constant 0 : index
    %c0_9 = arith.constant 0 : index
    %c0_10 = arith.constant 0 : index
    %7 = vector.load %arg4[%c0_8, %c0_9, %c0_10] : memref<7x1x64xf32, #tpu.memory_space<vmem>>, vector<1x1x64xf32>
    %8 = vector.shape_cast %7 : vector<1x1x64xf32> to vector<1x64xf32>
    %9 = vector.broadcast %8 : vector<1x64xf32> to vector<64x64xf32>
    %10 = arith.addf %6, %9 : vector<64x64xf32>
    %c0_11 = arith.constant 0 : index
    %c0_12 = arith.constant 0 : index
    %11 = vector.load %arg6[%c0_11, %c0_12] : memref<64x64xf32, #tpu.memory_space<vmem>>, vector<64x64xf32>
    tpu.vector_store %arg6[%c0_11, %c0_12], %10 {strides = array<i32>} : memref<64x64xf32, #tpu.memory_space<vmem>>, vector<64x64xf32>,
    %c0_i32 = arith.constant 0 : i32
    %c8_i32 = arith.constant 8 : i32
    %12 = arith.muli %c0_i32, %c8_i32 : i32
    %13 = tpu.assume_multiple %12, 8 : i32
    %14 = arith.index_cast %13 : i32 to index
    %c0_13 = arith.constant 0 : index
    %15 = vector.load %arg6[%14, %c0_13] : memref<64x64xf32, #tpu.memory_space<vmem>>, vector<8x64xf32>
    %cst_14 = arith.constant dense<0.000000e+00> : vector<8x64xf32>
    %16 = tpu.matmul %0, %3, %cst_14 {dimension_numbers = #tpu.dot_dimension_numbers<[1], [0], [0], [1], [0, 0, 1, 1], [], []>} : vector<8x16xf32>, vector<16x64xf32>, vector<8x64xf32> -> vector<8x64xf32>
    %17 = arith.addf %15, %16 : vector<8x64xf32>
    %18 = arith.negf %17 : vector<8x64xf32>
    %19 = math.exp %18 : vector<8x64xf32>
    %cst_15 = arith.constant 1.000000e+00 : f32
    %20 = vector.broadcast %cst_15 : f32 to vector<8x64xf32>
    %21 = arith.addf %20, %19 : vector<8x64xf32>
    %22 = arith.divf %20, %21 : vector<8x64xf32>
    %23 = vector.extract_strided_slice %22 {offsets = [0, 0], sizes = [8, 16], strides = [1, 1]} : vector<8x64xf32> to vector<8x16xf32>
    %24 = vector.extract_strided_slice %22 {offsets = [0, 16], sizes = [8, 16], strides = [1, 1]} : vector<8x64xf32> to vector<8x16xf32>
    %25 = vector.extract_strided_slice %22 {offsets = [0, 48], sizes = [8, 16], strides = [1, 1]} : vector<8x64xf32> to vector<8x16xf32>
    %26 = vector.extract_strided_slice %17 {offsets = [0, 32], sizes = [8, 16], strides = [1, 1]} : vector<8x64xf32> to vector<8x16xf32>
    %27 = math.tanh %26 : vector<8x16xf32>
    %28 = arith.mulf %24, %0 : vector<8x16xf32>
    %29 = arith.mulf %23, %27 : vector<8x16xf32>
    %30 = arith.addf %28, %29 : vector<8x16xf32>
    %31 = math.tanh %30 : vector<8x16xf32>
    %32 = arith.mulf %25, %31 : vector<8x16xf32>
    %33 = arith.index_cast %13 : i32 to index
    %c0_16 = arith.constant 0 : index
    %34 = vector.load %arg5[%33, %c0_16] : memref<64x16xf32, #tpu.memory_space<vmem>>, vector<8x16xf32>
    tpu.vector_store %arg5[%33, %c0_16], %32 {strides = array<i32>} : memref<64x16xf32, #tpu.memory_space<vmem>>, vector<8x16xf32>,
    %c1_i32 = arith.constant 1 : i32
    %c8_i32_17 = arith.constant 8 : i32
    %35 = arith.muli %c1_i32, %c8_i32_17 : i32
    %36 = tpu.assume_multiple %35, 8 : i32
    %37 = arith.index_cast %36 : i32 to index
    %c0_18 = arith.constant 0 : index
    %38 = vector.load %arg6[%37, %c0_18] : memref<64x64xf32, #tpu.memory_space<vmem>>, vector<8x64xf32>
    %cst_19 = arith.constant dense<0.000000e+00> : vector<8x64xf32>
    %39 = tpu.matmul %32, %3, %cst_19 {dimension_numbers = #tpu.dot_dimension_numbers<[1], [0], [0], [1], [0, 0, 1, 1], [], []>} : vector<8x16xf32>, vector<16x64xf32>, vector<8x64xf32> -> vector<8x64xf32>
    %40 = arith.addf %38, %39 : vector<8x64xf32>
    %41 = arith.negf %40 : vector<8x64xf32>
    %42 = math.exp %41 : vector<8x64xf32>
    %cst_20 = arith.constant 1.000000e+00 : f32
    %43 = vector.broadcast %cst_20 : f32 to vector<8x64xf32>
    %44 = arith.addf %43, %42 : vector<8x64xf32>
    %45 = arith.divf %43, %44 : vector<8x64xf32>
    %46 = vector.extract_strided_slice %45 {offsets = [0, 0], sizes = [8, 16], strides = [1, 1]} : vector<8x64xf32> to vector<8x16xf32>
    %47 = vector.extract_strided_slice %45 {offsets = [0, 16], sizes = [8, 16], strides = [1, 1]} : vector<8x64xf32> to vector<8x16xf32>
    %48 = vector.extract_strided_slice %45 {offsets = [0, 48], sizes = [8, 16], strides = [1, 1]} : vector<8x64xf32> to vector<8x16xf32>
    %49 = vector.extract_strided_slice %40 {offsets = [0, 32], sizes = [8, 16], strides = [1, 1]} : vector<8x64xf32> to vector<8x16xf32>
    %50 = math.tanh %49 : vector<8x16xf32>
    %51 = arith.mulf %47, %30 : vector<8x16xf32>
    %52 = arith.mulf %46, %50 : vector<8x16xf32>
    %53 = arith.addf %51, %52 : vector<8x16xf32>
    %54 = math.tanh %53 : vector<8x16xf32>
    %55 = arith.mulf %48, %54 : vector<8x16xf32>
    %56 = arith.index_cast %36 : i32 to index
    %c0_21 = arith.constant 0 : index
    %57 = vector.load %arg5[%56, %c0_21] : memref<64x16xf32, #tpu.memory_space<vmem>>, vector<8x16xf32>
    tpu.vector_store %arg5[%56, %c0_21], %55 {strides = array<i32>} : memref<64x16xf32, #tpu.memory_space<vmem>>, vector<8x16xf32>,
    %c2_i32 = arith.constant 2 : i32
    %c8_i32_22 = arith.constant 8 : i32
    %58 = arith.muli %c2_i32, %c8_i32_22 : i32
    %59 = tpu.assume_multiple %58, 8 : i32
    %60 = arith.index_cast %59 : i32 to index
    %c0_23 = arith.constant 0 : index
    %61 = vector.load %arg6[%60, %c0_23] : memref<64x64xf32, #tpu.memory_space<vmem>>, vector<8x64xf32>
    %cst_24 = arith.constant dense<0.000000e+00> : vector<8x64xf32>
    %62 = tpu.matmul %55, %3, %cst_24 {dimension_numbers = #tpu.dot_dimension_numbers<[1], [0], [0], [1], [0, 0, 1, 1], [], []>} : vector<8x16xf32>, vector<16x64xf32>, vector<8x64xf32> -> vector<8x64xf32>
    %63 = arith.addf %61, %62 : vector<8x64xf32>
    %64 = arith.negf %63 : vector<8x64xf32>
    %65 = math.exp %64 : vector<8x64xf32>
    %cst_25 = arith.constant 1.000000e+00 : f32
    %66 = vector.broadcast %cst_25 : f32 to vector<8x64xf32>
    %67 = arith.addf %66, %65 : vector<8x64xf32>
    %68 = arith.divf %66, %67 : vector<8x64xf32>
    %69 = vector.extract_strided_slice %68 {offsets = [0, 0], sizes = [8, 16], strides = [1, 1]} : vector<8x64xf32> to vector<8x16xf32>
    %70 = vector.extract_strided_slice %68 {offsets = [0, 16], sizes = [8, 16], strides = [1, 1]} : vector<8x64xf32> to vector<8x16xf32>
    %71 = vector.extract_strided_slice %68 {offsets = [0, 48], sizes = [8, 16], strides = [1, 1]} : vector<8x64xf32> to vector<8x16xf32>
    %72 = vector.extract_strided_slice %63 {offsets = [0, 32], sizes = [8, 16], strides = [1, 1]} : vector<8x64xf32> to vector<8x16xf32>
    %73 = math.tanh %72 : vector<8x16xf32>
    %74 = arith.mulf %70, %53 : vector<8x16xf32>
    %75 = arith.mulf %69, %73 : vector<8x16xf32>
    %76 = arith.addf %74, %75 : vector<8x16xf32>
    %77 = math.tanh %76 : vector<8x16xf32>
    %78 = arith.mulf %71, %77 : vector<8x16xf32>
    %79 = arith.index_cast %59 : i32 to index
    %c0_26 = arith.constant 0 : index
    %80 = vector.load %arg5[%79, %c0_26] : memref<64x16xf32, #tpu.memory_space<vmem>>, vector<8x16xf32>
    tpu.vector_store %arg5[%79, %c0_26], %78 {strides = array<i32>} : memref<64x16xf32, #tpu.memory_space<vmem>>, vector<8x16xf32>,
    %c3_i32 = arith.constant 3 : i32
    %c8_i32_27 = arith.constant 8 : i32
    %81 = arith.muli %c3_i32, %c8_i32_27 : i32
    %82 = tpu.assume_multiple %81, 8 : i32
    %83 = arith.index_cast %82 : i32 to index
    %c0_28 = arith.constant 0 : index
    %84 = vector.load %arg6[%83, %c0_28] : memref<64x64xf32, #tpu.memory_space<vmem>>, vector<8x64xf32>
    %cst_29 = arith.constant dense<0.000000e+00> : vector<8x64xf32>
    %85 = tpu.matmul %78, %3, %cst_29 {dimension_numbers = #tpu.dot_dimension_numbers<[1], [0], [0], [1], [0, 0, 1, 1], [], []>} : vector<8x16xf32>, vector<16x64xf32>, vector<8x64xf32> -> vector<8x64xf32>
    %86 = arith.addf %84, %85 : vector<8x64xf32>
    %87 = arith.negf %86 : vector<8x64xf32>
    %88 = math.exp %87 : vector<8x64xf32>
    %cst_30 = arith.constant 1.000000e+00 : f32
    %89 = vector.broadcast %cst_30 : f32 to vector<8x64xf32>
    %90 = arith.addf %89, %88 : vector<8x64xf32>
    %91 = arith.divf %89, %90 : vector<8x64xf32>
    %92 = vector.extract_strided_slice %91 {offsets = [0, 0], sizes = [8, 16], strides = [1, 1]} : vector<8x64xf32> to vector<8x16xf32>
    %93 = vector.extract_strided_slice %91 {offsets = [0, 16], sizes = [8, 16], strides = [1, 1]} : vector<8x64xf32> to vector<8x16xf32>
    %94 = vector.extract_strided_slice %91 {offsets = [0, 48], sizes = [8, 16], strides = [1, 1]} : vector<8x64xf32> to vector<8x16xf32>
    %95 = vector.extract_strided_slice %86 {offsets = [0, 32], sizes = [8, 16], strides = [1, 1]} : vector<8x64xf32> to vector<8x16xf32>
    %96 = math.tanh %95 : vector<8x16xf32>
    %97 = arith.mulf %93, %76 : vector<8x16xf32>
    %98 = arith.mulf %92, %96 : vector<8x16xf32>
    %99 = arith.addf %97, %98 : vector<8x16xf32>
    %100 = math.tanh %99 : vector<8x16xf32>
    %101 = arith.mulf %94, %100 : vector<8x16xf32>
    %102 = arith.index_cast %82 : i32 to index
    %c0_31 = arith.constant 0 : index
    %103 = vector.load %arg5[%102, %c0_31] : memref<64x16xf32, #tpu.memory_space<vmem>>, vector<8x16xf32>
    tpu.vector_store %arg5[%102, %c0_31], %101 {strides = array<i32>} : memref<64x16xf32, #tpu.memory_space<vmem>>, vector<8x16xf32>,
    %c4_i32 = arith.constant 4 : i32
    %c8_i32_32 = arith.constant 8 : i32
    %104 = arith.muli %c4_i32, %c8_i32_32 : i32
    %105 = tpu.assume_multiple %104, 8 : i32
    %106 = arith.index_cast %105 : i32 to index
    %c0_33 = arith.constant 0 : index
    %107 = vector.load %arg6[%106, %c0_33] : memref<64x64xf32, #tpu.memory_space<vmem>>, vector<8x64xf32>
    %cst_34 = arith.constant dense<0.000000e+00> : vector<8x64xf32>
    %108 = tpu.matmul %101, %3, %cst_34 {dimension_numbers = #tpu.dot_dimension_numbers<[1], [0], [0], [1], [0, 0, 1, 1], [], []>} : vector<8x16xf32>, vector<16x64xf32>, vector<8x64xf32> -> vector<8x64xf32>
    %109 = arith.addf %107, %108 : vector<8x64xf32>
    %110 = arith.negf %109 : vector<8x64xf32>
    %111 = math.exp %110 : vector<8x64xf32>
    %cst_35 = arith.constant 1.000000e+00 : f32
    %112 = vector.broadcast %cst_35 : f32 to vector<8x64xf32>
    %113 = arith.addf %112, %111 : vector<8x64xf32>
    %114 = arith.divf %112, %113 : vector<8x64xf32>
    %115 = vector.extract_strided_slice %114 {offsets = [0, 0], sizes = [8, 16], strides = [1, 1]} : vector<8x64xf32> to vector<8x16xf32>
    %116 = vector.extract_strided_slice %114 {offsets = [0, 16], sizes = [8, 16], strides = [1, 1]} : vector<8x64xf32> to vector<8x16xf32>
    %117 = vector.extract_strided_slice %114 {offsets = [0, 48], sizes = [8, 16], strides = [1, 1]} : vector<8x64xf32> to vector<8x16xf32>
    %118 = vector.extract_strided_slice %109 {offsets = [0, 32], sizes = [8, 16], strides = [1, 1]} : vector<8x64xf32> to vector<8x16xf32>
    %119 = math.tanh %118 : vector<8x16xf32>
    %120 = arith.mulf %116, %99 : vector<8x16xf32>
    %121 = arith.mulf %115, %119 : vector<8x16xf32>
    %122 = arith.addf %120, %121 : vector<8x16xf32>
    %123 = math.tanh %122 : vector<8x16xf32>
    %124 = arith.mulf %117, %123 : vector<8x16xf32>
    %125 = arith.index_cast %105 : i32 to index
    %c0_36 = arith.constant 0 : index
    %126 = vector.load %arg5[%125, %c0_36] : memref<64x16xf32, #tpu.memory_space<vmem>>, vector<8x16xf32>
    tpu.vector_store %arg5[%125, %c0_36], %124 {strides = array<i32>} : memref<64x16xf32, #tpu.memory_space<vmem>>, vector<8x16xf32>,
    %c5_i32 = arith.constant 5 : i32
    %c8_i32_37 = arith.constant 8 : i32
    %127 = arith.muli %c5_i32, %c8_i32_37 : i32
    %128 = tpu.assume_multiple %127, 8 : i32
    %129 = arith.index_cast %128 : i32 to index
    %c0_38 = arith.constant 0 : index
    %130 = vector.load %arg6[%129, %c0_38] : memref<64x64xf32, #tpu.memory_space<vmem>>, vector<8x64xf32>
    %cst_39 = arith.constant dense<0.000000e+00> : vector<8x64xf32>
    %131 = tpu.matmul %124, %3, %cst_39 {dimension_numbers = #tpu.dot_dimension_numbers<[1], [0], [0], [1], [0, 0, 1, 1], [], []>} : vector<8x16xf32>, vector<16x64xf32>, vector<8x64xf32> -> vector<8x64xf32>
    %132 = arith.addf %130, %131 : vector<8x64xf32>
    %133 = arith.negf %132 : vector<8x64xf32>
    %134 = math.exp %133 : vector<8x64xf32>
    %cst_40 = arith.constant 1.000000e+00 : f32
    %135 = vector.broadcast %cst_40 : f32 to vector<8x64xf32>
    %136 = arith.addf %135, %134 : vector<8x64xf32>
    %137 = arith.divf %135, %136 : vector<8x64xf32>
    %138 = vector.extract_strided_slice %137 {offsets = [0, 0], sizes = [8, 16], strides = [1, 1]} : vector<8x64xf32> to vector<8x16xf32>
    %139 = vector.extract_strided_slice %137 {offsets = [0, 16], sizes = [8, 16], strides = [1, 1]} : vector<8x64xf32> to vector<8x16xf32>
    %140 = vector.extract_strided_slice %137 {offsets = [0, 48], sizes = [8, 16], strides = [1, 1]} : vector<8x64xf32> to vector<8x16xf32>
    %141 = vector.extract_strided_slice %132 {offsets = [0, 32], sizes = [8, 16], strides = [1, 1]} : vector<8x64xf32> to vector<8x16xf32>
    %142 = math.tanh %141 : vector<8x16xf32>
    %143 = arith.mulf %139, %122 : vector<8x16xf32>
    %144 = arith.mulf %138, %142 : vector<8x16xf32>
    %145 = arith.addf %143, %144 : vector<8x16xf32>
    %146 = math.tanh %145 : vector<8x16xf32>
    %147 = arith.mulf %140, %146 : vector<8x16xf32>
    %148 = arith.index_cast %128 : i32 to index
    %c0_41 = arith.constant 0 : index
    %149 = vector.load %arg5[%148, %c0_41] : memref<64x16xf32, #tpu.memory_space<vmem>>, vector<8x16xf32>
    tpu.vector_store %arg5[%148, %c0_41], %147 {strides = array<i32>} : memref<64x16xf32, #tpu.memory_space<vmem>>, vector<8x16xf32>,
    %c6_i32 = arith.constant 6 : i32
    %c8_i32_42 = arith.constant 8 : i32
    %150 = arith.muli %c6_i32, %c8_i32_42 : i32
    %151 = tpu.assume_multiple %150, 8 : i32
    %152 = arith.index_cast %151 : i32 to index
    %c0_43 = arith.constant 0 : index
    %153 = vector.load %arg6[%152, %c0_43] : memref<64x64xf32, #tpu.memory_space<vmem>>, vector<8x64xf32>
    %cst_44 = arith.constant dense<0.000000e+00> : vector<8x64xf32>
    %154 = tpu.matmul %147, %3, %cst_44 {dimension_numbers = #tpu.dot_dimension_numbers<[1], [0], [0], [1], [0, 0, 1, 1], [], []>} : vector<8x16xf32>, vector<16x64xf32>, vector<8x64xf32> -> vector<8x64xf32>
    %155 = arith.addf %153, %154 : vector<8x64xf32>
    %156 = arith.negf %155 : vector<8x64xf32>
    %157 = math.exp %156 : vector<8x64xf32>
    %cst_45 = arith.constant 1.000000e+00 : f32
    %158 = vector.broadcast %cst_45 : f32 to vector<8x64xf32>
    %159 = arith.addf %158, %157 : vector<8x64xf32>
    %160 = arith.divf %158, %159 : vector<8x64xf32>
    %161 = vector.extract_strided_slice %160 {offsets = [0, 0], sizes = [8, 16], strides = [1, 1]} : vector<8x64xf32> to vector<8x16xf32>
    %162 = vector.extract_strided_slice %160 {offsets = [0, 16], sizes = [8, 16], strides = [1, 1]} : vector<8x64xf32> to vector<8x16xf32>
    %163 = vector.extract_strided_slice %160 {offsets = [0, 48], sizes = [8, 16], strides = [1, 1]} : vector<8x64xf32> to vector<8x16xf32>
    %164 = vector.extract_strided_slice %155 {offsets = [0, 32], sizes = [8, 16], strides = [1, 1]} : vector<8x64xf32> to vector<8x16xf32>
    %165 = math.tanh %164 : vector<8x16xf32>
    %166 = arith.mulf %162, %145 : vector<8x16xf32>
    %167 = arith.mulf %161, %165 : vector<8x16xf32>
    %168 = arith.addf %166, %167 : vector<8x16xf32>
    %169 = math.tanh %168 : vector<8x16xf32>
    %170 = arith.mulf %163, %169 : vector<8x16xf32>
    %171 = arith.index_cast %151 : i32 to index
    %c0_46 = arith.constant 0 : index
    %172 = vector.load %arg5[%171, %c0_46] : memref<64x16xf32, #tpu.memory_space<vmem>>, vector<8x16xf32>
    tpu.vector_store %arg5[%171, %c0_46], %170 {strides = array<i32>} : memref<64x16xf32, #tpu.memory_space<vmem>>, vector<8x16xf32>,
    %c7_i32 = arith.constant 7 : i32
    %c8_i32_47 = arith.constant 8 : i32
    %173 = arith.muli %c7_i32, %c8_i32_47 : i32
    %174 = tpu.assume_multiple %173, 8 : i32
    %175 = arith.index_cast %174 : i32 to index
    %c0_48 = arith.constant 0 : index
    %176 = vector.load %arg6[%175, %c0_48] : memref<64x64xf32, #tpu.memory_space<vmem>>, vector<8x64xf32>
    %cst_49 = arith.constant dense<0.000000e+00> : vector<8x64xf32>
    %177 = tpu.matmul %170, %3, %cst_49 {dimension_numbers = #tpu.dot_dimension_numbers<[1], [0], [0], [1], [0, 0, 1, 1], [], []>} : vector<8x16xf32>, vector<16x64xf32>, vector<8x64xf32> -> vector<8x64xf32>
    %178 = arith.addf %176, %177 : vector<8x64xf32>
    %179 = arith.negf %178 : vector<8x64xf32>
    %180 = math.exp %179 : vector<8x64xf32>
    %cst_50 = arith.constant 1.000000e+00 : f32
    %181 = vector.broadcast %cst_50 : f32 to vector<8x64xf32>
    %182 = arith.addf %181, %180 : vector<8x64xf32>
    %183 = arith.divf %181, %182 : vector<8x64xf32>
    %184 = vector.extract_strided_slice %183 {offsets = [0, 0], sizes = [8, 16], strides = [1, 1]} : vector<8x64xf32> to vector<8x16xf32>
    %185 = vector.extract_strided_slice %183 {offsets = [0, 16], sizes = [8, 16], strides = [1, 1]} : vector<8x64xf32> to vector<8x16xf32>
    %186 = vector.extract_strided_slice %183 {offsets = [0, 48], sizes = [8, 16], strides = [1, 1]} : vector<8x64xf32> to vector<8x16xf32>
    %187 = vector.extract_strided_slice %178 {offsets = [0, 32], sizes = [8, 16], strides = [1, 1]} : vector<8x64xf32> to vector<8x16xf32>
    %188 = math.tanh %187 : vector<8x16xf32>
    %189 = arith.mulf %185, %168 : vector<8x16xf32>
    %190 = arith.mulf %184, %188 : vector<8x16xf32>
    %191 = arith.addf %189, %190 : vector<8x16xf32>
    %192 = math.tanh %191 : vector<8x16xf32>
    %193 = arith.mulf %186, %192 : vector<8x16xf32>
    %194 = arith.index_cast %174 : i32 to index
    %c0_51 = arith.constant 0 : index
    %195 = vector.load %arg5[%194, %c0_51] : memref<64x16xf32, #tpu.memory_space<vmem>>, vector<8x16xf32>
    tpu.vector_store %arg5[%194, %c0_51], %193 {strides = array<i32>} : memref<64x16xf32, #tpu.memory_space<vmem>>, vector<8x16xf32>,
    %c8_i32_52 = arith.constant 8 : i32
    %c0_53 = arith.constant 0 : index
    %c0_54 = arith.constant 0 : index
    %196 = vector.load %arg5[%c0_53, %c0_54] : memref<64x16xf32, #tpu.memory_space<vmem>>, vector<64x16xf32>
    %c1 = arith.constant 1 : index
    %c0_55 = arith.constant 0 : index
    %c0_56 = arith.constant 0 : index
    %197 = vector.load %arg3[%c1, %c0_55, %c0_56] : memref<7x16x64xf32, #tpu.memory_space<vmem>>, vector<1x16x64xf32>
    %198 = vector.shape_cast %197 : vector<1x16x64xf32> to vector<16x64xf32>
    %c1_57 = arith.constant 1 : index
    %c0_58 = arith.constant 0 : index
    %c0_59 = arith.constant 0 : index
    %199 = vector.load %arg2[%c1_57, %c0_58, %c0_59] : memref<7x16x64xf32, #tpu.memory_space<vmem>>, vector<1x16x64xf32>
    %200 = vector.shape_cast %199 : vector<1x16x64xf32> to vector<16x64xf32>
    %cst_60 = arith.constant dense<0.000000e+00> : vector<64x64xf32>
    %201 = tpu.matmul %196, %200, %cst_60 {dimension_numbers = #tpu.dot_dimension_numbers<[1], [0], [0], [1], [0, 0, 1, 1], [], []>} : vector<64x16xf32>, vector<16x64xf32>, vector<64x64xf32> -> vector<64x64xf32>
    %c1_61 = arith.constant 1 : index
    %c0_62 = arith.constant 0 : index
    %c0_63 = arith.constant 0 : index
    %202 = vector.load %arg4[%c1_61, %c0_62, %c0_63] : memref<7x1x64xf32, #tpu.memory_space<vmem>>, vector<1x1x64xf32>
    %203 = vector.shape_cast %202 : vector<1x1x64xf32> to vector<1x64xf32>
    %204 = vector.broadcast %203 : vector<1x64xf32> to vector<64x64xf32>
    %205 = arith.addf %201, %204 : vector<64x64xf32>
    %c0_64 = arith.constant 0 : index
    %c0_65 = arith.constant 0 : index
    %206 = vector.load %arg6[%c0_64, %c0_65] : memref<64x64xf32, #tpu.memory_space<vmem>>, vector<64x64xf32>
    tpu.vector_store %arg6[%c0_64, %c0_65], %205 {strides = array<i32>} : memref<64x64xf32, #tpu.memory_space<vmem>>, vector<64x64xf32>,
    %c0_i32_66 = arith.constant 0 : i32
    %c8_i32_67 = arith.constant 8 : i32
    %207 = arith.muli %c0_i32_66, %c8_i32_67 : i32
    %208 = tpu.assume_multiple %207, 8 : i32
    %209 = arith.index_cast %208 : i32 to index
    %c0_68 = arith.constant 0 : index
    %210 = vector.load %arg6[%209, %c0_68] : memref<64x64xf32, #tpu.memory_space<vmem>>, vector<8x64xf32>
    %cst_69 = arith.constant dense<0.000000e+00> : vector<8x64xf32>
    %211 = tpu.matmul %193, %198, %cst_69 {dimension_numbers = #tpu.dot_dimension_numbers<[1], [0], [0], [1], [0, 0, 1, 1], [], []>} : vector<8x16xf32>, vector<16x64xf32>, vector<8x64xf32> -> vector<8x64xf32>
    %212 = arith.addf %210, %211 : vector<8x64xf32>
    %213 = arith.negf %212 : vector<8x64xf32>
    %214 = math.exp %213 : vector<8x64xf32>
    %cst_70 = arith.constant 1.000000e+00 : f32
    %215 = vector.broadcast %cst_70 : f32 to vector<8x64xf32>
    %216 = arith.addf %215, %214 : vector<8x64xf32>
    %217 = arith.divf %215, %216 : vector<8x64xf32>
    %218 = vector.extract_strided_slice %217 {offsets = [0, 0], sizes = [8, 16], strides = [1, 1]} : vector<8x64xf32> to vector<8x16xf32>
    %219 = vector.extract_strided_slice %217 {offsets = [0, 16], sizes = [8, 16], strides = [1, 1]} : vector<8x64xf32> to vector<8x16xf32>
    %220 = vector.extract_strided_slice %217 {offsets = [0, 48], sizes = [8, 16], strides = [1, 1]} : vector<8x64xf32> to vector<8x16xf32>
    %221 = vector.extract_strided_slice %212 {offsets = [0, 32], sizes = [8, 16], strides = [1, 1]} : vector<8x64xf32> to vector<8x16xf32>
    %222 = math.tanh %221 : vector<8x16xf32>
    %223 = arith.mulf %219, %191 : vector<8x16xf32>
    %224 = arith.mulf %218, %222 : vector<8x16xf32>
    %225 = arith.addf %223, %224 : vector<8x16xf32>
    %226 = math.tanh %225 : vector<8x16xf32>
    %227 = arith.mulf %220, %226 : vector<8x16xf32>
    %228 = arith.index_cast %208 : i32 to index
    %c0_71 = arith.constant 0 : index
    %229 = vector.load %arg5[%228, %c0_71] : memref<64x16xf32, #tpu.memory_space<vmem>>, vector<8x16xf32>
    tpu.vector_store %arg5[%228, %c0_71], %227 {strides = array<i32>} : memref<64x16xf32, #tpu.memory_space<vmem>>, vector<8x16xf32>,
    %c1_i32_72 = arith.constant 1 : i32
    %c8_i32_73 = arith.constant 8 : i32
    %230 = arith.muli %c1_i32_72, %c8_i32_73 : i32
    %231 = tpu.assume_multiple %230, 8 : i32
    %232 = arith.index_cast %231 : i32 to index
    %c0_74 = arith.constant 0 : index
    %233 = vector.load %arg6[%232, %c0_74] : memref<64x64xf32, #tpu.memory_space<vmem>>, vector<8x64xf32>
    %cst_75 = arith.constant dense<0.000000e+00> : vector<8x64xf32>
    %234 = tpu.matmul %227, %198, %cst_75 {dimension_numbers = #tpu.dot_dimension_numbers<[1], [0], [0], [1], [0, 0, 1, 1], [], []>} : vector<8x16xf32>, vector<16x64xf32>, vector<8x64xf32> -> vector<8x64xf32>
    %235 = arith.addf %233, %234 : vector<8x64xf32>
    %236 = arith.negf %235 : vector<8x64xf32>
    %237 = math.exp %236 : vector<8x64xf32>
    %cst_76 = arith.constant 1.000000e+00 : f32
    %238 = vector.broadcast %cst_76 : f32 to vector<8x64xf32>
    %239 = arith.addf %238, %237 : vector<8x64xf32>
    %240 = arith.divf %238, %239 : vector<8x64xf32>
    %241 = vector.extract_strided_slice %240 {offsets = [0, 0], sizes = [8, 16], strides = [1, 1]} : vector<8x64xf32> to vector<8x16xf32>
    %242 = vector.extract_strided_slice %240 {offsets = [0, 16], sizes = [8, 16], strides = [1, 1]} : vector<8x64xf32> to vector<8x16xf32>
    %243 = vector.extract_strided_slice %240 {offsets = [0, 48], sizes = [8, 16], strides = [1, 1]} : vector<8x64xf32> to vector<8x16xf32>
    %244 = vector.extract_strided_slice %235 {offsets = [0, 32], sizes = [8, 16], strides = [1, 1]} : vector<8x64xf32> to vector<8x16xf32>
    %245 = math.tanh %244 : vector<8x16xf32>
    %246 = arith.mulf %242, %225 : vector<8x16xf32>
    %247 = arith.mulf %241, %245 : vector<8x16xf32>
    %248 = arith.addf %246, %247 : vector<8x16xf32>
    %249 = math.tanh %248 : vector<8x16xf32>
    %250 = arith.mulf %243, %249 : vector<8x16xf32>
    %251 = arith.index_cast %231 : i32 to index
    %c0_77 = arith.constant 0 : index
    %252 = vector.load %arg5[%251, %c0_77] : memref<64x16xf32, #tpu.memory_space<vmem>>, vector<8x16xf32>
    tpu.vector_store %arg5[%251, %c0_77], %250 {strides = array<i32>} : memref<64x16xf32, #tpu.memory_space<vmem>>, vector<8x16xf32>,
    %c2_i32_78 = arith.constant 2 : i32
    %c8_i32_79 = arith.constant 8 : i32
    %253 = arith.muli %c2_i32_78, %c8_i32_79 : i32
    %254 = tpu.assume_multiple %253, 8 : i32
    %255 = arith.index_cast %254 : i32 to index
    %c0_80 = arith.constant 0 : index
    %256 = vector.load %arg6[%255, %c0_80] : memref<64x64xf32, #tpu.memory_space<vmem>>, vector<8x64xf32>
    %cst_81 = arith.constant dense<0.000000e+00> : vector<8x64xf32>
    %257 = tpu.matmul %250, %198, %cst_81 {dimension_numbers = #tpu.dot_dimension_numbers<[1], [0], [0], [1], [0, 0, 1, 1], [], []>} : vector<8x16xf32>, vector<16x64xf32>, vector<8x64xf32> -> vector<8x64xf32>
    %258 = arith.addf %256, %257 : vector<8x64xf32>
    %259 = arith.negf %258 : vector<8x64xf32>
    %260 = math.exp %259 : vector<8x64xf32>
    %cst_82 = arith.constant 1.000000e+00 : f32
    %261 = vector.broadcast %cst_82 : f32 to vector<8x64xf32>
    %262 = arith.addf %261, %260 : vector<8x64xf32>
    %263 = arith.divf %261, %262 : vector<8x64xf32>
    %264 = vector.extract_strided_slice %263 {offsets = [0, 0], sizes = [8, 16], strides = [1, 1]} : vector<8x64xf32> to vector<8x16xf32>
    %265 = vector.extract_strided_slice %263 {offsets = [0, 16], sizes = [8, 16], strides = [1, 1]} : vector<8x64xf32> to vector<8x16xf32>
    %266 = vector.extract_strided_slice %263 {offsets = [0, 48], sizes = [8, 16], strides = [1, 1]} : vector<8x64xf32> to vector<8x16xf32>
    %267 = vector.extract_strided_slice %258 {offsets = [0, 32], sizes = [8, 16], strides = [1, 1]} : vector<8x64xf32> to vector<8x16xf32>
    %268 = math.tanh %267 : vector<8x16xf32>
    %269 = arith.mulf %265, %248 : vector<8x16xf32>
    %270 = arith.mulf %264, %268 : vector<8x16xf32>
    %271 = arith.addf %269, %270 : vector<8x16xf32>
    %272 = math.tanh %271 : vector<8x16xf32>
    %273 = arith.mulf %266, %272 : vector<8x16xf32>
    %274 = arith.index_cast %254 : i32 to index
    %c0_83 = arith.constant 0 : index
    %275 = vector.load %arg5[%274, %c0_83] : memref<64x16xf32, #tpu.memory_space<vmem>>, vector<8x16xf32>
    tpu.vector_store %arg5[%274, %c0_83], %273 {strides = array<i32>} : memref<64x16xf32, #tpu.memory_space<vmem>>, vector<8x16xf32>,
    %c3_i32_84 = arith.constant 3 : i32
    %c8_i32_85 = arith.constant 8 : i32
    %276 = arith.muli %c3_i32_84, %c8_i32_85 : i32
    %277 = tpu.assume_multiple %276, 8 : i32
    %278 = arith.index_cast %277 : i32 to index
    %c0_86 = arith.constant 0 : index
    %279 = vector.load %arg6[%278, %c0_86] : memref<64x64xf32, #tpu.memory_space<vmem>>, vector<8x64xf32>
    %cst_87 = arith.constant dense<0.000000e+00> : vector<8x64xf32>
    %280 = tpu.matmul %273, %198, %cst_87 {dimension_numbers = #tpu.dot_dimension_numbers<[1], [0], [0], [1], [0, 0, 1, 1], [], []>} : vector<8x16xf32>, vector<16x64xf32>, vector<8x64xf32> -> vector<8x64xf32>
    %281 = arith.addf %279, %280 : vector<8x64xf32>
    %282 = arith.negf %281 : vector<8x64xf32>
    %283 = math.exp %282 : vector<8x64xf32>
    %cst_88 = arith.constant 1.000000e+00 : f32
    %284 = vector.broadcast %cst_88 : f32 to vector<8x64xf32>
    %285 = arith.addf %284, %283 : vector<8x64xf32>
    %286 = arith.divf %284, %285 : vector<8x64xf32>
    %287 = vector.extract_strided_slice %286 {offsets = [0, 0], sizes = [8, 16], strides = [1, 1]} : vector<8x64xf32> to vector<8x16xf32>
    %288 = vector.extract_strided_slice %286 {offsets = [0, 16], sizes = [8, 16], strides = [1, 1]} : vector<8x64xf32> to vector<8x16xf32>
    %289 = vector.extract_strided_slice %286 {offsets = [0, 48], sizes = [8, 16], strides = [1, 1]} : vector<8x64xf32> to vector<8x16xf32>
    %290 = vector.extract_strided_slice %281 {offsets = [0, 32], sizes = [8, 16], strides = [1, 1]} : vector<8x64xf32> to vector<8x16xf32>
    %291 = math.tanh %290 : vector<8x16xf32>
    %292 = arith.mulf %288, %271 : vector<8x16xf32>
    %293 = arith.mulf %287, %291 : vector<8x16xf32>
    %294 = arith.addf %292, %293 : vector<8x16xf32>
    %295 = math.tanh %294 : vector<8x16xf32>
    %296 = arith.mulf %289, %295 : vector<8x16xf32>
    %297 = arith.index_cast %277 : i32 to index
    %c0_89 = arith.constant 0 : index
    %298 = vector.load %arg5[%297, %c0_89] : memref<64x16xf32, #tpu.memory_space<vmem>>, vector<8x16xf32>
    tpu.vector_store %arg5[%297, %c0_89], %296 {strides = array<i32>} : memref<64x16xf32, #tpu.memory_space<vmem>>, vector<8x16xf32>,
    %c4_i32_90 = arith.constant 4 : i32
    %c8_i32_91 = arith.constant 8 : i32
    %299 = arith.muli %c4_i32_90, %c8_i32_91 : i32
    %300 = tpu.assume_multiple %299, 8 : i32
    %301 = arith.index_cast %300 : i32 to index
    %c0_92 = arith.constant 0 : index
    %302 = vector.load %arg6[%301, %c0_92] : memref<64x64xf32, #tpu.memory_space<vmem>>, vector<8x64xf32>
    %cst_93 = arith.constant dense<0.000000e+00> : vector<8x64xf32>
    %303 = tpu.matmul %296, %198, %cst_93 {dimension_numbers = #tpu.dot_dimension_numbers<[1], [0], [0], [1], [0, 0, 1, 1], [], []>} : vector<8x16xf32>, vector<16x64xf32>, vector<8x64xf32> -> vector<8x64xf32>
    %304 = arith.addf %302, %303 : vector<8x64xf32>
    %305 = arith.negf %304 : vector<8x64xf32>
    %306 = math.exp %305 : vector<8x64xf32>
    %cst_94 = arith.constant 1.000000e+00 : f32
    %307 = vector.broadcast %cst_94 : f32 to vector<8x64xf32>
    %308 = arith.addf %307, %306 : vector<8x64xf32>
    %309 = arith.divf %307, %308 : vector<8x64xf32>
    %310 = vector.extract_strided_slice %309 {offsets = [0, 0], sizes = [8, 16], strides = [1, 1]} : vector<8x64xf32> to vector<8x16xf32>
    %311 = vector.extract_strided_slice %309 {offsets = [0, 16], sizes = [8, 16], strides = [1, 1]} : vector<8x64xf32> to vector<8x16xf32>
    %312 = vector.extract_strided_slice %309 {offsets = [0, 48], sizes = [8, 16], strides = [1, 1]} : vector<8x64xf32> to vector<8x16xf32>
    %313 = vector.extract_strided_slice %304 {offsets = [0, 32], sizes = [8, 16], strides = [1, 1]} : vector<8x64xf32> to vector<8x16xf32>
    %314 = math.tanh %313 : vector<8x16xf32>
    %315 = arith.mulf %311, %294 : vector<8x16xf32>
    %316 = arith.mulf %310, %314 : vector<8x16xf32>
    %317 = arith.addf %315, %316 : vector<8x16xf32>
    %318 = math.tanh %317 : vector<8x16xf32>
    %319 = arith.mulf %312, %318 : vector<8x16xf32>
    %320 = arith.index_cast %300 : i32 to index
    %c0_95 = arith.constant 0 : index
    %321 = vector.load %arg5[%320, %c0_95] : memref<64x16xf32, #tpu.memory_space<vmem>>, vector<8x16xf32>
    tpu.vector_store %arg5[%320, %c0_95], %319 {strides = array<i32>} : memref<64x16xf32, #tpu.memory_space<vmem>>, vector<8x16xf32>,
    %c5_i32_96 = arith.constant 5 : i32
    %c8_i32_97 = arith.constant 8 : i32
    %322 = arith.muli %c5_i32_96, %c8_i32_97 : i32
    %323 = tpu.assume_multiple %322, 8 : i32
    %324 = arith.index_cast %323 : i32 to index
    %c0_98 = arith.constant 0 : index
    %325 = vector.load %arg6[%324, %c0_98] : memref<64x64xf32, #tpu.memory_space<vmem>>, vector<8x64xf32>
    %cst_99 = arith.constant dense<0.000000e+00> : vector<8x64xf32>
    %326 = tpu.matmul %319, %198, %cst_99 {dimension_numbers = #tpu.dot_dimension_numbers<[1], [0], [0], [1], [0, 0, 1, 1], [], []>} : vector<8x16xf32>, vector<16x64xf32>, vector<8x64xf32> -> vector<8x64xf32>
    %327 = arith.addf %325, %326 : vector<8x64xf32>
    %328 = arith.negf %327 : vector<8x64xf32>
    %329 = math.exp %328 : vector<8x64xf32>
    %cst_100 = arith.constant 1.000000e+00 : f32
    %330 = vector.broadcast %cst_100 : f32 to vector<8x64xf32>
    %331 = arith.addf %330, %329 : vector<8x64xf32>
    %332 = arith.divf %330, %331 : vector<8x64xf32>
    %333 = vector.extract_strided_slice %332 {offsets = [0, 0], sizes = [8, 16], strides = [1, 1]} : vector<8x64xf32> to vector<8x16xf32>
    %334 = vector.extract_strided_slice %332 {offsets = [0, 16], sizes = [8, 16], strides = [1, 1]} : vector<8x64xf32> to vector<8x16xf32>
    %335 = vector.extract_strided_slice %332 {offsets = [0, 48], sizes = [8, 16], strides = [1, 1]} : vector<8x64xf32> to vector<8x16xf32>
    %336 = vector.extract_strided_slice %327 {offsets = [0, 32], sizes = [8, 16], strides = [1, 1]} : vector<8x64xf32> to vector<8x16xf32>
    %337 = math.tanh %336 : vector<8x16xf32>
    %338 = arith.mulf %334, %317 : vector<8x16xf32>
    %339 = arith.mulf %333, %337 : vector<8x16xf32>
    %340 = arith.addf %338, %339 : vector<8x16xf32>
    %341 = math.tanh %340 : vector<8x16xf32>
    %342 = arith.mulf %335, %341 : vector<8x16xf32>
    %343 = arith.index_cast %323 : i32 to index
    %c0_101 = arith.constant 0 : index
    %344 = vector.load %arg5[%343, %c0_101] : memref<64x16xf32, #tpu.memory_space<vmem>>, vector<8x16xf32>
    tpu.vector_store %arg5[%343, %c0_101], %342 {strides = array<i32>} : memref<64x16xf32, #tpu.memory_space<vmem>>, vector<8x16xf32>,
    %c6_i32_102 = arith.constant 6 : i32
    %c8_i32_103 = arith.constant 8 : i32
    %345 = arith.muli %c6_i32_102, %c8_i32_103 : i32
    %346 = tpu.assume_multiple %345, 8 : i32
    %347 = arith.index_cast %346 : i32 to index
    %c0_104 = arith.constant 0 : index
    %348 = vector.load %arg6[%347, %c0_104] : memref<64x64xf32, #tpu.memory_space<vmem>>, vector<8x64xf32>
    %cst_105 = arith.constant dense<0.000000e+00> : vector<8x64xf32>
    %349 = tpu.matmul %342, %198, %cst_105 {dimension_numbers = #tpu.dot_dimension_numbers<[1], [0], [0], [1], [0, 0, 1, 1], [], []>} : vector<8x16xf32>, vector<16x64xf32>, vector<8x64xf32> -> vector<8x64xf32>
    %350 = arith.addf %348, %349 : vector<8x64xf32>
    %351 = arith.negf %350 : vector<8x64xf32>
    %352 = math.exp %351 : vector<8x64xf32>
    %cst_106 = arith.constant 1.000000e+00 : f32
    %353 = vector.broadcast %cst_106 : f32 to vector<8x64xf32>
    %354 = arith.addf %353, %352 : vector<8x64xf32>
    %355 = arith.divf %353, %354 : vector<8x64xf32>
    %356 = vector.extract_strided_slice %355 {offsets = [0, 0], sizes = [8, 16], strides = [1, 1]} : vector<8x64xf32> to vector<8x16xf32>
    %357 = vector.extract_strided_slice %355 {offsets = [0, 16], sizes = [8, 16], strides = [1, 1]} : vector<8x64xf32> to vector<8x16xf32>
    %358 = vector.extract_strided_slice %355 {offsets = [0, 48], sizes = [8, 16], strides = [1, 1]} : vector<8x64xf32> to vector<8x16xf32>
    %359 = vector.extract_strided_slice %350 {offsets = [0, 32], sizes = [8, 16], strides = [1, 1]} : vector<8x64xf32> to vector<8x16xf32>
    %360 = math.tanh %359 : vector<8x16xf32>
    %361 = arith.mulf %357, %340 : vector<8x16xf32>
    %362 = arith.mulf %356, %360 : vector<8x16xf32>
    %363 = arith.addf %361, %362 : vector<8x16xf32>
    %364 = math.tanh %363 : vector<8x16xf32>
    %365 = arith.mulf %358, %364 : vector<8x16xf32>
    %366 = arith.index_cast %346 : i32 to index
    %c0_107 = arith.constant 0 : index
    %367 = vector.load %arg5[%366, %c0_107] : memref<64x16xf32, #tpu.memory_space<vmem>>, vector<8x16xf32>
    tpu.vector_store %arg5[%366, %c0_107], %365 {strides = array<i32>} : memref<64x16xf32, #tpu.memory_space<vmem>>, vector<8x16xf32>,
    %c7_i32_108 = arith.constant 7 : i32
    %c8_i32_109 = arith.constant 8 : i32
    %368 = arith.muli %c7_i32_108, %c8_i32_109 : i32
    %369 = tpu.assume_multiple %368, 8 : i32
    %370 = arith.index_cast %369 : i32 to index
    %c0_110 = arith.constant 0 : index
    %371 = vector.load %arg6[%370, %c0_110] : memref<64x64xf32, #tpu.memory_space<vmem>>, vector<8x64xf32>
    %cst_111 = arith.constant dense<0.000000e+00> : vector<8x64xf32>
    %372 = tpu.matmul %365, %198, %cst_111 {dimension_numbers = #tpu.dot_dimension_numbers<[1], [0], [0], [1], [0, 0, 1, 1], [], []>} : vector<8x16xf32>, vector<16x64xf32>, vector<8x64xf32> -> vector<8x64xf32>
    %373 = arith.addf %371, %372 : vector<8x64xf32>
    %374 = arith.negf %373 : vector<8x64xf32>
    %375 = math.exp %374 : vector<8x64xf32>
    %cst_112 = arith.constant 1.000000e+00 : f32
    %376 = vector.broadcast %cst_112 : f32 to vector<8x64xf32>
    %377 = arith.addf %376, %375 : vector<8x64xf32>
    %378 = arith.divf %376, %377 : vector<8x64xf32>
    %379 = vector.extract_strided_slice %378 {offsets = [0, 0], sizes = [8, 16], strides = [1, 1]} : vector<8x64xf32> to vector<8x16xf32>
    %380 = vector.extract_strided_slice %378 {offsets = [0, 16], sizes = [8, 16], strides = [1, 1]} : vector<8x64xf32> to vector<8x16xf32>
    %381 = vector.extract_strided_slice %378 {offsets = [0, 48], sizes = [8, 16], strides = [1, 1]} : vector<8x64xf32> to vector<8x16xf32>
    %382 = vector.extract_strided_slice %373 {offsets = [0, 32], sizes = [8, 16], strides = [1, 1]} : vector<8x64xf32> to vector<8x16xf32>
    %383 = math.tanh %382 : vector<8x16xf32>
    %384 = arith.mulf %380, %363 : vector<8x16xf32>
    %385 = arith.mulf %379, %383 : vector<8x16xf32>
    %386 = arith.addf %384, %385 : vector<8x16xf32>
    %387 = math.tanh %386 : vector<8x16xf32>
    %388 = arith.mulf %381, %387 : vector<8x16xf32>
    %389 = arith.index_cast %369 : i32 to index
    %c0_113 = arith.constant 0 : index
    %390 = vector.load %arg5[%389, %c0_113] : memref<64x16xf32, #tpu.memory_space<vmem>>, vector<8x16xf32>
    tpu.vector_store %arg5[%389, %c0_113], %388 {strides = array<i32>} : memref<64x16xf32, #tpu.memory_space<vmem>>, vector<8x16xf32>,
    %c8_i32_114 = arith.constant 8 : i32
    %c0_115 = arith.constant 0 : index
    %c0_116 = arith.constant 0 : index
    %391 = vector.load %arg5[%c0_115, %c0_116] : memref<64x16xf32, #tpu.memory_space<vmem>>, vector<64x16xf32>
    %c2 = arith.constant 2 : index
    %c0_117 = arith.constant 0 : index
    %c0_118 = arith.constant 0 : index
    %392 = vector.load %arg3[%c2, %c0_117, %c0_118] : memref<7x16x64xf32, #tpu.memory_space<vmem>>, vector<1x16x64xf32>
    %393 = vector.shape_cast %392 : vector<1x16x64xf32> to vector<16x64xf32>
    %c2_119 = arith.constant 2 : index
    %c0_120 = arith.constant 0 : index
    %c0_121 = arith.constant 0 : index
    %394 = vector.load %arg2[%c2_119, %c0_120, %c0_121] : memref<7x16x64xf32, #tpu.memory_space<vmem>>, vector<1x16x64xf32>
    %395 = vector.shape_cast %394 : vector<1x16x64xf32> to vector<16x64xf32>
    %cst_122 = arith.constant dense<0.000000e+00> : vector<64x64xf32>
    %396 = tpu.matmul %391, %395, %cst_122 {dimension_numbers = #tpu.dot_dimension_numbers<[1], [0], [0], [1], [0, 0, 1, 1], [], []>} : vector<64x16xf32>, vector<16x64xf32>, vector<64x64xf32> -> vector<64x64xf32>
    %c2_123 = arith.constant 2 : index
    %c0_124 = arith.constant 0 : index
    %c0_125 = arith.constant 0 : index
    %397 = vector.load %arg4[%c2_123, %c0_124, %c0_125] : memref<7x1x64xf32, #tpu.memory_space<vmem>>, vector<1x1x64xf32>
    %398 = vector.shape_cast %397 : vector<1x1x64xf32> to vector<1x64xf32>
    %399 = vector.broadcast %398 : vector<1x64xf32> to vector<64x64xf32>
    %400 = arith.addf %396, %399 : vector<64x64xf32>
    %c0_126 = arith.constant 0 : index
    %c0_127 = arith.constant 0 : index
    %401 = vector.load %arg6[%c0_126, %c0_127] : memref<64x64xf32, #tpu.memory_space<vmem>>, vector<64x64xf32>
    tpu.vector_store %arg6[%c0_126, %c0_127], %400 {strides = array<i32>} : memref<64x64xf32, #tpu.memory_space<vmem>>, vector<64x64xf32>,
    %c0_i32_128 = arith.constant 0 : i32
    %c8_i32_129 = arith.constant 8 : i32
    %402 = arith.muli %c0_i32_128, %c8_i32_129 : i32
    %403 = tpu.assume_multiple %402, 8 : i32
    %404 = arith.index_cast %403 : i32 to index
    %c0_130 = arith.constant 0 : index
    %405 = vector.load %arg6[%404, %c0_130] : memref<64x64xf32, #tpu.memory_space<vmem>>, vector<8x64xf32>
    %cst_131 = arith.constant dense<0.000000e+00> : vector<8x64xf32>
    %406 = tpu.matmul %193, %393, %cst_131 {dimension_numbers = #tpu.dot_dimension_numbers<[1], [0], [0], [1], [0, 0, 1, 1], [], []>} : vector<8x16xf32>, vector<16x64xf32>, vector<8x64xf32> -> vector<8x64xf32>
    %407 = arith.addf %405, %406 : vector<8x64xf32>
    %408 = arith.negf %407 : vector<8x64xf32>
    %409 = math.exp %408 : vector<8x64xf32>
    %cst_132 = arith.constant 1.000000e+00 : f32
    %410 = vector.broadcast %cst_132 : f32 to vector<8x64xf32>
    %411 = arith.addf %410, %409 : vector<8x64xf32>
    %412 = arith.divf %410, %411 : vector<8x64xf32>
    %413 = vector.extract_strided_slice %412 {offsets = [0, 0], sizes = [8, 16], strides = [1, 1]} : vector<8x64xf32> to vector<8x16xf32>
    %414 = vector.extract_strided_slice %412 {offsets = [0, 16], sizes = [8, 16], strides = [1, 1]} : vector<8x64xf32> to vector<8x16xf32>
    %415 = vector.extract_strided_slice %412 {offsets = [0, 48], sizes = [8, 16], strides = [1, 1]} : vector<8x64xf32> to vector<8x16xf32>
    %416 = vector.extract_strided_slice %407 {offsets = [0, 32], sizes = [8, 16], strides = [1, 1]} : vector<8x64xf32> to vector<8x16xf32>
    %417 = math.tanh %416 : vector<8x16xf32>
    %418 = arith.mulf %414, %191 : vector<8x16xf32>
    %419 = arith.mulf %413, %417 : vector<8x16xf32>
    %420 = arith.addf %418, %419 : vector<8x16xf32>
    %421 = math.tanh %420 : vector<8x16xf32>
    %422 = arith.mulf %415, %421 : vector<8x16xf32>
    %423 = arith.index_cast %403 : i32 to index
    %c0_133 = arith.constant 0 : index
    %424 = vector.load %arg5[%423, %c0_133] : memref<64x16xf32, #tpu.memory_space<vmem>>, vector<8x16xf32>
    tpu.vector_store %arg5[%423, %c0_133], %422 {strides = array<i32>} : memref<64x16xf32, #tpu.memory_space<vmem>>, vector<8x16xf32>,
    %c1_i32_134 = arith.constant 1 : i32
    %c8_i32_135 = arith.constant 8 : i32
    %425 = arith.muli %c1_i32_134, %c8_i32_135 : i32
    %426 = tpu.assume_multiple %425, 8 : i32
    %427 = arith.index_cast %426 : i32 to index
    %c0_136 = arith.constant 0 : index
    %428 = vector.load %arg6[%427, %c0_136] : memref<64x64xf32, #tpu.memory_space<vmem>>, vector<8x64xf32>
    %cst_137 = arith.constant dense<0.000000e+00> : vector<8x64xf32>
    %429 = tpu.matmul %422, %393, %cst_137 {dimension_numbers = #tpu.dot_dimension_numbers<[1], [0], [0], [1], [0, 0, 1, 1], [], []>} : vector<8x16xf32>, vector<16x64xf32>, vector<8x64xf32> -> vector<8x64xf32>
    %430 = arith.addf %428, %429 : vector<8x64xf32>
    %431 = arith.negf %430 : vector<8x64xf32>
    %432 = math.exp %431 : vector<8x64xf32>
    %cst_138 = arith.constant 1.000000e+00 : f32
    %433 = vector.broadcast %cst_138 : f32 to vector<8x64xf32>
    %434 = arith.addf %433, %432 : vector<8x64xf32>
    %435 = arith.divf %433, %434 : vector<8x64xf32>
    %436 = vector.extract_strided_slice %435 {offsets = [0, 0], sizes = [8, 16], strides = [1, 1]} : vector<8x64xf32> to vector<8x16xf32>
    %437 = vector.extract_strided_slice %435 {offsets = [0, 16], sizes = [8, 16], strides = [1, 1]} : vector<8x64xf32> to vector<8x16xf32>
    %438 = vector.extract_strided_slice %435 {offsets = [0, 48], sizes = [8, 16], strides = [1, 1]} : vector<8x64xf32> to vector<8x16xf32>
    %439 = vector.extract_strided_slice %430 {offsets = [0, 32], sizes = [8, 16], strides = [1, 1]} : vector<8x64xf32> to vector<8x16xf32>
    %440 = math.tanh %439 : vector<8x16xf32>
    %441 = arith.mulf %437, %420 : vector<8x16xf32>
    %442 = arith.mulf %436, %440 : vector<8x16xf32>
    %443 = arith.addf %441, %442 : vector<8x16xf32>
    %444 = math.tanh %443 : vector<8x16xf32>
    %445 = arith.mulf %438, %444 : vector<8x16xf32>
    %446 = arith.index_cast %426 : i32 to index
    %c0_139 = arith.constant 0 : index
    %447 = vector.load %arg5[%446, %c0_139] : memref<64x16xf32, #tpu.memory_space<vmem>>, vector<8x16xf32>
    tpu.vector_store %arg5[%446, %c0_139], %445 {strides = array<i32>} : memref<64x16xf32, #tpu.memory_space<vmem>>, vector<8x16xf32>,
    %c2_i32_140 = arith.constant 2 : i32
    %c8_i32_141 = arith.constant 8 : i32
    %448 = arith.muli %c2_i32_140, %c8_i32_141 : i32
    %449 = tpu.assume_multiple %448, 8 : i32
    %450 = arith.index_cast %449 : i32 to index
    %c0_142 = arith.constant 0 : index
    %451 = vector.load %arg6[%450, %c0_142] : memref<64x64xf32, #tpu.memory_space<vmem>>, vector<8x64xf32>
    %cst_143 = arith.constant dense<0.000000e+00> : vector<8x64xf32>
    %452 = tpu.matmul %445, %393, %cst_143 {dimension_numbers = #tpu.dot_dimension_numbers<[1], [0], [0], [1], [0, 0, 1, 1], [], []>} : vector<8x16xf32>, vector<16x64xf32>, vector<8x64xf32> -> vector<8x64xf32>
    %453 = arith.addf %451, %452 : vector<8x64xf32>
    %454 = arith.negf %453 : vector<8x64xf32>
    %455 = math.exp %454 : vector<8x64xf32>
    %cst_144 = arith.constant 1.000000e+00 : f32
    %456 = vector.broadcast %cst_144 : f32 to vector<8x64xf32>
    %457 = arith.addf %456, %455 : vector<8x64xf32>
    %458 = arith.divf %456, %457 : vector<8x64xf32>
    %459 = vector.extract_strided_slice %458 {offsets = [0, 0], sizes = [8, 16], strides = [1, 1]} : vector<8x64xf32> to vector<8x16xf32>
    %460 = vector.extract_strided_slice %458 {offsets = [0, 16], sizes = [8, 16], strides = [1, 1]} : vector<8x64xf32> to vector<8x16xf32>
    %461 = vector.extract_strided_slice %458 {offsets = [0, 48], sizes = [8, 16], strides = [1, 1]} : vector<8x64xf32> to vector<8x16xf32>
    %462 = vector.extract_strided_slice %453 {offsets = [0, 32], sizes = [8, 16], strides = [1, 1]} : vector<8x64xf32> to vector<8x16xf32>
    %463 = math.tanh %462 : vector<8x16xf32>
    %464 = arith.mulf %460, %443 : vector<8x16xf32>
    %465 = arith.mulf %459, %463 : vector<8x16xf32>
    %466 = arith.addf %464, %465 : vector<8x16xf32>
    %467 = math.tanh %466 : vector<8x16xf32>
    %468 = arith.mulf %461, %467 : vector<8x16xf32>
    %469 = arith.index_cast %449 : i32 to index
    %c0_145 = arith.constant 0 : index
    %470 = vector.load %arg5[%469, %c0_145] : memref<64x16xf32, #tpu.memory_space<vmem>>, vector<8x16xf32>
    tpu.vector_store %arg5[%469, %c0_145], %468 {strides = array<i32>} : memref<64x16xf32, #tpu.memory_space<vmem>>, vector<8x16xf32>,
    %c3_i32_146 = arith.constant 3 : i32
    %c8_i32_147 = arith.constant 8 : i32
    %471 = arith.muli %c3_i32_146, %c8_i32_147 : i32
    %472 = tpu.assume_multiple %471, 8 : i32
    %473 = arith.index_cast %472 : i32 to index
    %c0_148 = arith.constant 0 : index
    %474 = vector.load %arg6[%473, %c0_148] : memref<64x64xf32, #tpu.memory_space<vmem>>, vector<8x64xf32>
    %cst_149 = arith.constant dense<0.000000e+00> : vector<8x64xf32>
    %475 = tpu.matmul %468, %393, %cst_149 {dimension_numbers = #tpu.dot_dimension_numbers<[1], [0], [0], [1], [0, 0, 1, 1], [], []>} : vector<8x16xf32>, vector<16x64xf32>, vector<8x64xf32> -> vector<8x64xf32>
    %476 = arith.addf %474, %475 : vector<8x64xf32>
    %477 = arith.negf %476 : vector<8x64xf32>
    %478 = math.exp %477 : vector<8x64xf32>
    %cst_150 = arith.constant 1.000000e+00 : f32
    %479 = vector.broadcast %cst_150 : f32 to vector<8x64xf32>
    %480 = arith.addf %479, %478 : vector<8x64xf32>
    %481 = arith.divf %479, %480 : vector<8x64xf32>
    %482 = vector.extract_strided_slice %481 {offsets = [0, 0], sizes = [8, 16], strides = [1, 1]} : vector<8x64xf32> to vector<8x16xf32>
    %483 = vector.extract_strided_slice %481 {offsets = [0, 16], sizes = [8, 16], strides = [1, 1]} : vector<8x64xf32> to vector<8x16xf32>
    %484 = vector.extract_strided_slice %481 {offsets = [0, 48], sizes = [8, 16], strides = [1, 1]} : vector<8x64xf32> to vector<8x16xf32>
    %485 = vector.extract_strided_slice %476 {offsets = [0, 32], sizes = [8, 16], strides = [1, 1]} : vector<8x64xf32> to vector<8x16xf32>
    %486 = math.tanh %485 : vector<8x16xf32>
    %487 = arith.mulf %483, %466 : vector<8x16xf32>
    %488 = arith.mulf %482, %486 : vector<8x16xf32>
    %489 = arith.addf %487, %488 : vector<8x16xf32>
    %490 = math.tanh %489 : vector<8x16xf32>
    %491 = arith.mulf %484, %490 : vector<8x16xf32>
    %492 = arith.index_cast %472 : i32 to index
    %c0_151 = arith.constant 0 : index
    %493 = vector.load %arg5[%492, %c0_151] : memref<64x16xf32, #tpu.memory_space<vmem>>, vector<8x16xf32>
    tpu.vector_store %arg5[%492, %c0_151], %491 {strides = array<i32>} : memref<64x16xf32, #tpu.memory_space<vmem>>, vector<8x16xf32>,
    %c4_i32_152 = arith.constant 4 : i32
    %c8_i32_153 = arith.constant 8 : i32
    %494 = arith.muli %c4_i32_152, %c8_i32_153 : i32
    %495 = tpu.assume_multiple %494, 8 : i32
    %496 = arith.index_cast %495 : i32 to index
    %c0_154 = arith.constant 0 : index
    %497 = vector.load %arg6[%496, %c0_154] : memref<64x64xf32, #tpu.memory_space<vmem>>, vector<8x64xf32>
    %cst_155 = arith.constant dense<0.000000e+00> : vector<8x64xf32>
    %498 = tpu.matmul %491, %393, %cst_155 {dimension_numbers = #tpu.dot_dimension_numbers<[1], [0], [0], [1], [0, 0, 1, 1], [], []>} : vector<8x16xf32>, vector<16x64xf32>, vector<8x64xf32> -> vector<8x64xf32>
    %499 = arith.addf %497, %498 : vector<8x64xf32>
    %500 = arith.negf %499 : vector<8x64xf32>
    %501 = math.exp %500 : vector<8x64xf32>
    %cst_156 = arith.constant 1.000000e+00 : f32
    %502 = vector.broadcast %cst_156 : f32 to vector<8x64xf32>
    %503 = arith.addf %502, %501 : vector<8x64xf32>
    %504 = arith.divf %502, %503 : vector<8x64xf32>
    %505 = vector.extract_strided_slice %504 {offsets = [0, 0], sizes = [8, 16], strides = [1, 1]} : vector<8x64xf32> to vector<8x16xf32>
    %506 = vector.extract_strided_slice %504 {offsets = [0, 16], sizes = [8, 16], strides = [1, 1]} : vector<8x64xf32> to vector<8x16xf32>
    %507 = vector.extract_strided_slice %504 {offsets = [0, 48], sizes = [8, 16], strides = [1, 1]} : vector<8x64xf32> to vector<8x16xf32>
    %508 = vector.extract_strided_slice %499 {offsets = [0, 32], sizes = [8, 16], strides = [1, 1]} : vector<8x64xf32> to vector<8x16xf32>
    %509 = math.tanh %508 : vector<8x16xf32>
    %510 = arith.mulf %506, %489 : vector<8x16xf32>
    %511 = arith.mulf %505, %509 : vector<8x16xf32>
    %512 = arith.addf %510, %511 : vector<8x16xf32>
    %513 = math.tanh %512 : vector<8x16xf32>
    %514 = arith.mulf %507, %513 : vector<8x16xf32>
    %515 = arith.index_cast %495 : i32 to index
    %c0_157 = arith.constant 0 : index
    %516 = vector.load %arg5[%515, %c0_157] : memref<64x16xf32, #tpu.memory_space<vmem>>, vector<8x16xf32>
    tpu.vector_store %arg5[%515, %c0_157], %514 {strides = array<i32>} : memref<64x16xf32, #tpu.memory_space<vmem>>, vector<8x16xf32>,
    %c5_i32_158 = arith.constant 5 : i32
    %c8_i32_159 = arith.constant 8 : i32
    %517 = arith.muli %c5_i32_158, %c8_i32_159 : i32
    %518 = tpu.assume_multiple %517, 8 : i32
    %519 = arith.index_cast %518 : i32 to index
    %c0_160 = arith.constant 0 : index
    %520 = vector.load %arg6[%519, %c0_160] : memref<64x64xf32, #tpu.memory_space<vmem>>, vector<8x64xf32>
    %cst_161 = arith.constant dense<0.000000e+00> : vector<8x64xf32>
    %521 = tpu.matmul %514, %393, %cst_161 {dimension_numbers = #tpu.dot_dimension_numbers<[1], [0], [0], [1], [0, 0, 1, 1], [], []>} : vector<8x16xf32>, vector<16x64xf32>, vector<8x64xf32> -> vector<8x64xf32>
    %522 = arith.addf %520, %521 : vector<8x64xf32>
    %523 = arith.negf %522 : vector<8x64xf32>
    %524 = math.exp %523 : vector<8x64xf32>
    %cst_162 = arith.constant 1.000000e+00 : f32
    %525 = vector.broadcast %cst_162 : f32 to vector<8x64xf32>
    %526 = arith.addf %525, %524 : vector<8x64xf32>
    %527 = arith.divf %525, %526 : vector<8x64xf32>
    %528 = vector.extract_strided_slice %527 {offsets = [0, 0], sizes = [8, 16], strides = [1, 1]} : vector<8x64xf32> to vector<8x16xf32>
    %529 = vector.extract_strided_slice %527 {offsets = [0, 16], sizes = [8, 16], strides = [1, 1]} : vector<8x64xf32> to vector<8x16xf32>
    %530 = vector.extract_strided_slice %527 {offsets = [0, 48], sizes = [8, 16], strides = [1, 1]} : vector<8x64xf32> to vector<8x16xf32>
    %531 = vector.extract_strided_slice %522 {offsets = [0, 32], sizes = [8, 16], strides = [1, 1]} : vector<8x64xf32> to vector<8x16xf32>
    %532 = math.tanh %531 : vector<8x16xf32>
    %533 = arith.mulf %529, %512 : vector<8x16xf32>
    %534 = arith.mulf %528, %532 : vector<8x16xf32>
    %535 = arith.addf %533, %534 : vector<8x16xf32>
    %536 = math.tanh %535 : vector<8x16xf32>
    %537 = arith.mulf %530, %536 : vector<8x16xf32>
    %538 = arith.index_cast %518 : i32 to index
    %c0_163 = arith.constant 0 : index
    %539 = vector.load %arg5[%538, %c0_163] : memref<64x16xf32, #tpu.memory_space<vmem>>, vector<8x16xf32>
    tpu.vector_store %arg5[%538, %c0_163], %537 {strides = array<i32>} : memref<64x16xf32, #tpu.memory_space<vmem>>, vector<8x16xf32>,
    %c6_i32_164 = arith.constant 6 : i32
    %c8_i32_165 = arith.constant 8 : i32
    %540 = arith.muli %c6_i32_164, %c8_i32_165 : i32
    %541 = tpu.assume_multiple %540, 8 : i32
    %542 = arith.index_cast %541 : i32 to index
    %c0_166 = arith.constant 0 : index
    %543 = vector.load %arg6[%542, %c0_166] : memref<64x64xf32, #tpu.memory_space<vmem>>, vector<8x64xf32>
    %cst_167 = arith.constant dense<0.000000e+00> : vector<8x64xf32>
    %544 = tpu.matmul %537, %393, %cst_167 {dimension_numbers = #tpu.dot_dimension_numbers<[1], [0], [0], [1], [0, 0, 1, 1], [], []>} : vector<8x16xf32>, vector<16x64xf32>, vector<8x64xf32> -> vector<8x64xf32>
    %545 = arith.addf %543, %544 : vector<8x64xf32>
    %546 = arith.negf %545 : vector<8x64xf32>
    %547 = math.exp %546 : vector<8x64xf32>
    %cst_168 = arith.constant 1.000000e+00 : f32
    %548 = vector.broadcast %cst_168 : f32 to vector<8x64xf32>
    %549 = arith.addf %548, %547 : vector<8x64xf32>
    %550 = arith.divf %548, %549 : vector<8x64xf32>
    %551 = vector.extract_strided_slice %550 {offsets = [0, 0], sizes = [8, 16], strides = [1, 1]} : vector<8x64xf32> to vector<8x16xf32>
    %552 = vector.extract_strided_slice %550 {offsets = [0, 16], sizes = [8, 16], strides = [1, 1]} : vector<8x64xf32> to vector<8x16xf32>
    %553 = vector.extract_strided_slice %550 {offsets = [0, 48], sizes = [8, 16], strides = [1, 1]} : vector<8x64xf32> to vector<8x16xf32>
    %554 = vector.extract_strided_slice %545 {offsets = [0, 32], sizes = [8, 16], strides = [1, 1]} : vector<8x64xf32> to vector<8x16xf32>
    %555 = math.tanh %554 : vector<8x16xf32>
    %556 = arith.mulf %552, %535 : vector<8x16xf32>
    %557 = arith.mulf %551, %555 : vector<8x16xf32>
    %558 = arith.addf %556, %557 : vector<8x16xf32>
    %559 = math.tanh %558 : vector<8x16xf32>
    %560 = arith.mulf %553, %559 : vector<8x16xf32>
    %561 = arith.index_cast %541 : i32 to index
    %c0_169 = arith.constant 0 : index
    %562 = vector.load %arg5[%561, %c0_169] : memref<64x16xf32, #tpu.memory_space<vmem>>, vector<8x16xf32>
    tpu.vector_store %arg5[%561, %c0_169], %560 {strides = array<i32>} : memref<64x16xf32, #tpu.memory_space<vmem>>, vector<8x16xf32>,
    %c7_i32_170 = arith.constant 7 : i32
    %c8_i32_171 = arith.constant 8 : i32
    %563 = arith.muli %c7_i32_170, %c8_i32_171 : i32
    %564 = tpu.assume_multiple %563, 8 : i32
    %565 = arith.index_cast %564 : i32 to index
    %c0_172 = arith.constant 0 : index
    %566 = vector.load %arg6[%565, %c0_172] : memref<64x64xf32, #tpu.memory_space<vmem>>, vector<8x64xf32>
    %cst_173 = arith.constant dense<0.000000e+00> : vector<8x64xf32>
    %567 = tpu.matmul %560, %393, %cst_173 {dimension_numbers = #tpu.dot_dimension_numbers<[1], [0], [0], [1], [0, 0, 1, 1], [], []>} : vector<8x16xf32>, vector<16x64xf32>, vector<8x64xf32> -> vector<8x64xf32>
    %568 = arith.addf %566, %567 : vector<8x64xf32>
    %569 = arith.negf %568 : vector<8x64xf32>
    %570 = math.exp %569 : vector<8x64xf32>
    %cst_174 = arith.constant 1.000000e+00 : f32
    %571 = vector.broadcast %cst_174 : f32 to vector<8x64xf32>
    %572 = arith.addf %571, %570 : vector<8x64xf32>
    %573 = arith.divf %571, %572 : vector<8x64xf32>
    %574 = vector.extract_strided_slice %573 {offsets = [0, 0], sizes = [8, 16], strides = [1, 1]} : vector<8x64xf32> to vector<8x16xf32>
    %575 = vector.extract_strided_slice %573 {offsets = [0, 16], sizes = [8, 16], strides = [1, 1]} : vector<8x64xf32> to vector<8x16xf32>
    %576 = vector.extract_strided_slice %573 {offsets = [0, 48], sizes = [8, 16], strides = [1, 1]} : vector<8x64xf32> to vector<8x16xf32>
    %577 = vector.extract_strided_slice %568 {offsets = [0, 32], sizes = [8, 16], strides = [1, 1]} : vector<8x64xf32> to vector<8x16xf32>
    %578 = math.tanh %577 : vector<8x16xf32>
    %579 = arith.mulf %575, %558 : vector<8x16xf32>
    %580 = arith.mulf %574, %578 : vector<8x16xf32>
    %581 = arith.addf %579, %580 : vector<8x16xf32>
    %582 = math.tanh %581 : vector<8x16xf32>
    %583 = arith.mulf %576, %582 : vector<8x16xf32>
    %584 = arith.index_cast %564 : i32 to index
    %c0_175 = arith.constant 0 : index
    %585 = vector.load %arg5[%584, %c0_175] : memref<64x16xf32, #tpu.memory_space<vmem>>, vector<8x16xf32>
    tpu.vector_store %arg5[%584, %c0_175], %583 {strides = array<i32>} : memref<64x16xf32, #tpu.memory_space<vmem>>, vector<8x16xf32>,
    %c8_i32_176 = arith.constant 8 : i32
    %c0_177 = arith.constant 0 : index
    %c0_178 = arith.constant 0 : index
    %586 = vector.load %arg5[%c0_177, %c0_178] : memref<64x16xf32, #tpu.memory_space<vmem>>, vector<64x16xf32>
    %c3 = arith.constant 3 : index
    %c0_179 = arith.constant 0 : index
    %c0_180 = arith.constant 0 : index
    %587 = vector.load %arg3[%c3, %c0_179, %c0_180] : memref<7x16x64xf32, #tpu.memory_space<vmem>>, vector<1x16x64xf32>
    %588 = vector.shape_cast %587 : vector<1x16x64xf32> to vector<16x64xf32>
    %c3_181 = arith.constant 3 : index
    %c0_182 = arith.constant 0 : index
    %c0_183 = arith.constant 0 : index
    %589 = vector.load %arg2[%c3_181, %c0_182, %c0_183] : memref<7x16x64xf32, #tpu.memory_space<vmem>>, vector<1x16x64xf32>
    %590 = vector.shape_cast %589 : vector<1x16x64xf32> to vector<16x64xf32>
    %cst_184 = arith.constant dense<0.000000e+00> : vector<64x64xf32>
    %591 = tpu.matmul %586, %590, %cst_184 {dimension_numbers = #tpu.dot_dimension_numbers<[1], [0], [0], [1], [0, 0, 1, 1], [], []>} : vector<64x16xf32>, vector<16x64xf32>, vector<64x64xf32> -> vector<64x64xf32>
    %c3_185 = arith.constant 3 : index
    %c0_186 = arith.constant 0 : index
    %c0_187 = arith.constant 0 : index
    %592 = vector.load %arg4[%c3_185, %c0_186, %c0_187] : memref<7x1x64xf32, #tpu.memory_space<vmem>>, vector<1x1x64xf32>
    %593 = vector.shape_cast %592 : vector<1x1x64xf32> to vector<1x64xf32>
    %594 = vector.broadcast %593 : vector<1x64xf32> to vector<64x64xf32>
    %595 = arith.addf %591, %594 : vector<64x64xf32>
    %c0_188 = arith.constant 0 : index
    %c0_189 = arith.constant 0 : index
    %596 = vector.load %arg6[%c0_188, %c0_189] : memref<64x64xf32, #tpu.memory_space<vmem>>, vector<64x64xf32>
    tpu.vector_store %arg6[%c0_188, %c0_189], %595 {strides = array<i32>} : memref<64x64xf32, #tpu.memory_space<vmem>>, vector<64x64xf32>,
    %c0_i32_190 = arith.constant 0 : i32
    %c8_i32_191 = arith.constant 8 : i32
    %597 = arith.muli %c0_i32_190, %c8_i32_191 : i32
    %598 = tpu.assume_multiple %597, 8 : i32
    %599 = arith.index_cast %598 : i32 to index
    %c0_192 = arith.constant 0 : index
    %600 = vector.load %arg6[%599, %c0_192] : memref<64x64xf32, #tpu.memory_space<vmem>>, vector<8x64xf32>
    %cst_193 = arith.constant dense<0.000000e+00> : vector<8x64xf32>
    %601 = tpu.matmul %193, %588, %cst_193 {dimension_numbers = #tpu.dot_dimension_numbers<[1], [0], [0], [1], [0, 0, 1, 1], [], []>} : vector<8x16xf32>, vector<16x64xf32>, vector<8x64xf32> -> vector<8x64xf32>
    %602 = arith.addf %600, %601 : vector<8x64xf32>
    %603 = arith.negf %602 : vector<8x64xf32>
    %604 = math.exp %603 : vector<8x64xf32>
    %cst_194 = arith.constant 1.000000e+00 : f32
    %605 = vector.broadcast %cst_194 : f32 to vector<8x64xf32>
    %606 = arith.addf %605, %604 : vector<8x64xf32>
    %607 = arith.divf %605, %606 : vector<8x64xf32>
    %608 = vector.extract_strided_slice %607 {offsets = [0, 0], sizes = [8, 16], strides = [1, 1]} : vector<8x64xf32> to vector<8x16xf32>
    %609 = vector.extract_strided_slice %607 {offsets = [0, 16], sizes = [8, 16], strides = [1, 1]} : vector<8x64xf32> to vector<8x16xf32>
    %610 = vector.extract_strided_slice %607 {offsets = [0, 48], sizes = [8, 16], strides = [1, 1]} : vector<8x64xf32> to vector<8x16xf32>
    %611 = vector.extract_strided_slice %602 {offsets = [0, 32], sizes = [8, 16], strides = [1, 1]} : vector<8x64xf32> to vector<8x16xf32>
    %612 = math.tanh %611 : vector<8x16xf32>
    %613 = arith.mulf %609, %191 : vector<8x16xf32>
    %614 = arith.mulf %608, %612 : vector<8x16xf32>
    %615 = arith.addf %613, %614 : vector<8x16xf32>
    %616 = math.tanh %615 : vector<8x16xf32>
    %617 = arith.mulf %610, %616 : vector<8x16xf32>
    %618 = arith.index_cast %598 : i32 to index
    %c0_195 = arith.constant 0 : index
    %619 = vector.load %arg5[%618, %c0_195] : memref<64x16xf32, #tpu.memory_space<vmem>>, vector<8x16xf32>
    tpu.vector_store %arg5[%618, %c0_195], %617 {strides = array<i32>} : memref<64x16xf32, #tpu.memory_space<vmem>>, vector<8x16xf32>,
    %c1_i32_196 = arith.constant 1 : i32
    %c8_i32_197 = arith.constant 8 : i32
    %620 = arith.muli %c1_i32_196, %c8_i32_197 : i32
    %621 = tpu.assume_multiple %620, 8 : i32
    %622 = arith.index_cast %621 : i32 to index
    %c0_198 = arith.constant 0 : index
    %623 = vector.load %arg6[%622, %c0_198] : memref<64x64xf32, #tpu.memory_space<vmem>>, vector<8x64xf32>
    %cst_199 = arith.constant dense<0.000000e+00> : vector<8x64xf32>
    %624 = tpu.matmul %617, %588, %cst_199 {dimension_numbers = #tpu.dot_dimension_numbers<[1], [0], [0], [1], [0, 0, 1, 1], [], []>} : vector<8x16xf32>, vector<16x64xf32>, vector<8x64xf32> -> vector<8x64xf32>
    %625 = arith.addf %623, %624 : vector<8x64xf32>
    %626 = arith.negf %625 : vector<8x64xf32>
    %627 = math.exp %626 : vector<8x64xf32>
    %cst_200 = arith.constant 1.000000e+00 : f32
    %628 = vector.broadcast %cst_200 : f32 to vector<8x64xf32>
    %629 = arith.addf %628, %627 : vector<8x64xf32>
    %630 = arith.divf %628, %629 : vector<8x64xf32>
    %631 = vector.extract_strided_slice %630 {offsets = [0, 0], sizes = [8, 16], strides = [1, 1]} : vector<8x64xf32> to vector<8x16xf32>
    %632 = vector.extract_strided_slice %630 {offsets = [0, 16], sizes = [8, 16], strides = [1, 1]} : vector<8x64xf32> to vector<8x16xf32>
    %633 = vector.extract_strided_slice %630 {offsets = [0, 48], sizes = [8, 16], strides = [1, 1]} : vector<8x64xf32> to vector<8x16xf32>
    %634 = vector.extract_strided_slice %625 {offsets = [0, 32], sizes = [8, 16], strides = [1, 1]} : vector<8x64xf32> to vector<8x16xf32>
    %635 = math.tanh %634 : vector<8x16xf32>
    %636 = arith.mulf %632, %615 : vector<8x16xf32>
    %637 = arith.mulf %631, %635 : vector<8x16xf32>
    %638 = arith.addf %636, %637 : vector<8x16xf32>
    %639 = math.tanh %638 : vector<8x16xf32>
    %640 = arith.mulf %633, %639 : vector<8x16xf32>
    %641 = arith.index_cast %621 : i32 to index
    %c0_201 = arith.constant 0 : index
    %642 = vector.load %arg5[%641, %c0_201] : memref<64x16xf32, #tpu.memory_space<vmem>>, vector<8x16xf32>
    tpu.vector_store %arg5[%641, %c0_201], %640 {strides = array<i32>} : memref<64x16xf32, #tpu.memory_space<vmem>>, vector<8x16xf32>,
    %c2_i32_202 = arith.constant 2 : i32
    %c8_i32_203 = arith.constant 8 : i32
    %643 = arith.muli %c2_i32_202, %c8_i32_203 : i32
    %644 = tpu.assume_multiple %643, 8 : i32
    %645 = arith.index_cast %644 : i32 to index
    %c0_204 = arith.constant 0 : index
    %646 = vector.load %arg6[%645, %c0_204] : memref<64x64xf32, #tpu.memory_space<vmem>>, vector<8x64xf32>
    %cst_205 = arith.constant dense<0.000000e+00> : vector<8x64xf32>
    %647 = tpu.matmul %640, %588, %cst_205 {dimension_numbers = #tpu.dot_dimension_numbers<[1], [0], [0], [1], [0, 0, 1, 1], [], []>} : vector<8x16xf32>, vector<16x64xf32>, vector<8x64xf32> -> vector<8x64xf32>
    %648 = arith.addf %646, %647 : vector<8x64xf32>
    %649 = arith.negf %648 : vector<8x64xf32>
    %650 = math.exp %649 : vector<8x64xf32>
    %cst_206 = arith.constant 1.000000e+00 : f32
    %651 = vector.broadcast %cst_206 : f32 to vector<8x64xf32>
    %652 = arith.addf %651, %650 : vector<8x64xf32>
    %653 = arith.divf %651, %652 : vector<8x64xf32>
    %654 = vector.extract_strided_slice %653 {offsets = [0, 0], sizes = [8, 16], strides = [1, 1]} : vector<8x64xf32> to vector<8x16xf32>
    %655 = vector.extract_strided_slice %653 {offsets = [0, 16], sizes = [8, 16], strides = [1, 1]} : vector<8x64xf32> to vector<8x16xf32>
    %656 = vector.extract_strided_slice %653 {offsets = [0, 48], sizes = [8, 16], strides = [1, 1]} : vector<8x64xf32> to vector<8x16xf32>
    %657 = vector.extract_strided_slice %648 {offsets = [0, 32], sizes = [8, 16], strides = [1, 1]} : vector<8x64xf32> to vector<8x16xf32>
    %658 = math.tanh %657 : vector<8x16xf32>
    %659 = arith.mulf %655, %638 : vector<8x16xf32>
    %660 = arith.mulf %654, %658 : vector<8x16xf32>
    %661 = arith.addf %659, %660 : vector<8x16xf32>
    %662 = math.tanh %661 : vector<8x16xf32>
    %663 = arith.mulf %656, %662 : vector<8x16xf32>
    %664 = arith.index_cast %644 : i32 to index
    %c0_207 = arith.constant 0 : index
    %665 = vector.load %arg5[%664, %c0_207] : memref<64x16xf32, #tpu.memory_space<vmem>>, vector<8x16xf32>
    tpu.vector_store %arg5[%664, %c0_207], %663 {strides = array<i32>} : memref<64x16xf32, #tpu.memory_space<vmem>>, vector<8x16xf32>,
    %c3_i32_208 = arith.constant 3 : i32
    %c8_i32_209 = arith.constant 8 : i32
    %666 = arith.muli %c3_i32_208, %c8_i32_209 : i32
    %667 = tpu.assume_multiple %666, 8 : i32
    %668 = arith.index_cast %667 : i32 to index
    %c0_210 = arith.constant 0 : index
    %669 = vector.load %arg6[%668, %c0_210] : memref<64x64xf32, #tpu.memory_space<vmem>>, vector<8x64xf32>
    %cst_211 = arith.constant dense<0.000000e+00> : vector<8x64xf32>
    %670 = tpu.matmul %663, %588, %cst_211 {dimension_numbers = #tpu.dot_dimension_numbers<[1], [0], [0], [1], [0, 0, 1, 1], [], []>} : vector<8x16xf32>, vector<16x64xf32>, vector<8x64xf32> -> vector<8x64xf32>
    %671 = arith.addf %669, %670 : vector<8x64xf32>
    %672 = arith.negf %671 : vector<8x64xf32>
    %673 = math.exp %672 : vector<8x64xf32>
    %cst_212 = arith.constant 1.000000e+00 : f32
    %674 = vector.broadcast %cst_212 : f32 to vector<8x64xf32>
    %675 = arith.addf %674, %673 : vector<8x64xf32>
    %676 = arith.divf %674, %675 : vector<8x64xf32>
    %677 = vector.extract_strided_slice %676 {offsets = [0, 0], sizes = [8, 16], strides = [1, 1]} : vector<8x64xf32> to vector<8x16xf32>
    %678 = vector.extract_strided_slice %676 {offsets = [0, 16], sizes = [8, 16], strides = [1, 1]} : vector<8x64xf32> to vector<8x16xf32>
    %679 = vector.extract_strided_slice %676 {offsets = [0, 48], sizes = [8, 16], strides = [1, 1]} : vector<8x64xf32> to vector<8x16xf32>
    %680 = vector.extract_strided_slice %671 {offsets = [0, 32], sizes = [8, 16], strides = [1, 1]} : vector<8x64xf32> to vector<8x16xf32>
    %681 = math.tanh %680 : vector<8x16xf32>
    %682 = arith.mulf %678, %661 : vector<8x16xf32>
    %683 = arith.mulf %677, %681 : vector<8x16xf32>
    %684 = arith.addf %682, %683 : vector<8x16xf32>
    %685 = math.tanh %684 : vector<8x16xf32>
    %686 = arith.mulf %679, %685 : vector<8x16xf32>
    %687 = arith.index_cast %667 : i32 to index
    %c0_213 = arith.constant 0 : index
    %688 = vector.load %arg5[%687, %c0_213] : memref<64x16xf32, #tpu.memory_space<vmem>>, vector<8x16xf32>
    tpu.vector_store %arg5[%687, %c0_213], %686 {strides = array<i32>} : memref<64x16xf32, #tpu.memory_space<vmem>>, vector<8x16xf32>,
    %c4_i32_214 = arith.constant 4 : i32
    %c8_i32_215 = arith.constant 8 : i32
    %689 = arith.muli %c4_i32_214, %c8_i32_215 : i32
    %690 = tpu.assume_multiple %689, 8 : i32
    %691 = arith.index_cast %690 : i32 to index
    %c0_216 = arith.constant 0 : index
    %692 = vector.load %arg6[%691, %c0_216] : memref<64x64xf32, #tpu.memory_space<vmem>>, vector<8x64xf32>
    %cst_217 = arith.constant dense<0.000000e+00> : vector<8x64xf32>
    %693 = tpu.matmul %686, %588, %cst_217 {dimension_numbers = #tpu.dot_dimension_numbers<[1], [0], [0], [1], [0, 0, 1, 1], [], []>} : vector<8x16xf32>, vector<16x64xf32>, vector<8x64xf32> -> vector<8x64xf32>
    %694 = arith.addf %692, %693 : vector<8x64xf32>
    %695 = arith.negf %694 : vector<8x64xf32>
    %696 = math.exp %695 : vector<8x64xf32>
    %cst_218 = arith.constant 1.000000e+00 : f32
    %697 = vector.broadcast %cst_218 : f32 to vector<8x64xf32>
    %698 = arith.addf %697, %696 : vector<8x64xf32>
    %699 = arith.divf %697, %698 : vector<8x64xf32>
    %700 = vector.extract_strided_slice %699 {offsets = [0, 0], sizes = [8, 16], strides = [1, 1]} : vector<8x64xf32> to vector<8x16xf32>
    %701 = vector.extract_strided_slice %699 {offsets = [0, 16], sizes = [8, 16], strides = [1, 1]} : vector<8x64xf32> to vector<8x16xf32>
    %702 = vector.extract_strided_slice %699 {offsets = [0, 48], sizes = [8, 16], strides = [1, 1]} : vector<8x64xf32> to vector<8x16xf32>
    %703 = vector.extract_strided_slice %694 {offsets = [0, 32], sizes = [8, 16], strides = [1, 1]} : vector<8x64xf32> to vector<8x16xf32>
    %704 = math.tanh %703 : vector<8x16xf32>
    %705 = arith.mulf %701, %684 : vector<8x16xf32>
    %706 = arith.mulf %700, %704 : vector<8x16xf32>
    %707 = arith.addf %705, %706 : vector<8x16xf32>
    %708 = math.tanh %707 : vector<8x16xf32>
    %709 = arith.mulf %702, %708 : vector<8x16xf32>
    %710 = arith.index_cast %690 : i32 to index
    %c0_219 = arith.constant 0 : index
    %711 = vector.load %arg5[%710, %c0_219] : memref<64x16xf32, #tpu.memory_space<vmem>>, vector<8x16xf32>
    tpu.vector_store %arg5[%710, %c0_219], %709 {strides = array<i32>} : memref<64x16xf32, #tpu.memory_space<vmem>>, vector<8x16xf32>,
    %c5_i32_220 = arith.constant 5 : i32
    %c8_i32_221 = arith.constant 8 : i32
    %712 = arith.muli %c5_i32_220, %c8_i32_221 : i32
    %713 = tpu.assume_multiple %712, 8 : i32
    %714 = arith.index_cast %713 : i32 to index
    %c0_222 = arith.constant 0 : index
    %715 = vector.load %arg6[%714, %c0_222] : memref<64x64xf32, #tpu.memory_space<vmem>>, vector<8x64xf32>
    %cst_223 = arith.constant dense<0.000000e+00> : vector<8x64xf32>
    %716 = tpu.matmul %709, %588, %cst_223 {dimension_numbers = #tpu.dot_dimension_numbers<[1], [0], [0], [1], [0, 0, 1, 1], [], []>} : vector<8x16xf32>, vector<16x64xf32>, vector<8x64xf32> -> vector<8x64xf32>
    %717 = arith.addf %715, %716 : vector<8x64xf32>
    %718 = arith.negf %717 : vector<8x64xf32>
    %719 = math.exp %718 : vector<8x64xf32>
    %cst_224 = arith.constant 1.000000e+00 : f32
    %720 = vector.broadcast %cst_224 : f32 to vector<8x64xf32>
    %721 = arith.addf %720, %719 : vector<8x64xf32>
    %722 = arith.divf %720, %721 : vector<8x64xf32>
    %723 = vector.extract_strided_slice %722 {offsets = [0, 0], sizes = [8, 16], strides = [1, 1]} : vector<8x64xf32> to vector<8x16xf32>
    %724 = vector.extract_strided_slice %722 {offsets = [0, 16], sizes = [8, 16], strides = [1, 1]} : vector<8x64xf32> to vector<8x16xf32>
    %725 = vector.extract_strided_slice %722 {offsets = [0, 48], sizes = [8, 16], strides = [1, 1]} : vector<8x64xf32> to vector<8x16xf32>
    %726 = vector.extract_strided_slice %717 {offsets = [0, 32], sizes = [8, 16], strides = [1, 1]} : vector<8x64xf32> to vector<8x16xf32>
    %727 = math.tanh %726 : vector<8x16xf32>
    %728 = arith.mulf %724, %707 : vector<8x16xf32>
    %729 = arith.mulf %723, %727 : vector<8x16xf32>
    %730 = arith.addf %728, %729 : vector<8x16xf32>
    %731 = math.tanh %730 : vector<8x16xf32>
    %732 = arith.mulf %725, %731 : vector<8x16xf32>
    %733 = arith.index_cast %713 : i32 to index
    %c0_225 = arith.constant 0 : index
    %734 = vector.load %arg5[%733, %c0_225] : memref<64x16xf32, #tpu.memory_space<vmem>>, vector<8x16xf32>
    tpu.vector_store %arg5[%733, %c0_225], %732 {strides = array<i32>} : memref<64x16xf32, #tpu.memory_space<vmem>>, vector<8x16xf32>,
    %c6_i32_226 = arith.constant 6 : i32
    %c8_i32_227 = arith.constant 8 : i32
    %735 = arith.muli %c6_i32_226, %c8_i32_227 : i32
    %736 = tpu.assume_multiple %735, 8 : i32
    %737 = arith.index_cast %736 : i32 to index
    %c0_228 = arith.constant 0 : index
    %738 = vector.load %arg6[%737, %c0_228] : memref<64x64xf32, #tpu.memory_space<vmem>>, vector<8x64xf32>
    %cst_229 = arith.constant dense<0.000000e+00> : vector<8x64xf32>
    %739 = tpu.matmul %732, %588, %cst_229 {dimension_numbers = #tpu.dot_dimension_numbers<[1], [0], [0], [1], [0, 0, 1, 1], [], []>} : vector<8x16xf32>, vector<16x64xf32>, vector<8x64xf32> -> vector<8x64xf32>
    %740 = arith.addf %738, %739 : vector<8x64xf32>
    %741 = arith.negf %740 : vector<8x64xf32>
    %742 = math.exp %741 : vector<8x64xf32>
    %cst_230 = arith.constant 1.000000e+00 : f32
    %743 = vector.broadcast %cst_230 : f32 to vector<8x64xf32>
    %744 = arith.addf %743, %742 : vector<8x64xf32>
    %745 = arith.divf %743, %744 : vector<8x64xf32>
    %746 = vector.extract_strided_slice %745 {offsets = [0, 0], sizes = [8, 16], strides = [1, 1]} : vector<8x64xf32> to vector<8x16xf32>
    %747 = vector.extract_strided_slice %745 {offsets = [0, 16], sizes = [8, 16], strides = [1, 1]} : vector<8x64xf32> to vector<8x16xf32>
    %748 = vector.extract_strided_slice %745 {offsets = [0, 48], sizes = [8, 16], strides = [1, 1]} : vector<8x64xf32> to vector<8x16xf32>
    %749 = vector.extract_strided_slice %740 {offsets = [0, 32], sizes = [8, 16], strides = [1, 1]} : vector<8x64xf32> to vector<8x16xf32>
    %750 = math.tanh %749 : vector<8x16xf32>
    %751 = arith.mulf %747, %730 : vector<8x16xf32>
    %752 = arith.mulf %746, %750 : vector<8x16xf32>
    %753 = arith.addf %751, %752 : vector<8x16xf32>
    %754 = math.tanh %753 : vector<8x16xf32>
    %755 = arith.mulf %748, %754 : vector<8x16xf32>
    %756 = arith.index_cast %736 : i32 to index
    %c0_231 = arith.constant 0 : index
    %757 = vector.load %arg5[%756, %c0_231] : memref<64x16xf32, #tpu.memory_space<vmem>>, vector<8x16xf32>
    tpu.vector_store %arg5[%756, %c0_231], %755 {strides = array<i32>} : memref<64x16xf32, #tpu.memory_space<vmem>>, vector<8x16xf32>,
    %c7_i32_232 = arith.constant 7 : i32
    %c8_i32_233 = arith.constant 8 : i32
    %758 = arith.muli %c7_i32_232, %c8_i32_233 : i32
    %759 = tpu.assume_multiple %758, 8 : i32
    %760 = arith.index_cast %759 : i32 to index
    %c0_234 = arith.constant 0 : index
    %761 = vector.load %arg6[%760, %c0_234] : memref<64x64xf32, #tpu.memory_space<vmem>>, vector<8x64xf32>
    %cst_235 = arith.constant dense<0.000000e+00> : vector<8x64xf32>
    %762 = tpu.matmul %755, %588, %cst_235 {dimension_numbers = #tpu.dot_dimension_numbers<[1], [0], [0], [1], [0, 0, 1, 1], [], []>} : vector<8x16xf32>, vector<16x64xf32>, vector<8x64xf32> -> vector<8x64xf32>
    %763 = arith.addf %761, %762 : vector<8x64xf32>
    %764 = arith.negf %763 : vector<8x64xf32>
    %765 = math.exp %764 : vector<8x64xf32>
    %cst_236 = arith.constant 1.000000e+00 : f32
    %766 = vector.broadcast %cst_236 : f32 to vector<8x64xf32>
    %767 = arith.addf %766, %765 : vector<8x64xf32>
    %768 = arith.divf %766, %767 : vector<8x64xf32>
    %769 = vector.extract_strided_slice %768 {offsets = [0, 0], sizes = [8, 16], strides = [1, 1]} : vector<8x64xf32> to vector<8x16xf32>
    %770 = vector.extract_strided_slice %768 {offsets = [0, 16], sizes = [8, 16], strides = [1, 1]} : vector<8x64xf32> to vector<8x16xf32>
    %771 = vector.extract_strided_slice %768 {offsets = [0, 48], sizes = [8, 16], strides = [1, 1]} : vector<8x64xf32> to vector<8x16xf32>
    %772 = vector.extract_strided_slice %763 {offsets = [0, 32], sizes = [8, 16], strides = [1, 1]} : vector<8x64xf32> to vector<8x16xf32>
    %773 = math.tanh %772 : vector<8x16xf32>
    %774 = arith.mulf %770, %753 : vector<8x16xf32>
    %775 = arith.mulf %769, %773 : vector<8x16xf32>
    %776 = arith.addf %774, %775 : vector<8x16xf32>
    %777 = math.tanh %776 : vector<8x16xf32>
    %778 = arith.mulf %771, %777 : vector<8x16xf32>
    %779 = arith.index_cast %759 : i32 to index
    %c0_237 = arith.constant 0 : index
    %780 = vector.load %arg5[%779, %c0_237] : memref<64x16xf32, #tpu.memory_space<vmem>>, vector<8x16xf32>
    tpu.vector_store %arg5[%779, %c0_237], %778 {strides = array<i32>} : memref<64x16xf32, #tpu.memory_space<vmem>>, vector<8x16xf32>,
    %c8_i32_238 = arith.constant 8 : i32
    %c0_239 = arith.constant 0 : index
    %c0_240 = arith.constant 0 : index
    %781 = vector.load %arg5[%c0_239, %c0_240] : memref<64x16xf32, #tpu.memory_space<vmem>>, vector<64x16xf32>
    %c4 = arith.constant 4 : index
    %c0_241 = arith.constant 0 : index
    %c0_242 = arith.constant 0 : index
    %782 = vector.load %arg3[%c4, %c0_241, %c0_242] : memref<7x16x64xf32, #tpu.memory_space<vmem>>, vector<1x16x64xf32>
    %783 = vector.shape_cast %782 : vector<1x16x64xf32> to vector<16x64xf32>
    %c4_243 = arith.constant 4 : index
    %c0_244 = arith.constant 0 : index
    %c0_245 = arith.constant 0 : index
    %784 = vector.load %arg2[%c4_243, %c0_244, %c0_245] : memref<7x16x64xf32, #tpu.memory_space<vmem>>, vector<1x16x64xf32>
    %785 = vector.shape_cast %784 : vector<1x16x64xf32> to vector<16x64xf32>
    %cst_246 = arith.constant dense<0.000000e+00> : vector<64x64xf32>
    %786 = tpu.matmul %781, %785, %cst_246 {dimension_numbers = #tpu.dot_dimension_numbers<[1], [0], [0], [1], [0, 0, 1, 1], [], []>} : vector<64x16xf32>, vector<16x64xf32>, vector<64x64xf32> -> vector<64x64xf32>
    %c4_247 = arith.constant 4 : index
    %c0_248 = arith.constant 0 : index
    %c0_249 = arith.constant 0 : index
    %787 = vector.load %arg4[%c4_247, %c0_248, %c0_249] : memref<7x1x64xf32, #tpu.memory_space<vmem>>, vector<1x1x64xf32>
    %788 = vector.shape_cast %787 : vector<1x1x64xf32> to vector<1x64xf32>
    %789 = vector.broadcast %788 : vector<1x64xf32> to vector<64x64xf32>
    %790 = arith.addf %786, %789 : vector<64x64xf32>
    %c0_250 = arith.constant 0 : index
    %c0_251 = arith.constant 0 : index
    %791 = vector.load %arg6[%c0_250, %c0_251] : memref<64x64xf32, #tpu.memory_space<vmem>>, vector<64x64xf32>
    tpu.vector_store %arg6[%c0_250, %c0_251], %790 {strides = array<i32>} : memref<64x64xf32, #tpu.memory_space<vmem>>, vector<64x64xf32>,
    %c0_i32_252 = arith.constant 0 : i32
    %c8_i32_253 = arith.constant 8 : i32
    %792 = arith.muli %c0_i32_252, %c8_i32_253 : i32
    %793 = tpu.assume_multiple %792, 8 : i32
    %794 = arith.index_cast %793 : i32 to index
    %c0_254 = arith.constant 0 : index
    %795 = vector.load %arg6[%794, %c0_254] : memref<64x64xf32, #tpu.memory_space<vmem>>, vector<8x64xf32>
    %cst_255 = arith.constant dense<0.000000e+00> : vector<8x64xf32>
    %796 = tpu.matmul %0, %783, %cst_255 {dimension_numbers = #tpu.dot_dimension_numbers<[1], [0], [0], [1], [0, 0, 1, 1], [], []>} : vector<8x16xf32>, vector<16x64xf32>, vector<8x64xf32> -> vector<8x64xf32>
    %797 = arith.addf %795, %796 : vector<8x64xf32>
    %798 = arith.negf %797 : vector<8x64xf32>
    %799 = math.exp %798 : vector<8x64xf32>
    %cst_256 = arith.constant 1.000000e+00 : f32
    %800 = vector.broadcast %cst_256 : f32 to vector<8x64xf32>
    %801 = arith.addf %800, %799 : vector<8x64xf32>
    %802 = arith.divf %800, %801 : vector<8x64xf32>
    %803 = vector.extract_strided_slice %802 {offsets = [0, 0], sizes = [8, 16], strides = [1, 1]} : vector<8x64xf32> to vector<8x16xf32>
    %804 = vector.extract_strided_slice %802 {offsets = [0, 16], sizes = [8, 16], strides = [1, 1]} : vector<8x64xf32> to vector<8x16xf32>
    %805 = vector.extract_strided_slice %802 {offsets = [0, 48], sizes = [8, 16], strides = [1, 1]} : vector<8x64xf32> to vector<8x16xf32>
    %806 = vector.extract_strided_slice %797 {offsets = [0, 32], sizes = [8, 16], strides = [1, 1]} : vector<8x64xf32> to vector<8x16xf32>
    %807 = math.tanh %806 : vector<8x16xf32>
    %808 = arith.mulf %804, %0 : vector<8x16xf32>
    %809 = arith.mulf %803, %807 : vector<8x16xf32>
    %810 = arith.addf %808, %809 : vector<8x16xf32>
    %811 = math.tanh %810 : vector<8x16xf32>
    %812 = arith.mulf %805, %811 : vector<8x16xf32>
    %813 = arith.index_cast %793 : i32 to index
    %c0_257 = arith.constant 0 : index
    %814 = vector.load %arg5[%813, %c0_257] : memref<64x16xf32, #tpu.memory_space<vmem>>, vector<8x16xf32>
    tpu.vector_store %arg5[%813, %c0_257], %812 {strides = array<i32>} : memref<64x16xf32, #tpu.memory_space<vmem>>, vector<8x16xf32>,
    %c1_i32_258 = arith.constant 1 : i32
    %c8_i32_259 = arith.constant 8 : i32
    %815 = arith.muli %c1_i32_258, %c8_i32_259 : i32
    %816 = tpu.assume_multiple %815, 8 : i32
    %817 = arith.index_cast %816 : i32 to index
    %c0_260 = arith.constant 0 : index
    %818 = vector.load %arg6[%817, %c0_260] : memref<64x64xf32, #tpu.memory_space<vmem>>, vector<8x64xf32>
    %cst_261 = arith.constant dense<0.000000e+00> : vector<8x64xf32>
    %819 = tpu.matmul %812, %783, %cst_261 {dimension_numbers = #tpu.dot_dimension_numbers<[1], [0], [0], [1], [0, 0, 1, 1], [], []>} : vector<8x16xf32>, vector<16x64xf32>, vector<8x64xf32> -> vector<8x64xf32>
    %820 = arith.addf %818, %819 : vector<8x64xf32>
    %821 = arith.negf %820 : vector<8x64xf32>
    %822 = math.exp %821 : vector<8x64xf32>
    %cst_262 = arith.constant 1.000000e+00 : f32
    %823 = vector.broadcast %cst_262 : f32 to vector<8x64xf32>
    %824 = arith.addf %823, %822 : vector<8x64xf32>
    %825 = arith.divf %823, %824 : vector<8x64xf32>
    %826 = vector.extract_strided_slice %825 {offsets = [0, 0], sizes = [8, 16], strides = [1, 1]} : vector<8x64xf32> to vector<8x16xf32>
    %827 = vector.extract_strided_slice %825 {offsets = [0, 16], sizes = [8, 16], strides = [1, 1]} : vector<8x64xf32> to vector<8x16xf32>
    %828 = vector.extract_strided_slice %825 {offsets = [0, 48], sizes = [8, 16], strides = [1, 1]} : vector<8x64xf32> to vector<8x16xf32>
    %829 = vector.extract_strided_slice %820 {offsets = [0, 32], sizes = [8, 16], strides = [1, 1]} : vector<8x64xf32> to vector<8x16xf32>
    %830 = math.tanh %829 : vector<8x16xf32>
    %831 = arith.mulf %827, %810 : vector<8x16xf32>
    %832 = arith.mulf %826, %830 : vector<8x16xf32>
    %833 = arith.addf %831, %832 : vector<8x16xf32>
    %834 = math.tanh %833 : vector<8x16xf32>
    %835 = arith.mulf %828, %834 : vector<8x16xf32>
    %836 = arith.index_cast %816 : i32 to index
    %c0_263 = arith.constant 0 : index
    %837 = vector.load %arg5[%836, %c0_263] : memref<64x16xf32, #tpu.memory_space<vmem>>, vector<8x16xf32>
    tpu.vector_store %arg5[%836, %c0_263], %835 {strides = array<i32>} : memref<64x16xf32, #tpu.memory_space<vmem>>, vector<8x16xf32>,
    %c2_i32_264 = arith.constant 2 : i32
    %c8_i32_265 = arith.constant 8 : i32
    %838 = arith.muli %c2_i32_264, %c8_i32_265 : i32
    %839 = tpu.assume_multiple %838, 8 : i32
    %840 = arith.index_cast %839 : i32 to index
    %c0_266 = arith.constant 0 : index
    %841 = vector.load %arg6[%840, %c0_266] : memref<64x64xf32, #tpu.memory_space<vmem>>, vector<8x64xf32>
    %cst_267 = arith.constant dense<0.000000e+00> : vector<8x64xf32>
    %842 = tpu.matmul %835, %783, %cst_267 {dimension_numbers = #tpu.dot_dimension_numbers<[1], [0], [0], [1], [0, 0, 1, 1], [], []>} : vector<8x16xf32>, vector<16x64xf32>, vector<8x64xf32> -> vector<8x64xf32>
    %843 = arith.addf %841, %842 : vector<8x64xf32>
    %844 = arith.negf %843 : vector<8x64xf32>
    %845 = math.exp %844 : vector<8x64xf32>
    %cst_268 = arith.constant 1.000000e+00 : f32
    %846 = vector.broadcast %cst_268 : f32 to vector<8x64xf32>
    %847 = arith.addf %846, %845 : vector<8x64xf32>
    %848 = arith.divf %846, %847 : vector<8x64xf32>
    %849 = vector.extract_strided_slice %848 {offsets = [0, 0], sizes = [8, 16], strides = [1, 1]} : vector<8x64xf32> to vector<8x16xf32>
    %850 = vector.extract_strided_slice %848 {offsets = [0, 16], sizes = [8, 16], strides = [1, 1]} : vector<8x64xf32> to vector<8x16xf32>
    %851 = vector.extract_strided_slice %848 {offsets = [0, 48], sizes = [8, 16], strides = [1, 1]} : vector<8x64xf32> to vector<8x16xf32>
    %852 = vector.extract_strided_slice %843 {offsets = [0, 32], sizes = [8, 16], strides = [1, 1]} : vector<8x64xf32> to vector<8x16xf32>
    %853 = math.tanh %852 : vector<8x16xf32>
    %854 = arith.mulf %850, %833 : vector<8x16xf32>
    %855 = arith.mulf %849, %853 : vector<8x16xf32>
    %856 = arith.addf %854, %855 : vector<8x16xf32>
    %857 = math.tanh %856 : vector<8x16xf32>
    %858 = arith.mulf %851, %857 : vector<8x16xf32>
    %859 = arith.index_cast %839 : i32 to index
    %c0_269 = arith.constant 0 : index
    %860 = vector.load %arg5[%859, %c0_269] : memref<64x16xf32, #tpu.memory_space<vmem>>, vector<8x16xf32>
    tpu.vector_store %arg5[%859, %c0_269], %858 {strides = array<i32>} : memref<64x16xf32, #tpu.memory_space<vmem>>, vector<8x16xf32>,
    %c3_i32_270 = arith.constant 3 : i32
    %c8_i32_271 = arith.constant 8 : i32
    %861 = arith.muli %c3_i32_270, %c8_i32_271 : i32
    %862 = tpu.assume_multiple %861, 8 : i32
    %863 = arith.index_cast %862 : i32 to index
    %c0_272 = arith.constant 0 : index
    %864 = vector.load %arg6[%863, %c0_272] : memref<64x64xf32, #tpu.memory_space<vmem>>, vector<8x64xf32>
    %cst_273 = arith.constant dense<0.000000e+00> : vector<8x64xf32>
    %865 = tpu.matmul %858, %783, %cst_273 {dimension_numbers = #tpu.dot_dimension_numbers<[1], [0], [0], [1], [0, 0, 1, 1], [], []>} : vector<8x16xf32>, vector<16x64xf32>, vector<8x64xf32> -> vector<8x64xf32>
    %866 = arith.addf %864, %865 : vector<8x64xf32>
    %867 = arith.negf %866 : vector<8x64xf32>
    %868 = math.exp %867 : vector<8x64xf32>
    %cst_274 = arith.constant 1.000000e+00 : f32
    %869 = vector.broadcast %cst_274 : f32 to vector<8x64xf32>
    %870 = arith.addf %869, %868 : vector<8x64xf32>
    %871 = arith.divf %869, %870 : vector<8x64xf32>
    %872 = vector.extract_strided_slice %871 {offsets = [0, 0], sizes = [8, 16], strides = [1, 1]} : vector<8x64xf32> to vector<8x16xf32>
    %873 = vector.extract_strided_slice %871 {offsets = [0, 16], sizes = [8, 16], strides = [1, 1]} : vector<8x64xf32> to vector<8x16xf32>
    %874 = vector.extract_strided_slice %871 {offsets = [0, 48], sizes = [8, 16], strides = [1, 1]} : vector<8x64xf32> to vector<8x16xf32>
    %875 = vector.extract_strided_slice %866 {offsets = [0, 32], sizes = [8, 16], strides = [1, 1]} : vector<8x64xf32> to vector<8x16xf32>
    %876 = math.tanh %875 : vector<8x16xf32>
    %877 = arith.mulf %873, %856 : vector<8x16xf32>
    %878 = arith.mulf %872, %876 : vector<8x16xf32>
    %879 = arith.addf %877, %878 : vector<8x16xf32>
    %880 = math.tanh %879 : vector<8x16xf32>
    %881 = arith.mulf %874, %880 : vector<8x16xf32>
    %882 = arith.index_cast %862 : i32 to index
    %c0_275 = arith.constant 0 : index
    %883 = vector.load %arg5[%882, %c0_275] : memref<64x16xf32, #tpu.memory_space<vmem>>, vector<8x16xf32>
    tpu.vector_store %arg5[%882, %c0_275], %881 {strides = array<i32>} : memref<64x16xf32, #tpu.memory_space<vmem>>, vector<8x16xf32>,
    %c4_i32_276 = arith.constant 4 : i32
    %c8_i32_277 = arith.constant 8 : i32
    %884 = arith.muli %c4_i32_276, %c8_i32_277 : i32
    %885 = tpu.assume_multiple %884, 8 : i32
    %886 = arith.index_cast %885 : i32 to index
    %c0_278 = arith.constant 0 : index
    %887 = vector.load %arg6[%886, %c0_278] : memref<64x64xf32, #tpu.memory_space<vmem>>, vector<8x64xf32>
    %cst_279 = arith.constant dense<0.000000e+00> : vector<8x64xf32>
    %888 = tpu.matmul %881, %783, %cst_279 {dimension_numbers = #tpu.dot_dimension_numbers<[1], [0], [0], [1], [0, 0, 1, 1], [], []>} : vector<8x16xf32>, vector<16x64xf32>, vector<8x64xf32> -> vector<8x64xf32>
    %889 = arith.addf %887, %888 : vector<8x64xf32>
    %890 = arith.negf %889 : vector<8x64xf32>
    %891 = math.exp %890 : vector<8x64xf32>
    %cst_280 = arith.constant 1.000000e+00 : f32
    %892 = vector.broadcast %cst_280 : f32 to vector<8x64xf32>
    %893 = arith.addf %892, %891 : vector<8x64xf32>
    %894 = arith.divf %892, %893 : vector<8x64xf32>
    %895 = vector.extract_strided_slice %894 {offsets = [0, 0], sizes = [8, 16], strides = [1, 1]} : vector<8x64xf32> to vector<8x16xf32>
    %896 = vector.extract_strided_slice %894 {offsets = [0, 16], sizes = [8, 16], strides = [1, 1]} : vector<8x64xf32> to vector<8x16xf32>
    %897 = vector.extract_strided_slice %894 {offsets = [0, 48], sizes = [8, 16], strides = [1, 1]} : vector<8x64xf32> to vector<8x16xf32>
    %898 = vector.extract_strided_slice %889 {offsets = [0, 32], sizes = [8, 16], strides = [1, 1]} : vector<8x64xf32> to vector<8x16xf32>
    %899 = math.tanh %898 : vector<8x16xf32>
    %900 = arith.mulf %896, %879 : vector<8x16xf32>
    %901 = arith.mulf %895, %899 : vector<8x16xf32>
    %902 = arith.addf %900, %901 : vector<8x16xf32>
    %903 = math.tanh %902 : vector<8x16xf32>
    %904 = arith.mulf %897, %903 : vector<8x16xf32>
    %905 = arith.index_cast %885 : i32 to index
    %c0_281 = arith.constant 0 : index
    %906 = vector.load %arg5[%905, %c0_281] : memref<64x16xf32, #tpu.memory_space<vmem>>, vector<8x16xf32>
    tpu.vector_store %arg5[%905, %c0_281], %904 {strides = array<i32>} : memref<64x16xf32, #tpu.memory_space<vmem>>, vector<8x16xf32>,
    %c5_i32_282 = arith.constant 5 : i32
    %c8_i32_283 = arith.constant 8 : i32
    %907 = arith.muli %c5_i32_282, %c8_i32_283 : i32
    %908 = tpu.assume_multiple %907, 8 : i32
    %909 = arith.index_cast %908 : i32 to index
    %c0_284 = arith.constant 0 : index
    %910 = vector.load %arg6[%909, %c0_284] : memref<64x64xf32, #tpu.memory_space<vmem>>, vector<8x64xf32>
    %cst_285 = arith.constant dense<0.000000e+00> : vector<8x64xf32>
    %911 = tpu.matmul %904, %783, %cst_285 {dimension_numbers = #tpu.dot_dimension_numbers<[1], [0], [0], [1], [0, 0, 1, 1], [], []>} : vector<8x16xf32>, vector<16x64xf32>, vector<8x64xf32> -> vector<8x64xf32>
    %912 = arith.addf %910, %911 : vector<8x64xf32>
    %913 = arith.negf %912 : vector<8x64xf32>
    %914 = math.exp %913 : vector<8x64xf32>
    %cst_286 = arith.constant 1.000000e+00 : f32
    %915 = vector.broadcast %cst_286 : f32 to vector<8x64xf32>
    %916 = arith.addf %915, %914 : vector<8x64xf32>
    %917 = arith.divf %915, %916 : vector<8x64xf32>
    %918 = vector.extract_strided_slice %917 {offsets = [0, 0], sizes = [8, 16], strides = [1, 1]} : vector<8x64xf32> to vector<8x16xf32>
    %919 = vector.extract_strided_slice %917 {offsets = [0, 16], sizes = [8, 16], strides = [1, 1]} : vector<8x64xf32> to vector<8x16xf32>
    %920 = vector.extract_strided_slice %917 {offsets = [0, 48], sizes = [8, 16], strides = [1, 1]} : vector<8x64xf32> to vector<8x16xf32>
    %921 = vector.extract_strided_slice %912 {offsets = [0, 32], sizes = [8, 16], strides = [1, 1]} : vector<8x64xf32> to vector<8x16xf32>
    %922 = math.tanh %921 : vector<8x16xf32>
    %923 = arith.mulf %919, %902 : vector<8x16xf32>
    %924 = arith.mulf %918, %922 : vector<8x16xf32>
    %925 = arith.addf %923, %924 : vector<8x16xf32>
    %926 = math.tanh %925 : vector<8x16xf32>
    %927 = arith.mulf %920, %926 : vector<8x16xf32>
    %928 = arith.index_cast %908 : i32 to index
    %c0_287 = arith.constant 0 : index
    %929 = vector.load %arg5[%928, %c0_287] : memref<64x16xf32, #tpu.memory_space<vmem>>, vector<8x16xf32>
    tpu.vector_store %arg5[%928, %c0_287], %927 {strides = array<i32>} : memref<64x16xf32, #tpu.memory_space<vmem>>, vector<8x16xf32>,
    %c6_i32_288 = arith.constant 6 : i32
    %c8_i32_289 = arith.constant 8 : i32
    %930 = arith.muli %c6_i32_288, %c8_i32_289 : i32
    %931 = tpu.assume_multiple %930, 8 : i32
    %932 = arith.index_cast %931 : i32 to index
    %c0_290 = arith.constant 0 : index
    %933 = vector.load %arg6[%932, %c0_290] : memref<64x64xf32, #tpu.memory_space<vmem>>, vector<8x64xf32>
    %cst_291 = arith.constant dense<0.000000e+00> : vector<8x64xf32>
    %934 = tpu.matmul %927, %783, %cst_291 {dimension_numbers = #tpu.dot_dimension_numbers<[1], [0], [0], [1], [0, 0, 1, 1], [], []>} : vector<8x16xf32>, vector<16x64xf32>, vector<8x64xf32> -> vector<8x64xf32>
    %935 = arith.addf %933, %934 : vector<8x64xf32>
    %936 = arith.negf %935 : vector<8x64xf32>
    %937 = math.exp %936 : vector<8x64xf32>
    %cst_292 = arith.constant 1.000000e+00 : f32
    %938 = vector.broadcast %cst_292 : f32 to vector<8x64xf32>
    %939 = arith.addf %938, %937 : vector<8x64xf32>
    %940 = arith.divf %938, %939 : vector<8x64xf32>
    %941 = vector.extract_strided_slice %940 {offsets = [0, 0], sizes = [8, 16], strides = [1, 1]} : vector<8x64xf32> to vector<8x16xf32>
    %942 = vector.extract_strided_slice %940 {offsets = [0, 16], sizes = [8, 16], strides = [1, 1]} : vector<8x64xf32> to vector<8x16xf32>
    %943 = vector.extract_strided_slice %940 {offsets = [0, 48], sizes = [8, 16], strides = [1, 1]} : vector<8x64xf32> to vector<8x16xf32>
    %944 = vector.extract_strided_slice %935 {offsets = [0, 32], sizes = [8, 16], strides = [1, 1]} : vector<8x64xf32> to vector<8x16xf32>
    %945 = math.tanh %944 : vector<8x16xf32>
    %946 = arith.mulf %942, %925 : vector<8x16xf32>
    %947 = arith.mulf %941, %945 : vector<8x16xf32>
    %948 = arith.addf %946, %947 : vector<8x16xf32>
    %949 = math.tanh %948 : vector<8x16xf32>
    %950 = arith.mulf %943, %949 : vector<8x16xf32>
    %951 = arith.index_cast %931 : i32 to index
    %c0_293 = arith.constant 0 : index
    %952 = vector.load %arg5[%951, %c0_293] : memref<64x16xf32, #tpu.memory_space<vmem>>, vector<8x16xf32>
    tpu.vector_store %arg5[%951, %c0_293], %950 {strides = array<i32>} : memref<64x16xf32, #tpu.memory_space<vmem>>, vector<8x16xf32>,
    %c7_i32_294 = arith.constant 7 : i32
    %c8_i32_295 = arith.constant 8 : i32
    %953 = arith.muli %c7_i32_294, %c8_i32_295 : i32
    %954 = tpu.assume_multiple %953, 8 : i32
    %955 = arith.index_cast %954 : i32 to index
    %c0_296 = arith.constant 0 : index
    %956 = vector.load %arg6[%955, %c0_296] : memref<64x64xf32, #tpu.memory_space<vmem>>, vector<8x64xf32>
    %cst_297 = arith.constant dense<0.000000e+00> : vector<8x64xf32>
    %957 = tpu.matmul %950, %783, %cst_297 {dimension_numbers = #tpu.dot_dimension_numbers<[1], [0], [0], [1], [0, 0, 1, 1], [], []>} : vector<8x16xf32>, vector<16x64xf32>, vector<8x64xf32> -> vector<8x64xf32>
    %958 = arith.addf %956, %957 : vector<8x64xf32>
    %959 = arith.negf %958 : vector<8x64xf32>
    %960 = math.exp %959 : vector<8x64xf32>
    %cst_298 = arith.constant 1.000000e+00 : f32
    %961 = vector.broadcast %cst_298 : f32 to vector<8x64xf32>
    %962 = arith.addf %961, %960 : vector<8x64xf32>
    %963 = arith.divf %961, %962 : vector<8x64xf32>
    %964 = vector.extract_strided_slice %963 {offsets = [0, 0], sizes = [8, 16], strides = [1, 1]} : vector<8x64xf32> to vector<8x16xf32>
    %965 = vector.extract_strided_slice %963 {offsets = [0, 16], sizes = [8, 16], strides = [1, 1]} : vector<8x64xf32> to vector<8x16xf32>
    %966 = vector.extract_strided_slice %963 {offsets = [0, 48], sizes = [8, 16], strides = [1, 1]} : vector<8x64xf32> to vector<8x16xf32>
    %967 = vector.extract_strided_slice %958 {offsets = [0, 32], sizes = [8, 16], strides = [1, 1]} : vector<8x64xf32> to vector<8x16xf32>
    %968 = math.tanh %967 : vector<8x16xf32>
    %969 = arith.mulf %965, %948 : vector<8x16xf32>
    %970 = arith.mulf %964, %968 : vector<8x16xf32>
    %971 = arith.addf %969, %970 : vector<8x16xf32>
    %972 = math.tanh %971 : vector<8x16xf32>
    %973 = arith.mulf %966, %972 : vector<8x16xf32>
    %974 = arith.index_cast %954 : i32 to index
    %c0_299 = arith.constant 0 : index
    %975 = vector.load %arg5[%974, %c0_299] : memref<64x16xf32, #tpu.memory_space<vmem>>, vector<8x16xf32>
    tpu.vector_store %arg5[%974, %c0_299], %973 {strides = array<i32>} : memref<64x16xf32, #tpu.memory_space<vmem>>, vector<8x16xf32>,
    %c8_i32_300 = arith.constant 8 : i32
    %c0_301 = arith.constant 0 : index
    %c0_302 = arith.constant 0 : index
    %976 = vector.load %arg5[%c0_301, %c0_302] : memref<64x16xf32, #tpu.memory_space<vmem>>, vector<64x16xf32>
    %c5 = arith.constant 5 : index
    %c0_303 = arith.constant 0 : index
    %c0_304 = arith.constant 0 : index
    %977 = vector.load %arg3[%c5, %c0_303, %c0_304] : memref<7x16x64xf32, #tpu.memory_space<vmem>>, vector<1x16x64xf32>
    %978 = vector.shape_cast %977 : vector<1x16x64xf32> to vector<16x64xf32>
    %c5_305 = arith.constant 5 : index
    %c0_306 = arith.constant 0 : index
    %c0_307 = arith.constant 0 : index
    %979 = vector.load %arg2[%c5_305, %c0_306, %c0_307] : memref<7x16x64xf32, #tpu.memory_space<vmem>>, vector<1x16x64xf32>
    %980 = vector.shape_cast %979 : vector<1x16x64xf32> to vector<16x64xf32>
    %cst_308 = arith.constant dense<0.000000e+00> : vector<64x64xf32>
    %981 = tpu.matmul %976, %980, %cst_308 {dimension_numbers = #tpu.dot_dimension_numbers<[1], [0], [0], [1], [0, 0, 1, 1], [], []>} : vector<64x16xf32>, vector<16x64xf32>, vector<64x64xf32> -> vector<64x64xf32>
    %c5_309 = arith.constant 5 : index
    %c0_310 = arith.constant 0 : index
    %c0_311 = arith.constant 0 : index
    %982 = vector.load %arg4[%c5_309, %c0_310, %c0_311] : memref<7x1x64xf32, #tpu.memory_space<vmem>>, vector<1x1x64xf32>
    %983 = vector.shape_cast %982 : vector<1x1x64xf32> to vector<1x64xf32>
    %984 = vector.broadcast %983 : vector<1x64xf32> to vector<64x64xf32>
    %985 = arith.addf %981, %984 : vector<64x64xf32>
    %c0_312 = arith.constant 0 : index
    %c0_313 = arith.constant 0 : index
    %986 = vector.load %arg6[%c0_312, %c0_313] : memref<64x64xf32, #tpu.memory_space<vmem>>, vector<64x64xf32>
    tpu.vector_store %arg6[%c0_312, %c0_313], %985 {strides = array<i32>} : memref<64x64xf32, #tpu.memory_space<vmem>>, vector<64x64xf32>,
    %c0_i32_314 = arith.constant 0 : i32
    %c8_i32_315 = arith.constant 8 : i32
    %987 = arith.muli %c0_i32_314, %c8_i32_315 : i32
    %988 = tpu.assume_multiple %987, 8 : i32
    %989 = arith.index_cast %988 : i32 to index
    %c0_316 = arith.constant 0 : index
    %990 = vector.load %arg6[%989, %c0_316] : memref<64x64xf32, #tpu.memory_space<vmem>>, vector<8x64xf32>
    %cst_317 = arith.constant dense<0.000000e+00> : vector<8x64xf32>
    %991 = tpu.matmul %0, %978, %cst_317 {dimension_numbers = #tpu.dot_dimension_numbers<[1], [0], [0], [1], [0, 0, 1, 1], [], []>} : vector<8x16xf32>, vector<16x64xf32>, vector<8x64xf32> -> vector<8x64xf32>
    %992 = arith.addf %990, %991 : vector<8x64xf32>
    %993 = arith.negf %992 : vector<8x64xf32>
    %994 = math.exp %993 : vector<8x64xf32>
    %cst_318 = arith.constant 1.000000e+00 : f32
    %995 = vector.broadcast %cst_318 : f32 to vector<8x64xf32>
    %996 = arith.addf %995, %994 : vector<8x64xf32>
    %997 = arith.divf %995, %996 : vector<8x64xf32>
    %998 = vector.extract_strided_slice %997 {offsets = [0, 0], sizes = [8, 16], strides = [1, 1]} : vector<8x64xf32> to vector<8x16xf32>
    %999 = vector.extract_strided_slice %997 {offsets = [0, 16], sizes = [8, 16], strides = [1, 1]} : vector<8x64xf32> to vector<8x16xf32>
    %1000 = vector.extract_strided_slice %997 {offsets = [0, 48], sizes = [8, 16], strides = [1, 1]} : vector<8x64xf32> to vector<8x16xf32>
    %1001 = vector.extract_strided_slice %992 {offsets = [0, 32], sizes = [8, 16], strides = [1, 1]} : vector<8x64xf32> to vector<8x16xf32>
    %1002 = math.tanh %1001 : vector<8x16xf32>
    %1003 = arith.mulf %999, %0 : vector<8x16xf32>
    %1004 = arith.mulf %998, %1002 : vector<8x16xf32>
    %1005 = arith.addf %1003, %1004 : vector<8x16xf32>
    %1006 = math.tanh %1005 : vector<8x16xf32>
    %1007 = arith.mulf %1000, %1006 : vector<8x16xf32>
    %1008 = arith.index_cast %988 : i32 to index
    %c0_319 = arith.constant 0 : index
    %1009 = vector.load %arg5[%1008, %c0_319] : memref<64x16xf32, #tpu.memory_space<vmem>>, vector<8x16xf32>
    tpu.vector_store %arg5[%1008, %c0_319], %1007 {strides = array<i32>} : memref<64x16xf32, #tpu.memory_space<vmem>>, vector<8x16xf32>,
    %c1_i32_320 = arith.constant 1 : i32
    %c8_i32_321 = arith.constant 8 : i32
    %1010 = arith.muli %c1_i32_320, %c8_i32_321 : i32
    %1011 = tpu.assume_multiple %1010, 8 : i32
    %1012 = arith.index_cast %1011 : i32 to index
    %c0_322 = arith.constant 0 : index
    %1013 = vector.load %arg6[%1012, %c0_322] : memref<64x64xf32, #tpu.memory_space<vmem>>, vector<8x64xf32>
    %cst_323 = arith.constant dense<0.000000e+00> : vector<8x64xf32>
    %1014 = tpu.matmul %1007, %978, %cst_323 {dimension_numbers = #tpu.dot_dimension_numbers<[1], [0], [0], [1], [0, 0, 1, 1], [], []>} : vector<8x16xf32>, vector<16x64xf32>, vector<8x64xf32> -> vector<8x64xf32>
    %1015 = arith.addf %1013, %1014 : vector<8x64xf32>
    %1016 = arith.negf %1015 : vector<8x64xf32>
    %1017 = math.exp %1016 : vector<8x64xf32>
    %cst_324 = arith.constant 1.000000e+00 : f32
    %1018 = vector.broadcast %cst_324 : f32 to vector<8x64xf32>
    %1019 = arith.addf %1018, %1017 : vector<8x64xf32>
    %1020 = arith.divf %1018, %1019 : vector<8x64xf32>
    %1021 = vector.extract_strided_slice %1020 {offsets = [0, 0], sizes = [8, 16], strides = [1, 1]} : vector<8x64xf32> to vector<8x16xf32>
    %1022 = vector.extract_strided_slice %1020 {offsets = [0, 16], sizes = [8, 16], strides = [1, 1]} : vector<8x64xf32> to vector<8x16xf32>
    %1023 = vector.extract_strided_slice %1020 {offsets = [0, 48], sizes = [8, 16], strides = [1, 1]} : vector<8x64xf32> to vector<8x16xf32>
    %1024 = vector.extract_strided_slice %1015 {offsets = [0, 32], sizes = [8, 16], strides = [1, 1]} : vector<8x64xf32> to vector<8x16xf32>
    %1025 = math.tanh %1024 : vector<8x16xf32>
    %1026 = arith.mulf %1022, %1005 : vector<8x16xf32>
    %1027 = arith.mulf %1021, %1025 : vector<8x16xf32>
    %1028 = arith.addf %1026, %1027 : vector<8x16xf32>
    %1029 = math.tanh %1028 : vector<8x16xf32>
    %1030 = arith.mulf %1023, %1029 : vector<8x16xf32>
    %1031 = arith.index_cast %1011 : i32 to index
    %c0_325 = arith.constant 0 : index
    %1032 = vector.load %arg5[%1031, %c0_325] : memref<64x16xf32, #tpu.memory_space<vmem>>, vector<8x16xf32>
    tpu.vector_store %arg5[%1031, %c0_325], %1030 {strides = array<i32>} : memref<64x16xf32, #tpu.memory_space<vmem>>, vector<8x16xf32>,
    %c2_i32_326 = arith.constant 2 : i32
    %c8_i32_327 = arith.constant 8 : i32
    %1033 = arith.muli %c2_i32_326, %c8_i32_327 : i32
    %1034 = tpu.assume_multiple %1033, 8 : i32
    %1035 = arith.index_cast %1034 : i32 to index
    %c0_328 = arith.constant 0 : index
    %1036 = vector.load %arg6[%1035, %c0_328] : memref<64x64xf32, #tpu.memory_space<vmem>>, vector<8x64xf32>
    %cst_329 = arith.constant dense<0.000000e+00> : vector<8x64xf32>
    %1037 = tpu.matmul %1030, %978, %cst_329 {dimension_numbers = #tpu.dot_dimension_numbers<[1], [0], [0], [1], [0, 0, 1, 1], [], []>} : vector<8x16xf32>, vector<16x64xf32>, vector<8x64xf32> -> vector<8x64xf32>
    %1038 = arith.addf %1036, %1037 : vector<8x64xf32>
    %1039 = arith.negf %1038 : vector<8x64xf32>
    %1040 = math.exp %1039 : vector<8x64xf32>
    %cst_330 = arith.constant 1.000000e+00 : f32
    %1041 = vector.broadcast %cst_330 : f32 to vector<8x64xf32>
    %1042 = arith.addf %1041, %1040 : vector<8x64xf32>
    %1043 = arith.divf %1041, %1042 : vector<8x64xf32>
    %1044 = vector.extract_strided_slice %1043 {offsets = [0, 0], sizes = [8, 16], strides = [1, 1]} : vector<8x64xf32> to vector<8x16xf32>
    %1045 = vector.extract_strided_slice %1043 {offsets = [0, 16], sizes = [8, 16], strides = [1, 1]} : vector<8x64xf32> to vector<8x16xf32>
    %1046 = vector.extract_strided_slice %1043 {offsets = [0, 48], sizes = [8, 16], strides = [1, 1]} : vector<8x64xf32> to vector<8x16xf32>
    %1047 = vector.extract_strided_slice %1038 {offsets = [0, 32], sizes = [8, 16], strides = [1, 1]} : vector<8x64xf32> to vector<8x16xf32>
    %1048 = math.tanh %1047 : vector<8x16xf32>
    %1049 = arith.mulf %1045, %1028 : vector<8x16xf32>
    %1050 = arith.mulf %1044, %1048 : vector<8x16xf32>
    %1051 = arith.addf %1049, %1050 : vector<8x16xf32>
    %1052 = math.tanh %1051 : vector<8x16xf32>
    %1053 = arith.mulf %1046, %1052 : vector<8x16xf32>
    %1054 = arith.index_cast %1034 : i32 to index
    %c0_331 = arith.constant 0 : index
    %1055 = vector.load %arg5[%1054, %c0_331] : memref<64x16xf32, #tpu.memory_space<vmem>>, vector<8x16xf32>
    tpu.vector_store %arg5[%1054, %c0_331], %1053 {strides = array<i32>} : memref<64x16xf32, #tpu.memory_space<vmem>>, vector<8x16xf32>,
    %c3_i32_332 = arith.constant 3 : i32
    %c8_i32_333 = arith.constant 8 : i32
    %1056 = arith.muli %c3_i32_332, %c8_i32_333 : i32
    %1057 = tpu.assume_multiple %1056, 8 : i32
    %1058 = arith.index_cast %1057 : i32 to index
    %c0_334 = arith.constant 0 : index
    %1059 = vector.load %arg6[%1058, %c0_334] : memref<64x64xf32, #tpu.memory_space<vmem>>, vector<8x64xf32>
    %cst_335 = arith.constant dense<0.000000e+00> : vector<8x64xf32>
    %1060 = tpu.matmul %1053, %978, %cst_335 {dimension_numbers = #tpu.dot_dimension_numbers<[1], [0], [0], [1], [0, 0, 1, 1], [], []>} : vector<8x16xf32>, vector<16x64xf32>, vector<8x64xf32> -> vector<8x64xf32>
    %1061 = arith.addf %1059, %1060 : vector<8x64xf32>
    %1062 = arith.negf %1061 : vector<8x64xf32>
    %1063 = math.exp %1062 : vector<8x64xf32>
    %cst_336 = arith.constant 1.000000e+00 : f32
    %1064 = vector.broadcast %cst_336 : f32 to vector<8x64xf32>
    %1065 = arith.addf %1064, %1063 : vector<8x64xf32>
    %1066 = arith.divf %1064, %1065 : vector<8x64xf32>
    %1067 = vector.extract_strided_slice %1066 {offsets = [0, 0], sizes = [8, 16], strides = [1, 1]} : vector<8x64xf32> to vector<8x16xf32>
    %1068 = vector.extract_strided_slice %1066 {offsets = [0, 16], sizes = [8, 16], strides = [1, 1]} : vector<8x64xf32> to vector<8x16xf32>
    %1069 = vector.extract_strided_slice %1066 {offsets = [0, 48], sizes = [8, 16], strides = [1, 1]} : vector<8x64xf32> to vector<8x16xf32>
    %1070 = vector.extract_strided_slice %1061 {offsets = [0, 32], sizes = [8, 16], strides = [1, 1]} : vector<8x64xf32> to vector<8x16xf32>
    %1071 = math.tanh %1070 : vector<8x16xf32>
    %1072 = arith.mulf %1068, %1051 : vector<8x16xf32>
    %1073 = arith.mulf %1067, %1071 : vector<8x16xf32>
    %1074 = arith.addf %1072, %1073 : vector<8x16xf32>
    %1075 = math.tanh %1074 : vector<8x16xf32>
    %1076 = arith.mulf %1069, %1075 : vector<8x16xf32>
    %1077 = arith.index_cast %1057 : i32 to index
    %c0_337 = arith.constant 0 : index
    %1078 = vector.load %arg5[%1077, %c0_337] : memref<64x16xf32, #tpu.memory_space<vmem>>, vector<8x16xf32>
    tpu.vector_store %arg5[%1077, %c0_337], %1076 {strides = array<i32>} : memref<64x16xf32, #tpu.memory_space<vmem>>, vector<8x16xf32>,
    %c4_i32_338 = arith.constant 4 : i32
    %c8_i32_339 = arith.constant 8 : i32
    %1079 = arith.muli %c4_i32_338, %c8_i32_339 : i32
    %1080 = tpu.assume_multiple %1079, 8 : i32
    %1081 = arith.index_cast %1080 : i32 to index
    %c0_340 = arith.constant 0 : index
    %1082 = vector.load %arg6[%1081, %c0_340] : memref<64x64xf32, #tpu.memory_space<vmem>>, vector<8x64xf32>
    %cst_341 = arith.constant dense<0.000000e+00> : vector<8x64xf32>
    %1083 = tpu.matmul %1076, %978, %cst_341 {dimension_numbers = #tpu.dot_dimension_numbers<[1], [0], [0], [1], [0, 0, 1, 1], [], []>} : vector<8x16xf32>, vector<16x64xf32>, vector<8x64xf32> -> vector<8x64xf32>
    %1084 = arith.addf %1082, %1083 : vector<8x64xf32>
    %1085 = arith.negf %1084 : vector<8x64xf32>
    %1086 = math.exp %1085 : vector<8x64xf32>
    %cst_342 = arith.constant 1.000000e+00 : f32
    %1087 = vector.broadcast %cst_342 : f32 to vector<8x64xf32>
    %1088 = arith.addf %1087, %1086 : vector<8x64xf32>
    %1089 = arith.divf %1087, %1088 : vector<8x64xf32>
    %1090 = vector.extract_strided_slice %1089 {offsets = [0, 0], sizes = [8, 16], strides = [1, 1]} : vector<8x64xf32> to vector<8x16xf32>
    %1091 = vector.extract_strided_slice %1089 {offsets = [0, 16], sizes = [8, 16], strides = [1, 1]} : vector<8x64xf32> to vector<8x16xf32>
    %1092 = vector.extract_strided_slice %1089 {offsets = [0, 48], sizes = [8, 16], strides = [1, 1]} : vector<8x64xf32> to vector<8x16xf32>
    %1093 = vector.extract_strided_slice %1084 {offsets = [0, 32], sizes = [8, 16], strides = [1, 1]} : vector<8x64xf32> to vector<8x16xf32>
    %1094 = math.tanh %1093 : vector<8x16xf32>
    %1095 = arith.mulf %1091, %1074 : vector<8x16xf32>
    %1096 = arith.mulf %1090, %1094 : vector<8x16xf32>
    %1097 = arith.addf %1095, %1096 : vector<8x16xf32>
    %1098 = math.tanh %1097 : vector<8x16xf32>
    %1099 = arith.mulf %1092, %1098 : vector<8x16xf32>
    %1100 = arith.index_cast %1080 : i32 to index
    %c0_343 = arith.constant 0 : index
    %1101 = vector.load %arg5[%1100, %c0_343] : memref<64x16xf32, #tpu.memory_space<vmem>>, vector<8x16xf32>
    tpu.vector_store %arg5[%1100, %c0_343], %1099 {strides = array<i32>} : memref<64x16xf32, #tpu.memory_space<vmem>>, vector<8x16xf32>,
    %c5_i32_344 = arith.constant 5 : i32
    %c8_i32_345 = arith.constant 8 : i32
    %1102 = arith.muli %c5_i32_344, %c8_i32_345 : i32
    %1103 = tpu.assume_multiple %1102, 8 : i32
    %1104 = arith.index_cast %1103 : i32 to index
    %c0_346 = arith.constant 0 : index
    %1105 = vector.load %arg6[%1104, %c0_346] : memref<64x64xf32, #tpu.memory_space<vmem>>, vector<8x64xf32>
    %cst_347 = arith.constant dense<0.000000e+00> : vector<8x64xf32>
    %1106 = tpu.matmul %1099, %978, %cst_347 {dimension_numbers = #tpu.dot_dimension_numbers<[1], [0], [0], [1], [0, 0, 1, 1], [], []>} : vector<8x16xf32>, vector<16x64xf32>, vector<8x64xf32> -> vector<8x64xf32>
    %1107 = arith.addf %1105, %1106 : vector<8x64xf32>
    %1108 = arith.negf %1107 : vector<8x64xf32>
    %1109 = math.exp %1108 : vector<8x64xf32>
    %cst_348 = arith.constant 1.000000e+00 : f32
    %1110 = vector.broadcast %cst_348 : f32 to vector<8x64xf32>
    %1111 = arith.addf %1110, %1109 : vector<8x64xf32>
    %1112 = arith.divf %1110, %1111 : vector<8x64xf32>
    %1113 = vector.extract_strided_slice %1112 {offsets = [0, 0], sizes = [8, 16], strides = [1, 1]} : vector<8x64xf32> to vector<8x16xf32>
    %1114 = vector.extract_strided_slice %1112 {offsets = [0, 16], sizes = [8, 16], strides = [1, 1]} : vector<8x64xf32> to vector<8x16xf32>
    %1115 = vector.extract_strided_slice %1112 {offsets = [0, 48], sizes = [8, 16], strides = [1, 1]} : vector<8x64xf32> to vector<8x16xf32>
    %1116 = vector.extract_strided_slice %1107 {offsets = [0, 32], sizes = [8, 16], strides = [1, 1]} : vector<8x64xf32> to vector<8x16xf32>
    %1117 = math.tanh %1116 : vector<8x16xf32>
    %1118 = arith.mulf %1114, %1097 : vector<8x16xf32>
    %1119 = arith.mulf %1113, %1117 : vector<8x16xf32>
    %1120 = arith.addf %1118, %1119 : vector<8x16xf32>
    %1121 = math.tanh %1120 : vector<8x16xf32>
    %1122 = arith.mulf %1115, %1121 : vector<8x16xf32>
    %1123 = arith.index_cast %1103 : i32 to index
    %c0_349 = arith.constant 0 : index
    %1124 = vector.load %arg5[%1123, %c0_349] : memref<64x16xf32, #tpu.memory_space<vmem>>, vector<8x16xf32>
    tpu.vector_store %arg5[%1123, %c0_349], %1122 {strides = array<i32>} : memref<64x16xf32, #tpu.memory_space<vmem>>, vector<8x16xf32>,
    %c6_i32_350 = arith.constant 6 : i32
    %c8_i32_351 = arith.constant 8 : i32
    %1125 = arith.muli %c6_i32_350, %c8_i32_351 : i32
    %1126 = tpu.assume_multiple %1125, 8 : i32
    %1127 = arith.index_cast %1126 : i32 to index
    %c0_352 = arith.constant 0 : index
    %1128 = vector.load %arg6[%1127, %c0_352] : memref<64x64xf32, #tpu.memory_space<vmem>>, vector<8x64xf32>
    %cst_353 = arith.constant dense<0.000000e+00> : vector<8x64xf32>
    %1129 = tpu.matmul %1122, %978, %cst_353 {dimension_numbers = #tpu.dot_dimension_numbers<[1], [0], [0], [1], [0, 0, 1, 1], [], []>} : vector<8x16xf32>, vector<16x64xf32>, vector<8x64xf32> -> vector<8x64xf32>
    %1130 = arith.addf %1128, %1129 : vector<8x64xf32>
    %1131 = arith.negf %1130 : vector<8x64xf32>
    %1132 = math.exp %1131 : vector<8x64xf32>
    %cst_354 = arith.constant 1.000000e+00 : f32
    %1133 = vector.broadcast %cst_354 : f32 to vector<8x64xf32>
    %1134 = arith.addf %1133, %1132 : vector<8x64xf32>
    %1135 = arith.divf %1133, %1134 : vector<8x64xf32>
    %1136 = vector.extract_strided_slice %1135 {offsets = [0, 0], sizes = [8, 16], strides = [1, 1]} : vector<8x64xf32> to vector<8x16xf32>
    %1137 = vector.extract_strided_slice %1135 {offsets = [0, 16], sizes = [8, 16], strides = [1, 1]} : vector<8x64xf32> to vector<8x16xf32>
    %1138 = vector.extract_strided_slice %1135 {offsets = [0, 48], sizes = [8, 16], strides = [1, 1]} : vector<8x64xf32> to vector<8x16xf32>
    %1139 = vector.extract_strided_slice %1130 {offsets = [0, 32], sizes = [8, 16], strides = [1, 1]} : vector<8x64xf32> to vector<8x16xf32>
    %1140 = math.tanh %1139 : vector<8x16xf32>
    %1141 = arith.mulf %1137, %1120 : vector<8x16xf32>
    %1142 = arith.mulf %1136, %1140 : vector<8x16xf32>
    %1143 = arith.addf %1141, %1142 : vector<8x16xf32>
    %1144 = math.tanh %1143 : vector<8x16xf32>
    %1145 = arith.mulf %1138, %1144 : vector<8x16xf32>
    %1146 = arith.index_cast %1126 : i32 to index
    %c0_355 = arith.constant 0 : index
    %1147 = vector.load %arg5[%1146, %c0_355] : memref<64x16xf32, #tpu.memory_space<vmem>>, vector<8x16xf32>
    tpu.vector_store %arg5[%1146, %c0_355], %1145 {strides = array<i32>} : memref<64x16xf32, #tpu.memory_space<vmem>>, vector<8x16xf32>,
    %c7_i32_356 = arith.constant 7 : i32
    %c8_i32_357 = arith.constant 8 : i32
    %1148 = arith.muli %c7_i32_356, %c8_i32_357 : i32
    %1149 = tpu.assume_multiple %1148, 8 : i32
    %1150 = arith.index_cast %1149 : i32 to index
    %c0_358 = arith.constant 0 : index
    %1151 = vector.load %arg6[%1150, %c0_358] : memref<64x64xf32, #tpu.memory_space<vmem>>, vector<8x64xf32>
    %cst_359 = arith.constant dense<0.000000e+00> : vector<8x64xf32>
    %1152 = tpu.matmul %1145, %978, %cst_359 {dimension_numbers = #tpu.dot_dimension_numbers<[1], [0], [0], [1], [0, 0, 1, 1], [], []>} : vector<8x16xf32>, vector<16x64xf32>, vector<8x64xf32> -> vector<8x64xf32>
    %1153 = arith.addf %1151, %1152 : vector<8x64xf32>
    %1154 = arith.negf %1153 : vector<8x64xf32>
    %1155 = math.exp %1154 : vector<8x64xf32>
    %cst_360 = arith.constant 1.000000e+00 : f32
    %1156 = vector.broadcast %cst_360 : f32 to vector<8x64xf32>
    %1157 = arith.addf %1156, %1155 : vector<8x64xf32>
    %1158 = arith.divf %1156, %1157 : vector<8x64xf32>
    %1159 = vector.extract_strided_slice %1158 {offsets = [0, 0], sizes = [8, 16], strides = [1, 1]} : vector<8x64xf32> to vector<8x16xf32>
    %1160 = vector.extract_strided_slice %1158 {offsets = [0, 16], sizes = [8, 16], strides = [1, 1]} : vector<8x64xf32> to vector<8x16xf32>
    %1161 = vector.extract_strided_slice %1158 {offsets = [0, 48], sizes = [8, 16], strides = [1, 1]} : vector<8x64xf32> to vector<8x16xf32>
    %1162 = vector.extract_strided_slice %1153 {offsets = [0, 32], sizes = [8, 16], strides = [1, 1]} : vector<8x64xf32> to vector<8x16xf32>
    %1163 = math.tanh %1162 : vector<8x16xf32>
    %1164 = arith.mulf %1160, %1143 : vector<8x16xf32>
    %1165 = arith.mulf %1159, %1163 : vector<8x16xf32>
    %1166 = arith.addf %1164, %1165 : vector<8x16xf32>
    %1167 = math.tanh %1166 : vector<8x16xf32>
    %1168 = arith.mulf %1161, %1167 : vector<8x16xf32>
    %1169 = arith.index_cast %1149 : i32 to index
    %c0_361 = arith.constant 0 : index
    %1170 = vector.load %arg5[%1169, %c0_361] : memref<64x16xf32, #tpu.memory_space<vmem>>, vector<8x16xf32>
    tpu.vector_store %arg5[%1169, %c0_361], %1168 {strides = array<i32>} : memref<64x16xf32, #tpu.memory_space<vmem>>, vector<8x16xf32>,
    %c8_i32_362 = arith.constant 8 : i32
    %c0_363 = arith.constant 0 : index
    %c0_364 = arith.constant 0 : index
    %1171 = vector.load %arg5[%c0_363, %c0_364] : memref<64x16xf32, #tpu.memory_space<vmem>>, vector<64x16xf32>
    %c6 = arith.constant 6 : index
    %c0_365 = arith.constant 0 : index
    %c0_366 = arith.constant 0 : index
    %1172 = vector.load %arg3[%c6, %c0_365, %c0_366] : memref<7x16x64xf32, #tpu.memory_space<vmem>>, vector<1x16x64xf32>
    %1173 = vector.shape_cast %1172 : vector<1x16x64xf32> to vector<16x64xf32>
    %c6_367 = arith.constant 6 : index
    %c0_368 = arith.constant 0 : index
    %c0_369 = arith.constant 0 : index
    %1174 = vector.load %arg2[%c6_367, %c0_368, %c0_369] : memref<7x16x64xf32, #tpu.memory_space<vmem>>, vector<1x16x64xf32>
    %1175 = vector.shape_cast %1174 : vector<1x16x64xf32> to vector<16x64xf32>
    %cst_370 = arith.constant dense<0.000000e+00> : vector<64x64xf32>
    %1176 = tpu.matmul %1171, %1175, %cst_370 {dimension_numbers = #tpu.dot_dimension_numbers<[1], [0], [0], [1], [0, 0, 1, 1], [], []>} : vector<64x16xf32>, vector<16x64xf32>, vector<64x64xf32> -> vector<64x64xf32>
    %c6_371 = arith.constant 6 : index
    %c0_372 = arith.constant 0 : index
    %c0_373 = arith.constant 0 : index
    %1177 = vector.load %arg4[%c6_371, %c0_372, %c0_373] : memref<7x1x64xf32, #tpu.memory_space<vmem>>, vector<1x1x64xf32>
    %1178 = vector.shape_cast %1177 : vector<1x1x64xf32> to vector<1x64xf32>
    %1179 = vector.broadcast %1178 : vector<1x64xf32> to vector<64x64xf32>
    %1180 = arith.addf %1176, %1179 : vector<64x64xf32>
    %c0_374 = arith.constant 0 : index
    %c0_375 = arith.constant 0 : index
    %1181 = vector.load %arg6[%c0_374, %c0_375] : memref<64x64xf32, #tpu.memory_space<vmem>>, vector<64x64xf32>
    tpu.vector_store %arg6[%c0_374, %c0_375], %1180 {strides = array<i32>} : memref<64x64xf32, #tpu.memory_space<vmem>>, vector<64x64xf32>,
    %c0_i32_376 = arith.constant 0 : i32
    %c8_i32_377 = arith.constant 8 : i32
    %1182 = arith.muli %c0_i32_376, %c8_i32_377 : i32
    %1183 = tpu.assume_multiple %1182, 8 : i32
    %1184 = arith.index_cast %1183 : i32 to index
    %c0_378 = arith.constant 0 : index
    %1185 = vector.load %arg6[%1184, %c0_378] : memref<64x64xf32, #tpu.memory_space<vmem>>, vector<8x64xf32>
    %cst_379 = arith.constant dense<0.000000e+00> : vector<8x64xf32>
    %1186 = tpu.matmul %0, %1173, %cst_379 {dimension_numbers = #tpu.dot_dimension_numbers<[1], [0], [0], [1], [0, 0, 1, 1], [], []>} : vector<8x16xf32>, vector<16x64xf32>, vector<8x64xf32> -> vector<8x64xf32>
    %1187 = arith.addf %1185, %1186 : vector<8x64xf32>
    %1188 = arith.negf %1187 : vector<8x64xf32>
    %1189 = math.exp %1188 : vector<8x64xf32>
    %cst_380 = arith.constant 1.000000e+00 : f32
    %1190 = vector.broadcast %cst_380 : f32 to vector<8x64xf32>
    %1191 = arith.addf %1190, %1189 : vector<8x64xf32>
    %1192 = arith.divf %1190, %1191 : vector<8x64xf32>
    %1193 = vector.extract_strided_slice %1192 {offsets = [0, 0], sizes = [8, 16], strides = [1, 1]} : vector<8x64xf32> to vector<8x16xf32>
    %1194 = vector.extract_strided_slice %1192 {offsets = [0, 16], sizes = [8, 16], strides = [1, 1]} : vector<8x64xf32> to vector<8x16xf32>
    %1195 = vector.extract_strided_slice %1192 {offsets = [0, 48], sizes = [8, 16], strides = [1, 1]} : vector<8x64xf32> to vector<8x16xf32>
    %1196 = vector.extract_strided_slice %1187 {offsets = [0, 32], sizes = [8, 16], strides = [1, 1]} : vector<8x64xf32> to vector<8x16xf32>
    %1197 = math.tanh %1196 : vector<8x16xf32>
    %1198 = arith.mulf %1194, %0 : vector<8x16xf32>
    %1199 = arith.mulf %1193, %1197 : vector<8x16xf32>
    %1200 = arith.addf %1198, %1199 : vector<8x16xf32>
    %1201 = math.tanh %1200 : vector<8x16xf32>
    %1202 = arith.mulf %1195, %1201 : vector<8x16xf32>
    %1203 = arith.index_cast %1183 : i32 to index
    %c0_381 = arith.constant 0 : index
    %1204 = vector.load %arg5[%1203, %c0_381] : memref<64x16xf32, #tpu.memory_space<vmem>>, vector<8x16xf32>
    tpu.vector_store %arg5[%1203, %c0_381], %1202 {strides = array<i32>} : memref<64x16xf32, #tpu.memory_space<vmem>>, vector<8x16xf32>,
    %c1_i32_382 = arith.constant 1 : i32
    %c8_i32_383 = arith.constant 8 : i32
    %1205 = arith.muli %c1_i32_382, %c8_i32_383 : i32
    %1206 = tpu.assume_multiple %1205, 8 : i32
    %1207 = arith.index_cast %1206 : i32 to index
    %c0_384 = arith.constant 0 : index
    %1208 = vector.load %arg6[%1207, %c0_384] : memref<64x64xf32, #tpu.memory_space<vmem>>, vector<8x64xf32>
    %cst_385 = arith.constant dense<0.000000e+00> : vector<8x64xf32>
    %1209 = tpu.matmul %1202, %1173, %cst_385 {dimension_numbers = #tpu.dot_dimension_numbers<[1], [0], [0], [1], [0, 0, 1, 1], [], []>} : vector<8x16xf32>, vector<16x64xf32>, vector<8x64xf32> -> vector<8x64xf32>
    %1210 = arith.addf %1208, %1209 : vector<8x64xf32>
    %1211 = arith.negf %1210 : vector<8x64xf32>
    %1212 = math.exp %1211 : vector<8x64xf32>
    %cst_386 = arith.constant 1.000000e+00 : f32
    %1213 = vector.broadcast %cst_386 : f32 to vector<8x64xf32>
    %1214 = arith.addf %1213, %1212 : vector<8x64xf32>
    %1215 = arith.divf %1213, %1214 : vector<8x64xf32>
    %1216 = vector.extract_strided_slice %1215 {offsets = [0, 0], sizes = [8, 16], strides = [1, 1]} : vector<8x64xf32> to vector<8x16xf32>
    %1217 = vector.extract_strided_slice %1215 {offsets = [0, 16], sizes = [8, 16], strides = [1, 1]} : vector<8x64xf32> to vector<8x16xf32>
    %1218 = vector.extract_strided_slice %1215 {offsets = [0, 48], sizes = [8, 16], strides = [1, 1]} : vector<8x64xf32> to vector<8x16xf32>
    %1219 = vector.extract_strided_slice %1210 {offsets = [0, 32], sizes = [8, 16], strides = [1, 1]} : vector<8x64xf32> to vector<8x16xf32>
    %1220 = math.tanh %1219 : vector<8x16xf32>
    %1221 = arith.mulf %1217, %1200 : vector<8x16xf32>
    %1222 = arith.mulf %1216, %1220 : vector<8x16xf32>
    %1223 = arith.addf %1221, %1222 : vector<8x16xf32>
    %1224 = math.tanh %1223 : vector<8x16xf32>
    %1225 = arith.mulf %1218, %1224 : vector<8x16xf32>
    %1226 = arith.index_cast %1206 : i32 to index
    %c0_387 = arith.constant 0 : index
    %1227 = vector.load %arg5[%1226, %c0_387] : memref<64x16xf32, #tpu.memory_space<vmem>>, vector<8x16xf32>
    tpu.vector_store %arg5[%1226, %c0_387], %1225 {strides = array<i32>} : memref<64x16xf32, #tpu.memory_space<vmem>>, vector<8x16xf32>,
    %c2_i32_388 = arith.constant 2 : i32
    %c8_i32_389 = arith.constant 8 : i32
    %1228 = arith.muli %c2_i32_388, %c8_i32_389 : i32
    %1229 = tpu.assume_multiple %1228, 8 : i32
    %1230 = arith.index_cast %1229 : i32 to index
    %c0_390 = arith.constant 0 : index
    %1231 = vector.load %arg6[%1230, %c0_390] : memref<64x64xf32, #tpu.memory_space<vmem>>, vector<8x64xf32>
    %cst_391 = arith.constant dense<0.000000e+00> : vector<8x64xf32>
    %1232 = tpu.matmul %1225, %1173, %cst_391 {dimension_numbers = #tpu.dot_dimension_numbers<[1], [0], [0], [1], [0, 0, 1, 1], [], []>} : vector<8x16xf32>, vector<16x64xf32>, vector<8x64xf32> -> vector<8x64xf32>
    %1233 = arith.addf %1231, %1232 : vector<8x64xf32>
    %1234 = arith.negf %1233 : vector<8x64xf32>
    %1235 = math.exp %1234 : vector<8x64xf32>
    %cst_392 = arith.constant 1.000000e+00 : f32
    %1236 = vector.broadcast %cst_392 : f32 to vector<8x64xf32>
    %1237 = arith.addf %1236, %1235 : vector<8x64xf32>
    %1238 = arith.divf %1236, %1237 : vector<8x64xf32>
    %1239 = vector.extract_strided_slice %1238 {offsets = [0, 0], sizes = [8, 16], strides = [1, 1]} : vector<8x64xf32> to vector<8x16xf32>
    %1240 = vector.extract_strided_slice %1238 {offsets = [0, 16], sizes = [8, 16], strides = [1, 1]} : vector<8x64xf32> to vector<8x16xf32>
    %1241 = vector.extract_strided_slice %1238 {offsets = [0, 48], sizes = [8, 16], strides = [1, 1]} : vector<8x64xf32> to vector<8x16xf32>
    %1242 = vector.extract_strided_slice %1233 {offsets = [0, 32], sizes = [8, 16], strides = [1, 1]} : vector<8x64xf32> to vector<8x16xf32>
    %1243 = math.tanh %1242 : vector<8x16xf32>
    %1244 = arith.mulf %1240, %1223 : vector<8x16xf32>
    %1245 = arith.mulf %1239, %1243 : vector<8x16xf32>
    %1246 = arith.addf %1244, %1245 : vector<8x16xf32>
    %1247 = math.tanh %1246 : vector<8x16xf32>
    %1248 = arith.mulf %1241, %1247 : vector<8x16xf32>
    %1249 = arith.index_cast %1229 : i32 to index
    %c0_393 = arith.constant 0 : index
    %1250 = vector.load %arg5[%1249, %c0_393] : memref<64x16xf32, #tpu.memory_space<vmem>>, vector<8x16xf32>
    tpu.vector_store %arg5[%1249, %c0_393], %1248 {strides = array<i32>} : memref<64x16xf32, #tpu.memory_space<vmem>>, vector<8x16xf32>,
    %c3_i32_394 = arith.constant 3 : i32
    %c8_i32_395 = arith.constant 8 : i32
    %1251 = arith.muli %c3_i32_394, %c8_i32_395 : i32
    %1252 = tpu.assume_multiple %1251, 8 : i32
    %1253 = arith.index_cast %1252 : i32 to index
    %c0_396 = arith.constant 0 : index
    %1254 = vector.load %arg6[%1253, %c0_396] : memref<64x64xf32, #tpu.memory_space<vmem>>, vector<8x64xf32>
    %cst_397 = arith.constant dense<0.000000e+00> : vector<8x64xf32>
    %1255 = tpu.matmul %1248, %1173, %cst_397 {dimension_numbers = #tpu.dot_dimension_numbers<[1], [0], [0], [1], [0, 0, 1, 1], [], []>} : vector<8x16xf32>, vector<16x64xf32>, vector<8x64xf32> -> vector<8x64xf32>
    %1256 = arith.addf %1254, %1255 : vector<8x64xf32>
    %1257 = arith.negf %1256 : vector<8x64xf32>
    %1258 = math.exp %1257 : vector<8x64xf32>
    %cst_398 = arith.constant 1.000000e+00 : f32
    %1259 = vector.broadcast %cst_398 : f32 to vector<8x64xf32>
    %1260 = arith.addf %1259, %1258 : vector<8x64xf32>
    %1261 = arith.divf %1259, %1260 : vector<8x64xf32>
    %1262 = vector.extract_strided_slice %1261 {offsets = [0, 0], sizes = [8, 16], strides = [1, 1]} : vector<8x64xf32> to vector<8x16xf32>
    %1263 = vector.extract_strided_slice %1261 {offsets = [0, 16], sizes = [8, 16], strides = [1, 1]} : vector<8x64xf32> to vector<8x16xf32>
    %1264 = vector.extract_strided_slice %1261 {offsets = [0, 48], sizes = [8, 16], strides = [1, 1]} : vector<8x64xf32> to vector<8x16xf32>
    %1265 = vector.extract_strided_slice %1256 {offsets = [0, 32], sizes = [8, 16], strides = [1, 1]} : vector<8x64xf32> to vector<8x16xf32>
    %1266 = math.tanh %1265 : vector<8x16xf32>
    %1267 = arith.mulf %1263, %1246 : vector<8x16xf32>
    %1268 = arith.mulf %1262, %1266 : vector<8x16xf32>
    %1269 = arith.addf %1267, %1268 : vector<8x16xf32>
    %1270 = math.tanh %1269 : vector<8x16xf32>
    %1271 = arith.mulf %1264, %1270 : vector<8x16xf32>
    %1272 = arith.index_cast %1252 : i32 to index
    %c0_399 = arith.constant 0 : index
    %1273 = vector.load %arg5[%1272, %c0_399] : memref<64x16xf32, #tpu.memory_space<vmem>>, vector<8x16xf32>
    tpu.vector_store %arg5[%1272, %c0_399], %1271 {strides = array<i32>} : memref<64x16xf32, #tpu.memory_space<vmem>>, vector<8x16xf32>,
    %c4_i32_400 = arith.constant 4 : i32
    %c8_i32_401 = arith.constant 8 : i32
    %1274 = arith.muli %c4_i32_400, %c8_i32_401 : i32
    %1275 = tpu.assume_multiple %1274, 8 : i32
    %1276 = arith.index_cast %1275 : i32 to index
    %c0_402 = arith.constant 0 : index
    %1277 = vector.load %arg6[%1276, %c0_402] : memref<64x64xf32, #tpu.memory_space<vmem>>, vector<8x64xf32>
    %cst_403 = arith.constant dense<0.000000e+00> : vector<8x64xf32>
    %1278 = tpu.matmul %1271, %1173, %cst_403 {dimension_numbers = #tpu.dot_dimension_numbers<[1], [0], [0], [1], [0, 0, 1, 1], [], []>} : vector<8x16xf32>, vector<16x64xf32>, vector<8x64xf32> -> vector<8x64xf32>
    %1279 = arith.addf %1277, %1278 : vector<8x64xf32>
    %1280 = arith.negf %1279 : vector<8x64xf32>
    %1281 = math.exp %1280 : vector<8x64xf32>
    %cst_404 = arith.constant 1.000000e+00 : f32
    %1282 = vector.broadcast %cst_404 : f32 to vector<8x64xf32>
    %1283 = arith.addf %1282, %1281 : vector<8x64xf32>
    %1284 = arith.divf %1282, %1283 : vector<8x64xf32>
    %1285 = vector.extract_strided_slice %1284 {offsets = [0, 0], sizes = [8, 16], strides = [1, 1]} : vector<8x64xf32> to vector<8x16xf32>
    %1286 = vector.extract_strided_slice %1284 {offsets = [0, 16], sizes = [8, 16], strides = [1, 1]} : vector<8x64xf32> to vector<8x16xf32>
    %1287 = vector.extract_strided_slice %1284 {offsets = [0, 48], sizes = [8, 16], strides = [1, 1]} : vector<8x64xf32> to vector<8x16xf32>
    %1288 = vector.extract_strided_slice %1279 {offsets = [0, 32], sizes = [8, 16], strides = [1, 1]} : vector<8x64xf32> to vector<8x16xf32>
    %1289 = math.tanh %1288 : vector<8x16xf32>
    %1290 = arith.mulf %1286, %1269 : vector<8x16xf32>
    %1291 = arith.mulf %1285, %1289 : vector<8x16xf32>
    %1292 = arith.addf %1290, %1291 : vector<8x16xf32>
    %1293 = math.tanh %1292 : vector<8x16xf32>
    %1294 = arith.mulf %1287, %1293 : vector<8x16xf32>
    %1295 = arith.index_cast %1275 : i32 to index
    %c0_405 = arith.constant 0 : index
    %1296 = vector.load %arg5[%1295, %c0_405] : memref<64x16xf32, #tpu.memory_space<vmem>>, vector<8x16xf32>
    tpu.vector_store %arg5[%1295, %c0_405], %1294 {strides = array<i32>} : memref<64x16xf32, #tpu.memory_space<vmem>>, vector<8x16xf32>,
    %c5_i32_406 = arith.constant 5 : i32
    %c8_i32_407 = arith.constant 8 : i32
    %1297 = arith.muli %c5_i32_406, %c8_i32_407 : i32
    %1298 = tpu.assume_multiple %1297, 8 : i32
    %1299 = arith.index_cast %1298 : i32 to index
    %c0_408 = arith.constant 0 : index
    %1300 = vector.load %arg6[%1299, %c0_408] : memref<64x64xf32, #tpu.memory_space<vmem>>, vector<8x64xf32>
    %cst_409 = arith.constant dense<0.000000e+00> : vector<8x64xf32>
    %1301 = tpu.matmul %1294, %1173, %cst_409 {dimension_numbers = #tpu.dot_dimension_numbers<[1], [0], [0], [1], [0, 0, 1, 1], [], []>} : vector<8x16xf32>, vector<16x64xf32>, vector<8x64xf32> -> vector<8x64xf32>
    %1302 = arith.addf %1300, %1301 : vector<8x64xf32>
    %1303 = arith.negf %1302 : vector<8x64xf32>
    %1304 = math.exp %1303 : vector<8x64xf32>
    %cst_410 = arith.constant 1.000000e+00 : f32
    %1305 = vector.broadcast %cst_410 : f32 to vector<8x64xf32>
    %1306 = arith.addf %1305, %1304 : vector<8x64xf32>
    %1307 = arith.divf %1305, %1306 : vector<8x64xf32>
    %1308 = vector.extract_strided_slice %1307 {offsets = [0, 0], sizes = [8, 16], strides = [1, 1]} : vector<8x64xf32> to vector<8x16xf32>
    %1309 = vector.extract_strided_slice %1307 {offsets = [0, 16], sizes = [8, 16], strides = [1, 1]} : vector<8x64xf32> to vector<8x16xf32>
    %1310 = vector.extract_strided_slice %1307 {offsets = [0, 48], sizes = [8, 16], strides = [1, 1]} : vector<8x64xf32> to vector<8x16xf32>
    %1311 = vector.extract_strided_slice %1302 {offsets = [0, 32], sizes = [8, 16], strides = [1, 1]} : vector<8x64xf32> to vector<8x16xf32>
    %1312 = math.tanh %1311 : vector<8x16xf32>
    %1313 = arith.mulf %1309, %1292 : vector<8x16xf32>
    %1314 = arith.mulf %1308, %1312 : vector<8x16xf32>
    %1315 = arith.addf %1313, %1314 : vector<8x16xf32>
    %1316 = math.tanh %1315 : vector<8x16xf32>
    %1317 = arith.mulf %1310, %1316 : vector<8x16xf32>
    %1318 = arith.index_cast %1298 : i32 to index
    %c0_411 = arith.constant 0 : index
    %1319 = vector.load %arg5[%1318, %c0_411] : memref<64x16xf32, #tpu.memory_space<vmem>>, vector<8x16xf32>
    tpu.vector_store %arg5[%1318, %c0_411], %1317 {strides = array<i32>} : memref<64x16xf32, #tpu.memory_space<vmem>>, vector<8x16xf32>,
    %c6_i32_412 = arith.constant 6 : i32
    %c8_i32_413 = arith.constant 8 : i32
    %1320 = arith.muli %c6_i32_412, %c8_i32_413 : i32
    %1321 = tpu.assume_multiple %1320, 8 : i32
    %1322 = arith.index_cast %1321 : i32 to index
    %c0_414 = arith.constant 0 : index
    %1323 = vector.load %arg6[%1322, %c0_414] : memref<64x64xf32, #tpu.memory_space<vmem>>, vector<8x64xf32>
    %cst_415 = arith.constant dense<0.000000e+00> : vector<8x64xf32>
    %1324 = tpu.matmul %1317, %1173, %cst_415 {dimension_numbers = #tpu.dot_dimension_numbers<[1], [0], [0], [1], [0, 0, 1, 1], [], []>} : vector<8x16xf32>, vector<16x64xf32>, vector<8x64xf32> -> vector<8x64xf32>
    %1325 = arith.addf %1323, %1324 : vector<8x64xf32>
    %1326 = arith.negf %1325 : vector<8x64xf32>
    %1327 = math.exp %1326 : vector<8x64xf32>
    %cst_416 = arith.constant 1.000000e+00 : f32
    %1328 = vector.broadcast %cst_416 : f32 to vector<8x64xf32>
    %1329 = arith.addf %1328, %1327 : vector<8x64xf32>
    %1330 = arith.divf %1328, %1329 : vector<8x64xf32>
    %1331 = vector.extract_strided_slice %1330 {offsets = [0, 0], sizes = [8, 16], strides = [1, 1]} : vector<8x64xf32> to vector<8x16xf32>
    %1332 = vector.extract_strided_slice %1330 {offsets = [0, 16], sizes = [8, 16], strides = [1, 1]} : vector<8x64xf32> to vector<8x16xf32>
    %1333 = vector.extract_strided_slice %1330 {offsets = [0, 48], sizes = [8, 16], strides = [1, 1]} : vector<8x64xf32> to vector<8x16xf32>
    %1334 = vector.extract_strided_slice %1325 {offsets = [0, 32], sizes = [8, 16], strides = [1, 1]} : vector<8x64xf32> to vector<8x16xf32>
    %1335 = math.tanh %1334 : vector<8x16xf32>
    %1336 = arith.mulf %1332, %1315 : vector<8x16xf32>
    %1337 = arith.mulf %1331, %1335 : vector<8x16xf32>
    %1338 = arith.addf %1336, %1337 : vector<8x16xf32>
    %1339 = math.tanh %1338 : vector<8x16xf32>
    %1340 = arith.mulf %1333, %1339 : vector<8x16xf32>
    %1341 = arith.index_cast %1321 : i32 to index
    %c0_417 = arith.constant 0 : index
    %1342 = vector.load %arg5[%1341, %c0_417] : memref<64x16xf32, #tpu.memory_space<vmem>>, vector<8x16xf32>
    tpu.vector_store %arg5[%1341, %c0_417], %1340 {strides = array<i32>} : memref<64x16xf32, #tpu.memory_space<vmem>>, vector<8x16xf32>,
    %c7_i32_418 = arith.constant 7 : i32
    %c8_i32_419 = arith.constant 8 : i32
    %1343 = arith.muli %c7_i32_418, %c8_i32_419 : i32
    %1344 = tpu.assume_multiple %1343, 8 : i32
    %1345 = arith.index_cast %1344 : i32 to index
    %c0_420 = arith.constant 0 : index
    %1346 = vector.load %arg6[%1345, %c0_420] : memref<64x64xf32, #tpu.memory_space<vmem>>, vector<8x64xf32>
    %cst_421 = arith.constant dense<0.000000e+00> : vector<8x64xf32>
    %1347 = tpu.matmul %1340, %1173, %cst_421 {dimension_numbers = #tpu.dot_dimension_numbers<[1], [0], [0], [1], [0, 0, 1, 1], [], []>} : vector<8x16xf32>, vector<16x64xf32>, vector<8x64xf32> -> vector<8x64xf32>
    %1348 = arith.addf %1346, %1347 : vector<8x64xf32>
    %1349 = arith.negf %1348 : vector<8x64xf32>
    %1350 = math.exp %1349 : vector<8x64xf32>
    %cst_422 = arith.constant 1.000000e+00 : f32
    %1351 = vector.broadcast %cst_422 : f32 to vector<8x64xf32>
    %1352 = arith.addf %1351, %1350 : vector<8x64xf32>
    %1353 = arith.divf %1351, %1352 : vector<8x64xf32>
    %1354 = vector.extract_strided_slice %1353 {offsets = [0, 0], sizes = [8, 16], strides = [1, 1]} : vector<8x64xf32> to vector<8x16xf32>
    %1355 = vector.extract_strided_slice %1353 {offsets = [0, 16], sizes = [8, 16], strides = [1, 1]} : vector<8x64xf32> to vector<8x16xf32>
    %1356 = vector.extract_strided_slice %1353 {offsets = [0, 48], sizes = [8, 16], strides = [1, 1]} : vector<8x64xf32> to vector<8x16xf32>
    %1357 = vector.extract_strided_slice %1348 {offsets = [0, 32], sizes = [8, 16], strides = [1, 1]} : vector<8x64xf32> to vector<8x16xf32>
    %1358 = math.tanh %1357 : vector<8x16xf32>
    %1359 = arith.mulf %1355, %1338 : vector<8x16xf32>
    %1360 = arith.mulf %1354, %1358 : vector<8x16xf32>
    %1361 = arith.addf %1359, %1360 : vector<8x16xf32>
    %1362 = math.tanh %1361 : vector<8x16xf32>
    %1363 = arith.mulf %1356, %1362 : vector<8x16xf32>
    %1364 = arith.index_cast %1344 : i32 to index
    %c0_423 = arith.constant 0 : index
    %1365 = vector.load %arg5[%1364, %c0_423] : memref<64x16xf32, #tpu.memory_space<vmem>>, vector<8x16xf32>
    tpu.vector_store %arg5[%1364, %c0_423], %1363 {strides = array<i32>} : memref<64x16xf32, #tpu.memory_space<vmem>>, vector<8x16xf32>,
    %c8_i32_424 = arith.constant 8 : i32
    return
  }
  func.func @transform_0(%arg0: i32) -> (i32, i32) {
    %c0_i32 = arith.constant 0 : i32
    %c0_i32_0 = arith.constant 0 : i32
    %c0_i32_1 = arith.constant 0 : i32
    return %c0_i32, %c0_i32_0 : i32, i32
  }
  func.func @transform_1(%arg0: i32) -> (i32, i32, i32) {
    %c0_i32 = arith.constant 0 : i32
    %c0_i32_0 = arith.constant 0 : i32
    %c0_i32_1 = arith.constant 0 : i32
    %c0_i32_2 = arith.constant 0 : i32
    return %c0_i32, %c0_i32_0, %c0_i32_1 : i32, i32, i32
  }
  func.func @transform_2(%arg0: i32) -> (i32, i32, i32) {
    %c0_i32 = arith.constant 0 : i32
    %c0_i32_0 = arith.constant 0 : i32
    %c0_i32_1 = arith.constant 0 : i32
    %c0_i32_2 = arith.constant 0 : i32
    return %c0_i32, %c0_i32_0, %c0_i32_1 : i32, i32, i32
  }
  func.func @transform_3(%arg0: i32) -> (i32, i32, i32) {
    %c0_i32 = arith.constant 0 : i32
    %c0_i32_0 = arith.constant 0 : i32
    %c0_i32_1 = arith.constant 0 : i32
    %c0_i32_2 = arith.constant 0 : i32
    return %c0_i32, %c0_i32_0, %c0_i32_1 : i32, i32, i32
  }
  func.func @transform_4(%arg0: i32) -> (i32, i32) {
    %c0_i32 = arith.constant 0 : i32
    %c0_i32_0 = arith.constant 0 : i32
    %c0_i32_1 = arith.constant 0 : i32
    return %c0_i32, %c0_i32_0 : i32, i32
  }
}

</mosaic_0001>

<llo_original>
// kernel: _lambda_.1
$region0: #{_lambda_.1}
  #allocation0 [shape = 'u32[]', space=smem, size = 0x4, offset = 0x4, fixed_abs, tag = 'smem constant byte address 0x4 - core index']
  #allocation1 [shape = 'u32[144,128]{1,0:T(1,128)}', space=vmem, size = 0x12000, scoped, tag = 'internal scratch']
  #allocation2 [shape = 'f32[64,64]{1,0:T(8,128)}', space=vmem, size = 0x8000, scoped, tag = 'scratch operand']
  %s0 = inlined_call_operand.vmem [shape: f32[64,16], index: 0, kind: input, shape index: {}]
  %s1 = inlined_call_operand.hbm [shape: f32[7,16,64], index: 1, kind: input, shape index: {}]
  %s2 = inlined_call_operand.vmem [shape: f32[7,16,64], index: 2, kind: input, shape index: {}]
  %s3 = inlined_call_operand.vmem [shape: f32[7,1,64], index: 3, kind: input, shape index: {}]
  %s4 = inlined_call_operand.vmem [shape: f32[64,16], index: 4, kind: output, shape index: {}]
  %s5 = sld [smem:[#allocation0]]
  $region30: #{_lambda_.1} parent=0
    _
  %s7 = ssub.s32 1, %s5
  %s8 = scalar_select 0, %s7, %s5
  $region1: #{_lambda_.1} parent=0
    #allocation3 [shape = 'u8[57344]{0}', space=vmem, size = 0xe000, scoped, tag = 'input window, operand 1, single buffered']
    #allocation4 [shape = 's32[1]{0}', space=sflag, size = 0x4, scoped, tag = 'scoped memory for _lambda_.1']
    %9 = vsyncpa [#allocation4], 0
    // Predicated region
    $region2: #{_lambda_.1} parent=1 // pred_check
      _
    $region3: #{_lambda_.1} parent=1 // pred_check_branch
      %11 = sbr.rel (0) target = $region5
    $region4: #{_lambda_.1} parent=1 // pred_region
      _
    $region5: #{_lambda_.1} parent=1 // pred_fallthru
      _
    // Predicated region
    $region6: #{_lambda_.1} parent=1 // pred_check
      _
    $region7: #{_lambda_.1} parent=1 // pred_check_branch
      %13 = sbr.rel (0) target = $region9
    $region8: #{_lambda_.1} parent=1 // pred_region
      %s15 = ssub.s32 1792, 1792
      %16 = vsyncadd [#allocation4], %s15
      %s17 = sshll.u32 [#allocation3], 4
      %s18 = int_to_ptr.vmem [resolvable:$true] %s17
      %23 = dma.hbm_to_vmem [thread:$0]  %s1, 1792, %s18, [#allocation4], 128, 128, 8
    $region9: #{_lambda_.1} parent=1 // pred_fallthru
      _
    // Predicated region
    $region10: #{_lambda_.1} parent=1 // pred_check
      _
    $region11: #{_lambda_.1} parent=1 // pred_check_branch
      %25 = sbr.rel (0) target = $region13
    $region12: #{_lambda_.1} parent=1 // pred_region
      _
    $region13: #{_lambda_.1} parent=1 // pred_fallthru
      _
    // Predicated region
    $region14: #{_lambda_.1} parent=1 // pred_check
      _
    $region15: #{_lambda_.1} parent=1 // pred_check_branch
      %27 = sbr.rel (0) target = $region17
    $region16: #{_lambda_.1} parent=1 // pred_region
      _
    $region17: #{_lambda_.1} parent=1 // pred_fallthru
      _
    // Predicated region
    $region18: #{_lambda_.1} parent=1 // pred_check
      _
    $region19: #{_lambda_.1} parent=1 // pred_check_branch
      %29 = sbr.rel (0) target = $region21
    $region20: #{_lambda_.1} parent=1 // pred_region
      %30 = dma.done [#allocation4], 1792
    $region21: #{_lambda_.1} parent=1 // pred_fallthru
      _
    %v31 = vld [vmem:[%s0] sm:$0xff]
    %v32 = vld [vmem:[%s0 + $0x8] sm:$0xff]
    %v33 = vld [vmem:[%s0 + $0x10] sm:$0xff]
    %v34 = vld [vmem:[%s0 + $0x18] sm:$0xff]
    %v35 = vld [vmem:[%s0 + $0x20] sm:$0xff]
    %v36 = vld [vmem:[%s0 + $0x28] sm:$0xff]
    %v37 = vld [vmem:[%s0 + $0x30] sm:$0xff]
    %v38 = vld [vmem:[%s0 + $0x38] sm:$0xff]
    %v39 = vld [vmem:[%s2] sm:$0xff]
    %v40 = vld [vmem:[%s2 + $0x8] sm:$0xff]
    %v41 = vld [vmem:[#allocation3] sm:$0xff]
    %v42 = vld [vmem:[#allocation3 + $0x8] sm:$0xff]
    %v43 = vld [vmem:[%s3] sm:$0x1]
    %v45 = vlaneseq
    %v46 = vshrl.u32 %v45, 7
    %v47 = vsub.s32 0, %v46
    %v48 = vrot.slane %v43, %v47
    %vm50 = vcmask 130048
    %v52 = vsel %vm50, %v31, 0
    %v55 = vsel %vm50, %v32, 0
    %v58 = vsel %vm50, %v33, 0
    %v61 = vsel %vm50, %v34, 0
    %v64 = vsel %vm50, %v35, 0
    %v67 = vsel %vm50, %v36, 0
    %v70 = vsel %vm50, %v37, 0
    %v73 = vsel %vm50, %v38, 0
    %75 = vmatprep.subr.mxu0 0.0
    %76 = vmatpush1.msra.mxu0 %v41
    %77 = vmatprep.subr.mxu0 0.0
    %78 = vmatpush1.msra.mxu0 %v42
    %79 = vmatprep.subr.mxu0 0.0
    %80 = vmatpush1.msra.mxu0 0.0
    %81 = vmatprep.subr.mxu0 0.0
    %82 = vmatpush1.msra.mxu0 0.0
    %83 = vmatprep.subr.mxu0 0.0
    %84 = vmatpush1.msra.mxu0 0.0
    %85 = vmatprep.subr.mxu0 0.0
    %86 = vmatpush1.msra.mxu0 0.0
    %87 = vmatprep.subr.mxu0 0.0
    %88 = vmatpush1.msra.mxu0 0.0
    %89 = vmatprep.subr.mxu0 0.0
    %90 = vmatpush1.msra.mxu0 0.0
    %91 = vmatprep.subr.mxu0 0.0
    %92 = vmatpush1.msra.mxu0 0.0
    %93 = vmatprep.subr.mxu0 0.0
    %94 = vmatpush1.msra.mxu0 0.0
    %95 = vmatprep.subr.mxu0 0.0
    %96 = vmatpush1.msra.mxu0 0.0
    %97 = vmatprep.subr.mxu0 0.0
    %98 = vmatpush1.msra.mxu0 0.0
    %99 = vmatprep.subr.mxu0 0.0
    %100 = vmatpush1.msra.mxu0 0.0
    %101 = vmatprep.subr.mxu0 0.0
    %102 = vmatpush1.msra.mxu0 0.0
    %103 = vmatprep.subr.mxu0 0.0
    %104 = vmatpush1.msra.mxu0 0.0
    %105 = vmatprep.subr.mxu0 0.0
    %106 = vmatpush1.msra.mxu0 0.0
    %107 = vmatprep.subr.mxu0 0.0
    %108 = vmatpush1.msra.mxu0 0.0
    %109 = vmatprep.subr.mxu0 0.0
    %110 = vmatpush1.msra.mxu0 0.0
    %111 = vmatprep.subr.mxu0 0.0
    %112 = vmatpush1.msra.mxu0 0.0
    %113 = vmatprep.subr.mxu0 0.0
    %114 = vmatpush1.msra.mxu0 0.0
    %115 = vmatprep.subr.mxu0 0.0
    %116 = vmatpush1.msra.mxu0 0.0
    %117 = vmatprep.subr.mxu0 0.0
    %118 = vmatpush1.msra.mxu0 0.0
    %119 = vmatprep.subr.mxu0 0.0
    %120 = vmatpush1.msra.mxu0 0.0
    %121 = vmatprep.subr.mxu0 0.0
    %122 = vmatpush1.msra.mxu0 0.0
    %123 = vmatprep.subr.mxu0 0.0
    %124 = vmatpush1.msra.mxu0 0.0
    %125 = vmatprep.subr.mxu0 0.0
    %126 = vmatpush1.msra.mxu0 0.0
    %127 = vmatprep.subr.mxu0 0.0
    %128 = vmatpush1.msra.mxu0 0.0
    %129 = vmatprep.subr.mxu0 0.0
    %130 = vmatpush1.msra.mxu0 0.0
    %131 = vmatprep.subr.mxu0 0.0
    %132 = vmatpush1.msra.mxu0 0.0
    %133 = vmatprep.subr.mxu0 0.0
    %134 = vmatpush1.msra.mxu0 0.0
    %135 = vmatprep.subr.mxu0 0.0
    %136 = vmatpush1.msra.mxu0 0.0
    %137 = vmatprep.subr.mxu0 0.0
    %138 = vmatpush1.msra.mxu0 0.0
    %139 = vmatprep.mubr.f32.mxu0 0.0
    %140 = vmatmul.mubr.f32.gmra.mrb[0].mxu0 %v52
    %v141 = vpop.f32.mrb[0].mxu0
    %v142 = vadd.f32 %v48, %v141
    %v143 = vpop.f32.mrb[0].mxu0
    %144 = vmatprep.mubr.f32.mxu0 0.0
    %145 = vmatmul.mubr.f32.gmra.mrb[0].mxu0 %v55
    %v146 = vpop.f32.mrb[0].mxu0
    %v147 = vadd.f32 %v48, %v146
    %v148 = vpop.f32.mrb[0].mxu0
    %149 = vmatprep.mubr.f32.mxu0 0.0
    %150 = vmatmul.mubr.f32.gmra.mrb[0].mxu0 %v58
    %v151 = vpop.f32.mrb[0].mxu0
    %v152 = vadd.f32 %v48, %v151
    %v153 = vpop.f32.mrb[0].mxu0
    %154 = vmatprep.mubr.f32.mxu0 0.0
    %155 = vmatmul.mubr.f32.gmra.mrb[0].mxu0 %v61
    %v156 = vpop.f32.mrb[0].mxu0
    %v157 = vadd.f32 %v48, %v156
    %v158 = vpop.f32.mrb[0].mxu0
    %159 = vmatprep.mubr.f32.mxu0 0.0
    %160 = vmatmul.mubr.f32.gmra.mrb[0].mxu0 %v64
    %v161 = vpop.f32.mrb[0].mxu0
    %v162 = vadd.f32 %v48, %v161
    %v163 = vpop.f32.mrb[0].mxu0
    %164 = vmatprep.mubr.f32.mxu0 0.0
    %165 = vmatmul.mubr.f32.gmra.mrb[0].mxu0 %v67
    %v166 = vpop.f32.mrb[0].mxu0
    %v167 = vadd.f32 %v48, %v166
    %v168 = vpop.f32.mrb[0].mxu0
    %169 = vmatprep.mubr.f32.mxu0 0.0
    %170 = vmatmul.mubr.f32.gmra.mrb[0].mxu0 %v70
    %v171 = vpop.f32.mrb[0].mxu0
    %v172 = vadd.f32 %v48, %v171
    %v173 = vpop.f32.mrb[0].mxu0
    %174 = vmatprep.mubr.f32.mxu0 0.0
    %175 = vmatmul.mubr.f32.gmra.mrb[0].mxu0 %v73
    %v176 = vpop.f32.mrb[0].mxu0
    %v177 = vadd.f32 %v48, %v176
    %v178 = vpop.f32.mrb[0].mxu0
    %179 = vdwg.mxu0
    %vm180 = vcmask 523264
    %181 = vst.msk [vmem:[#allocation2] sm:$0xff] %vm180, %v142
    %182 = vst.msk [vmem:[#allocation2 + $0x8] sm:$0xff] %vm180, %v147
    %183 = vst.msk [vmem:[#allocation2 + $0x10] sm:$0xff] %vm180, %v152
    %184 = vst.msk [vmem:[#allocation2 + $0x18] sm:$0xff] %vm180, %v157
    %185 = vst.msk [vmem:[#allocation2 + $0x20] sm:$0xff] %vm180, %v162
    %186 = vst.msk [vmem:[#allocation2 + $0x28] sm:$0xff] %vm180, %v167
    %187 = vst.msk [vmem:[#allocation2 + $0x30] sm:$0xff] %vm180, %v172
    %188 = vst.msk [vmem:[#allocation2 + $0x38] sm:$0xff] %vm180, %v177
    %v189 = vld [vmem:[#allocation2] sm:$0xff]
    %v191 = vsel %vm50, 0.0, 0
    %193 = vmatprep.subr.mxu0 0.0
    %194 = vmatpush1.msra.mxu0 %v39
    %195 = vmatprep.subr.mxu0 0.0
    %196 = vmatpush1.msra.mxu0 %v40
    %197 = vmatprep.subr.mxu0 0.0
    %198 = vmatpush1.msra.mxu0 0.0
    %199 = vmatprep.subr.mxu0 0.0
    %200 = vmatpush1.msra.mxu0 0.0
    %201 = vmatprep.subr.mxu0 0.0
    %202 = vmatpush1.msra.mxu0 0.0
    %203 = vmatprep.subr.mxu0 0.0
    %204 = vmatpush1.msra.mxu0 0.0
    %205 = vmatprep.subr.mxu0 0.0
    %206 = vmatpush1.msra.mxu0 0.0
    %207 = vmatprep.subr.mxu0 0.0
    %208 = vmatpush1.msra.mxu0 0.0
    %209 = vmatprep.subr.mxu0 0.0
    %210 = vmatpush1.msra.mxu0 0.0
    %211 = vmatprep.subr.mxu0 0.0
    %212 = vmatpush1.msra.mxu0 0.0
    %213 = vmatprep.subr.mxu0 0.0
    %214 = vmatpush1.msra.mxu0 0.0
    %215 = vmatprep.subr.mxu0 0.0
    %216 = vmatpush1.msra.mxu0 0.0
    %217 = vmatprep.subr.mxu0 0.0
    %218 = vmatpush1.msra.mxu0 0.0
    %219 = vmatprep.subr.mxu0 0.0
    %220 = vmatpush1.msra.mxu0 0.0
    %221 = vmatprep.subr.mxu0 0.0
    %222 = vmatpush1.msra.mxu0 0.0
    %223 = vmatprep.subr.mxu0 0.0
    %224 = vmatpush1.msra.mxu0 0.0
    %225 = vmatprep.subr.mxu0 0.0
    %226 = vmatpush1.msra.mxu0 0.0
    %227 = vmatprep.subr.mxu0 0.0
    %228 = vmatpush1.msra.mxu0 0.0
    %229 = vmatprep.subr.mxu0 0.0
    %230 = vmatpush1.msra.mxu0 0.0
    %231 = vmatprep.subr.mxu0 0.0
    %232 = vmatpush1.msra.mxu0 0.0
    %233 = vmatprep.subr.mxu0 0.0
    %234 = vmatpush1.msra.mxu0 0.0
    %235 = vmatprep.subr.mxu0 0.0
    %236 = vmatpush1.msra.mxu0 0.0
    %237 = vmatprep.subr.mxu0 0.0
    %238 = vmatpush1.msra.mxu0 0.0
    %239 = vmatprep.subr.mxu0 0.0
    %240 = vmatpush1.msra.mxu0 0.0
    %241 = vmatprep.subr.mxu0 0.0
    %242 = vmatpush1.msra.mxu0 0.0
    %243 = vmatprep.subr.mxu0 0.0
    %244 = vmatpush1.msra.mxu0 0.0
    %245 = vmatprep.subr.mxu0 0.0
    %246 = vmatpush1.msra.mxu0 0.0
    %247 = vmatprep.subr.mxu0 0.0
    %248 = vmatpush1.msra.mxu0 0.0
    %249 = vmatprep.subr.mxu0 0.0
    %250 = vmatpush1.msra.mxu0 0.0
    %251 = vmatprep.subr.mxu0 0.0
    %252 = vmatpush1.msra.mxu0 0.0
    %253 = vmatprep.subr.mxu0 0.0
    %254 = vmatpush1.msra.mxu0 0.0
    %255 = vmatprep.subr.mxu0 0.0
    %256 = vmatpush1.msra.mxu0 0.0
    %257 = vmatprep.mubr.f32.mxu0 0.0
    %258 = vmatmul.mubr.f32.gmra.mrb[0].mxu0 %v191
    %v259 = vpop.f32.mrb[0].mxu0
    %v260 = vadd.f32 0.0, %v259
    %v261 = vpop.f32.mrb[0].mxu0
    %262 = vdwg.mxu0
    %v263 = vadd.f32 %v189, %v260
    %v264 = vxor.u32 %v263, 2147483648
    %v265 = vmul.f32 %v264, 1.442695
    %v266 = vpow.pop %v265
    %v267 = vadd.f32 %v266, 1.0
    %v268 = vrcp.pop %v267
    %v269 = vmul.f32 1.0, %v268
    %v270 = vtanh.pop %v263
    %v271 = vmul.f32 %v269, 0.0
    %273 = vrot.lane.b32.xlu0 %v270, 96
    %v274 = vpop.permute.xlu0 %273
    %v276 = vmul.f32 %v269, %v274
    %278 = vrot.lane.b32.xlu0 %v276, 16
    %v279 = vpop.permute.xlu0 %278
    %v281 = vadd.f32 %v271, %v279
    %v282 = vtanh.pop %v281
    %284 = vrot.lane.b32.xlu0 %v282, 32
    %v285 = vpop.permute.xlu0 %284
    %v287 = vmul.f32 %v269, %v285
    %289 = vrot.lane.b32.xlu0 %v287, 80
    %v290 = vpop.permute.xlu0 %289
    %292 = vst.msk [vmem:[%s4] sm:$0xff] %vm50, %v290
    %s293 = scalar_lea.vmem [#allocation2], 8
    %v294 = vld [vmem:[%s293] sm:$0xff]
    %v295 = vsel %vm50, %v290, 0
    %297 = vmatprep.subr.mxu0 0.0
    %298 = vmatpush1.msra.mxu0 %v39
    %299 = vmatprep.subr.mxu0 0.0
    %300 = vmatpush1.msra.mxu0 %v40
    %301 = vmatprep.subr.mxu0 0.0
    %302 = vmatpush1.msra.mxu0 0.0
    %303 = vmatprep.subr.mxu0 0.0
    %304 = vmatpush1.msra.mxu0 0.0
    %305 = vmatprep.subr.mxu0 0.0
    %306 = vmatpush1.msra.mxu0 0.0
    %307 = vmatprep.subr.mxu0 0.0
    %308 = vmatpush1.msra.mxu0 0.0
    %309 = vmatprep.subr.mxu0 0.0
    %310 = vmatpush1.msra.mxu0 0.0
    %311 = vmatprep.subr.mxu0 0.0
    %312 = vmatpush1.msra.mxu0 0.0
    %313 = vmatprep.subr.mxu0 0.0
    %314 = vmatpush1.msra.mxu0 0.0
    %315 = vmatprep.subr.mxu0 0.0
    %316 = vmatpush1.msra.mxu0 0.0
    %317 = vmatprep.subr.mxu0 0.0
    %318 = vmatpush1.msra.mxu0 0.0
    %319 = vmatprep.subr.mxu0 0.0
    %320 = vmatpush1.msra.mxu0 0.0
    %321 = vmatprep.subr.mxu0 0.0
    %322 = vmatpush1.msra.mxu0 0.0
    %323 = vmatprep.subr.mxu0 0.0
    %324 = vmatpush1.msra.mxu0 0.0
    %325 = vmatprep.subr.mxu0 0.0
    %326 = vmatpush1.msra.mxu0 0.0
    %327 = vmatprep.subr.mxu0 0.0
    %328 = vmatpush1.msra.mxu0 0.0
    %329 = vmatprep.subr.mxu0 0.0
    %330 = vmatpush1.msra.mxu0 0.0
    %331 = vmatprep.subr.mxu0 0.0
    %332 = vmatpush1.msra.mxu0 0.0
    %333 = vmatprep.subr.mxu0 0.0
    %334 = vmatpush1.msra.mxu0 0.0
    %335 = vmatprep.subr.mxu0 0.0
    %336 = vmatpush1.msra.mxu0 0.0
    %337 = vmatprep.subr.mxu0 0.0
    %338 = vmatpush1.msra.mxu0 0.0
    %339 = vmatprep.subr.mxu0 0.0
    %340 = vmatpush1.msra.mxu0 0.0
    %341 = vmatprep.subr.mxu0 0.0
    %342 = vmatpush1.msra.mxu0 0.0
    %343 = vmatprep.subr.mxu0 0.0
    %344 = vmatpush1.msra.mxu0 0.0
    %345 = vmatprep.subr.mxu0 0.0
    %346 = vmatpush1.msra.mxu0 0.0
    %347 = vmatprep.subr.mxu0 0.0
    %348 = vmatpush1.msra.mxu0 0.0
    %349 = vmatprep.subr.mxu0 0.0
    %350 = vmatpush1.msra.mxu0 0.0
    %351 = vmatprep.subr.mxu0 0.0
    %352 = vmatpush1.msra.mxu0 0.0
    %353 = vmatprep.subr.mxu0 0.0
    %354 = vmatpush1.msra.mxu0 0.0
    %355 = vmatprep.subr.mxu0 0.0
    %356 = vmatpush1.msra.mxu0 0.0
    %357 = vmatprep.subr.mxu0 0.0
    %358 = vmatpush1.msra.mxu0 0.0
    %359 = vmatprep.subr.mxu0 0.0
    %360 = vmatpush1.msra.mxu0 0.0
    %361 = vmatprep.mubr.f32.mxu0 0.0
    %362 = vmatmul.mubr.f32.gmra.mrb[0].mxu0 %v295
    %v363 = vpop.f32.mrb[0].mxu0
    %v364 = vadd.f32 0.0, %v363
    %v365 = vpop.f32.mrb[0].mxu0
    %366 = vdwg.mxu0
    %v367 = vadd.f32 %v294, %v364
    %v368 = vxor.u32 %v367, 2147483648
    %v369 = vmul.f32 %v368, 1.442695
    %v370 = vpow.pop %v369
    %v371 = vadd.f32 %v370, 1.0
    %v372 = vrcp.pop %v371
    %v373 = vmul.f32 1.0, %v372
    %v374 = vtanh.pop %v367
    %v375 = vmul.f32 %v373, %v281
    %377 = vrot.lane.b32.xlu0 %v374, 96
    %v378 = vpop.permute.xlu0 %377
    %v380 = vmul.f32 %v373, %v378
    %382 = vrot.lane.b32.xlu0 %v380, 16
    %v383 = vpop.permute.xlu0 %382
    %v385 = vadd.f32 %v375, %v383
    %v386 = vtanh.pop %v385
    %388 = vrot.lane.b32.xlu0 %v386, 32
    %v389 = vpop.permute.xlu0 %388
    %v391 = vmul.f32 %v373, %v389
    %393 = vrot.lane.b32.xlu0 %v391, 80
    %v394 = vpop.permute.xlu0 %393
    %s396 = scalar_lea.vmem %s4, 8
    %397 = vst.msk [vmem:[%s396] sm:$0xff] %vm50, %v394
    %s398 = scalar_lea.vmem [#allocation2], 16
    %v399 = vld [vmem:[%s398] sm:$0xff]
    %v400 = vsel %vm50, %v394, 0
    %402 = vmatprep.subr.mxu0 0.0
    %403 = vmatpush1.msra.mxu0 %v39
    %404 = vmatprep.subr.mxu0 0.0
    %405 = vmatpush1.msra.mxu0 %v40
    %406 = vmatprep.subr.mxu0 0.0
    %407 = vmatpush1.msra.mxu0 0.0
    %408 = vmatprep.subr.mxu0 0.0
    %409 = vmatpush1.msra.mxu0 0.0
    %410 = vmatprep.subr.mxu0 0.0
    %411 = vmatpush1.msra.mxu0 0.0
    %412 = vmatprep.subr.mxu0 0.0
    %413 = vmatpush1.msra.mxu0 0.0
    %414 = vmatprep.subr.mxu0 0.0
    %415 = vmatpush1.msra.mxu0 0.0
    %416 = vmatprep.subr.mxu0 0.0
    %417 = vmatpush1.msra.mxu0 0.0
    %418 = vmatprep.subr.mxu0 0.0
    %419 = vmatpush1.msra.mxu0 0.0
    %420 = vmatprep.subr.mxu0 0.0
    %421 = vmatpush1.msra.mxu0 0.0
    %422 = vmatprep.subr.mxu0 0.0
    %423 = vmatpush1.msra.mxu0 0.0
    %424 = vmatprep.subr.mxu0 0.0
    %425 = vmatpush1.msra.mxu0 0.0
    %426 = vmatprep.subr.mxu0 0.0
    %427 = vmatpush1.msra.mxu0 0.0
    %428 = vmatprep.subr.mxu0 0.0
    %429 = vmatpush1.msra.mxu0 0.0
    %430 = vmatprep.subr.mxu0 0.0
    %431 = vmatpush1.msra.mxu0 0.0
    %432 = vmatprep.subr.mxu0 0.0
    %433 = vmatpush1.msra.mxu0 0.0
    %434 = vmatprep.subr.mxu0 0.0
    %435 = vmatpush1.msra.mxu0 0.0
    %436 = vmatprep.subr.mxu0 0.0
    %437 = vmatpush1.msra.mxu0 0.0
    %438 = vmatprep.subr.mxu0 0.0
    %439 = vmatpush1.msra.mxu0 0.0
    %440 = vmatprep.subr.mxu0 0.0
    %441 = vmatpush1.msra.mxu0 0.0
    %442 = vmatprep.subr.mxu0 0.0
    %443 = vmatpush1.msra.mxu0 0.0
    %444 = vmatprep.subr.mxu0 0.0
    %445 = vmatpush1.msra.mxu0 0.0
    %446 = vmatprep.subr.mxu0 0.0
    %447 = vmatpush1.msra.mxu0 0.0
    %448 = vmatprep.subr.mxu0 0.0
    %449 = vmatpush1.msra.mxu0 0.0
    %450 = vmatprep.subr.mxu0 0.0
    %451 = vmatpush1.msra.mxu0 0.0
    %452 = vmatprep.subr.mxu0 0.0
    %453 = vmatpush1.msra.mxu0 0.0
    %454 = vmatprep.subr.mxu0 0.0
    %455 = vmatpush1.msra.mxu0 0.0
    %456 = vmatprep.subr.mxu0 0.0
    %457 = vmatpush1.msra.mxu0 0.0
    %458 = vmatprep.subr.mxu0 0.0
    %459 = vmatpush1.msra.mxu0 0.0
    %460 = vmatprep.subr.mxu0 0.0
    %461 = vmatpush1.msra.mxu0 0.0
    %462 = vmatprep.subr.mxu0 0.0
    %463 = vmatpush1.msra.mxu0 0.0
    %464 = vmatprep.subr.mxu0 0.0
    %465 = vmatpush1.msra.mxu0 0.0
    %466 = vmatprep.mubr.f32.mxu0 0.0
    %467 = vmatmul.mubr.f32.gmra.mrb[0].mxu0 %v400
    %v468 = vpop.f32.mrb[0].mxu0
    %v469 = vadd.f32 0.0, %v468
    %v470 = vpop.f32.mrb[0].mxu0
    %471 = vdwg.mxu0
    %v472 = vadd.f32 %v399, %v469
    %v473 = vxor.u32 %v472, 2147483648
    %v474 = vmul.f32 %v473, 1.442695
    %v475 = vpow.pop %v474
    %v476 = vadd.f32 %v475, 1.0
    %v477 = vrcp.pop %v476
    %v478 = vmul.f32 1.0, %v477
    %v479 = vtanh.pop %v472
    %v480 = vmul.f32 %v478, %v385
    %482 = vrot.lane.b32.xlu0 %v479, 96
    %v483 = vpop.permute.xlu0 %482
    %v485 = vmul.f32 %v478, %v483
    %487 = vrot.lane.b32.xlu0 %v485, 16
    %v488 = vpop.permute.xlu0 %487
    %v490 = vadd.f32 %v480, %v488
    %v491 = vtanh.pop %v490
    %493 = vrot.lane.b32.xlu0 %v491, 32
    %v494 = vpop.permute.xlu0 %493
    %v496 = vmul.f32 %v478, %v494
    %498 = vrot.lane.b32.xlu0 %v496, 80
    %v499 = vpop.permute.xlu0 %498
    %s501 = scalar_lea.vmem %s4, 16
    %502 = vst.msk [vmem:[%s501] sm:$0xff] %vm50, %v499
    %s503 = scalar_lea.vmem [#allocation2], 24
    %v504 = vld [vmem:[%s503] sm:$0xff]
    %v505 = vsel %vm50, %v499, 0
    %507 = vmatprep.subr.mxu0 0.0
    %508 = vmatpush1.msra.mxu0 %v39
    %509 = vmatprep.subr.mxu0 0.0
    %510 = vmatpush1.msra.mxu0 %v40
    %511 = vmatprep.subr.mxu0 0.0
    %512 = vmatpush1.msra.mxu0 0.0
    %513 = vmatprep.subr.mxu0 0.0
    %514 = vmatpush1.msra.mxu0 0.0
    %515 = vmatprep.subr.mxu0 0.0
    %516 = vmatpush1.msra.mxu0 0.0
    %517 = vmatprep.subr.mxu0 0.0
    %518 = vmatpush1.msra.mxu0 0.0
    %519 = vmatprep.subr.mxu0 0.0
    %520 = vmatpush1.msra.mxu0 0.0
    %521 = vmatprep.subr.mxu0 0.0
    %522 = vmatpush1.msra.mxu0 0.0
    %523 = vmatprep.subr.mxu0 0.0
    %524 = vmatpush1.msra.mxu0 0.0
    %525 = vmatprep.subr.mxu0 0.0
    %526 = vmatpush1.msra.mxu0 0.0
    %527 = vmatprep.subr.mxu0 0.0
    %528 = vmatpush1.msra.mxu0 0.0
    %529 = vmatprep.subr.mxu0 0.0
    %530 = vmatpush1.msra.mxu0 0.0
    %531 = vmatprep.subr.mxu0 0.0
    %532 = vmatpush1.msra.mxu0 0.0
    %533 = vmatprep.subr.mxu0 0.0
    %534 = vmatpush1.msra.mxu0 0.0
    %535 = vmatprep.subr.mxu0 0.0
    %536 = vmatpush1.msra.mxu0 0.0
    %537 = vmatprep.subr.mxu0 0.0
    %538 = vmatpush1.msra.mxu0 0.0
    %539 = vmatprep.subr.mxu0 0.0
    %540 = vmatpush1.msra.mxu0 0.0
    %541 = vmatprep.subr.mxu0 0.0
    %542 = vmatpush1.msra.mxu0 0.0
    %543 = vmatprep.subr.mxu0 0.0
    %544 = vmatpush1.msra.mxu0 0.0
    %545 = vmatprep.subr.mxu0 0.0
    %546 = vmatpush1.msra.mxu0 0.0
    %547 = vmatprep.subr.mxu0 0.0
    %548 = vmatpush1.msra.mxu0 0.0
    %549 = vmatprep.subr.mxu0 0.0
    %550 = vmatpush1.msra.mxu0 0.0
    %551 = vmatprep.subr.mxu0 0.0
    %552 = vmatpush1.msra.mxu0 0.0
    %553 = vmatprep.subr.mxu0 0.0
    %554 = vmatpush1.msra.mxu0 0.0
    %555 = vmatprep.subr.mxu0 0.0
    %556 = vmatpush1.msra.mxu0 0.0
    %557 = vmatprep.subr.mxu0 0.0
    %558 = vmatpush1.msra.mxu0 0.0
    %559 = vmatprep.subr.mxu0 0.0
    %560 = vmatpush1.msra.mxu0 0.0
    %561 = vmatprep.subr.mxu0 0.0
    %562 = vmatpush1.msra.mxu0 0.0
    %563 = vmatprep.subr.mxu0 0.0
    %564 = vmatpush1.msra.mxu0 0.0
    %565 = vmatprep.subr.mxu0 0.0
    %566 = vmatpush1.msra.mxu0 0.0
    %567 = vmatprep.subr.mxu0 0.0
    %568 = vmatpush1.msra.mxu0 0.0
    %569 = vmatprep.subr.mxu0 0.0
    %570 = vmatpush1.msra.mxu0 0.0
    %571 = vmatprep.mubr.f32.mxu0 0.0
    %572 = vmatmul.mubr.f32.gmra.mrb[0].mxu0 %v505
    %v573 = vpop.f32.mrb[0].mxu0
    %v574 = vadd.f32 0.0, %v573
    %v575 = vpop.f32.mrb[0].mxu0
    %576 = vdwg.mxu0
    %v577 = vadd.f32 %v504, %v574
    %v578 = vxor.u32 %v577, 2147483648
    %v579 = vmul.f32 %v578, 1.442695
    %v580 = vpow.pop %v579
    %v581 = vadd.f32 %v580, 1.0
    %v582 = vrcp.pop %v581
    %v583 = vmul.f32 1.0, %v582
    %v584 = vtanh.pop %v577
    %v585 = vmul.f32 %v583, %v490
    %587 = vrot.lane.b32.xlu0 %v584, 96
    %v588 = vpop.permute.xlu0 %587
    %v590 = vmul.f32 %v583, %v588
    %592 = vrot.lane.b32.xlu0 %v590, 16
    %v593 = vpop.permute.xlu0 %592
    %v595 = vadd.f32 %v585, %v593
    %v596 = vtanh.pop %v595
    %598 = vrot.lane.b32.xlu0 %v596, 32
    %v599 = vpop.permute.xlu0 %598
    %v601 = vmul.f32 %v583, %v599
    %603 = vrot.lane.b32.xlu0 %v601, 80
    %v604 = vpop.permute.xlu0 %603
    %s606 = scalar_lea.vmem %s4, 24
    %607 = vst.msk [vmem:[%s606] sm:$0xff] %vm50, %v604
    %s608 = scalar_lea.vmem [#allocation2], 32
    %v609 = vld [vmem:[%s608] sm:$0xff]
    %v610 = vsel %vm50, %v604, 0
    %612 = vmatprep.subr.mxu0 0.0
    %613 = vmatpush1.msra.mxu0 %v39
    %614 = vmatprep.subr.mxu0 0.0
    %615 = vmatpush1.msra.mxu0 %v40
    %616 = vmatprep.subr.mxu0 0.0
    %617 = vmatpush1.msra.mxu0 0.0
    %618 = vmatprep.subr.mxu0 0.0
    %619 = vmatpush1.msra.mxu0 0.0
    %620 = vmatprep.subr.mxu0 0.0
    %621 = vmatpush1.msra.mxu0 0.0
    %622 = vmatprep.subr.mxu0 0.0
    %623 = vmatpush1.msra.mxu0 0.0
    %624 = vmatprep.subr.mxu0 0.0
    %625 = vmatpush1.msra.mxu0 0.0
    %626 = vmatprep.subr.mxu0 0.0
    %627 = vmatpush1.msra.mxu0 0.0
    %628 = vmatprep.subr.mxu0 0.0
    %629 = vmatpush1.msra.mxu0 0.0
    %630 = vmatprep.subr.mxu0 0.0
    %631 = vmatpush1.msra.mxu0 0.0
    %632 = vmatprep.subr.mxu0 0.0
    %633 = vmatpush1.msra.mxu0 0.0
    %634 = vmatprep.subr.mxu0 0.0
    %635 = vmatpush1.msra.mxu0 0.0
    %636 = vmatprep.subr.mxu0 0.0
    %637 = vmatpush1.msra.mxu0 0.0
    %638 = vmatprep.subr.mxu0 0.0
    %639 = vmatpush1.msra.mxu0 0.0
    %640 = vmatprep.subr.mxu0 0.0
    %641 = vmatpush1.msra.mxu0 0.0
    %642 = vmatprep.subr.mxu0 0.0
    %643 = vmatpush1.msra.mxu0 0.0
    %644 = vmatprep.subr.mxu0 0.0
    %645 = vmatpush1.msra.mxu0 0.0
    %646 = vmatprep.subr.mxu0 0.0
    %647 = vmatpush1.msra.mxu0 0.0
    %648 = vmatprep.subr.mxu0 0.0
    %649 = vmatpush1.msra.mxu0 0.0
    %650 = vmatprep.subr.mxu0 0.0
    %651 = vmatpush1.msra.mxu0 0.0
    %652 = vmatprep.subr.mxu0 0.0
    %653 = vmatpush1.msra.mxu0 0.0
    %654 = vmatprep.subr.mxu0 0.0
    %655 = vmatpush1.msra.mxu0 0.0
    %656 = vmatprep.subr.mxu0 0.0
    %657 = vmatpush1.msra.mxu0 0.0
    %658 = vmatprep.subr.mxu0 0.0
    %659 = vmatpush1.msra.mxu0 0.0
    %660 = vmatprep.subr.mxu0 0.0
    %661 = vmatpush1.msra.mxu0 0.0
    %662 = vmatprep.subr.mxu0 0.0
    %663 = vmatpush1.msra.mxu0 0.0
    %664 = vmatprep.subr.mxu0 0.0
    %665 = vmatpush1.msra.mxu0 0.0
    %666 = vmatprep.subr.mxu0 0.0
    %667 = vmatpush1.msra.mxu0 0.0
    %668 = vmatprep.subr.mxu0 0.0
    %669 = vmatpush1.msra.mxu0 0.0
    %670 = vmatprep.subr.mxu0 0.0
    %671 = vmatpush1.msra.mxu0 0.0
    %672 = vmatprep.subr.mxu0 0.0
    %673 = vmatpush1.msra.mxu0 0.0
    %674 = vmatprep.subr.mxu0 0.0
    %675 = vmatpush1.msra.mxu0 0.0
    %676 = vmatprep.mubr.f32.mxu0 0.0
    %677 = vmatmul.mubr.f32.gmra.mrb[0].mxu0 %v610
    %v678 = vpop.f32.mrb[0].mxu0
    %v679 = vadd.f32 0.0, %v678
    %v680 = vpop.f32.mrb[0].mxu0
    %681 = vdwg.mxu0
    %v682 = vadd.f32 %v609, %v679
    %v683 = vxor.u32 %v682, 2147483648
    %v684 = vmul.f32 %v683, 1.442695
    %v685 = vpow.pop %v684
    %v686 = vadd.f32 %v685, 1.0
    %v687 = vrcp.pop %v686
    %v688 = vmul.f32 1.0, %v687
    %v689 = vtanh.pop %v682
    %v690 = vmul.f32 %v688, %v595
    %692 = vrot.lane.b32.xlu0 %v689, 96
    %v693 = vpop.permute.xlu0 %692
    %v695 = vmul.f32 %v688, %v693
    %697 = vrot.lane.b32.xlu0 %v695, 16
    %v698 = vpop.permute.xlu0 %697
    %v700 = vadd.f32 %v690, %v698
    %v701 = vtanh.pop %v700
    %703 = vrot.lane.b32.xlu0 %v701, 32
    %v704 = vpop.permute.xlu0 %703
    %v706 = vmul.f32 %v688, %v704
    %708 = vrot.lane.b32.xlu0 %v706, 80
    %v709 = vpop.permute.xlu0 %708
    %s711 = scalar_lea.vmem %s4, 32
    %712 = vst.msk [vmem:[%s711] sm:$0xff] %vm50, %v709
    %s713 = scalar_lea.vmem [#allocation2], 40
    %v714 = vld [vmem:[%s713] sm:$0xff]
    %v715 = vsel %vm50, %v709, 0
    %717 = vmatprep.subr.mxu0 0.0
    %718 = vmatpush1.msra.mxu0 %v39
    %719 = vmatprep.subr.mxu0 0.0
    %720 = vmatpush1.msra.mxu0 %v40
    %721 = vmatprep.subr.mxu0 0.0
    %722 = vmatpush1.msra.mxu0 0.0
    %723 = vmatprep.subr.mxu0 0.0
    %724 = vmatpush1.msra.mxu0 0.0
    %725 = vmatprep.subr.mxu0 0.0
    %726 = vmatpush1.msra.mxu0 0.0
    %727 = vmatprep.subr.mxu0 0.0
    %728 = vmatpush1.msra.mxu0 0.0
    %729 = vmatprep.subr.mxu0 0.0
    %730 = vmatpush1.msra.mxu0 0.0
    %731 = vmatprep.subr.mxu0 0.0
    %732 = vmatpush1.msra.mxu0 0.0
    %733 = vmatprep.subr.mxu0 0.0
    %734 = vmatpush1.msra.mxu0 0.0
    %735 = vmatprep.subr.mxu0 0.0
    %736 = vmatpush1.msra.mxu0 0.0
    %737 = vmatprep.subr.mxu0 0.0
    %738 = vmatpush1.msra.mxu0 0.0
    %739 = vmatprep.subr.mxu0 0.0
    %740 = vmatpush1.msra.mxu0 0.0
    %741 = vmatprep.subr.mxu0 0.0
    %742 = vmatpush1.msra.mxu0 0.0
    %743 = vmatprep.subr.mxu0 0.0
    %744 = vmatpush1.msra.mxu0 0.0
    %745 = vmatprep.subr.mxu0 0.0
    %746 = vmatpush1.msra.mxu0 0.0
    %747 = vmatprep.subr.mxu0 0.0
    %748 = vmatpush1.msra.mxu0 0.0
    %749 = vmatprep.subr.mxu0 0.0
    %750 = vmatpush1.msra.mxu0 0.0
    %751 = vmatprep.subr.mxu0 0.0
    %752 = vmatpush1.msra.mxu0 0.0
    %753 = vmatprep.subr.mxu0 0.0
    %754 = vmatpush1.msra.mxu0 0.0
    %755 = vmatprep.subr.mxu0 0.0
    %756 = vmatpush1.msra.mxu0 0.0
    %757 = vmatprep.subr.mxu0 0.0
    %758 = vmatpush1.msra.mxu0 0.0
    %759 = vmatprep.subr.mxu0 0.0
    %760 = vmatpush1.msra.mxu0 0.0
    %761 = vmatprep.subr.mxu0 0.0
    %762 = vmatpush1.msra.mxu0 0.0
    %763 = vmatprep.subr.mxu0 0.0
    %764 = vmatpush1.msra.mxu0 0.0
    %765 = vmatprep.subr.mxu0 0.0
    %766 = vmatpush1.msra.mxu0 0.0
    %767 = vmatprep.subr.mxu0 0.0
    %768 = vmatpush1.msra.mxu0 0.0
    %769 = vmatprep.subr.mxu0 0.0
    %770 = vmatpush1.msra.mxu0 0.0
    %771 = vmatprep.subr.mxu0 0.0
    %772 = vmatpush1.msra.mxu0 0.0
    %773 = vmatprep.subr.mxu0 0.0
    %774 = vmatpush1.msra.mxu0 0.0
    %775 = vmatprep.subr.mxu0 0.0
    %776 = vmatpush1.msra.mxu0 0.0
    %777 = vmatprep.subr.mxu0 0.0
    %778 = vmatpush1.msra.mxu0 0.0
    %779 = vmatprep.subr.mxu0 0.0
    %780 = vmatpush1.msra.mxu0 0.0
    %781 = vmatprep.mubr.f32.mxu0 0.0
    %782 = vmatmul.mubr.f32.gmra.mrb[0].mxu0 %v715
    %v783 = vpop.f32.mrb[0].mxu0
    %v784 = vadd.f32 0.0, %v783
    %v785 = vpop.f32.mrb[0].mxu0
    %786 = vdwg.mxu0
    %v787 = vadd.f32 %v714, %v784
    %v788 = vxor.u32 %v787, 2147483648
    %v789 = vmul.f32 %v788, 1.442695
    %v790 = vpow.pop %v789
    %v791 = vadd.f32 %v790, 1.0
    %v792 = vrcp.pop %v791
    %v793 = vmul.f32 1.0, %v792
    %v794 = vtanh.pop %v787
    %v795 = vmul.f32 %v793, %v700
    %797 = vrot.lane.b32.xlu0 %v794, 96
    %v798 = vpop.permute.xlu0 %797
    %v800 = vmul.f32 %v793, %v798
    %802 = vrot.lane.b32.xlu0 %v800, 16
    %v803 = vpop.permute.xlu0 %802
    %v805 = vadd.f32 %v795, %v803
    %v806 = vtanh.pop %v805
    %808 = vrot.lane.b32.xlu0 %v806, 32
    %v809 = vpop.permute.xlu0 %808
    %v811 = vmul.f32 %v793, %v809
    %813 = vrot.lane.b32.xlu0 %v811, 80
    %v814 = vpop.permute.xlu0 %813
    %s816 = scalar_lea.vmem %s4, 40
    %817 = vst.msk [vmem:[%s816] sm:$0xff] %vm50, %v814
    %s818 = scalar_lea.vmem [#allocation2], 48
    %v819 = vld [vmem:[%s818] sm:$0xff]
    %v820 = vsel %vm50, %v814, 0
    %822 = vmatprep.subr.mxu0 0.0
    %823 = vmatpush1.msra.mxu0 %v39
    %824 = vmatprep.subr.mxu0 0.0
    %825 = vmatpush1.msra.mxu0 %v40
    %826 = vmatprep.subr.mxu0 0.0
    %827 = vmatpush1.msra.mxu0 0.0
    %828 = vmatprep.subr.mxu0 0.0
    %829 = vmatpush1.msra.mxu0 0.0
    %830 = vmatprep.subr.mxu0 0.0
    %831 = vmatpush1.msra.mxu0 0.0
    %832 = vmatprep.subr.mxu0 0.0
    %833 = vmatpush1.msra.mxu0 0.0
    %834 = vmatprep.subr.mxu0 0.0
    %835 = vmatpush1.msra.mxu0 0.0
    %836 = vmatprep.subr.mxu0 0.0
    %837 = vmatpush1.msra.mxu0 0.0
    %838 = vmatprep.subr.mxu0 0.0
    %839 = vmatpush1.msra.mxu0 0.0
    %840 = vmatprep.subr.mxu0 0.0
    %841 = vmatpush1.msra.mxu0 0.0
    %842 = vmatprep.subr.mxu0 0.0
    %843 = vmatpush1.msra.mxu0 0.0
    %844 = vmatprep.subr.mxu0 0.0
    %845 = vmatpush1.msra.mxu0 0.0
    %846 = vmatprep.subr.mxu0 0.0
    %847 = vmatpush1.msra.mxu0 0.0
    %848 = vmatprep.subr.mxu0 0.0
    %849 = vmatpush1.msra.mxu0 0.0
    %850 = vmatprep.subr.mxu0 0.0
    %851 = vmatpush1.msra.mxu0 0.0
    %852 = vmatprep.subr.mxu0 0.0
    %853 = vmatpush1.msra.mxu0 0.0
    %854 = vmatprep.subr.mxu0 0.0
    %855 = vmatpush1.msra.mxu0 0.0
    %856 = vmatprep.subr.mxu0 0.0
    %857 = vmatpush1.msra.mxu0 0.0
    %858 = vmatprep.subr.mxu0 0.0
    %859 = vmatpush1.msra.mxu0 0.0
    %860 = vmatprep.subr.mxu0 0.0
    %861 = vmatpush1.msra.mxu0 0.0
    %862 = vmatprep.subr.mxu0 0.0
    %863 = vmatpush1.msra.mxu0 0.0
    %864 = vmatprep.subr.mxu0 0.0
    %865 = vmatpush1.msra.mxu0 0.0
    %866 = vmatprep.subr.mxu0 0.0
    %867 = vmatpush1.msra.mxu0 0.0
    %868 = vmatprep.subr.mxu0 0.0
    %869 = vmatpush1.msra.mxu0 0.0
    %870 = vmatprep.subr.mxu0 0.0
    %871 = vmatpush1.msra.mxu0 0.0
    %872 = vmatprep.subr.mxu0 0.0
    %873 = vmatpush1.msra.mxu0 0.0
    %874 = vmatprep.subr.mxu0 0.0
    %875 = vmatpush1.msra.mxu0 0.0
    %876 = vmatprep.subr.mxu0 0.0
    %877 = vmatpush1.msra.mxu0 0.0
    %878 = vmatprep.subr.mxu0 0.0
    %879 = vmatpush1.msra.mxu0 0.0
    %880 = vmatprep.subr.mxu0 0.0
    %881 = vmatpush1.msra.mxu0 0.0
    %882 = vmatprep.subr.mxu0 0.0
    %883 = vmatpush1.msra.mxu0 0.0
    %884 = vmatprep.subr.mxu0 0.0
    %885 = vmatpush1.msra.mxu0 0.0
    %886 = vmatprep.mubr.f32.mxu0 0.0
    %887 = vmatmul.mubr.f32.gmra.mrb[0].mxu0 %v820
    %v888 = vpop.f32.mrb[0].mxu0
    %v889 = vadd.f32 0.0, %v888
    %v890 = vpop.f32.mrb[0].mxu0
    %891 = vdwg.mxu0
    %v892 = vadd.f32 %v819, %v889
    %v893 = vxor.u32 %v892, 2147483648
    %v894 = vmul.f32 %v893, 1.442695
    %v895 = vpow.pop %v894
    %v896 = vadd.f32 %v895, 1.0
    %v897 = vrcp.pop %v896
    %v898 = vmul.f32 1.0, %v897
    %v899 = vtanh.pop %v892
    %v900 = vmul.f32 %v898, %v805
    %902 = vrot.lane.b32.xlu0 %v899, 96
    %v903 = vpop.permute.xlu0 %902
    %v905 = vmul.f32 %v898, %v903
    %907 = vrot.lane.b32.xlu0 %v905, 16
    %v908 = vpop.permute.xlu0 %907
    %v910 = vadd.f32 %v900, %v908
    %v911 = vtanh.pop %v910
    %913 = vrot.lane.b32.xlu0 %v911, 32
    %v914 = vpop.permute.xlu0 %913
    %v916 = vmul.f32 %v898, %v914
    %918 = vrot.lane.b32.xlu0 %v916, 80
    %v919 = vpop.permute.xlu0 %918
    %s921 = scalar_lea.vmem %s4, 48
    %922 = vst.msk [vmem:[%s921] sm:$0xff] %vm50, %v919
    %s923 = scalar_lea.vmem [#allocation2], 56
    %v924 = vld [vmem:[%s923] sm:$0xff]
    %v925 = vsel %vm50, %v919, 0
    %927 = vmatprep.subr.mxu0 0.0
    %928 = vmatpush1.msra.mxu0 %v39
    %929 = vmatprep.subr.mxu0 0.0
    %930 = vmatpush1.msra.mxu0 %v40
    %931 = vmatprep.subr.mxu0 0.0
    %932 = vmatpush1.msra.mxu0 0.0
    %933 = vmatprep.subr.mxu0 0.0
    %934 = vmatpush1.msra.mxu0 0.0
    %935 = vmatprep.subr.mxu0 0.0
    %936 = vmatpush1.msra.mxu0 0.0
    %937 = vmatprep.subr.mxu0 0.0
    %938 = vmatpush1.msra.mxu0 0.0
    %939 = vmatprep.subr.mxu0 0.0
    %940 = vmatpush1.msra.mxu0 0.0
    %941 = vmatprep.subr.mxu0 0.0
    %942 = vmatpush1.msra.mxu0 0.0
    %943 = vmatprep.subr.mxu0 0.0
    %944 = vmatpush1.msra.mxu0 0.0
    %945 = vmatprep.subr.mxu0 0.0
    %946 = vmatpush1.msra.mxu0 0.0
    %947 = vmatprep.subr.mxu0 0.0
    %948 = vmatpush1.msra.mxu0 0.0
    %949 = vmatprep.subr.mxu0 0.0
    %950 = vmatpush1.msra.mxu0 0.0
    %951 = vmatprep.subr.mxu0 0.0
    %952 = vmatpush1.msra.mxu0 0.0
    %953 = vmatprep.subr.mxu0 0.0
    %954 = vmatpush1.msra.mxu0 0.0
    %955 = vmatprep.subr.mxu0 0.0
    %956 = vmatpush1.msra.mxu0 0.0
    %957 = vmatprep.subr.mxu0 0.0
    %958 = vmatpush1.msra.mxu0 0.0
    %959 = vmatprep.subr.mxu0 0.0
    %960 = vmatpush1.msra.mxu0 0.0
    %961 = vmatprep.subr.mxu0 0.0
    %962 = vmatpush1.msra.mxu0 0.0
    %963 = vmatprep.subr.mxu0 0.0
    %964 = vmatpush1.msra.mxu0 0.0
    %965 = vmatprep.subr.mxu0 0.0
    %966 = vmatpush1.msra.mxu0 0.0
    %967 = vmatprep.subr.mxu0 0.0
    %968 = vmatpush1.msra.mxu0 0.0
    %969 = vmatprep.subr.mxu0 0.0
    %970 = vmatpush1.msra.mxu0 0.0
    %971 = vmatprep.subr.mxu0 0.0
    %972 = vmatpush1.msra.mxu0 0.0
    %973 = vmatprep.subr.mxu0 0.0
    %974 = vmatpush1.msra.mxu0 0.0
    %975 = vmatprep.subr.mxu0 0.0
    %976 = vmatpush1.msra.mxu0 0.0
    %977 = vmatprep.subr.mxu0 0.0
    %978 = vmatpush1.msra.mxu0 0.0
    %979 = vmatprep.subr.mxu0 0.0
    %980 = vmatpush1.msra.mxu0 0.0
    %981 = vmatprep.subr.mxu0 0.0
    %982 = vmatpush1.msra.mxu0 0.0
    %983 = vmatprep.subr.mxu0 0.0
    %984 = vmatpush1.msra.mxu0 0.0
    %985 = vmatprep.subr.mxu0 0.0
    %986 = vmatpush1.msra.mxu0 0.0
    %987 = vmatprep.subr.mxu0 0.0
    %988 = vmatpush1.msra.mxu0 0.0
    %989 = vmatprep.subr.mxu0 0.0
    %990 = vmatpush1.msra.mxu0 0.0
    %991 = vmatprep.mubr.f32.mxu0 0.0
    %992 = vmatmul.mubr.f32.gmra.mrb[0].mxu0 %v925
    %v993 = vpop.f32.mrb[0].mxu0
    %v994 = vadd.f32 0.0, %v993
    %v995 = vpop.f32.mrb[0].mxu0
    %996 = vdwg.mxu0
    %v997 = vadd.f32 %v924, %v994
    %v998 = vxor.u32 %v997, 2147483648
    %v999 = vmul.f32 %v998, 1.442695
    %v1000 = vpow.pop %v999
    %v1001 = vadd.f32 %v1000, 1.0
    %v1002 = vrcp.pop %v1001
    %v1003 = vmul.f32 1.0, %v1002
    %v1004 = vtanh.pop %v997
    %v1005 = vmul.f32 %v1003, %v910
    %1007 = vrot.lane.b32.xlu0 %v1004, 96
    %v1008 = vpop.permute.xlu0 %1007
    %v1010 = vmul.f32 %v1003, %v1008
    %1012 = vrot.lane.b32.xlu0 %v1010, 16
    %v1013 = vpop.permute.xlu0 %1012
    %v1015 = vadd.f32 %v1005, %v1013
    %v1016 = vtanh.pop %v1015
    %1018 = vrot.lane.b32.xlu0 %v1016, 32
    %v1019 = vpop.permute.xlu0 %1018
    %v1021 = vmul.f32 %v1003, %v1019
    %1023 = vrot.lane.b32.xlu0 %v1021, 80
    %v1024 = vpop.permute.xlu0 %1023
    %s1026 = scalar_lea.vmem %s4, 56
    %1027 = vst.msk [vmem:[%s1026] sm:$0xff] %vm50, %v1024
    %v1028 = vld [vmem:[%s4] sm:$0xff]
    %v1029 = vld [vmem:[%s4 + $0x8] sm:$0xff]
    %v1030 = vld [vmem:[%s4 + $0x10] sm:$0xff]
    %v1031 = vld [vmem:[%s4 + $0x18] sm:$0xff]
    %v1032 = vld [vmem:[%s4 + $0x20] sm:$0xff]
    %v1033 = vld [vmem:[%s4 + $0x28] sm:$0xff]
    %v1034 = vld [vmem:[%s4 + $0x30] sm:$0xff]
    %v1035 = vld [vmem:[%s4 + $0x38] sm:$0xff]
    %s1036 = scalar_lea.vmem %s2, 16
    %v1037 = vld [vmem:[%s1036] sm:$0xff]
    %v1038 = vld [vmem:[%s1036 + $0x8] sm:$0xff]
    %s1039 = scalar_lea.vmem [#allocation3], 16
    %v1040 = vld [vmem:[%s1039] sm:$0xff]
    %v1041 = vld [vmem:[%s1039 + $0x8] sm:$0xff]
    %s1042 = scalar_lea.vmem %s3, 1
    %v1043 = vld [vmem:[%s1042] sm:$0x1]
    %v1045 = vlaneseq
    %v1046 = vshrl.u32 %v1045, 7
    %v1047 = vsub.s32 0, %v1046
    %v1048 = vrot.slane %v1043, %v1047
    %v1051 = vsel %vm50, %v1028, 0
    %v1054 = vsel %vm50, %v1029, 0
    %v1057 = vsel %vm50, %v1030, 0
    %v1060 = vsel %vm50, %v1031, 0
    %v1063 = vsel %vm50, %v1032, 0
    %v1066 = vsel %vm50, %v1033, 0
    %v1069 = vsel %vm50, %v1034, 0
    %v1072 = vsel %vm50, %v1035, 0
    %1074 = vmatprep.subr.mxu0 0.0
    %1075 = vmatpush1.msra.mxu0 %v1040
    %1076 = vmatprep.subr.mxu0 0.0
    %1077 = vmatpush1.msra.mxu0 %v1041
    %1078 = vmatprep.subr.mxu0 0.0
    %1079 = vmatpush1.msra.mxu0 0.0
    %1080 = vmatprep.subr.mxu0 0.0
    %1081 = vmatpush1.msra.mxu0 0.0
    %1082 = vmatprep.subr.mxu0 0.0
    %1083 = vmatpush1.msra.mxu0 0.0
    %1084 = vmatprep.subr.mxu0 0.0
    %1085 = vmatpush1.msra.mxu0 0.0
    %1086 = vmatprep.subr.mxu0 0.0
    %1087 = vmatpush1.msra.mxu0 0.0
    %1088 = vmatprep.subr.mxu0 0.0
    %1089 = vmatpush1.msra.mxu0 0.0
    %1090 = vmatprep.subr.mxu0 0.0
    %1091 = vmatpush1.msra.mxu0 0.0
    %1092 = vmatprep.subr.mxu0 0.0
    %1093 = vmatpush1.msra.mxu0 0.0
    %1094 = vmatprep.subr.mxu0 0.0
    %1095 = vmatpush1.msra.mxu0 0.0
    %1096 = vmatprep.subr.mxu0 0.0
    %1097 = vmatpush1.msra.mxu0 0.0
    %1098 = vmatprep.subr.mxu0 0.0
    %1099 = vmatpush1.msra.mxu0 0.0
    %1100 = vmatprep.subr.mxu0 0.0
    %1101 = vmatpush1.msra.mxu0 0.0
    %1102 = vmatprep.subr.mxu0 0.0
    %1103 = vmatpush1.msra.mxu0 0.0
    %1104 = vmatprep.subr.mxu0 0.0
    %1105 = vmatpush1.msra.mxu0 0.0
    %1106 = vmatprep.subr.mxu0 0.0
    %1107 = vmatpush1.msra.mxu0 0.0
    %1108 = vmatprep.subr.mxu0 0.0
    %1109 = vmatpush1.msra.mxu0 0.0
    %1110 = vmatprep.subr.mxu0 0.0
    %1111 = vmatpush1.msra.mxu0 0.0
    %1112 = vmatprep.subr.mxu0 0.0
    %1113 = vmatpush1.msra.mxu0 0.0
    %1114 = vmatprep.subr.mxu0 0.0
    %1115 = vmatpush1.msra.mxu0 0.0
    %1116 = vmatprep.subr.mxu0 0.0
    %1117 = vmatpush1.msra.mxu0 0.0
    %1118 = vmatprep.subr.mxu0 0.0
    %1119 = vmatpush1.msra.mxu0 0.0
    %1120 = vmatprep.subr.mxu0 0.0
    %1121 = vmatpush1.msra.mxu0 0.0
    %1122 = vmatprep.subr.mxu0 0.0
    %1123 = vmatpush1.msra.mxu0 0.0
    %1124 = vmatprep.subr.mxu0 0.0
    %1125 = vmatpush1.msra.mxu0 0.0
    %1126 = vmatprep.subr.mxu0 0.0
    %1127 = vmatpush1.msra.mxu0 0.0
    %1128 = vmatprep.subr.mxu0 0.0
    %1129 = vmatpush1.msra.mxu0 0.0
    %1130 = vmatprep.subr.mxu0 0.0
    %1131 = vmatpush1.msra.mxu0 0.0
    %1132 = vmatprep.subr.mxu0 0.0
    %1133 = vmatpush1.msra.mxu0 0.0
    %1134 = vmatprep.subr.mxu0 0.0
    %1135 = vmatpush1.msra.mxu0 0.0
    %1136 = vmatprep.subr.mxu0 0.0
    %1137 = vmatpush1.msra.mxu0 0.0
    %1138 = vmatprep.mubr.f32.mxu0 0.0
    %1139 = vmatmul.mubr.f32.gmra.mrb[0].mxu0 %v1051
    %v1140 = vpop.f32.mrb[0].mxu0
    %v1141 = vadd.f32 %v1048, %v1140
    %v1142 = vpop.f32.mrb[0].mxu0
    %1143 = vmatprep.mubr.f32.mxu0 0.0
    %1144 = vmatmul.mubr.f32.gmra.mrb[0].mxu0 %v1054
    %v1145 = vpop.f32.mrb[0].mxu0
    %v1146 = vadd.f32 %v1048, %v1145
    %v1147 = vpop.f32.mrb[0].mxu0
    %1148 = vmatprep.mubr.f32.mxu0 0.0
    %1149 = vmatmul.mubr.f32.gmra.mrb[0].mxu0 %v1057
    %v1150 = vpop.f32.mrb[0].mxu0
    %v1151 = vadd.f32 %v1048, %v1150
    %v1152 = vpop.f32.mrb[0].mxu0
    %1153 = vmatprep.mubr.f32.mxu0 0.0
    %1154 = vmatmul.mubr.f32.gmra.mrb[0].mxu0 %v1060
    %v1155 = vpop.f32.mrb[0].mxu0
    %v1156 = vadd.f32 %v1048, %v1155
    %v1157 = vpop.f32.mrb[0].mxu0
    %1158 = vmatprep.mubr.f32.mxu0 0.0
    %1159 = vmatmul.mubr.f32.gmra.mrb[0].mxu0 %v1063
    %v1160 = vpop.f32.mrb[0].mxu0
    %v1161 = vadd.f32 %v1048, %v1160
    %v1162 = vpop.f32.mrb[0].mxu0
    %1163 = vmatprep.mubr.f32.mxu0 0.0
    %1164 = vmatmul.mubr.f32.gmra.mrb[0].mxu0 %v1066
    %v1165 = vpop.f32.mrb[0].mxu0
    %v1166 = vadd.f32 %v1048, %v1165
    %v1167 = vpop.f32.mrb[0].mxu0
    %1168 = vmatprep.mubr.f32.mxu0 0.0
    %1169 = vmatmul.mubr.f32.gmra.mrb[0].mxu0 %v1069
    %v1170 = vpop.f32.mrb[0].mxu0
    %v1171 = vadd.f32 %v1048, %v1170
    %v1172 = vpop.f32.mrb[0].mxu0
    %1173 = vmatprep.mubr.f32.mxu0 0.0
    %1174 = vmatmul.mubr.f32.gmra.mrb[0].mxu0 %v1072
    %v1175 = vpop.f32.mrb[0].mxu0
    %v1176 = vadd.f32 %v1048, %v1175
    %v1177 = vpop.f32.mrb[0].mxu0
    %1178 = vdwg.mxu0
    %1179 = vst.msk [vmem:[#allocation2] sm:$0xff] %vm180, %v1141
    %1180 = vst.msk [vmem:[#allocation2 + $0x8] sm:$0xff] %vm180, %v1146
    %1181 = vst.msk [vmem:[#allocation2 + $0x10] sm:$0xff] %vm180, %v1151
    %1182 = vst.msk [vmem:[#allocation2 + $0x18] sm:$0xff] %vm180, %v1156
    %1183 = vst.msk [vmem:[#allocation2 + $0x20] sm:$0xff] %vm180, %v1161
    %1184 = vst.msk [vmem:[#allocation2 + $0x28] sm:$0xff] %vm180, %v1166
    %1185 = vst.msk [vmem:[#allocation2 + $0x30] sm:$0xff] %vm180, %v1171
    %1186 = vst.msk [vmem:[#allocation2 + $0x38] sm:$0xff] %vm180, %v1176
    %v1187 = vld [vmem:[#allocation2] sm:$0xff]
    %v1188 = vsel %vm50, %v1024, 0
    %1190 = vmatprep.subr.mxu0 0.0
    %1191 = vmatpush1.msra.mxu0 %v1037
    %1192 = vmatprep.subr.mxu0 0.0
    %1193 = vmatpush1.msra.mxu0 %v1038
    %1194 = vmatprep.subr.mxu0 0.0
    %1195 = vmatpush1.msra.mxu0 0.0
    %1196 = vmatprep.subr.mxu0 0.0
    %1197 = vmatpush1.msra.mxu0 0.0
    %1198 = vmatprep.subr.mxu0 0.0
    %1199 = vmatpush1.msra.mxu0 0.0
    %1200 = vmatprep.subr.mxu0 0.0
    %1201 = vmatpush1.msra.mxu0 0.0
    %1202 = vmatprep.subr.mxu0 0.0
    %1203 = vmatpush1.msra.mxu0 0.0
    %1204 = vmatprep.subr.mxu0 0.0
    %1205 = vmatpush1.msra.mxu0 0.0
    %1206 = vmatprep.subr.mxu0 0.0
    %1207 = vmatpush1.msra.mxu0 0.0
    %1208 = vmatprep.subr.mxu0 0.0
    %1209 = vmatpush1.msra.mxu0 0.0
    %1210 = vmatprep.subr.mxu0 0.0
    %1211 = vmatpush1.msra.mxu0 0.0
    %1212 = vmatprep.subr.mxu0 0.0
    %1213 = vmatpush1.msra.mxu0 0.0
    %1214 = vmatprep.subr.mxu0 0.0
    %1215 = vmatpush1.msra.mxu0 0.0
    %1216 = vmatprep.subr.mxu0 0.0
    %1217 = vmatpush1.msra.mxu0 0.0
    %1218 = vmatprep.subr.mxu0 0.0
    %1219 = vmatpush1.msra.mxu0 0.0
    %1220 = vmatprep.subr.mxu0 0.0
    %1221 = vmatpush1.msra.mxu0 0.0
    %1222 = vmatprep.subr.mxu0 0.0
    %1223 = vmatpush1.msra.mxu0 0.0
    %1224 = vmatprep.subr.mxu0 0.0
    %1225 = vmatpush1.msra.mxu0 0.0
    %1226 = vmatprep.subr.mxu0 0.0
    %1227 = vmatpush1.msra.mxu0 0.0
    %1228 = vmatprep.subr.mxu0 0.0
    %1229 = vmatpush1.msra.mxu0 0.0
    %1230 = vmatprep.subr.mxu0 0.0
    %1231 = vmatpush1.msra.mxu0 0.0
    %1232 = vmatprep.subr.mxu0 0.0
    %1233 = vmatpush1.msra.mxu0 0.0
    %1234 = vmatprep.subr.mxu0 0.0
    %1235 = vmatpush1.msra.mxu0 0.0
    %1236 = vmatprep.subr.mxu0 0.0
    %1237 = vmatpush1.msra.mxu0 0.0
    %1238 = vmatprep.subr.mxu0 0.0
    %1239 = vmatpush1.msra.mxu0 0.0
    %1240 = vmatprep.subr.mxu0 0.0
    %1241 = vmatpush1.msra.mxu0 0.0
    %1242 = vmatprep.subr.mxu0 0.0
    %1243 = vmatpush1.msra.mxu0 0.0
    %1244 = vmatprep.subr.mxu0 0.0
    %1245 = vmatpush1.msra.mxu0 0.0
    %1246 = vmatprep.subr.mxu0 0.0
    %1247 = vmatpush1.msra.mxu0 0.0
    %1248 = vmatprep.subr.mxu0 0.0
    %1249 = vmatpush1.msra.mxu0 0.0
    %1250 = vmatprep.subr.mxu0 0.0
    %1251 = vmatpush1.msra.mxu0 0.0
    %1252 = vmatprep.subr.mxu0 0.0
    %1253 = vmatpush1.msra.mxu0 0.0
    %1254 = vmatprep.mubr.f32.mxu0 0.0
    %1255 = vmatmul.mubr.f32.gmra.mrb[0].mxu0 %v1188
    %v1256 = vpop.f32.mrb[0].mxu0
    %v1257 = vadd.f32 0.0, %v1256
    %v1258 = vpop.f32.mrb[0].mxu0
    %1259 = vdwg.mxu0
    %v1260 = vadd.f32 %v1187, %v1257
    %v1261 = vxor.u32 %v1260, 2147483648
    %v1262 = vmul.f32 %v1261, 1.442695
    %v1263 = vpow.pop %v1262
    %v1264 = vadd.f32 %v1263, 1.0
    %v1265 = vrcp.pop %v1264
    %v1266 = vmul.f32 1.0, %v1265
    %v1267 = vtanh.pop %v1260
    %v1268 = vmul.f32 %v1266, %v1015
    %1270 = vrot.lane.b32.xlu0 %v1267, 96
    %v1271 = vpop.permute.xlu0 %1270
    %v1273 = vmul.f32 %v1266, %v1271
    %1275 = vrot.lane.b32.xlu0 %v1273, 16
    %v1276 = vpop.permute.xlu0 %1275
    %v1278 = vadd.f32 %v1268, %v1276
    %v1279 = vtanh.pop %v1278
    %1281 = vrot.lane.b32.xlu0 %v1279, 32
    %v1282 = vpop.permute.xlu0 %1281
    %v1284 = vmul.f32 %v1266, %v1282
    %1286 = vrot.lane.b32.xlu0 %v1284, 80
    %v1287 = vpop.permute.xlu0 %1286
    %1289 = vst.msk [vmem:[%s4] sm:$0xff] %vm50, %v1287
    %v1290 = vld [vmem:[%s293] sm:$0xff]
    %v1291 = vsel %vm50, %v1287, 0
    %1293 = vmatprep.subr.mxu0 0.0
    %1294 = vmatpush1.msra.mxu0 %v1037
    %1295 = vmatprep.subr.mxu0 0.0
    %1296 = vmatpush1.msra.mxu0 %v1038
    %1297 = vmatprep.subr.mxu0 0.0
    %1298 = vmatpush1.msra.mxu0 0.0
    %1299 = vmatprep.subr.mxu0 0.0
    %1300 = vmatpush1.msra.mxu0 0.0
    %1301 = vmatprep.subr.mxu0 0.0
    %1302 = vmatpush1.msra.mxu0 0.0
    %1303 = vmatprep.subr.mxu0 0.0
    %1304 = vmatpush1.msra.mxu0 0.0
    %1305 = vmatprep.subr.mxu0 0.0
    %1306 = vmatpush1.msra.mxu0 0.0
    %1307 = vmatprep.subr.mxu0 0.0
    %1308 = vmatpush1.msra.mxu0 0.0
    %1309 = vmatprep.subr.mxu0 0.0
    %1310 = vmatpush1.msra.mxu0 0.0
    %1311 = vmatprep.subr.mxu0 0.0
    %1312 = vmatpush1.msra.mxu0 0.0
    %1313 = vmatprep.subr.mxu0 0.0
    %1314 = vmatpush1.msra.mxu0 0.0
    %1315 = vmatprep.subr.mxu0 0.0
    %1316 = vmatpush1.msra.mxu0 0.0
    %1317 = vmatprep.subr.mxu0 0.0
    %1318 = vmatpush1.msra.mxu0 0.0
    %1319 = vmatprep.subr.mxu0 0.0
    %1320 = vmatpush1.msra.mxu0 0.0
    %1321 = vmatprep.subr.mxu0 0.0
    %1322 = vmatpush1.msra.mxu0 0.0
    %1323 = vmatprep.subr.mxu0 0.0
    %1324 = vmatpush1.msra.mxu0 0.0
    %1325 = vmatprep.subr.mxu0 0.0
    %1326 = vmatpush1.msra.mxu0 0.0
    %1327 = vmatprep.subr.mxu0 0.0
    %1328 = vmatpush1.msra.mxu0 0.0
    %1329 = vmatprep.subr.mxu0 0.0
    %1330 = vmatpush1.msra.mxu0 0.0
    %1331 = vmatprep.subr.mxu0 0.0
    %1332 = vmatpush1.msra.mxu0 0.0
    %1333 = vmatprep.subr.mxu0 0.0
    %1334 = vmatpush1.msra.mxu0 0.0
    %1335 = vmatprep.subr.mxu0 0.0
    %1336 = vmatpush1.msra.mxu0 0.0
    %1337 = vmatprep.subr.mxu0 0.0
    %1338 = vmatpush1.msra.mxu0 0.0
    %1339 = vmatprep.subr.mxu0 0.0
    %1340 = vmatpush1.msra.mxu0 0.0
    %1341 = vmatprep.subr.mxu0 0.0
    %1342 = vmatpush1.msra.mxu0 0.0
    %1343 = vmatprep.subr.mxu0 0.0
    %1344 = vmatpush1.msra.mxu0 0.0
    %1345 = vmatprep.subr.mxu0 0.0
    %1346 = vmatpush1.msra.mxu0 0.0
    %1347 = vmatprep.subr.mxu0 0.0
    %1348 = vmatpush1.msra.mxu0 0.0
    %1349 = vmatprep.subr.mxu0 0.0
    %1350 = vmatpush1.msra.mxu0 0.0
    %1351 = vmatprep.subr.mxu0 0.0
    %1352 = vmatpush1.msra.mxu0 0.0
    %1353 = vmatprep.subr.mxu0 0.0
    %1354 = vmatpush1.msra.mxu0 0.0
    %1355 = vmatprep.subr.mxu0 0.0
    %1356 = vmatpush1.msra.mxu0 0.0
    %1357 = vmatprep.mubr.f32.mxu0 0.0
    %1358 = vmatmul.mubr.f32.gmra.mrb[0].mxu0 %v1291
    %v1359 = vpop.f32.mrb[0].mxu0
    %v1360 = vadd.f32 0.0, %v1359
    %v1361 = vpop.f32.mrb[0].mxu0
    %1362 = vdwg.mxu0
    %v1363 = vadd.f32 %v1290, %v1360
    %v1364 = vxor.u32 %v1363, 2147483648
    %v1365 = vmul.f32 %v1364, 1.442695
    %v1366 = vpow.pop %v1365
    %v1367 = vadd.f32 %v1366, 1.0
    %v1368 = vrcp.pop %v1367
    %v1369 = vmul.f32 1.0, %v1368
    %v1370 = vtanh.pop %v1363
    %v1371 = vmul.f32 %v1369, %v1278
    %1373 = vrot.lane.b32.xlu0 %v1370, 96
    %v1374 = vpop.permute.xlu0 %1373
    %v1376 = vmul.f32 %v1369, %v1374
    %1378 = vrot.lane.b32.xlu0 %v1376, 16
    %v1379 = vpop.permute.xlu0 %1378
    %v1381 = vadd.f32 %v1371, %v1379
    %v1382 = vtanh.pop %v1381
    %1384 = vrot.lane.b32.xlu0 %v1382, 32
    %v1385 = vpop.permute.xlu0 %1384
    %v1387 = vmul.f32 %v1369, %v1385
    %1389 = vrot.lane.b32.xlu0 %v1387, 80
    %v1390 = vpop.permute.xlu0 %1389
    %1392 = vst.msk [vmem:[%s396] sm:$0xff] %vm50, %v1390
    %v1393 = vld [vmem:[%s398] sm:$0xff]
    %v1394 = vsel %vm50, %v1390, 0
    %1396 = vmatprep.subr.mxu0 0.0
    %1397 = vmatpush1.msra.mxu0 %v1037
    %1398 = vmatprep.subr.mxu0 0.0
    %1399 = vmatpush1.msra.mxu0 %v1038
    %1400 = vmatprep.subr.mxu0 0.0
    %1401 = vmatpush1.msra.mxu0 0.0
    %1402 = vmatprep.subr.mxu0 0.0
    %1403 = vmatpush1.msra.mxu0 0.0
    %1404 = vmatprep.subr.mxu0 0.0
    %1405 = vmatpush1.msra.mxu0 0.0
    %1406 = vmatprep.subr.mxu0 0.0
    %1407 = vmatpush1.msra.mxu0 0.0
    %1408 = vmatprep.subr.mxu0 0.0
    %1409 = vmatpush1.msra.mxu0 0.0
    %1410 = vmatprep.subr.mxu0 0.0
    %1411 = vmatpush1.msra.mxu0 0.0
    %1412 = vmatprep.subr.mxu0 0.0
    %1413 = vmatpush1.msra.mxu0 0.0
    %1414 = vmatprep.subr.mxu0 0.0
    %1415 = vmatpush1.msra.mxu0 0.0
    %1416 = vmatprep.subr.mxu0 0.0
    %1417 = vmatpush1.msra.mxu0 0.0
    %1418 = vmatprep.subr.mxu0 0.0
    %1419 = vmatpush1.msra.mxu0 0.0
    %1420 = vmatprep.subr.mxu0 0.0
    %1421 = vmatpush1.msra.mxu0 0.0
    %1422 = vmatprep.subr.mxu0 0.0
    %1423 = vmatpush1.msra.mxu0 0.0
    %1424 = vmatprep.subr.mxu0 0.0
    %1425 = vmatpush1.msra.mxu0 0.0
    %1426 = vmatprep.subr.mxu0 0.0
    %1427 = vmatpush1.msra.mxu0 0.0
    %1428 = vmatprep.subr.mxu0 0.0
    %1429 = vmatpush1.msra.mxu0 0.0
    %1430 = vmatprep.subr.mxu0 0.0
    %1431 = vmatpush1.msra.mxu0 0.0
    %1432 = vmatprep.subr.mxu0 0.0
    %1433 = vmatpush1.msra.mxu0 0.0
    %1434 = vmatprep.subr.mxu0 0.0
    %1435 = vmatpush1.msra.mxu0 0.0
    %1436 = vmatprep.subr.mxu0 0.0
    %1437 = vmatpush1.msra.mxu0 0.0
    %1438 = vmatprep.subr.mxu0 0.0
    %1439 = vmatpush1.msra.mxu0 0.0
    %1440 = vmatprep.subr.mxu0 0.0
    %1441 = vmatpush1.msra.mxu0 0.0
    %1442 = vmatprep.subr.mxu0 0.0
    %1443 = vmatpush1.msra.mxu0 0.0
    %1444 = vmatprep.subr.mxu0 0.0
    %1445 = vmatpush1.msra.mxu0 0.0
    %1446 = vmatprep.subr.mxu0 0.0
    %1447 = vmatpush1.msra.mxu0 0.0
    %1448 = vmatprep.subr.mxu0 0.0
    %1449 = vmatpush1.msra.mxu0 0.0
    %1450 = vmatprep.subr.mxu0 0.0
    %1451 = vmatpush1.msra.mxu0 0.0
    %1452 = vmatprep.subr.mxu0 0.0
    %1453 = vmatpush1.msra.mxu0 0.0
    %1454 = vmatprep.subr.mxu0 0.0
    %1455 = vmatpush1.msra.mxu0 0.0
    %1456 = vmatprep.subr.mxu0 0.0
    %1457 = vmatpush1.msra.mxu0 0.0
    %1458 = vmatprep.subr.mxu0 0.0
    %1459 = vmatpush1.msra.mxu0 0.0
    %1460 = vmatprep.mubr.f32.mxu0 0.0
    %1461 = vmatmul.mubr.f32.gmra.mrb[0].mxu0 %v1394
    %v1462 = vpop.f32.mrb[0].mxu0
    %v1463 = vadd.f32 0.0, %v1462
    %v1464 = vpop.f32.mrb[0].mxu0
    %1465 = vdwg.mxu0
    %v1466 = vadd.f32 %v1393, %v1463
    %v1467 = vxor.u32 %v1466, 2147483648
    %v1468 = vmul.f32 %v1467, 1.442695
    %v1469 = vpow.pop %v1468
    %v1470 = vadd.f32 %v1469, 1.0
    %v1471 = vrcp.pop %v1470
    %v1472 = vmul.f32 1.0, %v1471
    %v1473 = vtanh.pop %v1466
    %v1474 = vmul.f32 %v1472, %v1381
    %1476 = vrot.lane.b32.xlu0 %v1473, 96
    %v1477 = vpop.permute.xlu0 %1476
    %v1479 = vmul.f32 %v1472, %v1477
    %1481 = vrot.lane.b32.xlu0 %v1479, 16
    %v1482 = vpop.permute.xlu0 %1481
    %v1484 = vadd.f32 %v1474, %v1482
    %v1485 = vtanh.pop %v1484
    %1487 = vrot.lane.b32.xlu0 %v1485, 32
    %v1488 = vpop.permute.xlu0 %1487
    %v1490 = vmul.f32 %v1472, %v1488
    %1492 = vrot.lane.b32.xlu0 %v1490, 80
    %v1493 = vpop.permute.xlu0 %1492
    %1495 = vst.msk [vmem:[%s501] sm:$0xff] %vm50, %v1493
    %v1496 = vld [vmem:[%s503] sm:$0xff]
    %v1497 = vsel %vm50, %v1493, 0
    %1499 = vmatprep.subr.mxu0 0.0
    %1500 = vmatpush1.msra.mxu0 %v1037
    %1501 = vmatprep.subr.mxu0 0.0
    %1502 = vmatpush1.msra.mxu0 %v1038
    %1503 = vmatprep.subr.mxu0 0.0
    %1504 = vmatpush1.msra.mxu0 0.0
    %1505 = vmatprep.subr.mxu0 0.0
    %1506 = vmatpush1.msra.mxu0 0.0
    %1507 = vmatprep.subr.mxu0 0.0
    %1508 = vmatpush1.msra.mxu0 0.0
    %1509 = vmatprep.subr.mxu0 0.0
    %1510 = vmatpush1.msra.mxu0 0.0
    %1511 = vmatprep.subr.mxu0 0.0
    %1512 = vmatpush1.msra.mxu0 0.0
    %1513 = vmatprep.subr.mxu0 0.0
    %1514 = vmatpush1.msra.mxu0 0.0
    %1515 = vmatprep.subr.mxu0 0.0
    %1516 = vmatpush1.msra.mxu0 0.0
    %1517 = vmatprep.subr.mxu0 0.0
    %1518 = vmatpush1.msra.mxu0 0.0
    %1519 = vmatprep.subr.mxu0 0.0
    %1520 = vmatpush1.msra.mxu0 0.0
    %1521 = vmatprep.subr.mxu0 0.0
    %1522 = vmatpush1.msra.mxu0 0.0
    %1523 = vmatprep.subr.mxu0 0.0
    %1524 = vmatpush1.msra.mxu0 0.0
    %1525 = vmatprep.subr.mxu0 0.0
    %1526 = vmatpush1.msra.mxu0 0.0
    %1527 = vmatprep.subr.mxu0 0.0
    %1528 = vmatpush1.msra.mxu0 0.0
    %1529 = vmatprep.subr.mxu0 0.0
    %1530 = vmatpush1.msra.mxu0 0.0
    %1531 = vmatprep.subr.mxu0 0.0
    %1532 = vmatpush1.msra.mxu0 0.0
    %1533 = vmatprep.subr.mxu0 0.0
    %1534 = vmatpush1.msra.mxu0 0.0
    %1535 = vmatprep.subr.mxu0 0.0
    %1536 = vmatpush1.msra.mxu0 0.0
    %1537 = vmatprep.subr.mxu0 0.0
    %1538 = vmatpush1.msra.mxu0 0.0
    %1539 = vmatprep.subr.mxu0 0.0
    %1540 = vmatpush1.msra.mxu0 0.0
    %1541 = vmatprep.subr.mxu0 0.0
    %1542 = vmatpush1.msra.mxu0 0.0
    %1543 = vmatprep.subr.mxu0 0.0
    %1544 = vmatpush1.msra.mxu0 0.0
    %1545 = vmatprep.subr.mxu0 0.0
    %1546 = vmatpush1.msra.mxu0 0.0
    %1547 = vmatprep.subr.mxu0 0.0
    %1548 = vmatpush1.msra.mxu0 0.0
    %1549 = vmatprep.subr.mxu0 0.0
    %1550 = vmatpush1.msra.mxu0 0.0
    %1551 = vmatprep.subr.mxu0 0.0
    %1552 = vmatpush1.msra.mxu0 0.0
    %1553 = vmatprep.subr.mxu0 0.0
    %1554 = vmatpush1.msra.mxu0 0.0
    %1555 = vmatprep.subr.mxu0 0.0
    %1556 = vmatpush1.msra.mxu0 0.0
    %1557 = vmatprep.subr.mxu0 0.0
    %1558 = vmatpush1.msra.mxu0 0.0
    %1559 = vmatprep.subr.mxu0 0.0
    %1560 = vmatpush1.msra.mxu0 0.0
    %1561 = vmatprep.subr.mxu0 0.0
    %1562 = vmatpush1.msra.mxu0 0.0
    %1563 = vmatprep.mubr.f32.mxu0 0.0
    %1564 = vmatmul.mubr.f32.gmra.mrb[0].mxu0 %v1497
    %v1565 = vpop.f32.mrb[0].mxu0
    %v1566 = vadd.f32 0.0, %v1565
    %v1567 = vpop.f32.mrb[0].mxu0
    %1568 = vdwg.mxu0
    %v1569 = vadd.f32 %v1496, %v1566
    %v1570 = vxor.u32 %v1569, 2147483648
    %v1571 = vmul.f32 %v1570, 1.442695
    %v1572 = vpow.pop %v1571
    %v1573 = vadd.f32 %v1572, 1.0
    %v1574 = vrcp.pop %v1573
    %v1575 = vmul.f32 1.0, %v1574
    %v1576 = vtanh.pop %v1569
    %v1577 = vmul.f32 %v1575, %v1484
    %1579 = vrot.lane.b32.xlu0 %v1576, 96
    %v1580 = vpop.permute.xlu0 %1579
    %v1582 = vmul.f32 %v1575, %v1580
    %1584 = vrot.lane.b32.xlu0 %v1582, 16
    %v1585 = vpop.permute.xlu0 %1584
    %v1587 = vadd.f32 %v1577, %v1585
    %v1588 = vtanh.pop %v1587
    %1590 = vrot.lane.b32.xlu0 %v1588, 32
    %v1591 = vpop.permute.xlu0 %1590
    %v1593 = vmul.f32 %v1575, %v1591
    %1595 = vrot.lane.b32.xlu0 %v1593, 80
    %v1596 = vpop.permute.xlu0 %1595
    %1598 = vst.msk [vmem:[%s606] sm:$0xff] %vm50, %v1596
    %v1599 = vld [vmem:[%s608] sm:$0xff]
    %v1600 = vsel %vm50, %v1596, 0
    %1602 = vmatprep.subr.mxu0 0.0
    %1603 = vmatpush1.msra.mxu0 %v1037
    %1604 = vmatprep.subr.mxu0 0.0
    %1605 = vmatpush1.msra.mxu0 %v1038
    %1606 = vmatprep.subr.mxu0 0.0
    %1607 = vmatpush1.msra.mxu0 0.0
    %1608 = vmatprep.subr.mxu0 0.0
    %1609 = vmatpush1.msra.mxu0 0.0
    %1610 = vmatprep.subr.mxu0 0.0
    %1611 = vmatpush1.msra.mxu0 0.0
    %1612 = vmatprep.subr.mxu0 0.0
    %1613 = vmatpush1.msra.mxu0 0.0
    %1614 = vmatprep.subr.mxu0 0.0
    %1615 = vmatpush1.msra.mxu0 0.0
    %1616 = vmatprep.subr.mxu0 0.0
    %1617 = vmatpush1.msra.mxu0 0.0
    %1618 = vmatprep.subr.mxu0 0.0
    %1619 = vmatpush1.msra.mxu0 0.0
    %1620 = vmatprep.subr.mxu0 0.0
    %1621 = vmatpush1.msra.mxu0 0.0
    %1622 = vmatprep.subr.mxu0 0.0
    %1623 = vmatpush1.msra.mxu0 0.0
    %1624 = vmatprep.subr.mxu0 0.0
    %1625 = vmatpush1.msra.mxu0 0.0
    %1626 = vmatprep.subr.mxu0 0.0
    %1627 = vmatpush1.msra.mxu0 0.0
    %1628 = vmatprep.subr.mxu0 0.0
    %1629 = vmatpush1.msra.mxu0 0.0
    %1630 = vmatprep.subr.mxu0 0.0
    %1631 = vmatpush1.msra.mxu0 0.0
    %1632 = vmatprep.subr.mxu0 0.0
    %1633 = vmatpush1.msra.mxu0 0.0
    %1634 = vmatprep.subr.mxu0 0.0
    %1635 = vmatpush1.msra.mxu0 0.0
    %1636 = vmatprep.subr.mxu0 0.0
    %1637 = vmatpush1.msra.mxu0 0.0
    %1638 = vmatprep.subr.mxu0 0.0
    %1639 = vmatpush1.msra.mxu0 0.0
    %1640 = vmatprep.subr.mxu0 0.0
    %1641 = vmatpush1.msra.mxu0 0.0
    %1642 = vmatprep.subr.mxu0 0.0
    %1643 = vmatpush1.msra.mxu0 0.0
    %1644 = vmatprep.subr.mxu0 0.0
    %1645 = vmatpush1.msra.mxu0 0.0
    %1646 = vmatprep.subr.mxu0 0.0
    %1647 = vmatpush1.msra.mxu0 0.0
    %1648 = vmatprep.subr.mxu0 0.0
    %1649 = vmatpush1.msra.mxu0 0.0
    %1650 = vmatprep.subr.mxu0 0.0
    %1651 = vmatpush1.msra.mxu0 0.0
    %1652 = vmatprep.subr.mxu0 0.0
    %1653 = vmatpush1.msra.mxu0 0.0
    %1654 = vmatprep.subr.mxu0 0.0
    %1655 = vmatpush1.msra.mxu0 0.0
    %1656 = vmatprep.subr.mxu0 0.0
    %1657 = vmatpush1.msra.mxu0 0.0
    %1658 = vmatprep.subr.mxu0 0.0
    %1659 = vmatpush1.msra.mxu0 0.0
    %1660 = vmatprep.subr.mxu0 0.0
    %1661 = vmatpush1.msra.mxu0 0.0
    %1662 = vmatprep.subr.mxu0 0.0
    %1663 = vmatpush1.msra.mxu0 0.0
    %1664 = vmatprep.subr.mxu0 0.0
    %1665 = vmatpush1.msra.mxu0 0.0
    %1666 = vmatprep.mubr.f32.mxu0 0.0
    %1667 = vmatmul.mubr.f32.gmra.mrb[0].mxu0 %v1600
    %v1668 = vpop.f32.mrb[0].mxu0
    %v1669 = vadd.f32 0.0, %v1668
    %v1670 = vpop.f32.mrb[0].mxu0
    %1671 = vdwg.mxu0
    %v1672 = vadd.f32 %v1599, %v1669
    %v1673 = vxor.u32 %v1672, 2147483648
    %v1674 = vmul.f32 %v1673, 1.442695
    %v1675 = vpow.pop %v1674
    %v1676 = vadd.f32 %v1675, 1.0
    %v1677 = vrcp.pop %v1676
    %v1678 = vmul.f32 1.0, %v1677
    %v1679 = vtanh.pop %v1672
    %v1680 = vmul.f32 %v1678, %v1587
    %1682 = vrot.lane.b32.xlu0 %v1679, 96
    %v1683 = vpop.permute.xlu0 %1682
    %v1685 = vmul.f32 %v1678, %v1683
    %1687 = vrot.lane.b32.xlu0 %v1685, 16
    %v1688 = vpop.permute.xlu0 %1687
    %v1690 = vadd.f32 %v1680, %v1688
    %v1691 = vtanh.pop %v1690
    %1693 = vrot.lane.b32.xlu0 %v1691, 32
    %v1694 = vpop.permute.xlu0 %1693
    %v1696 = vmul.f32 %v1678, %v1694
    %1698 = vrot.lane.b32.xlu0 %v1696, 80
    %v1699 = vpop.permute.xlu0 %1698
    %1701 = vst.msk [vmem:[%s711] sm:$0xff] %vm50, %v1699
    %v1702 = vld [vmem:[%s713] sm:$0xff]
    %v1703 = vsel %vm50, %v1699, 0
    %1705 = vmatprep.subr.mxu0 0.0
    %1706 = vmatpush1.msra.mxu0 %v1037
    %1707 = vmatprep.subr.mxu0 0.0
    %1708 = vmatpush1.msra.mxu0 %v1038
    %1709 = vmatprep.subr.mxu0 0.0
    %1710 = vmatpush1.msra.mxu0 0.0
    %1711 = vmatprep.subr.mxu0 0.0
    %1712 = vmatpush1.msra.mxu0 0.0
    %1713 = vmatprep.subr.mxu0 0.0
    %1714 = vmatpush1.msra.mxu0 0.0
    %1715 = vmatprep.subr.mxu0 0.0
    %1716 = vmatpush1.msra.mxu0 0.0
    %1717 = vmatprep.subr.mxu0 0.0
    %1718 = vmatpush1.msra.mxu0 0.0
    %1719 = vmatprep.subr.mxu0 0.0
    %1720 = vmatpush1.msra.mxu0 0.0
    %1721 = vmatprep.subr.mxu0 0.0
    %1722 = vmatpush1.msra.mxu0 0.0
    %1723 = vmatprep.subr.mxu0 0.0
    %1724 = vmatpush1.msra.mxu0 0.0
    %1725 = vmatprep.subr.mxu0 0.0
    %1726 = vmatpush1.msra.mxu0 0.0
    %1727 = vmatprep.subr.mxu0 0.0
    %1728 = vmatpush1.msra.mxu0 0.0
    %1729 = vmatprep.subr.mxu0 0.0
    %1730 = vmatpush1.msra.mxu0 0.0
    %1731 = vmatprep.subr.mxu0 0.0
    %1732 = vmatpush1.msra.mxu0 0.0
    %1733 = vmatprep.subr.mxu0 0.0
    %1734 = vmatpush1.msra.mxu0 0.0
    %1735 = vmatprep.subr.mxu0 0.0
    %1736 = vmatpush1.msra.mxu0 0.0
    %1737 = vmatprep.subr.mxu0 0.0
    %1738 = vmatpush1.msra.mxu0 0.0
    %1739 = vmatprep.subr.mxu0 0.0
    %1740 = vmatpush1.msra.mxu0 0.0
    %1741 = vmatprep.subr.mxu0 0.0
    %1742 = vmatpush1.msra.mxu0 0.0
    %1743 = vmatprep.subr.mxu0 0.0
    %1744 = vmatpush1.msra.mxu0 0.0
    %1745 = vmatprep.subr.mxu0 0.0
    %1746 = vmatpush1.msra.mxu0 0.0
    %1747 = vmatprep.subr.mxu0 0.0
    %1748 = vmatpush1.msra.mxu0 0.0
    %1749 = vmatprep.subr.mxu0 0.0
    %1750 = vmatpush1.msra.mxu0 0.0
    %1751 = vmatprep.subr.mxu0 0.0
    %1752 = vmatpush1.msra.mxu0 0.0
    %1753 = vmatprep.subr.mxu0 0.0
    %1754 = vmatpush1.msra.mxu0 0.0
    %1755 = vmatprep.subr.mxu0 0.0
    %1756 = vmatpush1.msra.mxu0 0.0
    %1757 = vmatprep.subr.mxu0 0.0
    %1758 = vmatpush1.msra.mxu0 0.0
    %1759 = vmatprep.subr.mxu0 0.0
    %1760 = vmatpush1.msra.mxu0 0.0
    %1761 = vmatprep.subr.mxu0 0.0
    %1762 = vmatpush1.msra.mxu0 0.0
    %1763 = vmatprep.subr.mxu0 0.0
    %1764 = vmatpush1.msra.mxu0 0.0
    %1765 = vmatprep.subr.mxu0 0.0
    %1766 = vmatpush1.msra.mxu0 0.0
    %1767 = vmatprep.subr.mxu0 0.0
    %1768 = vmatpush1.msra.mxu0 0.0
    %1769 = vmatprep.mubr.f32.mxu0 0.0
    %1770 = vmatmul.mubr.f32.gmra.mrb[0].mxu0 %v1703
    %v1771 = vpop.f32.mrb[0].mxu0
    %v1772 = vadd.f32 0.0, %v1771
    %v1773 = vpop.f32.mrb[0].mxu0
    %1774 = vdwg.mxu0
    %v1775 = vadd.f32 %v1702, %v1772
    %v1776 = vxor.u32 %v1775, 2147483648
    %v1777 = vmul.f32 %v1776, 1.442695
    %v1778 = vpow.pop %v1777
    %v1779 = vadd.f32 %v1778, 1.0
    %v1780 = vrcp.pop %v1779
    %v1781 = vmul.f32 1.0, %v1780
    %v1782 = vtanh.pop %v1775
    %v1783 = vmul.f32 %v1781, %v1690
    %1785 = vrot.lane.b32.xlu0 %v1782, 96
    %v1786 = vpop.permute.xlu0 %1785
    %v1788 = vmul.f32 %v1781, %v1786
    %1790 = vrot.lane.b32.xlu0 %v1788, 16
    %v1791 = vpop.permute.xlu0 %1790
    %v1793 = vadd.f32 %v1783, %v1791
    %v1794 = vtanh.pop %v1793
    %1796 = vrot.lane.b32.xlu0 %v1794, 32
    %v1797 = vpop.permute.xlu0 %1796
    %v1799 = vmul.f32 %v1781, %v1797
    %1801 = vrot.lane.b32.xlu0 %v1799, 80
    %v1802 = vpop.permute.xlu0 %1801
    %1804 = vst.msk [vmem:[%s816] sm:$0xff] %vm50, %v1802
    %v1805 = vld [vmem:[%s818] sm:$0xff]
    %v1806 = vsel %vm50, %v1802, 0
    %1808 = vmatprep.subr.mxu0 0.0
    %1809 = vmatpush1.msra.mxu0 %v1037
    %1810 = vmatprep.subr.mxu0 0.0
    %1811 = vmatpush1.msra.mxu0 %v1038
    %1812 = vmatprep.subr.mxu0 0.0
    %1813 = vmatpush1.msra.mxu0 0.0
    %1814 = vmatprep.subr.mxu0 0.0
    %1815 = vmatpush1.msra.mxu0 0.0
    %1816 = vmatprep.subr.mxu0 0.0
    %1817 = vmatpush1.msra.mxu0 0.0
    %1818 = vmatprep.subr.mxu0 0.0
    %1819 = vmatpush1.msra.mxu0 0.0
    %1820 = vmatprep.subr.mxu0 0.0
    %1821 = vmatpush1.msra.mxu0 0.0
    %1822 = vmatprep.subr.mxu0 0.0
    %1823 = vmatpush1.msra.mxu0 0.0
    %1824 = vmatprep.subr.mxu0 0.0
    %1825 = vmatpush1.msra.mxu0 0.0
    %1826 = vmatprep.subr.mxu0 0.0
    %1827 = vmatpush1.msra.mxu0 0.0
    %1828 = vmatprep.subr.mxu0 0.0
    %1829 = vmatpush1.msra.mxu0 0.0
    %1830 = vmatprep.subr.mxu0 0.0
    %1831 = vmatpush1.msra.mxu0 0.0
    %1832 = vmatprep.subr.mxu0 0.0
    %1833 = vmatpush1.msra.mxu0 0.0
    %1834 = vmatprep.subr.mxu0 0.0
    %1835 = vmatpush1.msra.mxu0 0.0
    %1836 = vmatprep.subr.mxu0 0.0
    %1837 = vmatpush1.msra.mxu0 0.0
    %1838 = vmatprep.subr.mxu0 0.0
    %1839 = vmatpush1.msra.mxu0 0.0
    %1840 = vmatprep.subr.mxu0 0.0
    %1841 = vmatpush1.msra.mxu0 0.0
    %1842 = vmatprep.subr.mxu0 0.0
    %1843 = vmatpush1.msra.mxu0 0.0
    %1844 = vmatprep.subr.mxu0 0.0
    %1845 = vmatpush1.msra.mxu0 0.0
    %1846 = vmatprep.subr.mxu0 0.0
    %1847 = vmatpush1.msra.mxu0 0.0
    %1848 = vmatprep.subr.mxu0 0.0
    %1849 = vmatpush1.msra.mxu0 0.0
    %1850 = vmatprep.subr.mxu0 0.0
    %1851 = vmatpush1.msra.mxu0 0.0
    %1852 = vmatprep.subr.mxu0 0.0
    %1853 = vmatpush1.msra.mxu0 0.0
    %1854 = vmatprep.subr.mxu0 0.0
    %1855 = vmatpush1.msra.mxu0 0.0
    %1856 = vmatprep.subr.mxu0 0.0
    %1857 = vmatpush1.msra.mxu0 0.0
    %1858 = vmatprep.subr.mxu0 0.0
    %1859 = vmatpush1.msra.mxu0 0.0
    %1860 = vmatprep.subr.mxu0 0.0
    %1861 = vmatpush1.msra.mxu0 0.0
    %1862 = vmatprep.subr.mxu0 0.0
    %1863 = vmatpush1.msra.mxu0 0.0
    %1864 = vmatprep.subr.mxu0 0.0
    %1865 = vmatpush1.msra.mxu0 0.0
    %1866 = vmatprep.subr.mxu0 0.0
    %1867 = vmatpush1.msra.mxu0 0.0
    %1868 = vmatprep.subr.mxu0 0.0
    %1869 = vmatpush1.msra.mxu0 0.0
    %1870 = vmatprep.subr.mxu0 0.0
    %1871 = vmatpush1.msra.mxu0 0.0
    %1872 = vmatprep.mubr.f32.mxu0 0.0
    %1873 = vmatmul.mubr.f32.gmra.mrb[0].mxu0 %v1806
    %v1874 = vpop.f32.mrb[0].mxu0
    %v1875 = vadd.f32 0.0, %v1874
    %v1876 = vpop.f32.mrb[0].mxu0
    %1877 = vdwg.mxu0
    %v1878 = vadd.f32 %v1805, %v1875
    %v1879 = vxor.u32 %v1878, 2147483648
    %v1880 = vmul.f32 %v1879, 1.442695
    %v1881 = vpow.pop %v1880
    %v1882 = vadd.f32 %v1881, 1.0
    %v1883 = vrcp.pop %v1882
    %v1884 = vmul.f32 1.0, %v1883
    %v1885 = vtanh.pop %v1878
    %v1886 = vmul.f32 %v1884, %v1793
    %1888 = vrot.lane.b32.xlu0 %v1885, 96
    %v1889 = vpop.permute.xlu0 %1888
    %v1891 = vmul.f32 %v1884, %v1889
    %1893 = vrot.lane.b32.xlu0 %v1891, 16
    %v1894 = vpop.permute.xlu0 %1893
    %v1896 = vadd.f32 %v1886, %v1894
    %v1897 = vtanh.pop %v1896
    %1899 = vrot.lane.b32.xlu0 %v1897, 32
    %v1900 = vpop.permute.xlu0 %1899
    %v1902 = vmul.f32 %v1884, %v1900
    %1904 = vrot.lane.b32.xlu0 %v1902, 80
    %v1905 = vpop.permute.xlu0 %1904
    %1907 = vst.msk [vmem:[%s921] sm:$0xff] %vm50, %v1905
    %v1908 = vld [vmem:[%s923] sm:$0xff]
    %v1909 = vsel %vm50, %v1905, 0
    %1911 = vmatprep.subr.mxu0 0.0
    %1912 = vmatpush1.msra.mxu0 %v1037
    %1913 = vmatprep.subr.mxu0 0.0
    %1914 = vmatpush1.msra.mxu0 %v1038
    %1915 = vmatprep.subr.mxu0 0.0
    %1916 = vmatpush1.msra.mxu0 0.0
    %1917 = vmatprep.subr.mxu0 0.0
    %1918 = vmatpush1.msra.mxu0 0.0
    %1919 = vmatprep.subr.mxu0 0.0
    %1920 = vmatpush1.msra.mxu0 0.0
    %1921 = vmatprep.subr.mxu0 0.0
    %1922 = vmatpush1.msra.mxu0 0.0
    %1923 = vmatprep.subr.mxu0 0.0
    %1924 = vmatpush1.msra.mxu0 0.0
    %1925 = vmatprep.subr.mxu0 0.0
    %1926 = vmatpush1.msra.mxu0 0.0
    %1927 = vmatprep.subr.mxu0 0.0
    %1928 = vmatpush1.msra.mxu0 0.0
    %1929 = vmatprep.subr.mxu0 0.0
    %1930 = vmatpush1.msra.mxu0 0.0
    %1931 = vmatprep.subr.mxu0 0.0
    %1932 = vmatpush1.msra.mxu0 0.0
    %1933 = vmatprep.subr.mxu0 0.0
    %1934 = vmatpush1.msra.mxu0 0.0
    %1935 = vmatprep.subr.mxu0 0.0
    %1936 = vmatpush1.msra.mxu0 0.0
    %1937 = vmatprep.subr.mxu0 0.0
    %1938 = vmatpush1.msra.mxu0 0.0
    %1939 = vmatprep.subr.mxu0 0.0
    %1940 = vmatpush1.msra.mxu0 0.0
    %1941 = vmatprep.subr.mxu0 0.0
    %1942 = vmatpush1.msra.mxu0 0.0
    %1943 = vmatprep.subr.mxu0 0.0
    %1944 = vmatpush1.msra.mxu0 0.0
    %1945 = vmatprep.subr.mxu0 0.0
    %1946 = vmatpush1.msra.mxu0 0.0
    %1947 = vmatprep.subr.mxu0 0.0
    %1948 = vmatpush1.msra.mxu0 0.0
    %1949 = vmatprep.subr.mxu0 0.0
    %1950 = vmatpush1.msra.mxu0 0.0
    %1951 = vmatprep.subr.mxu0 0.0
    %1952 = vmatpush1.msra.mxu0 0.0
    %1953 = vmatprep.subr.mxu0 0.0
    %1954 = vmatpush1.msra.mxu0 0.0
    %1955 = vmatprep.subr.mxu0 0.0
    %1956 = vmatpush1.msra.mxu0 0.0
    %1957 = vmatprep.subr.mxu0 0.0
    %1958 = vmatpush1.msra.mxu0 0.0
    %1959 = vmatprep.subr.mxu0 0.0
    %1960 = vmatpush1.msra.mxu0 0.0
    %1961 = vmatprep.subr.mxu0 0.0
    %1962 = vmatpush1.msra.mxu0 0.0
    %1963 = vmatprep.subr.mxu0 0.0
    %1964 = vmatpush1.msra.mxu0 0.0
    %1965 = vmatprep.subr.mxu0 0.0
    %1966 = vmatpush1.msra.mxu0 0.0
    %1967 = vmatprep.subr.mxu0 0.0
    %1968 = vmatpush1.msra.mxu0 0.0
    %1969 = vmatprep.subr.mxu0 0.0
    %1970 = vmatpush1.msra.mxu0 0.0
    %1971 = vmatprep.subr.mxu0 0.0
    %1972 = vmatpush1.msra.mxu0 0.0
    %1973 = vmatprep.subr.mxu0 0.0
    %1974 = vmatpush1.msra.mxu0 0.0
    %1975 = vmatprep.mubr.f32.mxu0 0.0
    %1976 = vmatmul.mubr.f32.gmra.mrb[0].mxu0 %v1909
    %v1977 = vpop.f32.mrb[0].mxu0
    %v1978 = vadd.f32 0.0, %v1977
    %v1979 = vpop.f32.mrb[0].mxu0
    %1980 = vdwg.mxu0
    %v1981 = vadd.f32 %v1908, %v1978
    %v1982 = vxor.u32 %v1981, 2147483648
    %v1983 = vmul.f32 %v1982, 1.442695
    %v1984 = vpow.pop %v1983
    %v1985 = vadd.f32 %v1984, 1.0
    %v1986 = vrcp.pop %v1985
    %v1987 = vmul.f32 1.0, %v1986
    %v1988 = vtanh.pop %v1981
    %v1989 = vmul.f32 %v1987, %v1896
    %1991 = vrot.lane.b32.xlu0 %v1988, 96
    %v1992 = vpop.permute.xlu0 %1991
    %v1994 = vmul.f32 %v1987, %v1992
    %1996 = vrot.lane.b32.xlu0 %v1994, 16
    %v1997 = vpop.permute.xlu0 %1996
    %v1999 = vadd.f32 %v1989, %v1997
    %v2000 = vtanh.pop %v1999
    %2002 = vrot.lane.b32.xlu0 %v2000, 32
    %v2003 = vpop.permute.xlu0 %2002
    %v2005 = vmul.f32 %v1987, %v2003
    %2007 = vrot.lane.b32.xlu0 %v2005, 80
    %v2008 = vpop.permute.xlu0 %2007
    %2010 = vst.msk [vmem:[%s1026] sm:$0xff] %vm50, %v2008
    %v2011 = vld [vmem:[%s4] sm:$0xff]
    %v2012 = vld [vmem:[%s4 + $0x8] sm:$0xff]
    %v2013 = vld [vmem:[%s4 + $0x10] sm:$0xff]
    %v2014 = vld [vmem:[%s4 + $0x18] sm:$0xff]
    %v2015 = vld [vmem:[%s4 + $0x20] sm:$0xff]
    %v2016 = vld [vmem:[%s4 + $0x28] sm:$0xff]
    %v2017 = vld [vmem:[%s4 + $0x30] sm:$0xff]
    %v2018 = vld [vmem:[%s4 + $0x38] sm:$0xff]
    %s2019 = scalar_lea.vmem %s2, 32
    %v2020 = vld [vmem:[%s2019] sm:$0xff]
    %v2021 = vld [vmem:[%s2019 + $0x8] sm:$0xff]
    %s2022 = scalar_lea.vmem [#allocation3], 32
    %v2023 = vld [vmem:[%s2022] sm:$0xff]
    %v2024 = vld [vmem:[%s2022 + $0x8] sm:$0xff]
    %s2025 = scalar_lea.vmem %s3, 2
    %v2026 = vld [vmem:[%s2025] sm:$0x1]
    %v2028 = vlaneseq
    %v2029 = vshrl.u32 %v2028, 7
    %v2030 = vsub.s32 0, %v2029
    %v2031 = vrot.slane %v2026, %v2030
    %v2034 = vsel %vm50, %v2011, 0
    %v2037 = vsel %vm50, %v2012, 0
    %v2040 = vsel %vm50, %v2013, 0
    %v2043 = vsel %vm50, %v2014, 0
    %v2046 = vsel %vm50, %v2015, 0
    %v2049 = vsel %vm50, %v2016, 0
    %v2052 = vsel %vm50, %v2017, 0
    %v2055 = vsel %vm50, %v2018, 0
    %2057 = vmatprep.subr.mxu0 0.0
    %2058 = vmatpush1.msra.mxu0 %v2023
    %2059 = vmatprep.subr.mxu0 0.0
    %2060 = vmatpush1.msra.mxu0 %v2024
    %2061 = vmatprep.subr.mxu0 0.0
    %2062 = vmatpush1.msra.mxu0 0.0
    %2063 = vmatprep.subr.mxu0 0.0
    %2064 = vmatpush1.msra.mxu0 0.0
    %2065 = vmatprep.subr.mxu0 0.0
    %2066 = vmatpush1.msra.mxu0 0.0
    %2067 = vmatprep.subr.mxu0 0.0
    %2068 = vmatpush1.msra.mxu0 0.0
    %2069 = vmatprep.subr.mxu0 0.0
    %2070 = vmatpush1.msra.mxu0 0.0
    %2071 = vmatprep.subr.mxu0 0.0
    %2072 = vmatpush1.msra.mxu0 0.0
    %2073 = vmatprep.subr.mxu0 0.0
    %2074 = vmatpush1.msra.mxu0 0.0
    %2075 = vmatprep.subr.mxu0 0.0
    %2076 = vmatpush1.msra.mxu0 0.0
    %2077 = vmatprep.subr.mxu0 0.0
    %2078 = vmatpush1.msra.mxu0 0.0
    %2079 = vmatprep.subr.mxu0 0.0
    %2080 = vmatpush1.msra.mxu0 0.0
    %2081 = vmatprep.subr.mxu0 0.0
    %2082 = vmatpush1.msra.mxu0 0.0
    %2083 = vmatprep.subr.mxu0 0.0
    %2084 = vmatpush1.msra.mxu0 0.0
    %2085 = vmatprep.subr.mxu0 0.0
    %2086 = vmatpush1.msra.mxu0 0.0
    %2087 = vmatprep.subr.mxu0 0.0
    %2088 = vmatpush1.msra.mxu0 0.0
    %2089 = vmatprep.subr.mxu0 0.0
    %2090 = vmatpush1.msra.mxu0 0.0
    %2091 = vmatprep.subr.mxu0 0.0
    %2092 = vmatpush1.msra.mxu0 0.0
    %2093 = vmatprep.subr.mxu0 0.0
    %2094 = vmatpush1.msra.mxu0 0.0
    %2095 = vmatprep.subr.mxu0 0.0
    %2096 = vmatpush1.msra.mxu0 0.0
    %2097 = vmatprep.subr.mxu0 0.0
    %2098 = vmatpush1.msra.mxu0 0.0
    %2099 = vmatprep.subr.mxu0 0.0
    %2100 = vmatpush1.msra.mxu0 0.0
    %2101 = vmatprep.subr.mxu0 0.0
    %2102 = vmatpush1.msra.mxu0 0.0
    %2103 = vmatprep.subr.mxu0 0.0
    %2104 = vmatpush1.msra.mxu0 0.0
    %2105 = vmatprep.subr.mxu0 0.0
    %2106 = vmatpush1.msra.mxu0 0.0
    %2107 = vmatprep.subr.mxu0 0.0
    %2108 = vmatpush1.msra.mxu0 0.0
    %2109 = vmatprep.subr.mxu0 0.0
    %2110 = vmatpush1.msra.mxu0 0.0
    %2111 = vmatprep.subr.mxu0 0.0
    %2112 = vmatpush1.msra.mxu0 0.0
    %2113 = vmatprep.subr.mxu0 0.0
    %2114 = vmatpush1.msra.mxu0 0.0
    %2115 = vmatprep.subr.mxu0 0.0
    %2116 = vmatpush1.msra.mxu0 0.0
    %2117 = vmatprep.subr.mxu0 0.0
    %2118 = vmatpush1.msra.mxu0 0.0
    %2119 = vmatprep.subr.mxu0 0.0
    %2120 = vmatpush1.msra.mxu0 0.0
    %2121 = vmatprep.mubr.f32.mxu0 0.0
    %2122 = vmatmul.mubr.f32.gmra.mrb[0].mxu0 %v2034
    %v2123 = vpop.f32.mrb[0].mxu0
    %v2124 = vadd.f32 %v2031, %v2123
    %v2125 = vpop.f32.mrb[0].mxu0
    %2126 = vmatprep.mubr.f32.mxu0 0.0
    %2127 = vmatmul.mubr.f32.gmra.mrb[0].mxu0 %v2037
    %v2128 = vpop.f32.mrb[0].mxu0
    %v2129 = vadd.f32 %v2031, %v2128
    %v2130 = vpop.f32.mrb[0].mxu0
    %2131 = vmatprep.mubr.f32.mxu0 0.0
    %2132 = vmatmul.mubr.f32.gmra.mrb[0].mxu0 %v2040
    %v2133 = vpop.f32.mrb[0].mxu0
    %v2134 = vadd.f32 %v2031, %v2133
    %v2135 = vpop.f32.mrb[0].mxu0
    %2136 = vmatprep.mubr.f32.mxu0 0.0
    %2137 = vmatmul.mubr.f32.gmra.mrb[0].mxu0 %v2043
    %v2138 = vpop.f32.mrb[0].mxu0
    %v2139 = vadd.f32 %v2031, %v2138
    %v2140 = vpop.f32.mrb[0].mxu0
    %2141 = vmatprep.mubr.f32.mxu0 0.0
    %2142 = vmatmul.mubr.f32.gmra.mrb[0].mxu0 %v2046
    %v2143 = vpop.f32.mrb[0].mxu0
    %v2144 = vadd.f32 %v2031, %v2143
    %v2145 = vpop.f32.mrb[0].mxu0
    %2146 = vmatprep.mubr.f32.mxu0 0.0
    %2147 = vmatmul.mubr.f32.gmra.mrb[0].mxu0 %v2049
    %v2148 = vpop.f32.mrb[0].mxu0
    %v2149 = vadd.f32 %v2031, %v2148
    %v2150 = vpop.f32.mrb[0].mxu0
    %2151 = vmatprep.mubr.f32.mxu0 0.0
    %2152 = vmatmul.mubr.f32.gmra.mrb[0].mxu0 %v2052
    %v2153 = vpop.f32.mrb[0].mxu0
    %v2154 = vadd.f32 %v2031, %v2153
    %v2155 = vpop.f32.mrb[0].mxu0
    %2156 = vmatprep.mubr.f32.mxu0 0.0
    %2157 = vmatmul.mubr.f32.gmra.mrb[0].mxu0 %v2055
    %v2158 = vpop.f32.mrb[0].mxu0
    %v2159 = vadd.f32 %v2031, %v2158
    %v2160 = vpop.f32.mrb[0].mxu0
    %2161 = vdwg.mxu0
    %2162 = vst.msk [vmem:[#allocation2] sm:$0xff] %vm180, %v2124
    %2163 = vst.msk [vmem:[#allocation2 + $0x8] sm:$0xff] %vm180, %v2129
    %2164 = vst.msk [vmem:[#allocation2 + $0x10] sm:$0xff] %vm180, %v2134
    %2165 = vst.msk [vmem:[#allocation2 + $0x18] sm:$0xff] %vm180, %v2139
    %2166 = vst.msk [vmem:[#allocation2 + $0x20] sm:$0xff] %vm180, %v2144
    %2167 = vst.msk [vmem:[#allocation2 + $0x28] sm:$0xff] %vm180, %v2149
    %2168 = vst.msk [vmem:[#allocation2 + $0x30] sm:$0xff] %vm180, %v2154
    %2169 = vst.msk [vmem:[#allocation2 + $0x38] sm:$0xff] %vm180, %v2159
    %v2170 = vld [vmem:[#allocation2] sm:$0xff]
    %2171 = vmatprep.subr.mxu0 0.0
    %2172 = vmatpush1.msra.mxu0 %v2020
    %2173 = vmatprep.subr.mxu0 0.0
    %2174 = vmatpush1.msra.mxu0 %v2021
    %2175 = vmatprep.subr.mxu0 0.0
    %2176 = vmatpush1.msra.mxu0 0.0
    %2177 = vmatprep.subr.mxu0 0.0
    %2178 = vmatpush1.msra.mxu0 0.0
    %2179 = vmatprep.subr.mxu0 0.0
    %2180 = vmatpush1.msra.mxu0 0.0
    %2181 = vmatprep.subr.mxu0 0.0
    %2182 = vmatpush1.msra.mxu0 0.0
    %2183 = vmatprep.subr.mxu0 0.0
    %2184 = vmatpush1.msra.mxu0 0.0
    %2185 = vmatprep.subr.mxu0 0.0
    %2186 = vmatpush1.msra.mxu0 0.0
    %2187 = vmatprep.subr.mxu0 0.0
    %2188 = vmatpush1.msra.mxu0 0.0
    %2189 = vmatprep.subr.mxu0 0.0
    %2190 = vmatpush1.msra.mxu0 0.0
    %2191 = vmatprep.subr.mxu0 0.0
    %2192 = vmatpush1.msra.mxu0 0.0
    %2193 = vmatprep.subr.mxu0 0.0
    %2194 = vmatpush1.msra.mxu0 0.0
    %2195 = vmatprep.subr.mxu0 0.0
    %2196 = vmatpush1.msra.mxu0 0.0
    %2197 = vmatprep.subr.mxu0 0.0
    %2198 = vmatpush1.msra.mxu0 0.0
    %2199 = vmatprep.subr.mxu0 0.0
    %2200 = vmatpush1.msra.mxu0 0.0
    %2201 = vmatprep.subr.mxu0 0.0
    %2202 = vmatpush1.msra.mxu0 0.0
    %2203 = vmatprep.subr.mxu0 0.0
    %2204 = vmatpush1.msra.mxu0 0.0
    %2205 = vmatprep.subr.mxu0 0.0
    %2206 = vmatpush1.msra.mxu0 0.0
    %2207 = vmatprep.subr.mxu0 0.0
    %2208 = vmatpush1.msra.mxu0 0.0
    %2209 = vmatprep.subr.mxu0 0.0
    %2210 = vmatpush1.msra.mxu0 0.0
    %2211 = vmatprep.subr.mxu0 0.0
    %2212 = vmatpush1.msra.mxu0 0.0
    %2213 = vmatprep.subr.mxu0 0.0
    %2214 = vmatpush1.msra.mxu0 0.0
    %2215 = vmatprep.subr.mxu0 0.0
    %2216 = vmatpush1.msra.mxu0 0.0
    %2217 = vmatprep.subr.mxu0 0.0
    %2218 = vmatpush1.msra.mxu0 0.0
    %2219 = vmatprep.subr.mxu0 0.0
    %2220 = vmatpush1.msra.mxu0 0.0
    %2221 = vmatprep.subr.mxu0 0.0
    %2222 = vmatpush1.msra.mxu0 0.0
    %2223 = vmatprep.subr.mxu0 0.0
    %2224 = vmatpush1.msra.mxu0 0.0
    %2225 = vmatprep.subr.mxu0 0.0
    %2226 = vmatpush1.msra.mxu0 0.0
    %2227 = vmatprep.subr.mxu0 0.0
    %2228 = vmatpush1.msra.mxu0 0.0
    %2229 = vmatprep.subr.mxu0 0.0
    %2230 = vmatpush1.msra.mxu0 0.0
    %2231 = vmatprep.subr.mxu0 0.0
    %2232 = vmatpush1.msra.mxu0 0.0
    %2233 = vmatprep.subr.mxu0 0.0
    %2234 = vmatpush1.msra.mxu0 0.0
    %2235 = vmatprep.mubr.f32.mxu0 0.0
    %2236 = vmatmul.mubr.f32.gmra.mrb[0].mxu0 %v1188
    %v2237 = vpop.f32.mrb[0].mxu0
    %v2238 = vadd.f32 0.0, %v2237
    %v2239 = vpop.f32.mrb[0].mxu0
    %2240 = vdwg.mxu0
    %v2241 = vadd.f32 %v2170, %v2238
    %v2242 = vxor.u32 %v2241, 2147483648
    %v2243 = vmul.f32 %v2242, 1.442695
    %v2244 = vpow.pop %v2243
    %v2245 = vadd.f32 %v2244, 1.0
    %v2246 = vrcp.pop %v2245
    %v2247 = vmul.f32 1.0, %v2246
    %v2248 = vtanh.pop %v2241
    %v2249 = vmul.f32 %v2247, %v1015
    %2251 = vrot.lane.b32.xlu0 %v2248, 96
    %v2252 = vpop.permute.xlu0 %2251
    %v2254 = vmul.f32 %v2247, %v2252
    %2256 = vrot.lane.b32.xlu0 %v2254, 16
    %v2257 = vpop.permute.xlu0 %2256
    %v2259 = vadd.f32 %v2249, %v2257
    %v2260 = vtanh.pop %v2259
    %2262 = vrot.lane.b32.xlu0 %v2260, 32
    %v2263 = vpop.permute.xlu0 %2262
    %v2265 = vmul.f32 %v2247, %v2263
    %2267 = vrot.lane.b32.xlu0 %v2265, 80
    %v2268 = vpop.permute.xlu0 %2267
    %2270 = vst.msk [vmem:[%s4] sm:$0xff] %vm50, %v2268
    %v2271 = vld [vmem:[%s293] sm:$0xff]
    %v2272 = vsel %vm50, %v2268, 0
    %2274 = vmatprep.subr.mxu0 0.0
    %2275 = vmatpush1.msra.mxu0 %v2020
    %2276 = vmatprep.subr.mxu0 0.0
    %2277 = vmatpush1.msra.mxu0 %v2021
    %2278 = vmatprep.subr.mxu0 0.0
    %2279 = vmatpush1.msra.mxu0 0.0
    %2280 = vmatprep.subr.mxu0 0.0
    %2281 = vmatpush1.msra.mxu0 0.0
    %2282 = vmatprep.subr.mxu0 0.0
    %2283 = vmatpush1.msra.mxu0 0.0
    %2284 = vmatprep.subr.mxu0 0.0
    %2285 = vmatpush1.msra.mxu0 0.0
    %2286 = vmatprep.subr.mxu0 0.0
    %2287 = vmatpush1.msra.mxu0 0.0
    %2288 = vmatprep.subr.mxu0 0.0
    %2289 = vmatpush1.msra.mxu0 0.0
    %2290 = vmatprep.subr.mxu0 0.0
    %2291 = vmatpush1.msra.mxu0 0.0
    %2292 = vmatprep.subr.mxu0 0.0
    %2293 = vmatpush1.msra.mxu0 0.0
    %2294 = vmatprep.subr.mxu0 0.0
    %2295 = vmatpush1.msra.mxu0 0.0
    %2296 = vmatprep.subr.mxu0 0.0
    %2297 = vmatpush1.msra.mxu0 0.0
    %2298 = vmatprep.subr.mxu0 0.0
    %2299 = vmatpush1.msra.mxu0 0.0
    %2300 = vmatprep.subr.mxu0 0.0
    %2301 = vmatpush1.msra.mxu0 0.0
    %2302 = vmatprep.subr.mxu0 0.0
    %2303 = vmatpush1.msra.mxu0 0.0
    %2304 = vmatprep.subr.mxu0 0.0
    %2305 = vmatpush1.msra.mxu0 0.0
    %2306 = vmatprep.subr.mxu0 0.0
    %2307 = vmatpush1.msra.mxu0 0.0
    %2308 = vmatprep.subr.mxu0 0.0
    %2309 = vmatpush1.msra.mxu0 0.0
    %2310 = vmatprep.subr.mxu0 0.0
    %2311 = vmatpush1.msra.mxu0 0.0
    %2312 = vmatprep.subr.mxu0 0.0
    %2313 = vmatpush1.msra.mxu0 0.0
    %2314 = vmatprep.subr.mxu0 0.0
    %2315 = vmatpush1.msra.mxu0 0.0
    %2316 = vmatprep.subr.mxu0 0.0
    %2317 = vmatpush1.msra.mxu0 0.0
    %2318 = vmatprep.subr.mxu0 0.0
    %2319 = vmatpush1.msra.mxu0 0.0
    %2320 = vmatprep.subr.mxu0 0.0
    %2321 = vmatpush1.msra.mxu0 0.0
    %2322 = vmatprep.subr.mxu0 0.0
    %2323 = vmatpush1.msra.mxu0 0.0
    %2324 = vmatprep.subr.mxu0 0.0
    %2325 = vmatpush1.msra.mxu0 0.0
    %2326 = vmatprep.subr.mxu0 0.0
    %2327 = vmatpush1.msra.mxu0 0.0
    %2328 = vmatprep.subr.mxu0 0.0
    %2329 = vmatpush1.msra.mxu0 0.0
    %2330 = vmatprep.subr.mxu0 0.0
    %2331 = vmatpush1.msra.mxu0 0.0
    %2332 = vmatprep.subr.mxu0 0.0
    %2333 = vmatpush1.msra.mxu0 0.0
    %2334 = vmatprep.subr.mxu0 0.0
    %2335 = vmatpush1.msra.mxu0 0.0
    %2336 = vmatprep.subr.mxu0 0.0
    %2337 = vmatpush1.msra.mxu0 0.0
    %2338 = vmatprep.mubr.f32.mxu0 0.0
    %2339 = vmatmul.mubr.f32.gmra.mrb[0].mxu0 %v2272
    %v2340 = vpop.f32.mrb[0].mxu0
    %v2341 = vadd.f32 0.0, %v2340
    %v2342 = vpop.f32.mrb[0].mxu0
    %2343 = vdwg.mxu0
    %v2344 = vadd.f32 %v2271, %v2341
    %v2345 = vxor.u32 %v2344, 2147483648
    %v2346 = vmul.f32 %v2345, 1.442695
    %v2347 = vpow.pop %v2346
    %v2348 = vadd.f32 %v2347, 1.0
    %v2349 = vrcp.pop %v2348
    %v2350 = vmul.f32 1.0, %v2349
    %v2351 = vtanh.pop %v2344
    %v2352 = vmul.f32 %v2350, %v2259
    %2354 = vrot.lane.b32.xlu0 %v2351, 96
    %v2355 = vpop.permute.xlu0 %2354
    %v2357 = vmul.f32 %v2350, %v2355
    %2359 = vrot.lane.b32.xlu0 %v2357, 16
    %v2360 = vpop.permute.xlu0 %2359
    %v2362 = vadd.f32 %v2352, %v2360
    %v2363 = vtanh.pop %v2362
    %2365 = vrot.lane.b32.xlu0 %v2363, 32
    %v2366 = vpop.permute.xlu0 %2365
    %v2368 = vmul.f32 %v2350, %v2366
    %2370 = vrot.lane.b32.xlu0 %v2368, 80
    %v2371 = vpop.permute.xlu0 %2370
    %2373 = vst.msk [vmem:[%s396] sm:$0xff] %vm50, %v2371
    %v2374 = vld [vmem:[%s398] sm:$0xff]
    %v2375 = vsel %vm50, %v2371, 0
    %2377 = vmatprep.subr.mxu0 0.0
    %2378 = vmatpush1.msra.mxu0 %v2020
    %2379 = vmatprep.subr.mxu0 0.0
    %2380 = vmatpush1.msra.mxu0 %v2021
    %2381 = vmatprep.subr.mxu0 0.0
    %2382 = vmatpush1.msra.mxu0 0.0
    %2383 = vmatprep.subr.mxu0 0.0
    %2384 = vmatpush1.msra.mxu0 0.0
    %2385 = vmatprep.subr.mxu0 0.0
    %2386 = vmatpush1.msra.mxu0 0.0
    %2387 = vmatprep.subr.mxu0 0.0
    %2388 = vmatpush1.msra.mxu0 0.0
    %2389 = vmatprep.subr.mxu0 0.0
    %2390 = vmatpush1.msra.mxu0 0.0
    %2391 = vmatprep.subr.mxu0 0.0
    %2392 = vmatpush1.msra.mxu0 0.0
    %2393 = vmatprep.subr.mxu0 0.0
    %2394 = vmatpush1.msra.mxu0 0.0
    %2395 = vmatprep.subr.mxu0 0.0
    %2396 = vmatpush1.msra.mxu0 0.0
    %2397 = vmatprep.subr.mxu0 0.0
    %2398 = vmatpush1.msra.mxu0 0.0
    %2399 = vmatprep.subr.mxu0 0.0
    %2400 = vmatpush1.msra.mxu0 0.0
    %2401 = vmatprep.subr.mxu0 0.0
    %2402 = vmatpush1.msra.mxu0 0.0
    %2403 = vmatprep.subr.mxu0 0.0
    %2404 = vmatpush1.msra.mxu0 0.0
    %2405 = vmatprep.subr.mxu0 0.0
    %2406 = vmatpush1.msra.mxu0 0.0
    %2407 = vmatprep.subr.mxu0 0.0
    %2408 = vmatpush1.msra.mxu0 0.0
    %2409 = vmatprep.subr.mxu0 0.0
    %2410 = vmatpush1.msra.mxu0 0.0
    %2411 = vmatprep.subr.mxu0 0.0
    %2412 = vmatpush1.msra.mxu0 0.0
    %2413 = vmatprep.subr.mxu0 0.0
    %2414 = vmatpush1.msra.mxu0 0.0
    %2415 = vmatprep.subr.mxu0 0.0
    %2416 = vmatpush1.msra.mxu0 0.0
    %2417 = vmatprep.subr.mxu0 0.0
    %2418 = vmatpush1.msra.mxu0 0.0
    %2419 = vmatprep.subr.mxu0 0.0
    %2420 = vmatpush1.msra.mxu0 0.0
    %2421 = vmatprep.subr.mxu0 0.0
    %2422 = vmatpush1.msra.mxu0 0.0
    %2423 = vmatprep.subr.mxu0 0.0
    %2424 = vmatpush1.msra.mxu0 0.0
    %2425 = vmatprep.subr.mxu0 0.0
    %2426 = vmatpush1.msra.mxu0 0.0
    %2427 = vmatprep.subr.mxu0 0.0
    %2428 = vmatpush1.msra.mxu0 0.0
    %2429 = vmatprep.subr.mxu0 0.0
    %2430 = vmatpush1.msra.mxu0 0.0
    %2431 = vmatprep.subr.mxu0 0.0
    %2432 = vmatpush1.msra.mxu0 0.0
    %2433 = vmatprep.subr.mxu0 0.0
    %2434 = vmatpush1.msra.mxu0 0.0
    %2435 = vmatprep.subr.mxu0 0.0
    %2436 = vmatpush1.msra.mxu0 0.0
    %2437 = vmatprep.subr.mxu0 0.0
    %2438 = vmatpush1.msra.mxu0 0.0
    %2439 = vmatprep.subr.mxu0 0.0
    %2440 = vmatpush1.msra.mxu0 0.0
    %2441 = vmatprep.mubr.f32.mxu0 0.0
    %2442 = vmatmul.mubr.f32.gmra.mrb[0].mxu0 %v2375
    %v2443 = vpop.f32.mrb[0].mxu0
    %v2444 = vadd.f32 0.0, %v2443
    %v2445 = vpop.f32.mrb[0].mxu0
    %2446 = vdwg.mxu0
    %v2447 = vadd.f32 %v2374, %v2444
    %v2448 = vxor.u32 %v2447, 2147483648
    %v2449 = vmul.f32 %v2448, 1.442695
    %v2450 = vpow.pop %v2449
    %v2451 = vadd.f32 %v2450, 1.0
    %v2452 = vrcp.pop %v2451
    %v2453 = vmul.f32 1.0, %v2452
    %v2454 = vtanh.pop %v2447
    %v2455 = vmul.f32 %v2453, %v2362
    %2457 = vrot.lane.b32.xlu0 %v2454, 96
    %v2458 = vpop.permute.xlu0 %2457
    %v2460 = vmul.f32 %v2453, %v2458
    %2462 = vrot.lane.b32.xlu0 %v2460, 16
    %v2463 = vpop.permute.xlu0 %2462
    %v2465 = vadd.f32 %v2455, %v2463
    %v2466 = vtanh.pop %v2465
    %2468 = vrot.lane.b32.xlu0 %v2466, 32
    %v2469 = vpop.permute.xlu0 %2468
    %v2471 = vmul.f32 %v2453, %v2469
    %2473 = vrot.lane.b32.xlu0 %v2471, 80
    %v2474 = vpop.permute.xlu0 %2473
    %2476 = vst.msk [vmem:[%s501] sm:$0xff] %vm50, %v2474
    %v2477 = vld [vmem:[%s503] sm:$0xff]
    %v2478 = vsel %vm50, %v2474, 0
    %2480 = vmatprep.subr.mxu0 0.0
    %2481 = vmatpush1.msra.mxu0 %v2020
    %2482 = vmatprep.subr.mxu0 0.0
    %2483 = vmatpush1.msra.mxu0 %v2021
    %2484 = vmatprep.subr.mxu0 0.0
    %2485 = vmatpush1.msra.mxu0 0.0
    %2486 = vmatprep.subr.mxu0 0.0
    %2487 = vmatpush1.msra.mxu0 0.0
    %2488 = vmatprep.subr.mxu0 0.0
    %2489 = vmatpush1.msra.mxu0 0.0
    %2490 = vmatprep.subr.mxu0 0.0
    %2491 = vmatpush1.msra.mxu0 0.0
    %2492 = vmatprep.subr.mxu0 0.0
    %2493 = vmatpush1.msra.mxu0 0.0
    %2494 = vmatprep.subr.mxu0 0.0
    %2495 = vmatpush1.msra.mxu0 0.0
    %2496 = vmatprep.subr.mxu0 0.0
    %2497 = vmatpush1.msra.mxu0 0.0
    %2498 = vmatprep.subr.mxu0 0.0
    %2499 = vmatpush1.msra.mxu0 0.0
    %2500 = vmatprep.subr.mxu0 0.0
    %2501 = vmatpush1.msra.mxu0 0.0
    %2502 = vmatprep.subr.mxu0 0.0
    %2503 = vmatpush1.msra.mxu0 0.0
    %2504 = vmatprep.subr.mxu0 0.0
    %2505 = vmatpush1.msra.mxu0 0.0
    %2506 = vmatprep.subr.mxu0 0.0
    %2507 = vmatpush1.msra.mxu0 0.0
    %2508 = vmatprep.subr.mxu0 0.0
    %2509 = vmatpush1.msra.mxu0 0.0
    %2510 = vmatprep.subr.mxu0 0.0
    %2511 = vmatpush1.msra.mxu0 0.0
    %2512 = vmatprep.subr.mxu0 0.0
    %2513 = vmatpush1.msra.mxu0 0.0
    %2514 = vmatprep.subr.mxu0 0.0
    %2515 = vmatpush1.msra.mxu0 0.0
    %2516 = vmatprep.subr.mxu0 0.0
    %2517 = vmatpush1.msra.mxu0 0.0
    %2518 = vmatprep.subr.mxu0 0.0
    %2519 = vmatpush1.msra.mxu0 0.0
    %2520 = vmatprep.subr.mxu0 0.0
    %2521 = vmatpush1.msra.mxu0 0.0
    %2522 = vmatprep.subr.mxu0 0.0
    %2523 = vmatpush1.msra.mxu0 0.0
    %2524 = vmatprep.subr.mxu0 0.0
    %2525 = vmatpush1.msra.mxu0 0.0
    %2526 = vmatprep.subr.mxu0 0.0
    %2527 = vmatpush1.msra.mxu0 0.0
    %2528 = vmatprep.subr.mxu0 0.0
    %2529 = vmatpush1.msra.mxu0 0.0
    %2530 = vmatprep.subr.mxu0 0.0
    %2531 = vmatpush1.msra.mxu0 0.0
    %2532 = vmatprep.subr.mxu0 0.0
    %2533 = vmatpush1.msra.mxu0 0.0
    %2534 = vmatprep.subr.mxu0 0.0
    %2535 = vmatpush1.msra.mxu0 0.0
    %2536 = vmatprep.subr.mxu0 0.0
    %2537 = vmatpush1.msra.mxu0 0.0
    %2538 = vmatprep.subr.mxu0 0.0
    %2539 = vmatpush1.msra.mxu0 0.0
    %2540 = vmatprep.subr.mxu0 0.0
    %2541 = vmatpush1.msra.mxu0 0.0
    %2542 = vmatprep.subr.mxu0 0.0
    %2543 = vmatpush1.msra.mxu0 0.0
    %2544 = vmatprep.mubr.f32.mxu0 0.0
    %2545 = vmatmul.mubr.f32.gmra.mrb[0].mxu0 %v2478
    %v2546 = vpop.f32.mrb[0].mxu0
    %v2547 = vadd.f32 0.0, %v2546
    %v2548 = vpop.f32.mrb[0].mxu0
    %2549 = vdwg.mxu0
    %v2550 = vadd.f32 %v2477, %v2547
    %v2551 = vxor.u32 %v2550, 2147483648
    %v2552 = vmul.f32 %v2551, 1.442695
    %v2553 = vpow.pop %v2552
    %v2554 = vadd.f32 %v2553, 1.0
    %v2555 = vrcp.pop %v2554
    %v2556 = vmul.f32 1.0, %v2555
    %v2557 = vtanh.pop %v2550
    %v2558 = vmul.f32 %v2556, %v2465
    %2560 = vrot.lane.b32.xlu0 %v2557, 96
    %v2561 = vpop.permute.xlu0 %2560
    %v2563 = vmul.f32 %v2556, %v2561
    %2565 = vrot.lane.b32.xlu0 %v2563, 16
    %v2566 = vpop.permute.xlu0 %2565
    %v2568 = vadd.f32 %v2558, %v2566
    %v2569 = vtanh.pop %v2568
    %2571 = vrot.lane.b32.xlu0 %v2569, 32
    %v2572 = vpop.permute.xlu0 %2571
    %v2574 = vmul.f32 %v2556, %v2572
    %2576 = vrot.lane.b32.xlu0 %v2574, 80
    %v2577 = vpop.permute.xlu0 %2576
    %2579 = vst.msk [vmem:[%s606] sm:$0xff] %vm50, %v2577
    %v2580 = vld [vmem:[%s608] sm:$0xff]
    %v2581 = vsel %vm50, %v2577, 0
    %2583 = vmatprep.subr.mxu0 0.0
    %2584 = vmatpush1.msra.mxu0 %v2020
    %2585 = vmatprep.subr.mxu0 0.0
    %2586 = vmatpush1.msra.mxu0 %v2021
    %2587 = vmatprep.subr.mxu0 0.0
    %2588 = vmatpush1.msra.mxu0 0.0
    %2589 = vmatprep.subr.mxu0 0.0
    %2590 = vmatpush1.msra.mxu0 0.0
    %2591 = vmatprep.subr.mxu0 0.0
    %2592 = vmatpush1.msra.mxu0 0.0
    %2593 = vmatprep.subr.mxu0 0.0
    %2594 = vmatpush1.msra.mxu0 0.0
    %2595 = vmatprep.subr.mxu0 0.0
    %2596 = vmatpush1.msra.mxu0 0.0
    %2597 = vmatprep.subr.mxu0 0.0
    %2598 = vmatpush1.msra.mxu0 0.0
    %2599 = vmatprep.subr.mxu0 0.0
    %2600 = vmatpush1.msra.mxu0 0.0
    %2601 = vmatprep.subr.mxu0 0.0
    %2602 = vmatpush1.msra.mxu0 0.0
    %2603 = vmatprep.subr.mxu0 0.0
    %2604 = vmatpush1.msra.mxu0 0.0
    %2605 = vmatprep.subr.mxu0 0.0
    %2606 = vmatpush1.msra.mxu0 0.0
    %2607 = vmatprep.subr.mxu0 0.0
    %2608 = vmatpush1.msra.mxu0 0.0
    %2609 = vmatprep.subr.mxu0 0.0
    %2610 = vmatpush1.msra.mxu0 0.0
    %2611 = vmatprep.subr.mxu0 0.0
    %2612 = vmatpush1.msra.mxu0 0.0
    %2613 = vmatprep.subr.mxu0 0.0
    %2614 = vmatpush1.msra.mxu0 0.0
    %2615 = vmatprep.subr.mxu0 0.0
    %2616 = vmatpush1.msra.mxu0 0.0
    %2617 = vmatprep.subr.mxu0 0.0
    %2618 = vmatpush1.msra.mxu0 0.0
    %2619 = vmatprep.subr.mxu0 0.0
    %2620 = vmatpush1.msra.mxu0 0.0
    %2621 = vmatprep.subr.mxu0 0.0
    %2622 = vmatpush1.msra.mxu0 0.0
    %2623 = vmatprep.subr.mxu0 0.0
    %2624 = vmatpush1.msra.mxu0 0.0
    %2625 = vmatprep.subr.mxu0 0.0
    %2626 = vmatpush1.msra.mxu0 0.0
    %2627 = vmatprep.subr.mxu0 0.0
    %2628 = vmatpush1.msra.mxu0 0.0
    %2629 = vmatprep.subr.mxu0 0.0
    %2630 = vmatpush1.msra.mxu0 0.0
    %2631 = vmatprep.subr.mxu0 0.0
    %2632 = vmatpush1.msra.mxu0 0.0
    %2633 = vmatprep.subr.mxu0 0.0
    %2634 = vmatpush1.msra.mxu0 0.0
    %2635 = vmatprep.subr.mxu0 0.0
    %2636 = vmatpush1.msra.mxu0 0.0
    %2637 = vmatprep.subr.mxu0 0.0
    %2638 = vmatpush1.msra.mxu0 0.0
    %2639 = vmatprep.subr.mxu0 0.0
    %2640 = vmatpush1.msra.mxu0 0.0
    %2641 = vmatprep.subr.mxu0 0.0
    %2642 = vmatpush1.msra.mxu0 0.0
    %2643 = vmatprep.subr.mxu0 0.0
    %2644 = vmatpush1.msra.mxu0 0.0
    %2645 = vmatprep.subr.mxu0 0.0
    %2646 = vmatpush1.msra.mxu0 0.0
    %2647 = vmatprep.mubr.f32.mxu0 0.0
    %2648 = vmatmul.mubr.f32.gmra.mrb[0].mxu0 %v2581
    %v2649 = vpop.f32.mrb[0].mxu0
    %v2650 = vadd.f32 0.0, %v2649
    %v2651 = vpop.f32.mrb[0].mxu0
    %2652 = vdwg.mxu0
    %v2653 = vadd.f32 %v2580, %v2650
    %v2654 = vxor.u32 %v2653, 2147483648
    %v2655 = vmul.f32 %v2654, 1.442695
    %v2656 = vpow.pop %v2655
    %v2657 = vadd.f32 %v2656, 1.0
    %v2658 = vrcp.pop %v2657
    %v2659 = vmul.f32 1.0, %v2658
    %v2660 = vtanh.pop %v2653
    %v2661 = vmul.f32 %v2659, %v2568
    %2663 = vrot.lane.b32.xlu0 %v2660, 96
    %v2664 = vpop.permute.xlu0 %2663
    %v2666 = vmul.f32 %v2659, %v2664
    %2668 = vrot.lane.b32.xlu0 %v2666, 16
    %v2669 = vpop.permute.xlu0 %2668
    %v2671 = vadd.f32 %v2661, %v2669
    %v2672 = vtanh.pop %v2671
    %2674 = vrot.lane.b32.xlu0 %v2672, 32
    %v2675 = vpop.permute.xlu0 %2674
    %v2677 = vmul.f32 %v2659, %v2675
    %2679 = vrot.lane.b32.xlu0 %v2677, 80
    %v2680 = vpop.permute.xlu0 %2679
    %2682 = vst.msk [vmem:[%s711] sm:$0xff] %vm50, %v2680
    %v2683 = vld [vmem:[%s713] sm:$0xff]
    %v2684 = vsel %vm50, %v2680, 0
    %2686 = vmatprep.subr.mxu0 0.0
    %2687 = vmatpush1.msra.mxu0 %v2020
    %2688 = vmatprep.subr.mxu0 0.0
    %2689 = vmatpush1.msra.mxu0 %v2021
    %2690 = vmatprep.subr.mxu0 0.0
    %2691 = vmatpush1.msra.mxu0 0.0
    %2692 = vmatprep.subr.mxu0 0.0
    %2693 = vmatpush1.msra.mxu0 0.0
    %2694 = vmatprep.subr.mxu0 0.0
    %2695 = vmatpush1.msra.mxu0 0.0
    %2696 = vmatprep.subr.mxu0 0.0
    %2697 = vmatpush1.msra.mxu0 0.0
    %2698 = vmatprep.subr.mxu0 0.0
    %2699 = vmatpush1.msra.mxu0 0.0
    %2700 = vmatprep.subr.mxu0 0.0
    %2701 = vmatpush1.msra.mxu0 0.0
    %2702 = vmatprep.subr.mxu0 0.0
    %2703 = vmatpush1.msra.mxu0 0.0
    %2704 = vmatprep.subr.mxu0 0.0
    %2705 = vmatpush1.msra.mxu0 0.0
    %2706 = vmatprep.subr.mxu0 0.0
    %2707 = vmatpush1.msra.mxu0 0.0
    %2708 = vmatprep.subr.mxu0 0.0
    %2709 = vmatpush1.msra.mxu0 0.0
    %2710 = vmatprep.subr.mxu0 0.0
    %2711 = vmatpush1.msra.mxu0 0.0
    %2712 = vmatprep.subr.mxu0 0.0
    %2713 = vmatpush1.msra.mxu0 0.0
    %2714 = vmatprep.subr.mxu0 0.0
    %2715 = vmatpush1.msra.mxu0 0.0
    %2716 = vmatprep.subr.mxu0 0.0
    %2717 = vmatpush1.msra.mxu0 0.0
    %2718 = vmatprep.subr.mxu0 0.0
    %2719 = vmatpush1.msra.mxu0 0.0
    %2720 = vmatprep.subr.mxu0 0.0
    %2721 = vmatpush1.msra.mxu0 0.0
    %2722 = vmatprep.subr.mxu0 0.0
    %2723 = vmatpush1.msra.mxu0 0.0
    %2724 = vmatprep.subr.mxu0 0.0
    %2725 = vmatpush1.msra.mxu0 0.0
    %2726 = vmatprep.subr.mxu0 0.0
    %2727 = vmatpush1.msra.mxu0 0.0
    %2728 = vmatprep.subr.mxu0 0.0
    %2729 = vmatpush1.msra.mxu0 0.0
    %2730 = vmatprep.subr.mxu0 0.0
    %2731 = vmatpush1.msra.mxu0 0.0
    %2732 = vmatprep.subr.mxu0 0.0
    %2733 = vmatpush1.msra.mxu0 0.0
    %2734 = vmatprep.subr.mxu0 0.0
    %2735 = vmatpush1.msra.mxu0 0.0
    %2736 = vmatprep.subr.mxu0 0.0
    %2737 = vmatpush1.msra.mxu0 0.0
    %2738 = vmatprep.subr.mxu0 0.0
    %2739 = vmatpush1.msra.mxu0 0.0
    %2740 = vmatprep.subr.mxu0 0.0
    %2741 = vmatpush1.msra.mxu0 0.0
    %2742 = vmatprep.subr.mxu0 0.0
    %2743 = vmatpush1.msra.mxu0 0.0
    %2744 = vmatprep.subr.mxu0 0.0
    %2745 = vmatpush1.msra.mxu0 0.0
    %2746 = vmatprep.subr.mxu0 0.0
    %2747 = vmatpush1.msra.mxu0 0.0
    %2748 = vmatprep.subr.mxu0 0.0
    %2749 = vmatpush1.msra.mxu0 0.0
    %2750 = vmatprep.mubr.f32.mxu0 0.0
    %2751 = vmatmul.mubr.f32.gmra.mrb[0].mxu0 %v2684
    %v2752 = vpop.f32.mrb[0].mxu0
    %v2753 = vadd.f32 0.0, %v2752
    %v2754 = vpop.f32.mrb[0].mxu0
    %2755 = vdwg.mxu0
    %v2756 = vadd.f32 %v2683, %v2753
    %v2757 = vxor.u32 %v2756, 2147483648
    %v2758 = vmul.f32 %v2757, 1.442695
    %v2759 = vpow.pop %v2758
    %v2760 = vadd.f32 %v2759, 1.0
    %v2761 = vrcp.pop %v2760
    %v2762 = vmul.f32 1.0, %v2761
    %v2763 = vtanh.pop %v2756
    %v2764 = vmul.f32 %v2762, %v2671
    %2766 = vrot.lane.b32.xlu0 %v2763, 96
    %v2767 = vpop.permute.xlu0 %2766
    %v2769 = vmul.f32 %v2762, %v2767
    %2771 = vrot.lane.b32.xlu0 %v2769, 16
    %v2772 = vpop.permute.xlu0 %2771
    %v2774 = vadd.f32 %v2764, %v2772
    %v2775 = vtanh.pop %v2774
    %2777 = vrot.lane.b32.xlu0 %v2775, 32
    %v2778 = vpop.permute.xlu0 %2777
    %v2780 = vmul.f32 %v2762, %v2778
    %2782 = vrot.lane.b32.xlu0 %v2780, 80
    %v2783 = vpop.permute.xlu0 %2782
    %2785 = vst.msk [vmem:[%s816] sm:$0xff] %vm50, %v2783
    %v2786 = vld [vmem:[%s818] sm:$0xff]
    %v2787 = vsel %vm50, %v2783, 0
    %2789 = vmatprep.subr.mxu0 0.0
    %2790 = vmatpush1.msra.mxu0 %v2020
    %2791 = vmatprep.subr.mxu0 0.0
    %2792 = vmatpush1.msra.mxu0 %v2021
    %2793 = vmatprep.subr.mxu0 0.0
    %2794 = vmatpush1.msra.mxu0 0.0
    %2795 = vmatprep.subr.mxu0 0.0
    %2796 = vmatpush1.msra.mxu0 0.0
    %2797 = vmatprep.subr.mxu0 0.0
    %2798 = vmatpush1.msra.mxu0 0.0
    %2799 = vmatprep.subr.mxu0 0.0
    %2800 = vmatpush1.msra.mxu0 0.0
    %2801 = vmatprep.subr.mxu0 0.0
    %2802 = vmatpush1.msra.mxu0 0.0
    %2803 = vmatprep.subr.mxu0 0.0
    %2804 = vmatpush1.msra.mxu0 0.0
    %2805 = vmatprep.subr.mxu0 0.0
    %2806 = vmatpush1.msra.mxu0 0.0
    %2807 = vmatprep.subr.mxu0 0.0
    %2808 = vmatpush1.msra.mxu0 0.0
    %2809 = vmatprep.subr.mxu0 0.0
    %2810 = vmatpush1.msra.mxu0 0.0
    %2811 = vmatprep.subr.mxu0 0.0
    %2812 = vmatpush1.msra.mxu0 0.0
    %2813 = vmatprep.subr.mxu0 0.0
    %2814 = vmatpush1.msra.mxu0 0.0
    %2815 = vmatprep.subr.mxu0 0.0
    %2816 = vmatpush1.msra.mxu0 0.0
    %2817 = vmatprep.subr.mxu0 0.0
    %2818 = vmatpush1.msra.mxu0 0.0
    %2819 = vmatprep.subr.mxu0 0.0
    %2820 = vmatpush1.msra.mxu0 0.0
    %2821 = vmatprep.subr.mxu0 0.0
    %2822 = vmatpush1.msra.mxu0 0.0
    %2823 = vmatprep.subr.mxu0 0.0
    %2824 = vmatpush1.msra.mxu0 0.0
    %2825 = vmatprep.subr.mxu0 0.0
    %2826 = vmatpush1.msra.mxu0 0.0
    %2827 = vmatprep.subr.mxu0 0.0
    %2828 = vmatpush1.msra.mxu0 0.0
    %2829 = vmatprep.subr.mxu0 0.0
    %2830 = vmatpush1.msra.mxu0 0.0
    %2831 = vmatprep.subr.mxu0 0.0
    %2832 = vmatpush1.msra.mxu0 0.0
    %2833 = vmatprep.subr.mxu0 0.0
    %2834 = vmatpush1.msra.mxu0 0.0
    %2835 = vmatprep.subr.mxu0 0.0
    %2836 = vmatpush1.msra.mxu0 0.0
    %2837 = vmatprep.subr.mxu0 0.0
    %2838 = vmatpush1.msra.mxu0 0.0
    %2839 = vmatprep.subr.mxu0 0.0
    %2840 = vmatpush1.msra.mxu0 0.0
    %2841 = vmatprep.subr.mxu0 0.0
    %2842 = vmatpush1.msra.mxu0 0.0
    %2843 = vmatprep.subr.mxu0 0.0
    %2844 = vmatpush1.msra.mxu0 0.0
    %2845 = vmatprep.subr.mxu0 0.0
    %2846 = vmatpush1.msra.mxu0 0.0
    %2847 = vmatprep.subr.mxu0 0.0
    %2848 = vmatpush1.msra.mxu0 0.0
    %2849 = vmatprep.subr.mxu0 0.0
    %2850 = vmatpush1.msra.mxu0 0.0
    %2851 = vmatprep.subr.mxu0 0.0
    %2852 = vmatpush1.msra.mxu0 0.0
    %2853 = vmatprep.mubr.f32.mxu0 0.0
    %2854 = vmatmul.mubr.f32.gmra.mrb[0].mxu0 %v2787
    %v2855 = vpop.f32.mrb[0].mxu0
    %v2856 = vadd.f32 0.0, %v2855
    %v2857 = vpop.f32.mrb[0].mxu0
    %2858 = vdwg.mxu0
    %v2859 = vadd.f32 %v2786, %v2856
    %v2860 = vxor.u32 %v2859, 2147483648
    %v2861 = vmul.f32 %v2860, 1.442695
    %v2862 = vpow.pop %v2861
    %v2863 = vadd.f32 %v2862, 1.0
    %v2864 = vrcp.pop %v2863
    %v2865 = vmul.f32 1.0, %v2864
    %v2866 = vtanh.pop %v2859
    %v2867 = vmul.f32 %v2865, %v2774
    %2869 = vrot.lane.b32.xlu0 %v2866, 96
    %v2870 = vpop.permute.xlu0 %2869
    %v2872 = vmul.f32 %v2865, %v2870
    %2874 = vrot.lane.b32.xlu0 %v2872, 16
    %v2875 = vpop.permute.xlu0 %2874
    %v2877 = vadd.f32 %v2867, %v2875
    %v2878 = vtanh.pop %v2877
    %2880 = vrot.lane.b32.xlu0 %v2878, 32
    %v2881 = vpop.permute.xlu0 %2880
    %v2883 = vmul.f32 %v2865, %v2881
    %2885 = vrot.lane.b32.xlu0 %v2883, 80
    %v2886 = vpop.permute.xlu0 %2885
    %2888 = vst.msk [vmem:[%s921] sm:$0xff] %vm50, %v2886
    %v2889 = vld [vmem:[%s923] sm:$0xff]
    %v2890 = vsel %vm50, %v2886, 0
    %2892 = vmatprep.subr.mxu0 0.0
    %2893 = vmatpush1.msra.mxu0 %v2020
    %2894 = vmatprep.subr.mxu0 0.0
    %2895 = vmatpush1.msra.mxu0 %v2021
    %2896 = vmatprep.subr.mxu0 0.0
    %2897 = vmatpush1.msra.mxu0 0.0
    %2898 = vmatprep.subr.mxu0 0.0
    %2899 = vmatpush1.msra.mxu0 0.0
    %2900 = vmatprep.subr.mxu0 0.0
    %2901 = vmatpush1.msra.mxu0 0.0
    %2902 = vmatprep.subr.mxu0 0.0
    %2903 = vmatpush1.msra.mxu0 0.0
    %2904 = vmatprep.subr.mxu0 0.0
    %2905 = vmatpush1.msra.mxu0 0.0
    %2906 = vmatprep.subr.mxu0 0.0
    %2907 = vmatpush1.msra.mxu0 0.0
    %2908 = vmatprep.subr.mxu0 0.0
    %2909 = vmatpush1.msra.mxu0 0.0
    %2910 = vmatprep.subr.mxu0 0.0
    %2911 = vmatpush1.msra.mxu0 0.0
    %2912 = vmatprep.subr.mxu0 0.0
    %2913 = vmatpush1.msra.mxu0 0.0
    %2914 = vmatprep.subr.mxu0 0.0
    %2915 = vmatpush1.msra.mxu0 0.0
    %2916 = vmatprep.subr.mxu0 0.0
    %2917 = vmatpush1.msra.mxu0 0.0
    %2918 = vmatprep.subr.mxu0 0.0
    %2919 = vmatpush1.msra.mxu0 0.0
    %2920 = vmatprep.subr.mxu0 0.0
    %2921 = vmatpush1.msra.mxu0 0.0
    %2922 = vmatprep.subr.mxu0 0.0
    %2923 = vmatpush1.msra.mxu0 0.0
    %2924 = vmatprep.subr.mxu0 0.0
    %2925 = vmatpush1.msra.mxu0 0.0
    %2926 = vmatprep.subr.mxu0 0.0
    %2927 = vmatpush1.msra.mxu0 0.0
    %2928 = vmatprep.subr.mxu0 0.0
    %2929 = vmatpush1.msra.mxu0 0.0
    %2930 = vmatprep.subr.mxu0 0.0
    %2931 = vmatpush1.msra.mxu0 0.0
    %2932 = vmatprep.subr.mxu0 0.0
    %2933 = vmatpush1.msra.mxu0 0.0
    %2934 = vmatprep.subr.mxu0 0.0
    %2935 = vmatpush1.msra.mxu0 0.0
    %2936 = vmatprep.subr.mxu0 0.0
    %2937 = vmatpush1.msra.mxu0 0.0
    %2938 = vmatprep.subr.mxu0 0.0
    %2939 = vmatpush1.msra.mxu0 0.0
    %2940 = vmatprep.subr.mxu0 0.0
    %2941 = vmatpush1.msra.mxu0 0.0
    %2942 = vmatprep.subr.mxu0 0.0
    %2943 = vmatpush1.msra.mxu0 0.0
    %2944 = vmatprep.subr.mxu0 0.0
    %2945 = vmatpush1.msra.mxu0 0.0
    %2946 = vmatprep.subr.mxu0 0.0
    %2947 = vmatpush1.msra.mxu0 0.0
    %2948 = vmatprep.subr.mxu0 0.0
    %2949 = vmatpush1.msra.mxu0 0.0
    %2950 = vmatprep.subr.mxu0 0.0
    %2951 = vmatpush1.msra.mxu0 0.0
    %2952 = vmatprep.subr.mxu0 0.0
    %2953 = vmatpush1.msra.mxu0 0.0
    %2954 = vmatprep.subr.mxu0 0.0
    %2955 = vmatpush1.msra.mxu0 0.0
    %2956 = vmatprep.mubr.f32.mxu0 0.0
    %2957 = vmatmul.mubr.f32.gmra.mrb[0].mxu0 %v2890
    %v2958 = vpop.f32.mrb[0].mxu0
    %v2959 = vadd.f32 0.0, %v2958
    %v2960 = vpop.f32.mrb[0].mxu0
    %2961 = vdwg.mxu0
    %v2962 = vadd.f32 %v2889, %v2959
    %v2963 = vxor.u32 %v2962, 2147483648
    %v2964 = vmul.f32 %v2963, 1.442695
    %v2965 = vpow.pop %v2964
    %v2966 = vadd.f32 %v2965, 1.0
    %v2967 = vrcp.pop %v2966
    %v2968 = vmul.f32 1.0, %v2967
    %v2969 = vtanh.pop %v2962
    %v2970 = vmul.f32 %v2968, %v2877
    %2972 = vrot.lane.b32.xlu0 %v2969, 96
    %v2973 = vpop.permute.xlu0 %2972
    %v2975 = vmul.f32 %v2968, %v2973
    %2977 = vrot.lane.b32.xlu0 %v2975, 16
    %v2978 = vpop.permute.xlu0 %2977
    %v2980 = vadd.f32 %v2970, %v2978
    %v2981 = vtanh.pop %v2980
    %2983 = vrot.lane.b32.xlu0 %v2981, 32
    %v2984 = vpop.permute.xlu0 %2983
    %v2986 = vmul.f32 %v2968, %v2984
    %2988 = vrot.lane.b32.xlu0 %v2986, 80
    %v2989 = vpop.permute.xlu0 %2988
    %2991 = vst.msk [vmem:[%s1026] sm:$0xff] %vm50, %v2989
    %v2992 = vld [vmem:[%s4] sm:$0xff]
    %v2993 = vld [vmem:[%s4 + $0x8] sm:$0xff]
    %v2994 = vld [vmem:[%s4 + $0x10] sm:$0xff]
    %v2995 = vld [vmem:[%s4 + $0x18] sm:$0xff]
    %v2996 = vld [vmem:[%s4 + $0x20] sm:$0xff]
    %v2997 = vld [vmem:[%s4 + $0x28] sm:$0xff]
    %v2998 = vld [vmem:[%s4 + $0x30] sm:$0xff]
    %v2999 = vld [vmem:[%s4 + $0x38] sm:$0xff]
    %s3000 = scalar_lea.vmem %s2, 48
    %v3001 = vld [vmem:[%s3000] sm:$0xff]
    %v3002 = vld [vmem:[%s3000 + $0x8] sm:$0xff]
    %s3003 = scalar_lea.vmem [#allocation3], 48
    %v3004 = vld [vmem:[%s3003] sm:$0xff]
    %v3005 = vld [vmem:[%s3003 + $0x8] sm:$0xff]
    %s3006 = scalar_lea.vmem %s3, 3
    %v3007 = vld [vmem:[%s3006] sm:$0x1]
    %v3009 = vlaneseq
    %v3010 = vshrl.u32 %v3009, 7
    %v3011 = vsub.s32 0, %v3010
    %v3012 = vrot.slane %v3007, %v3011
    %v3015 = vsel %vm50, %v2992, 0
    %v3018 = vsel %vm50, %v2993, 0
    %v3021 = vsel %vm50, %v2994, 0
    %v3024 = vsel %vm50, %v2995, 0
    %v3027 = vsel %vm50, %v2996, 0
    %v3030 = vsel %vm50, %v2997, 0
    %v3033 = vsel %vm50, %v2998, 0
    %v3036 = vsel %vm50, %v2999, 0
    %3038 = vmatprep.subr.mxu0 0.0
    %3039 = vmatpush1.msra.mxu0 %v3004
    %3040 = vmatprep.subr.mxu0 0.0
    %3041 = vmatpush1.msra.mxu0 %v3005
    %3042 = vmatprep.subr.mxu0 0.0
    %3043 = vmatpush1.msra.mxu0 0.0
    %3044 = vmatprep.subr.mxu0 0.0
    %3045 = vmatpush1.msra.mxu0 0.0
    %3046 = vmatprep.subr.mxu0 0.0
    %3047 = vmatpush1.msra.mxu0 0.0
    %3048 = vmatprep.subr.mxu0 0.0
    %3049 = vmatpush1.msra.mxu0 0.0
    %3050 = vmatprep.subr.mxu0 0.0
    %3051 = vmatpush1.msra.mxu0 0.0
    %3052 = vmatprep.subr.mxu0 0.0
    %3053 = vmatpush1.msra.mxu0 0.0
    %3054 = vmatprep.subr.mxu0 0.0
    %3055 = vmatpush1.msra.mxu0 0.0
    %3056 = vmatprep.subr.mxu0 0.0
    %3057 = vmatpush1.msra.mxu0 0.0
    %3058 = vmatprep.subr.mxu0 0.0
    %3059 = vmatpush1.msra.mxu0 0.0
    %3060 = vmatprep.subr.mxu0 0.0
    %3061 = vmatpush1.msra.mxu0 0.0
    %3062 = vmatprep.subr.mxu0 0.0
    %3063 = vmatpush1.msra.mxu0 0.0
    %3064 = vmatprep.subr.mxu0 0.0
    %3065 = vmatpush1.msra.mxu0 0.0
    %3066 = vmatprep.subr.mxu0 0.0
    %3067 = vmatpush1.msra.mxu0 0.0
    %3068 = vmatprep.subr.mxu0 0.0
    %3069 = vmatpush1.msra.mxu0 0.0
    %3070 = vmatprep.subr.mxu0 0.0
    %3071 = vmatpush1.msra.mxu0 0.0
    %3072 = vmatprep.subr.mxu0 0.0
    %3073 = vmatpush1.msra.mxu0 0.0
    %3074 = vmatprep.subr.mxu0 0.0
    %3075 = vmatpush1.msra.mxu0 0.0
    %3076 = vmatprep.subr.mxu0 0.0
    %3077 = vmatpush1.msra.mxu0 0.0
    %3078 = vmatprep.subr.mxu0 0.0
    %3079 = vmatpush1.msra.mxu0 0.0
    %3080 = vmatprep.subr.mxu0 0.0
    %3081 = vmatpush1.msra.mxu0 0.0
    %3082 = vmatprep.subr.mxu0 0.0
    %3083 = vmatpush1.msra.mxu0 0.0
    %3084 = vmatprep.subr.mxu0 0.0
    %3085 = vmatpush1.msra.mxu0 0.0
    %3086 = vmatprep.subr.mxu0 0.0
    %3087 = vmatpush1.msra.mxu0 0.0
    %3088 = vmatprep.subr.mxu0 0.0
    %3089 = vmatpush1.msra.mxu0 0.0
    %3090 = vmatprep.subr.mxu0 0.0
    %3091 = vmatpush1.msra.mxu0 0.0
    %3092 = vmatprep.subr.mxu0 0.0
    %3093 = vmatpush1.msra.mxu0 0.0
    %3094 = vmatprep.subr.mxu0 0.0
    %3095 = vmatpush1.msra.mxu0 0.0
    %3096 = vmatprep.subr.mxu0 0.0
    %3097 = vmatpush1.msra.mxu0 0.0
    %3098 = vmatprep.subr.mxu0 0.0
    %3099 = vmatpush1.msra.mxu0 0.0
    %3100 = vmatprep.subr.mxu0 0.0
    %3101 = vmatpush1.msra.mxu0 0.0
    %3102 = vmatprep.mubr.f32.mxu0 0.0
    %3103 = vmatmul.mubr.f32.gmra.mrb[0].mxu0 %v3015
    %v3104 = vpop.f32.mrb[0].mxu0
    %v3105 = vadd.f32 %v3012, %v3104
    %v3106 = vpop.f32.mrb[0].mxu0
    %3107 = vmatprep.mubr.f32.mxu0 0.0
    %3108 = vmatmul.mubr.f32.gmra.mrb[0].mxu0 %v3018
    %v3109 = vpop.f32.mrb[0].mxu0
    %v3110 = vadd.f32 %v3012, %v3109
    %v3111 = vpop.f32.mrb[0].mxu0
    %3112 = vmatprep.mubr.f32.mxu0 0.0
    %3113 = vmatmul.mubr.f32.gmra.mrb[0].mxu0 %v3021
    %v3114 = vpop.f32.mrb[0].mxu0
    %v3115 = vadd.f32 %v3012, %v3114
    %v3116 = vpop.f32.mrb[0].mxu0
    %3117 = vmatprep.mubr.f32.mxu0 0.0
    %3118 = vmatmul.mubr.f32.gmra.mrb[0].mxu0 %v3024
    %v3119 = vpop.f32.mrb[0].mxu0
    %v3120 = vadd.f32 %v3012, %v3119
    %v3121 = vpop.f32.mrb[0].mxu0
    %3122 = vmatprep.mubr.f32.mxu0 0.0
    %3123 = vmatmul.mubr.f32.gmra.mrb[0].mxu0 %v3027
    %v3124 = vpop.f32.mrb[0].mxu0
    %v3125 = vadd.f32 %v3012, %v3124
    %v3126 = vpop.f32.mrb[0].mxu0
    %3127 = vmatprep.mubr.f32.mxu0 0.0
    %3128 = vmatmul.mubr.f32.gmra.mrb[0].mxu0 %v3030
    %v3129 = vpop.f32.mrb[0].mxu0
    %v3130 = vadd.f32 %v3012, %v3129
    %v3131 = vpop.f32.mrb[0].mxu0
    %3132 = vmatprep.mubr.f32.mxu0 0.0
    %3133 = vmatmul.mubr.f32.gmra.mrb[0].mxu0 %v3033
    %v3134 = vpop.f32.mrb[0].mxu0
    %v3135 = vadd.f32 %v3012, %v3134
    %v3136 = vpop.f32.mrb[0].mxu0
    %3137 = vmatprep.mubr.f32.mxu0 0.0
    %3138 = vmatmul.mubr.f32.gmra.mrb[0].mxu0 %v3036
    %v3139 = vpop.f32.mrb[0].mxu0
    %v3140 = vadd.f32 %v3012, %v3139
    %v3141 = vpop.f32.mrb[0].mxu0
    %3142 = vdwg.mxu0
    %3143 = vst.msk [vmem:[#allocation2] sm:$0xff] %vm180, %v3105
    %3144 = vst.msk [vmem:[#allocation2 + $0x8] sm:$0xff] %vm180, %v3110
    %3145 = vst.msk [vmem:[#allocation2 + $0x10] sm:$0xff] %vm180, %v3115
    %3146 = vst.msk [vmem:[#allocation2 + $0x18] sm:$0xff] %vm180, %v3120
    %3147 = vst.msk [vmem:[#allocation2 + $0x20] sm:$0xff] %vm180, %v3125
    %3148 = vst.msk [vmem:[#allocation2 + $0x28] sm:$0xff] %vm180, %v3130
    %3149 = vst.msk [vmem:[#allocation2 + $0x30] sm:$0xff] %vm180, %v3135
    %3150 = vst.msk [vmem:[#allocation2 + $0x38] sm:$0xff] %vm180, %v3140
    %v3151 = vld [vmem:[#allocation2] sm:$0xff]
    %3152 = vmatprep.subr.mxu0 0.0
    %3153 = vmatpush1.msra.mxu0 %v3001
    %3154 = vmatprep.subr.mxu0 0.0
    %3155 = vmatpush1.msra.mxu0 %v3002
    %3156 = vmatprep.subr.mxu0 0.0
    %3157 = vmatpush1.msra.mxu0 0.0
    %3158 = vmatprep.subr.mxu0 0.0
    %3159 = vmatpush1.msra.mxu0 0.0
    %3160 = vmatprep.subr.mxu0 0.0
    %3161 = vmatpush1.msra.mxu0 0.0
    %3162 = vmatprep.subr.mxu0 0.0
    %3163 = vmatpush1.msra.mxu0 0.0
    %3164 = vmatprep.subr.mxu0 0.0
    %3165 = vmatpush1.msra.mxu0 0.0
    %3166 = vmatprep.subr.mxu0 0.0
    %3167 = vmatpush1.msra.mxu0 0.0
    %3168 = vmatprep.subr.mxu0 0.0
    %3169 = vmatpush1.msra.mxu0 0.0
    %3170 = vmatprep.subr.mxu0 0.0
    %3171 = vmatpush1.msra.mxu0 0.0
    %3172 = vmatprep.subr.mxu0 0.0
    %3173 = vmatpush1.msra.mxu0 0.0
    %3174 = vmatprep.subr.mxu0 0.0
    %3175 = vmatpush1.msra.mxu0 0.0
    %3176 = vmatprep.subr.mxu0 0.0
    %3177 = vmatpush1.msra.mxu0 0.0
    %3178 = vmatprep.subr.mxu0 0.0
    %3179 = vmatpush1.msra.mxu0 0.0
    %3180 = vmatprep.subr.mxu0 0.0
    %3181 = vmatpush1.msra.mxu0 0.0
    %3182 = vmatprep.subr.mxu0 0.0
    %3183 = vmatpush1.msra.mxu0 0.0
    %3184 = vmatprep.subr.mxu0 0.0
    %3185 = vmatpush1.msra.mxu0 0.0
    %3186 = vmatprep.subr.mxu0 0.0
    %3187 = vmatpush1.msra.mxu0 0.0
    %3188 = vmatprep.subr.mxu0 0.0
    %3189 = vmatpush1.msra.mxu0 0.0
    %3190 = vmatprep.subr.mxu0 0.0
    %3191 = vmatpush1.msra.mxu0 0.0
    %3192 = vmatprep.subr.mxu0 0.0
    %3193 = vmatpush1.msra.mxu0 0.0
    %3194 = vmatprep.subr.mxu0 0.0
    %3195 = vmatpush1.msra.mxu0 0.0
    %3196 = vmatprep.subr.mxu0 0.0
    %3197 = vmatpush1.msra.mxu0 0.0
    %3198 = vmatprep.subr.mxu0 0.0
    %3199 = vmatpush1.msra.mxu0 0.0
    %3200 = vmatprep.subr.mxu0 0.0
    %3201 = vmatpush1.msra.mxu0 0.0
    %3202 = vmatprep.subr.mxu0 0.0
    %3203 = vmatpush1.msra.mxu0 0.0
    %3204 = vmatprep.subr.mxu0 0.0
    %3205 = vmatpush1.msra.mxu0 0.0
    %3206 = vmatprep.subr.mxu0 0.0
    %3207 = vmatpush1.msra.mxu0 0.0
    %3208 = vmatprep.subr.mxu0 0.0
    %3209 = vmatpush1.msra.mxu0 0.0
    %3210 = vmatprep.subr.mxu0 0.0
    %3211 = vmatpush1.msra.mxu0 0.0
    %3212 = vmatprep.subr.mxu0 0.0
    %3213 = vmatpush1.msra.mxu0 0.0
    %3214 = vmatprep.subr.mxu0 0.0
    %3215 = vmatpush1.msra.mxu0 0.0
    %3216 = vmatprep.mubr.f32.mxu0 0.0
    %3217 = vmatmul.mubr.f32.gmra.mrb[0].mxu0 %v1188
    %v3218 = vpop.f32.mrb[0].mxu0
    %v3219 = vadd.f32 0.0, %v3218
    %v3220 = vpop.f32.mrb[0].mxu0
    %3221 = vdwg.mxu0
    %v3222 = vadd.f32 %v3151, %v3219
    %v3223 = vxor.u32 %v3222, 2147483648
    %v3224 = vmul.f32 %v3223, 1.442695
    %v3225 = vpow.pop %v3224
    %v3226 = vadd.f32 %v3225, 1.0
    %v3227 = vrcp.pop %v3226
    %v3228 = vmul.f32 1.0, %v3227
    %v3229 = vtanh.pop %v3222
    %v3230 = vmul.f32 %v3228, %v1015
    %3232 = vrot.lane.b32.xlu0 %v3229, 96
    %v3233 = vpop.permute.xlu0 %3232
    %v3235 = vmul.f32 %v3228, %v3233
    %3237 = vrot.lane.b32.xlu0 %v3235, 16
    %v3238 = vpop.permute.xlu0 %3237
    %v3240 = vadd.f32 %v3230, %v3238
    %v3241 = vtanh.pop %v3240
    %3243 = vrot.lane.b32.xlu0 %v3241, 32
    %v3244 = vpop.permute.xlu0 %3243
    %v3246 = vmul.f32 %v3228, %v3244
    %3248 = vrot.lane.b32.xlu0 %v3246, 80
    %v3249 = vpop.permute.xlu0 %3248
    %3251 = vst.msk [vmem:[%s4] sm:$0xff] %vm50, %v3249
    %v3252 = vld [vmem:[%s293] sm:$0xff]
    %v3253 = vsel %vm50, %v3249, 0
    %3255 = vmatprep.subr.mxu0 0.0
    %3256 = vmatpush1.msra.mxu0 %v3001
    %3257 = vmatprep.subr.mxu0 0.0
    %3258 = vmatpush1.msra.mxu0 %v3002
    %3259 = vmatprep.subr.mxu0 0.0
    %3260 = vmatpush1.msra.mxu0 0.0
    %3261 = vmatprep.subr.mxu0 0.0
    %3262 = vmatpush1.msra.mxu0 0.0
    %3263 = vmatprep.subr.mxu0 0.0
    %3264 = vmatpush1.msra.mxu0 0.0
    %3265 = vmatprep.subr.mxu0 0.0
    %3266 = vmatpush1.msra.mxu0 0.0
    %3267 = vmatprep.subr.mxu0 0.0
    %3268 = vmatpush1.msra.mxu0 0.0
    %3269 = vmatprep.subr.mxu0 0.0
    %3270 = vmatpush1.msra.mxu0 0.0
    %3271 = vmatprep.subr.mxu0 0.0
    %3272 = vmatpush1.msra.mxu0 0.0
    %3273 = vmatprep.subr.mxu0 0.0
    %3274 = vmatpush1.msra.mxu0 0.0
    %3275 = vmatprep.subr.mxu0 0.0
    %3276 = vmatpush1.msra.mxu0 0.0
    %3277 = vmatprep.subr.mxu0 0.0
    %3278 = vmatpush1.msra.mxu0 0.0
    %3279 = vmatprep.subr.mxu0 0.0
    %3280 = vmatpush1.msra.mxu0 0.0
    %3281 = vmatprep.subr.mxu0 0.0
    %3282 = vmatpush1.msra.mxu0 0.0
    %3283 = vmatprep.subr.mxu0 0.0
    %3284 = vmatpush1.msra.mxu0 0.0
    %3285 = vmatprep.subr.mxu0 0.0
    %3286 = vmatpush1.msra.mxu0 0.0
    %3287 = vmatprep.subr.mxu0 0.0
    %3288 = vmatpush1.msra.mxu0 0.0
    %3289 = vmatprep.subr.mxu0 0.0
    %3290 = vmatpush1.msra.mxu0 0.0
    %3291 = vmatprep.subr.mxu0 0.0
    %3292 = vmatpush1.msra.mxu0 0.0
    %3293 = vmatprep.subr.mxu0 0.0
    %3294 = vmatpush1.msra.mxu0 0.0
    %3295 = vmatprep.subr.mxu0 0.0
    %3296 = vmatpush1.msra.mxu0 0.0
    %3297 = vmatprep.subr.mxu0 0.0
    %3298 = vmatpush1.msra.mxu0 0.0
    %3299 = vmatprep.subr.mxu0 0.0
    %3300 = vmatpush1.msra.mxu0 0.0
    %3301 = vmatprep.subr.mxu0 0.0
    %3302 = vmatpush1.msra.mxu0 0.0
    %3303 = vmatprep.subr.mxu0 0.0
    %3304 = vmatpush1.msra.mxu0 0.0
    %3305 = vmatprep.subr.mxu0 0.0
    %3306 = vmatpush1.msra.mxu0 0.0
    %3307 = vmatprep.subr.mxu0 0.0
    %3308 = vmatpush1.msra.mxu0 0.0
    %3309 = vmatprep.subr.mxu0 0.0
    %3310 = vmatpush1.msra.mxu0 0.0
    %3311 = vmatprep.subr.mxu0 0.0
    %3312 = vmatpush1.msra.mxu0 0.0
    %3313 = vmatprep.subr.mxu0 0.0
    %3314 = vmatpush1.msra.mxu0 0.0
    %3315 = vmatprep.subr.mxu0 0.0
    %3316 = vmatpush1.msra.mxu0 0.0
    %3317 = vmatprep.subr.mxu0 0.0
    %3318 = vmatpush1.msra.mxu0 0.0
    %3319 = vmatprep.mubr.f32.mxu0 0.0
    %3320 = vmatmul.mubr.f32.gmra.mrb[0].mxu0 %v3253
    %v3321 = vpop.f32.mrb[0].mxu0
    %v3322 = vadd.f32 0.0, %v3321
    %v3323 = vpop.f32.mrb[0].mxu0
    %3324 = vdwg.mxu0
    %v3325 = vadd.f32 %v3252, %v3322
    %v3326 = vxor.u32 %v3325, 2147483648
    %v3327 = vmul.f32 %v3326, 1.442695
    %v3328 = vpow.pop %v3327
    %v3329 = vadd.f32 %v3328, 1.0
    %v3330 = vrcp.pop %v3329
    %v3331 = vmul.f32 1.0, %v3330
    %v3332 = vtanh.pop %v3325
    %v3333 = vmul.f32 %v3331, %v3240
    %3335 = vrot.lane.b32.xlu0 %v3332, 96
    %v3336 = vpop.permute.xlu0 %3335
    %v3338 = vmul.f32 %v3331, %v3336
    %3340 = vrot.lane.b32.xlu0 %v3338, 16
    %v3341 = vpop.permute.xlu0 %3340
    %v3343 = vadd.f32 %v3333, %v3341
    %v3344 = vtanh.pop %v3343
    %3346 = vrot.lane.b32.xlu0 %v3344, 32
    %v3347 = vpop.permute.xlu0 %3346
    %v3349 = vmul.f32 %v3331, %v3347
    %3351 = vrot.lane.b32.xlu0 %v3349, 80
    %v3352 = vpop.permute.xlu0 %3351
    %3354 = vst.msk [vmem:[%s396] sm:$0xff] %vm50, %v3352
    %v3355 = vld [vmem:[%s398] sm:$0xff]
    %v3356 = vsel %vm50, %v3352, 0
    %3358 = vmatprep.subr.mxu0 0.0
    %3359 = vmatpush1.msra.mxu0 %v3001
    %3360 = vmatprep.subr.mxu0 0.0
    %3361 = vmatpush1.msra.mxu0 %v3002
    %3362 = vmatprep.subr.mxu0 0.0
    %3363 = vmatpush1.msra.mxu0 0.0
    %3364 = vmatprep.subr.mxu0 0.0
    %3365 = vmatpush1.msra.mxu0 0.0
    %3366 = vmatprep.subr.mxu0 0.0
    %3367 = vmatpush1.msra.mxu0 0.0
    %3368 = vmatprep.subr.mxu0 0.0
    %3369 = vmatpush1.msra.mxu0 0.0
    %3370 = vmatprep.subr.mxu0 0.0
    %3371 = vmatpush1.msra.mxu0 0.0
    %3372 = vmatprep.subr.mxu0 0.0
    %3373 = vmatpush1.msra.mxu0 0.0
    %3374 = vmatprep.subr.mxu0 0.0
    %3375 = vmatpush1.msra.mxu0 0.0
    %3376 = vmatprep.subr.mxu0 0.0
    %3377 = vmatpush1.msra.mxu0 0.0
    %3378 = vmatprep.subr.mxu0 0.0
    %3379 = vmatpush1.msra.mxu0 0.0
    %3380 = vmatprep.subr.mxu0 0.0
    %3381 = vmatpush1.msra.mxu0 0.0
    %3382 = vmatprep.subr.mxu0 0.0
    %3383 = vmatpush1.msra.mxu0 0.0
    %3384 = vmatprep.subr.mxu0 0.0
    %3385 = vmatpush1.msra.mxu0 0.0
    %3386 = vmatprep.subr.mxu0 0.0
    %3387 = vmatpush1.msra.mxu0 0.0
    %3388 = vmatprep.subr.mxu0 0.0
    %3389 = vmatpush1.msra.mxu0 0.0
    %3390 = vmatprep.subr.mxu0 0.0
    %3391 = vmatpush1.msra.mxu0 0.0
    %3392 = vmatprep.subr.mxu0 0.0
    %3393 = vmatpush1.msra.mxu0 0.0
    %3394 = vmatprep.subr.mxu0 0.0
    %3395 = vmatpush1.msra.mxu0 0.0
    %3396 = vmatprep.subr.mxu0 0.0
    %3397 = vmatpush1.msra.mxu0 0.0
    %3398 = vmatprep.subr.mxu0 0.0
    %3399 = vmatpush1.msra.mxu0 0.0
    %3400 = vmatprep.subr.mxu0 0.0
    %3401 = vmatpush1.msra.mxu0 0.0
    %3402 = vmatprep.subr.mxu0 0.0
    %3403 = vmatpush1.msra.mxu0 0.0
    %3404 = vmatprep.subr.mxu0 0.0
    %3405 = vmatpush1.msra.mxu0 0.0
    %3406 = vmatprep.subr.mxu0 0.0
    %3407 = vmatpush1.msra.mxu0 0.0
    %3408 = vmatprep.subr.mxu0 0.0
    %3409 = vmatpush1.msra.mxu0 0.0
    %3410 = vmatprep.subr.mxu0 0.0
    %3411 = vmatpush1.msra.mxu0 0.0
    %3412 = vmatprep.subr.mxu0 0.0
    %3413 = vmatpush1.msra.mxu0 0.0
    %3414 = vmatprep.subr.mxu0 0.0
    %3415 = vmatpush1.msra.mxu0 0.0
    %3416 = vmatprep.subr.mxu0 0.0
    %3417 = vmatpush1.msra.mxu0 0.0
    %3418 = vmatprep.subr.mxu0 0.0
    %3419 = vmatpush1.msra.mxu0 0.0
    %3420 = vmatprep.subr.mxu0 0.0
    %3421 = vmatpush1.msra.mxu0 0.0
    %3422 = vmatprep.mubr.f32.mxu0 0.0
    %3423 = vmatmul.mubr.f32.gmra.mrb[0].mxu0 %v3356
    %v3424 = vpop.f32.mrb[0].mxu0
    %v3425 = vadd.f32 0.0, %v3424
    %v3426 = vpop.f32.mrb[0].mxu0
    %3427 = vdwg.mxu0
    %v3428 = vadd.f32 %v3355, %v3425
    %v3429 = vxor.u32 %v3428, 2147483648
    %v3430 = vmul.f32 %v3429, 1.442695
    %v3431 = vpow.pop %v3430
    %v3432 = vadd.f32 %v3431, 1.0
    %v3433 = vrcp.pop %v3432
    %v3434 = vmul.f32 1.0, %v3433
    %v3435 = vtanh.pop %v3428
    %v3436 = vmul.f32 %v3434, %v3343
    %3438 = vrot.lane.b32.xlu0 %v3435, 96
    %v3439 = vpop.permute.xlu0 %3438
    %v3441 = vmul.f32 %v3434, %v3439
    %3443 = vrot.lane.b32.xlu0 %v3441, 16
    %v3444 = vpop.permute.xlu0 %3443
    %v3446 = vadd.f32 %v3436, %v3444
    %v3447 = vtanh.pop %v3446
    %3449 = vrot.lane.b32.xlu0 %v3447, 32
    %v3450 = vpop.permute.xlu0 %3449
    %v3452 = vmul.f32 %v3434, %v3450
    %3454 = vrot.lane.b32.xlu0 %v3452, 80
    %v3455 = vpop.permute.xlu0 %3454
    %3457 = vst.msk [vmem:[%s501] sm:$0xff] %vm50, %v3455
    %v3458 = vld [vmem:[%s503] sm:$0xff]
    %v3459 = vsel %vm50, %v3455, 0
    %3461 = vmatprep.subr.mxu0 0.0
    %3462 = vmatpush1.msra.mxu0 %v3001
    %3463 = vmatprep.subr.mxu0 0.0
    %3464 = vmatpush1.msra.mxu0 %v3002
    %3465 = vmatprep.subr.mxu0 0.0
    %3466 = vmatpush1.msra.mxu0 0.0
    %3467 = vmatprep.subr.mxu0 0.0
    %3468 = vmatpush1.msra.mxu0 0.0
    %3469 = vmatprep.subr.mxu0 0.0
    %3470 = vmatpush1.msra.mxu0 0.0
    %3471 = vmatprep.subr.mxu0 0.0
    %3472 = vmatpush1.msra.mxu0 0.0
    %3473 = vmatprep.subr.mxu0 0.0
    %3474 = vmatpush1.msra.mxu0 0.0
    %3475 = vmatprep.subr.mxu0 0.0
    %3476 = vmatpush1.msra.mxu0 0.0
    %3477 = vmatprep.subr.mxu0 0.0
    %3478 = vmatpush1.msra.mxu0 0.0
    %3479 = vmatprep.subr.mxu0 0.0
    %3480 = vmatpush1.msra.mxu0 0.0
    %3481 = vmatprep.subr.mxu0 0.0
    %3482 = vmatpush1.msra.mxu0 0.0
    %3483 = vmatprep.subr.mxu0 0.0
    %3484 = vmatpush1.msra.mxu0 0.0
    %3485 = vmatprep.subr.mxu0 0.0
    %3486 = vmatpush1.msra.mxu0 0.0
    %3487 = vmatprep.subr.mxu0 0.0
    %3488 = vmatpush1.msra.mxu0 0.0
    %3489 = vmatprep.subr.mxu0 0.0
    %3490 = vmatpush1.msra.mxu0 0.0
    %3491 = vmatprep.subr.mxu0 0.0
    %3492 = vmatpush1.msra.mxu0 0.0
    %3493 = vmatprep.subr.mxu0 0.0
    %3494 = vmatpush1.msra.mxu0 0.0
    %3495 = vmatprep.subr.mxu0 0.0
    %3496 = vmatpush1.msra.mxu0 0.0
    %3497 = vmatprep.subr.mxu0 0.0
    %3498 = vmatpush1.msra.mxu0 0.0
    %3499 = vmatprep.subr.mxu0 0.0
    %3500 = vmatpush1.msra.mxu0 0.0
    %3501 = vmatprep.subr.mxu0 0.0
    %3502 = vmatpush1.msra.mxu0 0.0
    %3503 = vmatprep.subr.mxu0 0.0
    %3504 = vmatpush1.msra.mxu0 0.0
    %3505 = vmatprep.subr.mxu0 0.0
    %3506 = vmatpush1.msra.mxu0 0.0
    %3507 = vmatprep.subr.mxu0 0.0
    %3508 = vmatpush1.msra.mxu0 0.0
    %3509 = vmatprep.subr.mxu0 0.0
    %3510 = vmatpush1.msra.mxu0 0.0
    %3511 = vmatprep.subr.mxu0 0.0
    %3512 = vmatpush1.msra.mxu0 0.0
    %3513 = vmatprep.subr.mxu0 0.0
    %3514 = vmatpush1.msra.mxu0 0.0
    %3515 = vmatprep.subr.mxu0 0.0
    %3516 = vmatpush1.msra.mxu0 0.0
    %3517 = vmatprep.subr.mxu0 0.0
    %3518 = vmatpush1.msra.mxu0 0.0
    %3519 = vmatprep.subr.mxu0 0.0
    %3520 = vmatpush1.msra.mxu0 0.0
    %3521 = vmatprep.subr.mxu0 0.0
    %3522 = vmatpush1.msra.mxu0 0.0
    %3523 = vmatprep.subr.mxu0 0.0
    %3524 = vmatpush1.msra.mxu0 0.0
    %3525 = vmatprep.mubr.f32.mxu0 0.0
    %3526 = vmatmul.mubr.f32.gmra.mrb[0].mxu0 %v3459
    %v3527 = vpop.f32.mrb[0].mxu0
    %v3528 = vadd.f32 0.0, %v3527
    %v3529 = vpop.f32.mrb[0].mxu0
    %3530 = vdwg.mxu0
    %v3531 = vadd.f32 %v3458, %v3528
    %v3532 = vxor.u32 %v3531, 2147483648
    %v3533 = vmul.f32 %v3532, 1.442695
    %v3534 = vpow.pop %v3533
    %v3535 = vadd.f32 %v3534, 1.0
    %v3536 = vrcp.pop %v3535
    %v3537 = vmul.f32 1.0, %v3536
    %v3538 = vtanh.pop %v3531
    %v3539 = vmul.f32 %v3537, %v3446
    %3541 = vrot.lane.b32.xlu0 %v3538, 96
    %v3542 = vpop.permute.xlu0 %3541
    %v3544 = vmul.f32 %v3537, %v3542
    %3546 = vrot.lane.b32.xlu0 %v3544, 16
    %v3547 = vpop.permute.xlu0 %3546
    %v3549 = vadd.f32 %v3539, %v3547
    %v3550 = vtanh.pop %v3549
    %3552 = vrot.lane.b32.xlu0 %v3550, 32
    %v3553 = vpop.permute.xlu0 %3552
    %v3555 = vmul.f32 %v3537, %v3553
    %3557 = vrot.lane.b32.xlu0 %v3555, 80
    %v3558 = vpop.permute.xlu0 %3557
    %3560 = vst.msk [vmem:[%s606] sm:$0xff] %vm50, %v3558
    %v3561 = vld [vmem:[%s608] sm:$0xff]
    %v3562 = vsel %vm50, %v3558, 0
    %3564 = vmatprep.subr.mxu0 0.0
    %3565 = vmatpush1.msra.mxu0 %v3001
    %3566 = vmatprep.subr.mxu0 0.0
    %3567 = vmatpush1.msra.mxu0 %v3002
    %3568 = vmatprep.subr.mxu0 0.0
    %3569 = vmatpush1.msra.mxu0 0.0
    %3570 = vmatprep.subr.mxu0 0.0
    %3571 = vmatpush1.msra.mxu0 0.0
    %3572 = vmatprep.subr.mxu0 0.0
    %3573 = vmatpush1.msra.mxu0 0.0
    %3574 = vmatprep.subr.mxu0 0.0
    %3575 = vmatpush1.msra.mxu0 0.0
    %3576 = vmatprep.subr.mxu0 0.0
    %3577 = vmatpush1.msra.mxu0 0.0
    %3578 = vmatprep.subr.mxu0 0.0
    %3579 = vmatpush1.msra.mxu0 0.0
    %3580 = vmatprep.subr.mxu0 0.0
    %3581 = vmatpush1.msra.mxu0 0.0
    %3582 = vmatprep.subr.mxu0 0.0
    %3583 = vmatpush1.msra.mxu0 0.0
    %3584 = vmatprep.subr.mxu0 0.0
    %3585 = vmatpush1.msra.mxu0 0.0
    %3586 = vmatprep.subr.mxu0 0.0
    %3587 = vmatpush1.msra.mxu0 0.0
    %3588 = vmatprep.subr.mxu0 0.0
    %3589 = vmatpush1.msra.mxu0 0.0
    %3590 = vmatprep.subr.mxu0 0.0
    %3591 = vmatpush1.msra.mxu0 0.0
    %3592 = vmatprep.subr.mxu0 0.0
    %3593 = vmatpush1.msra.mxu0 0.0
    %3594 = vmatprep.subr.mxu0 0.0
    %3595 = vmatpush1.msra.mxu0 0.0
    %3596 = vmatprep.subr.mxu0 0.0
    %3597 = vmatpush1.msra.mxu0 0.0
    %3598 = vmatprep.subr.mxu0 0.0
    %3599 = vmatpush1.msra.mxu0 0.0
    %3600 = vmatprep.subr.mxu0 0.0
    %3601 = vmatpush1.msra.mxu0 0.0
    %3602 = vmatprep.subr.mxu0 0.0
    %3603 = vmatpush1.msra.mxu0 0.0
    %3604 = vmatprep.subr.mxu0 0.0
    %3605 = vmatpush1.msra.mxu0 0.0
    %3606 = vmatprep.subr.mxu0 0.0
    %3607 = vmatpush1.msra.mxu0 0.0
    %3608 = vmatprep.subr.mxu0 0.0
    %3609 = vmatpush1.msra.mxu0 0.0
    %3610 = vmatprep.subr.mxu0 0.0
    %3611 = vmatpush1.msra.mxu0 0.0
    %3612 = vmatprep.subr.mxu0 0.0
    %3613 = vmatpush1.msra.mxu0 0.0
    %3614 = vmatprep.subr.mxu0 0.0
    %3615 = vmatpush1.msra.mxu0 0.0
    %3616 = vmatprep.subr.mxu0 0.0
    %3617 = vmatpush1.msra.mxu0 0.0
    %3618 = vmatprep.subr.mxu0 0.0
    %3619 = vmatpush1.msra.mxu0 0.0
    %3620 = vmatprep.subr.mxu0 0.0
    %3621 = vmatpush1.msra.mxu0 0.0
    %3622 = vmatprep.subr.mxu0 0.0
    %3623 = vmatpush1.msra.mxu0 0.0
    %3624 = vmatprep.subr.mxu0 0.0
    %3625 = vmatpush1.msra.mxu0 0.0
    %3626 = vmatprep.subr.mxu0 0.0
    %3627 = vmatpush1.msra.mxu0 0.0
    %3628 = vmatprep.mubr.f32.mxu0 0.0
    %3629 = vmatmul.mubr.f32.gmra.mrb[0].mxu0 %v3562
    %v3630 = vpop.f32.mrb[0].mxu0
    %v3631 = vadd.f32 0.0, %v3630
    %v3632 = vpop.f32.mrb[0].mxu0
    %3633 = vdwg.mxu0
    %v3634 = vadd.f32 %v3561, %v3631
    %v3635 = vxor.u32 %v3634, 2147483648
    %v3636 = vmul.f32 %v3635, 1.442695
    %v3637 = vpow.pop %v3636
    %v3638 = vadd.f32 %v3637, 1.0
    %v3639 = vrcp.pop %v3638
    %v3640 = vmul.f32 1.0, %v3639
    %v3641 = vtanh.pop %v3634
    %v3642 = vmul.f32 %v3640, %v3549
    %3644 = vrot.lane.b32.xlu0 %v3641, 96
    %v3645 = vpop.permute.xlu0 %3644
    %v3647 = vmul.f32 %v3640, %v3645
    %3649 = vrot.lane.b32.xlu0 %v3647, 16
    %v3650 = vpop.permute.xlu0 %3649
    %v3652 = vadd.f32 %v3642, %v3650
    %v3653 = vtanh.pop %v3652
    %3655 = vrot.lane.b32.xlu0 %v3653, 32
    %v3656 = vpop.permute.xlu0 %3655
    %v3658 = vmul.f32 %v3640, %v3656
    %3660 = vrot.lane.b32.xlu0 %v3658, 80
    %v3661 = vpop.permute.xlu0 %3660
    %3663 = vst.msk [vmem:[%s711] sm:$0xff] %vm50, %v3661
    %v3664 = vld [vmem:[%s713] sm:$0xff]
    %v3665 = vsel %vm50, %v3661, 0
    %3667 = vmatprep.subr.mxu0 0.0
    %3668 = vmatpush1.msra.mxu0 %v3001
    %3669 = vmatprep.subr.mxu0 0.0
    %3670 = vmatpush1.msra.mxu0 %v3002
    %3671 = vmatprep.subr.mxu0 0.0
    %3672 = vmatpush1.msra.mxu0 0.0
    %3673 = vmatprep.subr.mxu0 0.0
    %3674 = vmatpush1.msra.mxu0 0.0
    %3675 = vmatprep.subr.mxu0 0.0
    %3676 = vmatpush1.msra.mxu0 0.0
    %3677 = vmatprep.subr.mxu0 0.0
    %3678 = vmatpush1.msra.mxu0 0.0
    %3679 = vmatprep.subr.mxu0 0.0
    %3680 = vmatpush1.msra.mxu0 0.0
    %3681 = vmatprep.subr.mxu0 0.0
    %3682 = vmatpush1.msra.mxu0 0.0
    %3683 = vmatprep.subr.mxu0 0.0
    %3684 = vmatpush1.msra.mxu0 0.0
    %3685 = vmatprep.subr.mxu0 0.0
    %3686 = vmatpush1.msra.mxu0 0.0
    %3687 = vmatprep.subr.mxu0 0.0
    %3688 = vmatpush1.msra.mxu0 0.0
    %3689 = vmatprep.subr.mxu0 0.0
    %3690 = vmatpush1.msra.mxu0 0.0
    %3691 = vmatprep.subr.mxu0 0.0
    %3692 = vmatpush1.msra.mxu0 0.0
    %3693 = vmatprep.subr.mxu0 0.0
    %3694 = vmatpush1.msra.mxu0 0.0
    %3695 = vmatprep.subr.mxu0 0.0
    %3696 = vmatpush1.msra.mxu0 0.0
    %3697 = vmatprep.subr.mxu0 0.0
    %3698 = vmatpush1.msra.mxu0 0.0
    %3699 = vmatprep.subr.mxu0 0.0
    %3700 = vmatpush1.msra.mxu0 0.0
    %3701 = vmatprep.subr.mxu0 0.0
    %3702 = vmatpush1.msra.mxu0 0.0
    %3703 = vmatprep.subr.mxu0 0.0
    %3704 = vmatpush1.msra.mxu0 0.0
    %3705 = vmatprep.subr.mxu0 0.0
    %3706 = vmatpush1.msra.mxu0 0.0
    %3707 = vmatprep.subr.mxu0 0.0
    %3708 = vmatpush1.msra.mxu0 0.0
    %3709 = vmatprep.subr.mxu0 0.0
    %3710 = vmatpush1.msra.mxu0 0.0
    %3711 = vmatprep.subr.mxu0 0.0
    %3712 = vmatpush1.msra.mxu0 0.0
    %3713 = vmatprep.subr.mxu0 0.0
    %3714 = vmatpush1.msra.mxu0 0.0
    %3715 = vmatprep.subr.mxu0 0.0
    %3716 = vmatpush1.msra.mxu0 0.0
    %3717 = vmatprep.subr.mxu0 0.0
    %3718 = vmatpush1.msra.mxu0 0.0
    %3719 = vmatprep.subr.mxu0 0.0
    %3720 = vmatpush1.msra.mxu0 0.0
    %3721 = vmatprep.subr.mxu0 0.0
    %3722 = vmatpush1.msra.mxu0 0.0
    %3723 = vmatprep.subr.mxu0 0.0
    %3724 = vmatpush1.msra.mxu0 0.0
    %3725 = vmatprep.subr.mxu0 0.0
    %3726 = vmatpush1.msra.mxu0 0.0
    %3727 = vmatprep.subr.mxu0 0.0
    %3728 = vmatpush1.msra.mxu0 0.0
    %3729 = vmatprep.subr.mxu0 0.0
    %3730 = vmatpush1.msra.mxu0 0.0
    %3731 = vmatprep.mubr.f32.mxu0 0.0
    %3732 = vmatmul.mubr.f32.gmra.mrb[0].mxu0 %v3665
    %v3733 = vpop.f32.mrb[0].mxu0
    %v3734 = vadd.f32 0.0, %v3733
    %v3735 = vpop.f32.mrb[0].mxu0
    %3736 = vdwg.mxu0
    %v3737 = vadd.f32 %v3664, %v3734
    %v3738 = vxor.u32 %v3737, 2147483648
    %v3739 = vmul.f32 %v3738, 1.442695
    %v3740 = vpow.pop %v3739
    %v3741 = vadd.f32 %v3740, 1.0
    %v3742 = vrcp.pop %v3741
    %v3743 = vmul.f32 1.0, %v3742
    %v3744 = vtanh.pop %v3737
    %v3745 = vmul.f32 %v3743, %v3652
    %3747 = vrot.lane.b32.xlu0 %v3744, 96
    %v3748 = vpop.permute.xlu0 %3747
    %v3750 = vmul.f32 %v3743, %v3748
    %3752 = vrot.lane.b32.xlu0 %v3750, 16
    %v3753 = vpop.permute.xlu0 %3752
    %v3755 = vadd.f32 %v3745, %v3753
    %v3756 = vtanh.pop %v3755
    %3758 = vrot.lane.b32.xlu0 %v3756, 32
    %v3759 = vpop.permute.xlu0 %3758
    %v3761 = vmul.f32 %v3743, %v3759
    %3763 = vrot.lane.b32.xlu0 %v3761, 80
    %v3764 = vpop.permute.xlu0 %3763
    %3766 = vst.msk [vmem:[%s816] sm:$0xff] %vm50, %v3764
    %v3767 = vld [vmem:[%s818] sm:$0xff]
    %v3768 = vsel %vm50, %v3764, 0
    %3770 = vmatprep.subr.mxu0 0.0
    %3771 = vmatpush1.msra.mxu0 %v3001
    %3772 = vmatprep.subr.mxu0 0.0
    %3773 = vmatpush1.msra.mxu0 %v3002
    %3774 = vmatprep.subr.mxu0 0.0
    %3775 = vmatpush1.msra.mxu0 0.0
    %3776 = vmatprep.subr.mxu0 0.0
    %3777 = vmatpush1.msra.mxu0 0.0
    %3778 = vmatprep.subr.mxu0 0.0
    %3779 = vmatpush1.msra.mxu0 0.0
    %3780 = vmatprep.subr.mxu0 0.0
    %3781 = vmatpush1.msra.mxu0 0.0
    %3782 = vmatprep.subr.mxu0 0.0
    %3783 = vmatpush1.msra.mxu0 0.0
    %3784 = vmatprep.subr.mxu0 0.0
    %3785 = vmatpush1.msra.mxu0 0.0
    %3786 = vmatprep.subr.mxu0 0.0
    %3787 = vmatpush1.msra.mxu0 0.0
    %3788 = vmatprep.subr.mxu0 0.0
    %3789 = vmatpush1.msra.mxu0 0.0
    %3790 = vmatprep.subr.mxu0 0.0
    %3791 = vmatpush1.msra.mxu0 0.0
    %3792 = vmatprep.subr.mxu0 0.0
    %3793 = vmatpush1.msra.mxu0 0.0
    %3794 = vmatprep.subr.mxu0 0.0
    %3795 = vmatpush1.msra.mxu0 0.0
    %3796 = vmatprep.subr.mxu0 0.0
    %3797 = vmatpush1.msra.mxu0 0.0
    %3798 = vmatprep.subr.mxu0 0.0
    %3799 = vmatpush1.msra.mxu0 0.0
    %3800 = vmatprep.subr.mxu0 0.0
    %3801 = vmatpush1.msra.mxu0 0.0
    %3802 = vmatprep.subr.mxu0 0.0
    %3803 = vmatpush1.msra.mxu0 0.0
    %3804 = vmatprep.subr.mxu0 0.0
    %3805 = vmatpush1.msra.mxu0 0.0
    %3806 = vmatprep.subr.mxu0 0.0
    %3807 = vmatpush1.msra.mxu0 0.0
    %3808 = vmatprep.subr.mxu0 0.0
    %3809 = vmatpush1.msra.mxu0 0.0
    %3810 = vmatprep.subr.mxu0 0.0
    %3811 = vmatpush1.msra.mxu0 0.0
    %3812 = vmatprep.subr.mxu0 0.0
    %3813 = vmatpush1.msra.mxu0 0.0
    %3814 = vmatprep.subr.mxu0 0.0
    %3815 = vmatpush1.msra.mxu0 0.0
    %3816 = vmatprep.subr.mxu0 0.0
    %3817 = vmatpush1.msra.mxu0 0.0
    %3818 = vmatprep.subr.mxu0 0.0
    %3819 = vmatpush1.msra.mxu0 0.0
    %3820 = vmatprep.subr.mxu0 0.0
    %3821 = vmatpush1.msra.mxu0 0.0
    %3822 = vmatprep.subr.mxu0 0.0
    %3823 = vmatpush1.msra.mxu0 0.0
    %3824 = vmatprep.subr.mxu0 0.0
    %3825 = vmatpush1.msra.mxu0 0.0
    %3826 = vmatprep.subr.mxu0 0.0
    %3827 = vmatpush1.msra.mxu0 0.0
    %3828 = vmatprep.subr.mxu0 0.0
    %3829 = vmatpush1.msra.mxu0 0.0
    %3830 = vmatprep.subr.mxu0 0.0
    %3831 = vmatpush1.msra.mxu0 0.0
    %3832 = vmatprep.subr.mxu0 0.0
    %3833 = vmatpush1.msra.mxu0 0.0
    %3834 = vmatprep.mubr.f32.mxu0 0.0
    %3835 = vmatmul.mubr.f32.gmra.mrb[0].mxu0 %v3768
    %v3836 = vpop.f32.mrb[0].mxu0
    %v3837 = vadd.f32 0.0, %v3836
    %v3838 = vpop.f32.mrb[0].mxu0
    %3839 = vdwg.mxu0
    %v3840 = vadd.f32 %v3767, %v3837
    %v3841 = vxor.u32 %v3840, 2147483648
    %v3842 = vmul.f32 %v3841, 1.442695
    %v3843 = vpow.pop %v3842
    %v3844 = vadd.f32 %v3843, 1.0
    %v3845 = vrcp.pop %v3844
    %v3846 = vmul.f32 1.0, %v3845
    %v3847 = vtanh.pop %v3840
    %v3848 = vmul.f32 %v3846, %v3755
    %3850 = vrot.lane.b32.xlu0 %v3847, 96
    %v3851 = vpop.permute.xlu0 %3850
    %v3853 = vmul.f32 %v3846, %v3851
    %3855 = vrot.lane.b32.xlu0 %v3853, 16
    %v3856 = vpop.permute.xlu0 %3855
    %v3858 = vadd.f32 %v3848, %v3856
    %v3859 = vtanh.pop %v3858
    %3861 = vrot.lane.b32.xlu0 %v3859, 32
    %v3862 = vpop.permute.xlu0 %3861
    %v3864 = vmul.f32 %v3846, %v3862
    %3866 = vrot.lane.b32.xlu0 %v3864, 80
    %v3867 = vpop.permute.xlu0 %3866
    %3869 = vst.msk [vmem:[%s921] sm:$0xff] %vm50, %v3867
    %v3870 = vld [vmem:[%s923] sm:$0xff]
    %v3871 = vsel %vm50, %v3867, 0
    %3873 = vmatprep.subr.mxu0 0.0
    %3874 = vmatpush1.msra.mxu0 %v3001
    %3875 = vmatprep.subr.mxu0 0.0
    %3876 = vmatpush1.msra.mxu0 %v3002
    %3877 = vmatprep.subr.mxu0 0.0
    %3878 = vmatpush1.msra.mxu0 0.0
    %3879 = vmatprep.subr.mxu0 0.0
    %3880 = vmatpush1.msra.mxu0 0.0
    %3881 = vmatprep.subr.mxu0 0.0
    %3882 = vmatpush1.msra.mxu0 0.0
    %3883 = vmatprep.subr.mxu0 0.0
    %3884 = vmatpush1.msra.mxu0 0.0
    %3885 = vmatprep.subr.mxu0 0.0
    %3886 = vmatpush1.msra.mxu0 0.0
    %3887 = vmatprep.subr.mxu0 0.0
    %3888 = vmatpush1.msra.mxu0 0.0
    %3889 = vmatprep.subr.mxu0 0.0
    %3890 = vmatpush1.msra.mxu0 0.0
    %3891 = vmatprep.subr.mxu0 0.0
    %3892 = vmatpush1.msra.mxu0 0.0
    %3893 = vmatprep.subr.mxu0 0.0
    %3894 = vmatpush1.msra.mxu0 0.0
    %3895 = vmatprep.subr.mxu0 0.0
    %3896 = vmatpush1.msra.mxu0 0.0
    %3897 = vmatprep.subr.mxu0 0.0
    %3898 = vmatpush1.msra.mxu0 0.0
    %3899 = vmatprep.subr.mxu0 0.0
    %3900 = vmatpush1.msra.mxu0 0.0
    %3901 = vmatprep.subr.mxu0 0.0
    %3902 = vmatpush1.msra.mxu0 0.0
    %3903 = vmatprep.subr.mxu0 0.0
    %3904 = vmatpush1.msra.mxu0 0.0
    %3905 = vmatprep.subr.mxu0 0.0
    %3906 = vmatpush1.msra.mxu0 0.0
    %3907 = vmatprep.subr.mxu0 0.0
    %3908 = vmatpush1.msra.mxu0 0.0
    %3909 = vmatprep.subr.mxu0 0.0
    %3910 = vmatpush1.msra.mxu0 0.0
    %3911 = vmatprep.subr.mxu0 0.0
    %3912 = vmatpush1.msra.mxu0 0.0
    %3913 = vmatprep.subr.mxu0 0.0
    %3914 = vmatpush1.msra.mxu0 0.0
    %3915 = vmatprep.subr.mxu0 0.0
    %3916 = vmatpush1.msra.mxu0 0.0
    %3917 = vmatprep.subr.mxu0 0.0
    %3918 = vmatpush1.msra.mxu0 0.0
    %3919 = vmatprep.subr.mxu0 0.0
    %3920 = vmatpush1.msra.mxu0 0.0
    %3921 = vmatprep.subr.mxu0 0.0
    %3922 = vmatpush1.msra.mxu0 0.0
    %3923 = vmatprep.subr.mxu0 0.0
    %3924 = vmatpush1.msra.mxu0 0.0
    %3925 = vmatprep.subr.mxu0 0.0
    %3926 = vmatpush1.msra.mxu0 0.0
    %3927 = vmatprep.subr.mxu0 0.0
    %3928 = vmatpush1.msra.mxu0 0.0
    %3929 = vmatprep.subr.mxu0 0.0
    %3930 = vmatpush1.msra.mxu0 0.0
    %3931 = vmatprep.subr.mxu0 0.0
    %3932 = vmatpush1.msra.mxu0 0.0
    %3933 = vmatprep.subr.mxu0 0.0
    %3934 = vmatpush1.msra.mxu0 0.0
    %3935 = vmatprep.subr.mxu0 0.0
    %3936 = vmatpush1.msra.mxu0 0.0
    %3937 = vmatprep.mubr.f32.mxu0 0.0
    %3938 = vmatmul.mubr.f32.gmra.mrb[0].mxu0 %v3871
    %v3939 = vpop.f32.mrb[0].mxu0
    %v3940 = vadd.f32 0.0, %v3939
    %v3941 = vpop.f32.mrb[0].mxu0
    %3942 = vdwg.mxu0
    %v3943 = vadd.f32 %v3870, %v3940
    %v3944 = vxor.u32 %v3943, 2147483648
    %v3945 = vmul.f32 %v3944, 1.442695
    %v3946 = vpow.pop %v3945
    %v3947 = vadd.f32 %v3946, 1.0
    %v3948 = vrcp.pop %v3947
    %v3949 = vmul.f32 1.0, %v3948
    %v3950 = vtanh.pop %v3943
    %v3951 = vmul.f32 %v3949, %v3858
    %3953 = vrot.lane.b32.xlu0 %v3950, 96
    %v3954 = vpop.permute.xlu0 %3953
    %v3956 = vmul.f32 %v3949, %v3954
    %3958 = vrot.lane.b32.xlu0 %v3956, 16
    %v3959 = vpop.permute.xlu0 %3958
    %v3961 = vadd.f32 %v3951, %v3959
    %v3962 = vtanh.pop %v3961
    %3964 = vrot.lane.b32.xlu0 %v3962, 32
    %v3965 = vpop.permute.xlu0 %3964
    %v3967 = vmul.f32 %v3949, %v3965
    %3969 = vrot.lane.b32.xlu0 %v3967, 80
    %v3970 = vpop.permute.xlu0 %3969
    %3972 = vst.msk [vmem:[%s1026] sm:$0xff] %vm50, %v3970
    %v3973 = vld [vmem:[%s4] sm:$0xff]
    %v3974 = vld [vmem:[%s4 + $0x8] sm:$0xff]
    %v3975 = vld [vmem:[%s4 + $0x10] sm:$0xff]
    %v3976 = vld [vmem:[%s4 + $0x18] sm:$0xff]
    %v3977 = vld [vmem:[%s4 + $0x20] sm:$0xff]
    %v3978 = vld [vmem:[%s4 + $0x28] sm:$0xff]
    %v3979 = vld [vmem:[%s4 + $0x30] sm:$0xff]
    %v3980 = vld [vmem:[%s4 + $0x38] sm:$0xff]
    %s3981 = scalar_lea.vmem %s2, 64
    %v3982 = vld [vmem:[%s3981] sm:$0xff]
    %v3983 = vld [vmem:[%s3981 + $0x8] sm:$0xff]
    %s3984 = scalar_lea.vmem [#allocation3], 64
    %v3985 = vld [vmem:[%s3984] sm:$0xff]
    %v3986 = vld [vmem:[%s3984 + $0x8] sm:$0xff]
    %s3987 = scalar_lea.vmem %s3, 4
    %v3988 = vld [vmem:[%s3987] sm:$0x1]
    %v3990 = vlaneseq
    %v3991 = vshrl.u32 %v3990, 7
    %v3992 = vsub.s32 0, %v3991
    %v3993 = vrot.slane %v3988, %v3992
    %v3996 = vsel %vm50, %v3973, 0
    %v3999 = vsel %vm50, %v3974, 0
    %v4002 = vsel %vm50, %v3975, 0
    %v4005 = vsel %vm50, %v3976, 0
    %v4008 = vsel %vm50, %v3977, 0
    %v4011 = vsel %vm50, %v3978, 0
    %v4014 = vsel %vm50, %v3979, 0
    %v4017 = vsel %vm50, %v3980, 0
    %4019 = vmatprep.subr.mxu0 0.0
    %4020 = vmatpush1.msra.mxu0 %v3985
    %4021 = vmatprep.subr.mxu0 0.0
    %4022 = vmatpush1.msra.mxu0 %v3986
    %4023 = vmatprep.subr.mxu0 0.0
    %4024 = vmatpush1.msra.mxu0 0.0
    %4025 = vmatprep.subr.mxu0 0.0
    %4026 = vmatpush1.msra.mxu0 0.0
    %4027 = vmatprep.subr.mxu0 0.0
    %4028 = vmatpush1.msra.mxu0 0.0
    %4029 = vmatprep.subr.mxu0 0.0
    %4030 = vmatpush1.msra.mxu0 0.0
    %4031 = vmatprep.subr.mxu0 0.0
    %4032 = vmatpush1.msra.mxu0 0.0
    %4033 = vmatprep.subr.mxu0 0.0
    %4034 = vmatpush1.msra.mxu0 0.0
    %4035 = vmatprep.subr.mxu0 0.0
    %4036 = vmatpush1.msra.mxu0 0.0
    %4037 = vmatprep.subr.mxu0 0.0
    %4038 = vmatpush1.msra.mxu0 0.0
    %4039 = vmatprep.subr.mxu0 0.0
    %4040 = vmatpush1.msra.mxu0 0.0
    %4041 = vmatprep.subr.mxu0 0.0
    %4042 = vmatpush1.msra.mxu0 0.0
    %4043 = vmatprep.subr.mxu0 0.0
    %4044 = vmatpush1.msra.mxu0 0.0
    %4045 = vmatprep.subr.mxu0 0.0
    %4046 = vmatpush1.msra.mxu0 0.0
    %4047 = vmatprep.subr.mxu0 0.0
    %4048 = vmatpush1.msra.mxu0 0.0
    %4049 = vmatprep.subr.mxu0 0.0
    %4050 = vmatpush1.msra.mxu0 0.0
    %4051 = vmatprep.subr.mxu0 0.0
    %4052 = vmatpush1.msra.mxu0 0.0
    %4053 = vmatprep.subr.mxu0 0.0
    %4054 = vmatpush1.msra.mxu0 0.0
    %4055 = vmatprep.subr.mxu0 0.0
    %4056 = vmatpush1.msra.mxu0 0.0
    %4057 = vmatprep.subr.mxu0 0.0
    %4058 = vmatpush1.msra.mxu0 0.0
    %4059 = vmatprep.subr.mxu0 0.0
    %4060 = vmatpush1.msra.mxu0 0.0
    %4061 = vmatprep.subr.mxu0 0.0
    %4062 = vmatpush1.msra.mxu0 0.0
    %4063 = vmatprep.subr.mxu0 0.0
    %4064 = vmatpush1.msra.mxu0 0.0
    %4065 = vmatprep.subr.mxu0 0.0
    %4066 = vmatpush1.msra.mxu0 0.0
    %4067 = vmatprep.subr.mxu0 0.0
    %4068 = vmatpush1.msra.mxu0 0.0
    %4069 = vmatprep.subr.mxu0 0.0
    %4070 = vmatpush1.msra.mxu0 0.0
    %4071 = vmatprep.subr.mxu0 0.0
    %4072 = vmatpush1.msra.mxu0 0.0
    %4073 = vmatprep.subr.mxu0 0.0
    %4074 = vmatpush1.msra.mxu0 0.0
    %4075 = vmatprep.subr.mxu0 0.0
    %4076 = vmatpush1.msra.mxu0 0.0
    %4077 = vmatprep.subr.mxu0 0.0
    %4078 = vmatpush1.msra.mxu0 0.0
    %4079 = vmatprep.subr.mxu0 0.0
    %4080 = vmatpush1.msra.mxu0 0.0
    %4081 = vmatprep.subr.mxu0 0.0
    %4082 = vmatpush1.msra.mxu0 0.0
    %4083 = vmatprep.mubr.f32.mxu0 0.0
    %4084 = vmatmul.mubr.f32.gmra.mrb[0].mxu0 %v3996
    %v4085 = vpop.f32.mrb[0].mxu0
    %v4086 = vadd.f32 %v3993, %v4085
    %v4087 = vpop.f32.mrb[0].mxu0
    %4088 = vmatprep.mubr.f32.mxu0 0.0
    %4089 = vmatmul.mubr.f32.gmra.mrb[0].mxu0 %v3999
    %v4090 = vpop.f32.mrb[0].mxu0
    %v4091 = vadd.f32 %v3993, %v4090
    %v4092 = vpop.f32.mrb[0].mxu0
    %4093 = vmatprep.mubr.f32.mxu0 0.0
    %4094 = vmatmul.mubr.f32.gmra.mrb[0].mxu0 %v4002
    %v4095 = vpop.f32.mrb[0].mxu0
    %v4096 = vadd.f32 %v3993, %v4095
    %v4097 = vpop.f32.mrb[0].mxu0
    %4098 = vmatprep.mubr.f32.mxu0 0.0
    %4099 = vmatmul.mubr.f32.gmra.mrb[0].mxu0 %v4005
    %v4100 = vpop.f32.mrb[0].mxu0
    %v4101 = vadd.f32 %v3993, %v4100
    %v4102 = vpop.f32.mrb[0].mxu0
    %4103 = vmatprep.mubr.f32.mxu0 0.0
    %4104 = vmatmul.mubr.f32.gmra.mrb[0].mxu0 %v4008
    %v4105 = vpop.f32.mrb[0].mxu0
    %v4106 = vadd.f32 %v3993, %v4105
    %v4107 = vpop.f32.mrb[0].mxu0
    %4108 = vmatprep.mubr.f32.mxu0 0.0
    %4109 = vmatmul.mubr.f32.gmra.mrb[0].mxu0 %v4011
    %v4110 = vpop.f32.mrb[0].mxu0
    %v4111 = vadd.f32 %v3993, %v4110
    %v4112 = vpop.f32.mrb[0].mxu0
    %4113 = vmatprep.mubr.f32.mxu0 0.0
    %4114 = vmatmul.mubr.f32.gmra.mrb[0].mxu0 %v4014
    %v4115 = vpop.f32.mrb[0].mxu0
    %v4116 = vadd.f32 %v3993, %v4115
    %v4117 = vpop.f32.mrb[0].mxu0
    %4118 = vmatprep.mubr.f32.mxu0 0.0
    %4119 = vmatmul.mubr.f32.gmra.mrb[0].mxu0 %v4017
    %v4120 = vpop.f32.mrb[0].mxu0
    %v4121 = vadd.f32 %v3993, %v4120
    %v4122 = vpop.f32.mrb[0].mxu0
    %4123 = vdwg.mxu0
    %4124 = vst.msk [vmem:[#allocation2] sm:$0xff] %vm180, %v4086
    %4125 = vst.msk [vmem:[#allocation2 + $0x8] sm:$0xff] %vm180, %v4091
    %4126 = vst.msk [vmem:[#allocation2 + $0x10] sm:$0xff] %vm180, %v4096
    %4127 = vst.msk [vmem:[#allocation2 + $0x18] sm:$0xff] %vm180, %v4101
    %4128 = vst.msk [vmem:[#allocation2 + $0x20] sm:$0xff] %vm180, %v4106
    %4129 = vst.msk [vmem:[#allocation2 + $0x28] sm:$0xff] %vm180, %v4111
    %4130 = vst.msk [vmem:[#allocation2 + $0x30] sm:$0xff] %vm180, %v4116
    %4131 = vst.msk [vmem:[#allocation2 + $0x38] sm:$0xff] %vm180, %v4121
    %v4132 = vld [vmem:[#allocation2] sm:$0xff]
    %4133 = vmatprep.subr.mxu0 0.0
    %4134 = vmatpush1.msra.mxu0 %v3982
    %4135 = vmatprep.subr.mxu0 0.0
    %4136 = vmatpush1.msra.mxu0 %v3983
    %4137 = vmatprep.subr.mxu0 0.0
    %4138 = vmatpush1.msra.mxu0 0.0
    %4139 = vmatprep.subr.mxu0 0.0
    %4140 = vmatpush1.msra.mxu0 0.0
    %4141 = vmatprep.subr.mxu0 0.0
    %4142 = vmatpush1.msra.mxu0 0.0
    %4143 = vmatprep.subr.mxu0 0.0
    %4144 = vmatpush1.msra.mxu0 0.0
    %4145 = vmatprep.subr.mxu0 0.0
    %4146 = vmatpush1.msra.mxu0 0.0
    %4147 = vmatprep.subr.mxu0 0.0
    %4148 = vmatpush1.msra.mxu0 0.0
    %4149 = vmatprep.subr.mxu0 0.0
    %4150 = vmatpush1.msra.mxu0 0.0
    %4151 = vmatprep.subr.mxu0 0.0
    %4152 = vmatpush1.msra.mxu0 0.0
    %4153 = vmatprep.subr.mxu0 0.0
    %4154 = vmatpush1.msra.mxu0 0.0
    %4155 = vmatprep.subr.mxu0 0.0
    %4156 = vmatpush1.msra.mxu0 0.0
    %4157 = vmatprep.subr.mxu0 0.0
    %4158 = vmatpush1.msra.mxu0 0.0
    %4159 = vmatprep.subr.mxu0 0.0
    %4160 = vmatpush1.msra.mxu0 0.0
    %4161 = vmatprep.subr.mxu0 0.0
    %4162 = vmatpush1.msra.mxu0 0.0
    %4163 = vmatprep.subr.mxu0 0.0
    %4164 = vmatpush1.msra.mxu0 0.0
    %4165 = vmatprep.subr.mxu0 0.0
    %4166 = vmatpush1.msra.mxu0 0.0
    %4167 = vmatprep.subr.mxu0 0.0
    %4168 = vmatpush1.msra.mxu0 0.0
    %4169 = vmatprep.subr.mxu0 0.0
    %4170 = vmatpush1.msra.mxu0 0.0
    %4171 = vmatprep.subr.mxu0 0.0
    %4172 = vmatpush1.msra.mxu0 0.0
    %4173 = vmatprep.subr.mxu0 0.0
    %4174 = vmatpush1.msra.mxu0 0.0
    %4175 = vmatprep.subr.mxu0 0.0
    %4176 = vmatpush1.msra.mxu0 0.0
    %4177 = vmatprep.subr.mxu0 0.0
    %4178 = vmatpush1.msra.mxu0 0.0
    %4179 = vmatprep.subr.mxu0 0.0
    %4180 = vmatpush1.msra.mxu0 0.0
    %4181 = vmatprep.subr.mxu0 0.0
    %4182 = vmatpush1.msra.mxu0 0.0
    %4183 = vmatprep.subr.mxu0 0.0
    %4184 = vmatpush1.msra.mxu0 0.0
    %4185 = vmatprep.subr.mxu0 0.0
    %4186 = vmatpush1.msra.mxu0 0.0
    %4187 = vmatprep.subr.mxu0 0.0
    %4188 = vmatpush1.msra.mxu0 0.0
    %4189 = vmatprep.subr.mxu0 0.0
    %4190 = vmatpush1.msra.mxu0 0.0
    %4191 = vmatprep.subr.mxu0 0.0
    %4192 = vmatpush1.msra.mxu0 0.0
    %4193 = vmatprep.subr.mxu0 0.0
    %4194 = vmatpush1.msra.mxu0 0.0
    %4195 = vmatprep.subr.mxu0 0.0
    %4196 = vmatpush1.msra.mxu0 0.0
    %4197 = vmatprep.mubr.f32.mxu0 0.0
    %4198 = vmatmul.mubr.f32.gmra.mrb[0].mxu0 %v191
    %v4199 = vpop.f32.mrb[0].mxu0
    %v4200 = vadd.f32 0.0, %v4199
    %v4201 = vpop.f32.mrb[0].mxu0
    %4202 = vdwg.mxu0
    %v4203 = vadd.f32 %v4132, %v4200
    %v4204 = vxor.u32 %v4203, 2147483648
    %v4205 = vmul.f32 %v4204, 1.442695
    %v4206 = vpow.pop %v4205
    %v4207 = vadd.f32 %v4206, 1.0
    %v4208 = vrcp.pop %v4207
    %v4209 = vmul.f32 1.0, %v4208
    %v4210 = vtanh.pop %v4203
    %v4211 = vmul.f32 %v4209, 0.0
    %4213 = vrot.lane.b32.xlu0 %v4210, 96
    %v4214 = vpop.permute.xlu0 %4213
    %v4216 = vmul.f32 %v4209, %v4214
    %4218 = vrot.lane.b32.xlu0 %v4216, 16
    %v4219 = vpop.permute.xlu0 %4218
    %v4221 = vadd.f32 %v4211, %v4219
    %v4222 = vtanh.pop %v4221
    %4224 = vrot.lane.b32.xlu0 %v4222, 32
    %v4225 = vpop.permute.xlu0 %4224
    %v4227 = vmul.f32 %v4209, %v4225
    %4229 = vrot.lane.b32.xlu0 %v4227, 80
    %v4230 = vpop.permute.xlu0 %4229
    %4232 = vst.msk [vmem:[%s4] sm:$0xff] %vm50, %v4230
    %v4233 = vld [vmem:[%s293] sm:$0xff]
    %v4234 = vsel %vm50, %v4230, 0
    %4236 = vmatprep.subr.mxu0 0.0
    %4237 = vmatpush1.msra.mxu0 %v3982
    %4238 = vmatprep.subr.mxu0 0.0
    %4239 = vmatpush1.msra.mxu0 %v3983
    %4240 = vmatprep.subr.mxu0 0.0
    %4241 = vmatpush1.msra.mxu0 0.0
    %4242 = vmatprep.subr.mxu0 0.0
    %4243 = vmatpush1.msra.mxu0 0.0
    %4244 = vmatprep.subr.mxu0 0.0
    %4245 = vmatpush1.msra.mxu0 0.0
    %4246 = vmatprep.subr.mxu0 0.0
    %4247 = vmatpush1.msra.mxu0 0.0
    %4248 = vmatprep.subr.mxu0 0.0
    %4249 = vmatpush1.msra.mxu0 0.0
    %4250 = vmatprep.subr.mxu0 0.0
    %4251 = vmatpush1.msra.mxu0 0.0
    %4252 = vmatprep.subr.mxu0 0.0
    %4253 = vmatpush1.msra.mxu0 0.0
    %4254 = vmatprep.subr.mxu0 0.0
    %4255 = vmatpush1.msra.mxu0 0.0
    %4256 = vmatprep.subr.mxu0 0.0
    %4257 = vmatpush1.msra.mxu0 0.0
    %4258 = vmatprep.subr.mxu0 0.0
    %4259 = vmatpush1.msra.mxu0 0.0
    %4260 = vmatprep.subr.mxu0 0.0
    %4261 = vmatpush1.msra.mxu0 0.0
    %4262 = vmatprep.subr.mxu0 0.0
    %4263 = vmatpush1.msra.mxu0 0.0
    %4264 = vmatprep.subr.mxu0 0.0
    %4265 = vmatpush1.msra.mxu0 0.0
    %4266 = vmatprep.subr.mxu0 0.0
    %4267 = vmatpush1.msra.mxu0 0.0
    %4268 = vmatprep.subr.mxu0 0.0
    %4269 = vmatpush1.msra.mxu0 0.0
    %4270 = vmatprep.subr.mxu0 0.0
    %4271 = vmatpush1.msra.mxu0 0.0
    %4272 = vmatprep.subr.mxu0 0.0
    %4273 = vmatpush1.msra.mxu0 0.0
    %4274 = vmatprep.subr.mxu0 0.0
    %4275 = vmatpush1.msra.mxu0 0.0
    %4276 = vmatprep.subr.mxu0 0.0
    %4277 = vmatpush1.msra.mxu0 0.0
    %4278 = vmatprep.subr.mxu0 0.0
    %4279 = vmatpush1.msra.mxu0 0.0
    %4280 = vmatprep.subr.mxu0 0.0
    %4281 = vmatpush1.msra.mxu0 0.0
    %4282 = vmatprep.subr.mxu0 0.0
    %4283 = vmatpush1.msra.mxu0 0.0
    %4284 = vmatprep.subr.mxu0 0.0
    %4285 = vmatpush1.msra.mxu0 0.0
    %4286 = vmatprep.subr.mxu0 0.0
    %4287 = vmatpush1.msra.mxu0 0.0
    %4288 = vmatprep.subr.mxu0 0.0
    %4289 = vmatpush1.msra.mxu0 0.0
    %4290 = vmatprep.subr.mxu0 0.0
    %4291 = vmatpush1.msra.mxu0 0.0
    %4292 = vmatprep.subr.mxu0 0.0
    %4293 = vmatpush1.msra.mxu0 0.0
    %4294 = vmatprep.subr.mxu0 0.0
    %4295 = vmatpush1.msra.mxu0 0.0
    %4296 = vmatprep.subr.mxu0 0.0
    %4297 = vmatpush1.msra.mxu0 0.0
    %4298 = vmatprep.subr.mxu0 0.0
    %4299 = vmatpush1.msra.mxu0 0.0
    %4300 = vmatprep.mubr.f32.mxu0 0.0
    %4301 = vmatmul.mubr.f32.gmra.mrb[0].mxu0 %v4234
    %v4302 = vpop.f32.mrb[0].mxu0
    %v4303 = vadd.f32 0.0, %v4302
    %v4304 = vpop.f32.mrb[0].mxu0
    %4305 = vdwg.mxu0
    %v4306 = vadd.f32 %v4233, %v4303
    %v4307 = vxor.u32 %v4306, 2147483648
    %v4308 = vmul.f32 %v4307, 1.442695
    %v4309 = vpow.pop %v4308
    %v4310 = vadd.f32 %v4309, 1.0
    %v4311 = vrcp.pop %v4310
    %v4312 = vmul.f32 1.0, %v4311
    %v4313 = vtanh.pop %v4306
    %v4314 = vmul.f32 %v4312, %v4221
    %4316 = vrot.lane.b32.xlu0 %v4313, 96
    %v4317 = vpop.permute.xlu0 %4316
    %v4319 = vmul.f32 %v4312, %v4317
    %4321 = vrot.lane.b32.xlu0 %v4319, 16
    %v4322 = vpop.permute.xlu0 %4321
    %v4324 = vadd.f32 %v4314, %v4322
    %v4325 = vtanh.pop %v4324
    %4327 = vrot.lane.b32.xlu0 %v4325, 32
    %v4328 = vpop.permute.xlu0 %4327
    %v4330 = vmul.f32 %v4312, %v4328
    %4332 = vrot.lane.b32.xlu0 %v4330, 80
    %v4333 = vpop.permute.xlu0 %4332
    %4335 = vst.msk [vmem:[%s396] sm:$0xff] %vm50, %v4333
    %v4336 = vld [vmem:[%s398] sm:$0xff]
    %v4337 = vsel %vm50, %v4333, 0
    %4339 = vmatprep.subr.mxu0 0.0
    %4340 = vmatpush1.msra.mxu0 %v3982
    %4341 = vmatprep.subr.mxu0 0.0
    %4342 = vmatpush1.msra.mxu0 %v3983
    %4343 = vmatprep.subr.mxu0 0.0
    %4344 = vmatpush1.msra.mxu0 0.0
    %4345 = vmatprep.subr.mxu0 0.0
    %4346 = vmatpush1.msra.mxu0 0.0
    %4347 = vmatprep.subr.mxu0 0.0
    %4348 = vmatpush1.msra.mxu0 0.0
    %4349 = vmatprep.subr.mxu0 0.0
    %4350 = vmatpush1.msra.mxu0 0.0
    %4351 = vmatprep.subr.mxu0 0.0
    %4352 = vmatpush1.msra.mxu0 0.0
    %4353 = vmatprep.subr.mxu0 0.0
    %4354 = vmatpush1.msra.mxu0 0.0
    %4355 = vmatprep.subr.mxu0 0.0
    %4356 = vmatpush1.msra.mxu0 0.0
    %4357 = vmatprep.subr.mxu0 0.0
    %4358 = vmatpush1.msra.mxu0 0.0
    %4359 = vmatprep.subr.mxu0 0.0
    %4360 = vmatpush1.msra.mxu0 0.0
    %4361 = vmatprep.subr.mxu0 0.0
    %4362 = vmatpush1.msra.mxu0 0.0
    %4363 = vmatprep.subr.mxu0 0.0
    %4364 = vmatpush1.msra.mxu0 0.0
    %4365 = vmatprep.subr.mxu0 0.0
    %4366 = vmatpush1.msra.mxu0 0.0
    %4367 = vmatprep.subr.mxu0 0.0
    %4368 = vmatpush1.msra.mxu0 0.0
    %4369 = vmatprep.subr.mxu0 0.0
    %4370 = vmatpush1.msra.mxu0 0.0
    %4371 = vmatprep.subr.mxu0 0.0
    %4372 = vmatpush1.msra.mxu0 0.0
    %4373 = vmatprep.subr.mxu0 0.0
    %4374 = vmatpush1.msra.mxu0 0.0
    %4375 = vmatprep.subr.mxu0 0.0
    %4376 = vmatpush1.msra.mxu0 0.0
    %4377 = vmatprep.subr.mxu0 0.0
    %4378 = vmatpush1.msra.mxu0 0.0
    %4379 = vmatprep.subr.mxu0 0.0
    %4380 = vmatpush1.msra.mxu0 0.0
    %4381 = vmatprep.subr.mxu0 0.0
    %4382 = vmatpush1.msra.mxu0 0.0
    %4383 = vmatprep.subr.mxu0 0.0
    %4384 = vmatpush1.msra.mxu0 0.0
    %4385 = vmatprep.subr.mxu0 0.0
    %4386 = vmatpush1.msra.mxu0 0.0
    %4387 = vmatprep.subr.mxu0 0.0
    %4388 = vmatpush1.msra.mxu0 0.0
    %4389 = vmatprep.subr.mxu0 0.0
    %4390 = vmatpush1.msra.mxu0 0.0
    %4391 = vmatprep.subr.mxu0 0.0
    %4392 = vmatpush1.msra.mxu0 0.0
    %4393 = vmatprep.subr.mxu0 0.0
    %4394 = vmatpush1.msra.mxu0 0.0
    %4395 = vmatprep.subr.mxu0 0.0
    %4396 = vmatpush1.msra.mxu0 0.0
    %4397 = vmatprep.subr.mxu0 0.0
    %4398 = vmatpush1.msra.mxu0 0.0
    %4399 = vmatprep.subr.mxu0 0.0
    %4400 = vmatpush1.msra.mxu0 0.0
    %4401 = vmatprep.subr.mxu0 0.0
    %4402 = vmatpush1.msra.mxu0 0.0
    %4403 = vmatprep.mubr.f32.mxu0 0.0
    %4404 = vmatmul.mubr.f32.gmra.mrb[0].mxu0 %v4337
    %v4405 = vpop.f32.mrb[0].mxu0
    %v4406 = vadd.f32 0.0, %v4405
    %v4407 = vpop.f32.mrb[0].mxu0
    %4408 = vdwg.mxu0
    %v4409 = vadd.f32 %v4336, %v4406
    %v4410 = vxor.u32 %v4409, 2147483648
    %v4411 = vmul.f32 %v4410, 1.442695
    %v4412 = vpow.pop %v4411
    %v4413 = vadd.f32 %v4412, 1.0
    %v4414 = vrcp.pop %v4413
    %v4415 = vmul.f32 1.0, %v4414
    %v4416 = vtanh.pop %v4409
    %v4417 = vmul.f32 %v4415, %v4324
    %4419 = vrot.lane.b32.xlu0 %v4416, 96
    %v4420 = vpop.permute.xlu0 %4419
    %v4422 = vmul.f32 %v4415, %v4420
    %4424 = vrot.lane.b32.xlu0 %v4422, 16
    %v4425 = vpop.permute.xlu0 %4424
    %v4427 = vadd.f32 %v4417, %v4425
    %v4428 = vtanh.pop %v4427
    %4430 = vrot.lane.b32.xlu0 %v4428, 32
    %v4431 = vpop.permute.xlu0 %4430
    %v4433 = vmul.f32 %v4415, %v4431
    %4435 = vrot.lane.b32.xlu0 %v4433, 80
    %v4436 = vpop.permute.xlu0 %4435
    %4438 = vst.msk [vmem:[%s501] sm:$0xff] %vm50, %v4436
    %v4439 = vld [vmem:[%s503] sm:$0xff]
    %v4440 = vsel %vm50, %v4436, 0
    %4442 = vmatprep.subr.mxu0 0.0
    %4443 = vmatpush1.msra.mxu0 %v3982
    %4444 = vmatprep.subr.mxu0 0.0
    %4445 = vmatpush1.msra.mxu0 %v3983
    %4446 = vmatprep.subr.mxu0 0.0
    %4447 = vmatpush1.msra.mxu0 0.0
    %4448 = vmatprep.subr.mxu0 0.0
    %4449 = vmatpush1.msra.mxu0 0.0
    %4450 = vmatprep.subr.mxu0 0.0
    %4451 = vmatpush1.msra.mxu0 0.0
    %4452 = vmatprep.subr.mxu0 0.0
    %4453 = vmatpush1.msra.mxu0 0.0
    %4454 = vmatprep.subr.mxu0 0.0
    %4455 = vmatpush1.msra.mxu0 0.0
    %4456 = vmatprep.subr.mxu0 0.0
    %4457 = vmatpush1.msra.mxu0 0.0
    %4458 = vmatprep.subr.mxu0 0.0
    %4459 = vmatpush1.msra.mxu0 0.0
    %4460 = vmatprep.subr.mxu0 0.0
    %4461 = vmatpush1.msra.mxu0 0.0
    %4462 = vmatprep.subr.mxu0 0.0
    %4463 = vmatpush1.msra.mxu0 0.0
    %4464 = vmatprep.subr.mxu0 0.0
    %4465 = vmatpush1.msra.mxu0 0.0
    %4466 = vmatprep.subr.mxu0 0.0
    %4467 = vmatpush1.msra.mxu0 0.0
    %4468 = vmatprep.subr.mxu0 0.0
    %4469 = vmatpush1.msra.mxu0 0.0
    %4470 = vmatprep.subr.mxu0 0.0
    %4471 = vmatpush1.msra.mxu0 0.0
    %4472 = vmatprep.subr.mxu0 0.0
    %4473 = vmatpush1.msra.mxu0 0.0
    %4474 = vmatprep.subr.mxu0 0.0
    %4475 = vmatpush1.msra.mxu0 0.0
    %4476 = vmatprep.subr.mxu0 0.0
    %4477 = vmatpush1.msra.mxu0 0.0
    %4478 = vmatprep.subr.mxu0 0.0
    %4479 = vmatpush1.msra.mxu0 0.0
    %4480 = vmatprep.subr.mxu0 0.0
    %4481 = vmatpush1.msra.mxu0 0.0
    %4482 = vmatprep.subr.mxu0 0.0
    %4483 = vmatpush1.msra.mxu0 0.0
    %4484 = vmatprep.subr.mxu0 0.0
    %4485 = vmatpush1.msra.mxu0 0.0
    %4486 = vmatprep.subr.mxu0 0.0
    %4487 = vmatpush1.msra.mxu0 0.0
    %4488 = vmatprep.subr.mxu0 0.0
    %4489 = vmatpush1.msra.mxu0 0.0
    %4490 = vmatprep.subr.mxu0 0.0
    %4491 = vmatpush1.msra.mxu0 0.0
    %4492 = vmatprep.subr.mxu0 0.0
    %4493 = vmatpush1.msra.mxu0 0.0
    %4494 = vmatprep.subr.mxu0 0.0
    %4495 = vmatpush1.msra.mxu0 0.0
    %4496 = vmatprep.subr.mxu0 0.0
    %4497 = vmatpush1.msra.mxu0 0.0
    %4498 = vmatprep.subr.mxu0 0.0
    %4499 = vmatpush1.msra.mxu0 0.0
    %4500 = vmatprep.subr.mxu0 0.0
    %4501 = vmatpush1.msra.mxu0 0.0
    %4502 = vmatprep.subr.mxu0 0.0
    %4503 = vmatpush1.msra.mxu0 0.0
    %4504 = vmatprep.subr.mxu0 0.0
    %4505 = vmatpush1.msra.mxu0 0.0
    %4506 = vmatprep.mubr.f32.mxu0 0.0
    %4507 = vmatmul.mubr.f32.gmra.mrb[0].mxu0 %v4440
    %v4508 = vpop.f32.mrb[0].mxu0
    %v4509 = vadd.f32 0.0, %v4508
    %v4510 = vpop.f32.mrb[0].mxu0
    %4511 = vdwg.mxu0
    %v4512 = vadd.f32 %v4439, %v4509
    %v4513 = vxor.u32 %v4512, 2147483648
    %v4514 = vmul.f32 %v4513, 1.442695
    %v4515 = vpow.pop %v4514
    %v4516 = vadd.f32 %v4515, 1.0
    %v4517 = vrcp.pop %v4516
    %v4518 = vmul.f32 1.0, %v4517
    %v4519 = vtanh.pop %v4512
    %v4520 = vmul.f32 %v4518, %v4427
    %4522 = vrot.lane.b32.xlu0 %v4519, 96
    %v4523 = vpop.permute.xlu0 %4522
    %v4525 = vmul.f32 %v4518, %v4523
    %4527 = vrot.lane.b32.xlu0 %v4525, 16
    %v4528 = vpop.permute.xlu0 %4527
    %v4530 = vadd.f32 %v4520, %v4528
    %v4531 = vtanh.pop %v4530
    %4533 = vrot.lane.b32.xlu0 %v4531, 32
    %v4534 = vpop.permute.xlu0 %4533
    %v4536 = vmul.f32 %v4518, %v4534
    %4538 = vrot.lane.b32.xlu0 %v4536, 80
    %v4539 = vpop.permute.xlu0 %4538
    %4541 = vst.msk [vmem:[%s606] sm:$0xff] %vm50, %v4539
    %v4542 = vld [vmem:[%s608] sm:$0xff]
    %v4543 = vsel %vm50, %v4539, 0
    %4545 = vmatprep.subr.mxu0 0.0
    %4546 = vmatpush1.msra.mxu0 %v3982
    %4547 = vmatprep.subr.mxu0 0.0
    %4548 = vmatpush1.msra.mxu0 %v3983
    %4549 = vmatprep.subr.mxu0 0.0
    %4550 = vmatpush1.msra.mxu0 0.0
    %4551 = vmatprep.subr.mxu0 0.0
    %4552 = vmatpush1.msra.mxu0 0.0
    %4553 = vmatprep.subr.mxu0 0.0
    %4554 = vmatpush1.msra.mxu0 0.0
    %4555 = vmatprep.subr.mxu0 0.0
    %4556 = vmatpush1.msra.mxu0 0.0
    %4557 = vmatprep.subr.mxu0 0.0
    %4558 = vmatpush1.msra.mxu0 0.0
    %4559 = vmatprep.subr.mxu0 0.0
    %4560 = vmatpush1.msra.mxu0 0.0
    %4561 = vmatprep.subr.mxu0 0.0
    %4562 = vmatpush1.msra.mxu0 0.0
    %4563 = vmatprep.subr.mxu0 0.0
    %4564 = vmatpush1.msra.mxu0 0.0
    %4565 = vmatprep.subr.mxu0 0.0
    %4566 = vmatpush1.msra.mxu0 0.0
    %4567 = vmatprep.subr.mxu0 0.0
    %4568 = vmatpush1.msra.mxu0 0.0
    %4569 = vmatprep.subr.mxu0 0.0
    %4570 = vmatpush1.msra.mxu0 0.0
    %4571 = vmatprep.subr.mxu0 0.0
    %4572 = vmatpush1.msra.mxu0 0.0
    %4573 = vmatprep.subr.mxu0 0.0
    %4574 = vmatpush1.msra.mxu0 0.0
    %4575 = vmatprep.subr.mxu0 0.0
    %4576 = vmatpush1.msra.mxu0 0.0
    %4577 = vmatprep.subr.mxu0 0.0
    %4578 = vmatpush1.msra.mxu0 0.0
    %4579 = vmatprep.subr.mxu0 0.0
    %4580 = vmatpush1.msra.mxu0 0.0
    %4581 = vmatprep.subr.mxu0 0.0
    %4582 = vmatpush1.msra.mxu0 0.0
    %4583 = vmatprep.subr.mxu0 0.0
    %4584 = vmatpush1.msra.mxu0 0.0
    %4585 = vmatprep.subr.mxu0 0.0
    %4586 = vmatpush1.msra.mxu0 0.0
    %4587 = vmatprep.subr.mxu0 0.0
    %4588 = vmatpush1.msra.mxu0 0.0
    %4589 = vmatprep.subr.mxu0 0.0
    %4590 = vmatpush1.msra.mxu0 0.0
    %4591 = vmatprep.subr.mxu0 0.0
    %4592 = vmatpush1.msra.mxu0 0.0
    %4593 = vmatprep.subr.mxu0 0.0
    %4594 = vmatpush1.msra.mxu0 0.0
    %4595 = vmatprep.subr.mxu0 0.0
    %4596 = vmatpush1.msra.mxu0 0.0
    %4597 = vmatprep.subr.mxu0 0.0
    %4598 = vmatpush1.msra.mxu0 0.0
    %4599 = vmatprep.subr.mxu0 0.0
    %4600 = vmatpush1.msra.mxu0 0.0
    %4601 = vmatprep.subr.mxu0 0.0
    %4602 = vmatpush1.msra.mxu0 0.0
    %4603 = vmatprep.subr.mxu0 0.0
    %4604 = vmatpush1.msra.mxu0 0.0
    %4605 = vmatprep.subr.mxu0 0.0
    %4606 = vmatpush1.msra.mxu0 0.0
    %4607 = vmatprep.subr.mxu0 0.0
    %4608 = vmatpush1.msra.mxu0 0.0
    %4609 = vmatprep.mubr.f32.mxu0 0.0
    %4610 = vmatmul.mubr.f32.gmra.mrb[0].mxu0 %v4543
    %v4611 = vpop.f32.mrb[0].mxu0
    %v4612 = vadd.f32 0.0, %v4611
    %v4613 = vpop.f32.mrb[0].mxu0
    %4614 = vdwg.mxu0
    %v4615 = vadd.f32 %v4542, %v4612
    %v4616 = vxor.u32 %v4615, 2147483648
    %v4617 = vmul.f32 %v4616, 1.442695
    %v4618 = vpow.pop %v4617
    %v4619 = vadd.f32 %v4618, 1.0
    %v4620 = vrcp.pop %v4619
    %v4621 = vmul.f32 1.0, %v4620
    %v4622 = vtanh.pop %v4615
    %v4623 = vmul.f32 %v4621, %v4530
    %4625 = vrot.lane.b32.xlu0 %v4622, 96
    %v4626 = vpop.permute.xlu0 %4625
    %v4628 = vmul.f32 %v4621, %v4626
    %4630 = vrot.lane.b32.xlu0 %v4628, 16
    %v4631 = vpop.permute.xlu0 %4630
    %v4633 = vadd.f32 %v4623, %v4631
    %v4634 = vtanh.pop %v4633
    %4636 = vrot.lane.b32.xlu0 %v4634, 32
    %v4637 = vpop.permute.xlu0 %4636
    %v4639 = vmul.f32 %v4621, %v4637
    %4641 = vrot.lane.b32.xlu0 %v4639, 80
    %v4642 = vpop.permute.xlu0 %4641
    %4644 = vst.msk [vmem:[%s711] sm:$0xff] %vm50, %v4642
    %v4645 = vld [vmem:[%s713] sm:$0xff]
    %v4646 = vsel %vm50, %v4642, 0
    %4648 = vmatprep.subr.mxu0 0.0
    %4649 = vmatpush1.msra.mxu0 %v3982
    %4650 = vmatprep.subr.mxu0 0.0
    %4651 = vmatpush1.msra.mxu0 %v3983
    %4652 = vmatprep.subr.mxu0 0.0
    %4653 = vmatpush1.msra.mxu0 0.0
    %4654 = vmatprep.subr.mxu0 0.0
    %4655 = vmatpush1.msra.mxu0 0.0
    %4656 = vmatprep.subr.mxu0 0.0
    %4657 = vmatpush1.msra.mxu0 0.0
    %4658 = vmatprep.subr.mxu0 0.0
    %4659 = vmatpush1.msra.mxu0 0.0
    %4660 = vmatprep.subr.mxu0 0.0
    %4661 = vmatpush1.msra.mxu0 0.0
    %4662 = vmatprep.subr.mxu0 0.0
    %4663 = vmatpush1.msra.mxu0 0.0
    %4664 = vmatprep.subr.mxu0 0.0
    %4665 = vmatpush1.msra.mxu0 0.0
    %4666 = vmatprep.subr.mxu0 0.0
    %4667 = vmatpush1.msra.mxu0 0.0
    %4668 = vmatprep.subr.mxu0 0.0
    %4669 = vmatpush1.msra.mxu0 0.0
    %4670 = vmatprep.subr.mxu0 0.0
    %4671 = vmatpush1.msra.mxu0 0.0
    %4672 = vmatprep.subr.mxu0 0.0
    %4673 = vmatpush1.msra.mxu0 0.0
    %4674 = vmatprep.subr.mxu0 0.0
    %4675 = vmatpush1.msra.mxu0 0.0
    %4676 = vmatprep.subr.mxu0 0.0
    %4677 = vmatpush1.msra.mxu0 0.0
    %4678 = vmatprep.subr.mxu0 0.0
    %4679 = vmatpush1.msra.mxu0 0.0
    %4680 = vmatprep.subr.mxu0 0.0
    %4681 = vmatpush1.msra.mxu0 0.0
    %4682 = vmatprep.subr.mxu0 0.0
    %4683 = vmatpush1.msra.mxu0 0.0
    %4684 = vmatprep.subr.mxu0 0.0
    %4685 = vmatpush1.msra.mxu0 0.0
    %4686 = vmatprep.subr.mxu0 0.0
    %4687 = vmatpush1.msra.mxu0 0.0
    %4688 = vmatprep.subr.mxu0 0.0
    %4689 = vmatpush1.msra.mxu0 0.0
    %4690 = vmatprep.subr.mxu0 0.0
    %4691 = vmatpush1.msra.mxu0 0.0
    %4692 = vmatprep.subr.mxu0 0.0
    %4693 = vmatpush1.msra.mxu0 0.0
    %4694 = vmatprep.subr.mxu0 0.0
    %4695 = vmatpush1.msra.mxu0 0.0
    %4696 = vmatprep.subr.mxu0 0.0
    %4697 = vmatpush1.msra.mxu0 0.0
    %4698 = vmatprep.subr.mxu0 0.0
    %4699 = vmatpush1.msra.mxu0 0.0
    %4700 = vmatprep.subr.mxu0 0.0
    %4701 = vmatpush1.msra.mxu0 0.0
    %4702 = vmatprep.subr.mxu0 0.0
    %4703 = vmatpush1.msra.mxu0 0.0
    %4704 = vmatprep.subr.mxu0 0.0
    %4705 = vmatpush1.msra.mxu0 0.0
    %4706 = vmatprep.subr.mxu0 0.0
    %4707 = vmatpush1.msra.mxu0 0.0
    %4708 = vmatprep.subr.mxu0 0.0
    %4709 = vmatpush1.msra.mxu0 0.0
    %4710 = vmatprep.subr.mxu0 0.0
    %4711 = vmatpush1.msra.mxu0 0.0
    %4712 = vmatprep.mubr.f32.mxu0 0.0
    %4713 = vmatmul.mubr.f32.gmra.mrb[0].mxu0 %v4646
    %v4714 = vpop.f32.mrb[0].mxu0
    %v4715 = vadd.f32 0.0, %v4714
    %v4716 = vpop.f32.mrb[0].mxu0
    %4717 = vdwg.mxu0
    %v4718 = vadd.f32 %v4645, %v4715
    %v4719 = vxor.u32 %v4718, 2147483648
    %v4720 = vmul.f32 %v4719, 1.442695
    %v4721 = vpow.pop %v4720
    %v4722 = vadd.f32 %v4721, 1.0
    %v4723 = vrcp.pop %v4722
    %v4724 = vmul.f32 1.0, %v4723
    %v4725 = vtanh.pop %v4718
    %v4726 = vmul.f32 %v4724, %v4633
    %4728 = vrot.lane.b32.xlu0 %v4725, 96
    %v4729 = vpop.permute.xlu0 %4728
    %v4731 = vmul.f32 %v4724, %v4729
    %4733 = vrot.lane.b32.xlu0 %v4731, 16
    %v4734 = vpop.permute.xlu0 %4733
    %v4736 = vadd.f32 %v4726, %v4734
    %v4737 = vtanh.pop %v4736
    %4739 = vrot.lane.b32.xlu0 %v4737, 32
    %v4740 = vpop.permute.xlu0 %4739
    %v4742 = vmul.f32 %v4724, %v4740
    %4744 = vrot.lane.b32.xlu0 %v4742, 80
    %v4745 = vpop.permute.xlu0 %4744
    %4747 = vst.msk [vmem:[%s816] sm:$0xff] %vm50, %v4745
    %v4748 = vld [vmem:[%s818] sm:$0xff]
    %v4749 = vsel %vm50, %v4745, 0
    %4751 = vmatprep.subr.mxu0 0.0
    %4752 = vmatpush1.msra.mxu0 %v3982
    %4753 = vmatprep.subr.mxu0 0.0
    %4754 = vmatpush1.msra.mxu0 %v3983
    %4755 = vmatprep.subr.mxu0 0.0
    %4756 = vmatpush1.msra.mxu0 0.0
    %4757 = vmatprep.subr.mxu0 0.0
    %4758 = vmatpush1.msra.mxu0 0.0
    %4759 = vmatprep.subr.mxu0 0.0
    %4760 = vmatpush1.msra.mxu0 0.0
    %4761 = vmatprep.subr.mxu0 0.0
    %4762 = vmatpush1.msra.mxu0 0.0
    %4763 = vmatprep.subr.mxu0 0.0
    %4764 = vmatpush1.msra.mxu0 0.0
    %4765 = vmatprep.subr.mxu0 0.0
    %4766 = vmatpush1.msra.mxu0 0.0
    %4767 = vmatprep.subr.mxu0 0.0
    %4768 = vmatpush1.msra.mxu0 0.0
    %4769 = vmatprep.subr.mxu0 0.0
    %4770 = vmatpush1.msra.mxu0 0.0
    %4771 = vmatprep.subr.mxu0 0.0
    %4772 = vmatpush1.msra.mxu0 0.0
    %4773 = vmatprep.subr.mxu0 0.0
    %4774 = vmatpush1.msra.mxu0 0.0
    %4775 = vmatprep.subr.mxu0 0.0
    %4776 = vmatpush1.msra.mxu0 0.0
    %4777 = vmatprep.subr.mxu0 0.0
    %4778 = vmatpush1.msra.mxu0 0.0
    %4779 = vmatprep.subr.mxu0 0.0
    %4780 = vmatpush1.msra.mxu0 0.0
    %4781 = vmatprep.subr.mxu0 0.0
    %4782 = vmatpush1.msra.mxu0 0.0
    %4783 = vmatprep.subr.mxu0 0.0
    %4784 = vmatpush1.msra.mxu0 0.0
    %4785 = vmatprep.subr.mxu0 0.0
    %4786 = vmatpush1.msra.mxu0 0.0
    %4787 = vmatprep.subr.mxu0 0.0
    %4788 = vmatpush1.msra.mxu0 0.0
    %4789 = vmatprep.subr.mxu0 0.0
    %4790 = vmatpush1.msra.mxu0 0.0
    %4791 = vmatprep.subr.mxu0 0.0
    %4792 = vmatpush1.msra.mxu0 0.0
    %4793 = vmatprep.subr.mxu0 0.0
    %4794 = vmatpush1.msra.mxu0 0.0
    %4795 = vmatprep.subr.mxu0 0.0
    %4796 = vmatpush1.msra.mxu0 0.0
    %4797 = vmatprep.subr.mxu0 0.0
    %4798 = vmatpush1.msra.mxu0 0.0
    %4799 = vmatprep.subr.mxu0 0.0
    %4800 = vmatpush1.msra.mxu0 0.0
    %4801 = vmatprep.subr.mxu0 0.0
    %4802 = vmatpush1.msra.mxu0 0.0
    %4803 = vmatprep.subr.mxu0 0.0
    %4804 = vmatpush1.msra.mxu0 0.0
    %4805 = vmatprep.subr.mxu0 0.0
    %4806 = vmatpush1.msra.mxu0 0.0
    %4807 = vmatprep.subr.mxu0 0.0
    %4808 = vmatpush1.msra.mxu0 0.0
    %4809 = vmatprep.subr.mxu0 0.0
    %4810 = vmatpush1.msra.mxu0 0.0
    %4811 = vmatprep.subr.mxu0 0.0
    %4812 = vmatpush1.msra.mxu0 0.0
    %4813 = vmatprep.subr.mxu0 0.0
    %4814 = vmatpush1.msra.mxu0 0.0
    %4815 = vmatprep.mubr.f32.mxu0 0.0
    %4816 = vmatmul.mubr.f32.gmra.mrb[0].mxu0 %v4749
    %v4817 = vpop.f32.mrb[0].mxu0
    %v4818 = vadd.f32 0.0, %v4817
    %v4819 = vpop.f32.mrb[0].mxu0
    %4820 = vdwg.mxu0
    %v4821 = vadd.f32 %v4748, %v4818
    %v4822 = vxor.u32 %v4821, 2147483648
    %v4823 = vmul.f32 %v4822, 1.442695
    %v4824 = vpow.pop %v4823
    %v4825 = vadd.f32 %v4824, 1.0
    %v4826 = vrcp.pop %v4825
    %v4827 = vmul.f32 1.0, %v4826
    %v4828 = vtanh.pop %v4821
    %v4829 = vmul.f32 %v4827, %v4736
    %4831 = vrot.lane.b32.xlu0 %v4828, 96
    %v4832 = vpop.permute.xlu0 %4831
    %v4834 = vmul.f32 %v4827, %v4832
    %4836 = vrot.lane.b32.xlu0 %v4834, 16
    %v4837 = vpop.permute.xlu0 %4836
    %v4839 = vadd.f32 %v4829, %v4837
    %v4840 = vtanh.pop %v4839
    %4842 = vrot.lane.b32.xlu0 %v4840, 32
    %v4843 = vpop.permute.xlu0 %4842
    %v4845 = vmul.f32 %v4827, %v4843
    %4847 = vrot.lane.b32.xlu0 %v4845, 80
    %v4848 = vpop.permute.xlu0 %4847
    %4850 = vst.msk [vmem:[%s921] sm:$0xff] %vm50, %v4848
    %v4851 = vld [vmem:[%s923] sm:$0xff]
    %v4852 = vsel %vm50, %v4848, 0
    %4854 = vmatprep.subr.mxu0 0.0
    %4855 = vmatpush1.msra.mxu0 %v3982
    %4856 = vmatprep.subr.mxu0 0.0
    %4857 = vmatpush1.msra.mxu0 %v3983
    %4858 = vmatprep.subr.mxu0 0.0
    %4859 = vmatpush1.msra.mxu0 0.0
    %4860 = vmatprep.subr.mxu0 0.0
    %4861 = vmatpush1.msra.mxu0 0.0
    %4862 = vmatprep.subr.mxu0 0.0
    %4863 = vmatpush1.msra.mxu0 0.0
    %4864 = vmatprep.subr.mxu0 0.0
    %4865 = vmatpush1.msra.mxu0 0.0
    %4866 = vmatprep.subr.mxu0 0.0
    %4867 = vmatpush1.msra.mxu0 0.0
    %4868 = vmatprep.subr.mxu0 0.0
    %4869 = vmatpush1.msra.mxu0 0.0
    %4870 = vmatprep.subr.mxu0 0.0
    %4871 = vmatpush1.msra.mxu0 0.0
    %4872 = vmatprep.subr.mxu0 0.0
    %4873 = vmatpush1.msra.mxu0 0.0
    %4874 = vmatprep.subr.mxu0 0.0
    %4875 = vmatpush1.msra.mxu0 0.0
    %4876 = vmatprep.subr.mxu0 0.0
    %4877 = vmatpush1.msra.mxu0 0.0
    %4878 = vmatprep.subr.mxu0 0.0
    %4879 = vmatpush1.msra.mxu0 0.0
    %4880 = vmatprep.subr.mxu0 0.0
    %4881 = vmatpush1.msra.mxu0 0.0
    %4882 = vmatprep.subr.mxu0 0.0
    %4883 = vmatpush1.msra.mxu0 0.0
    %4884 = vmatprep.subr.mxu0 0.0
    %4885 = vmatpush1.msra.mxu0 0.0
    %4886 = vmatprep.subr.mxu0 0.0
    %4887 = vmatpush1.msra.mxu0 0.0
    %4888 = vmatprep.subr.mxu0 0.0
    %4889 = vmatpush1.msra.mxu0 0.0
    %4890 = vmatprep.subr.mxu0 0.0
    %4891 = vmatpush1.msra.mxu0 0.0
    %4892 = vmatprep.subr.mxu0 0.0
    %4893 = vmatpush1.msra.mxu0 0.0
    %4894 = vmatprep.subr.mxu0 0.0
    %4895 = vmatpush1.msra.mxu0 0.0
    %4896 = vmatprep.subr.mxu0 0.0
    %4897 = vmatpush1.msra.mxu0 0.0
    %4898 = vmatprep.subr.mxu0 0.0
    %4899 = vmatpush1.msra.mxu0 0.0
    %4900 = vmatprep.subr.mxu0 0.0
    %4901 = vmatpush1.msra.mxu0 0.0
    %4902 = vmatprep.subr.mxu0 0.0
    %4903 = vmatpush1.msra.mxu0 0.0
    %4904 = vmatprep.subr.mxu0 0.0
    %4905 = vmatpush1.msra.mxu0 0.0
    %4906 = vmatprep.subr.mxu0 0.0
    %4907 = vmatpush1.msra.mxu0 0.0
    %4908 = vmatprep.subr.mxu0 0.0
    %4909 = vmatpush1.msra.mxu0 0.0
    %4910 = vmatprep.subr.mxu0 0.0
    %4911 = vmatpush1.msra.mxu0 0.0
    %4912 = vmatprep.subr.mxu0 0.0
    %4913 = vmatpush1.msra.mxu0 0.0
    %4914 = vmatprep.subr.mxu0 0.0
    %4915 = vmatpush1.msra.mxu0 0.0
    %4916 = vmatprep.subr.mxu0 0.0
    %4917 = vmatpush1.msra.mxu0 0.0
    %4918 = vmatprep.mubr.f32.mxu0 0.0
    %4919 = vmatmul.mubr.f32.gmra.mrb[0].mxu0 %v4852
    %v4920 = vpop.f32.mrb[0].mxu0
    %v4921 = vadd.f32 0.0, %v4920
    %v4922 = vpop.f32.mrb[0].mxu0
    %4923 = vdwg.mxu0
    %v4924 = vadd.f32 %v4851, %v4921
    %v4925 = vxor.u32 %v4924, 2147483648
    %v4926 = vmul.f32 %v4925, 1.442695
    %v4927 = vpow.pop %v4926
    %v4928 = vadd.f32 %v4927, 1.0
    %v4929 = vrcp.pop %v4928
    %v4930 = vmul.f32 1.0, %v4929
    %v4931 = vtanh.pop %v4924
    %v4932 = vmul.f32 %v4930, %v4839
    %4934 = vrot.lane.b32.xlu0 %v4931, 96
    %v4935 = vpop.permute.xlu0 %4934
    %v4937 = vmul.f32 %v4930, %v4935
    %4939 = vrot.lane.b32.xlu0 %v4937, 16
    %v4940 = vpop.permute.xlu0 %4939
    %v4942 = vadd.f32 %v4932, %v4940
    %v4943 = vtanh.pop %v4942
    %4945 = vrot.lane.b32.xlu0 %v4943, 32
    %v4946 = vpop.permute.xlu0 %4945
    %v4948 = vmul.f32 %v4930, %v4946
    %4950 = vrot.lane.b32.xlu0 %v4948, 80
    %v4951 = vpop.permute.xlu0 %4950
    %4953 = vst.msk [vmem:[%s1026] sm:$0xff] %vm50, %v4951
    %v4954 = vld [vmem:[%s4] sm:$0xff]
    %v4955 = vld [vmem:[%s4 + $0x8] sm:$0xff]
    %v4956 = vld [vmem:[%s4 + $0x10] sm:$0xff]
    %v4957 = vld [vmem:[%s4 + $0x18] sm:$0xff]
    %v4958 = vld [vmem:[%s4 + $0x20] sm:$0xff]
    %v4959 = vld [vmem:[%s4 + $0x28] sm:$0xff]
    %v4960 = vld [vmem:[%s4 + $0x30] sm:$0xff]
    %v4961 = vld [vmem:[%s4 + $0x38] sm:$0xff]
    %s4962 = scalar_lea.vmem %s2, 80
    %v4963 = vld [vmem:[%s4962] sm:$0xff]
    %v4964 = vld [vmem:[%s4962 + $0x8] sm:$0xff]
    %s4965 = scalar_lea.vmem [#allocation3], 80
    %v4966 = vld [vmem:[%s4965] sm:$0xff]
    %v4967 = vld [vmem:[%s4965 + $0x8] sm:$0xff]
    %s4968 = scalar_lea.vmem %s3, 5
    %v4969 = vld [vmem:[%s4968] sm:$0x1]
    %v4971 = vlaneseq
    %v4972 = vshrl.u32 %v4971, 7
    %v4973 = vsub.s32 0, %v4972
    %v4974 = vrot.slane %v4969, %v4973
    %v4977 = vsel %vm50, %v4954, 0
    %v4980 = vsel %vm50, %v4955, 0
    %v4983 = vsel %vm50, %v4956, 0
    %v4986 = vsel %vm50, %v4957, 0
    %v4989 = vsel %vm50, %v4958, 0
    %v4992 = vsel %vm50, %v4959, 0
    %v4995 = vsel %vm50, %v4960, 0
    %v4998 = vsel %vm50, %v4961, 0
    %5000 = vmatprep.subr.mxu0 0.0
    %5001 = vmatpush1.msra.mxu0 %v4966
    %5002 = vmatprep.subr.mxu0 0.0
    %5003 = vmatpush1.msra.mxu0 %v4967
    %5004 = vmatprep.subr.mxu0 0.0
    %5005 = vmatpush1.msra.mxu0 0.0
    %5006 = vmatprep.subr.mxu0 0.0
    %5007 = vmatpush1.msra.mxu0 0.0
    %5008 = vmatprep.subr.mxu0 0.0
    %5009 = vmatpush1.msra.mxu0 0.0
    %5010 = vmatprep.subr.mxu0 0.0
    %5011 = vmatpush1.msra.mxu0 0.0
    %5012 = vmatprep.subr.mxu0 0.0
    %5013 = vmatpush1.msra.mxu0 0.0
    %5014 = vmatprep.subr.mxu0 0.0
    %5015 = vmatpush1.msra.mxu0 0.0
    %5016 = vmatprep.subr.mxu0 0.0
    %5017 = vmatpush1.msra.mxu0 0.0
    %5018 = vmatprep.subr.mxu0 0.0
    %5019 = vmatpush1.msra.mxu0 0.0
    %5020 = vmatprep.subr.mxu0 0.0
    %5021 = vmatpush1.msra.mxu0 0.0
    %5022 = vmatprep.subr.mxu0 0.0
    %5023 = vmatpush1.msra.mxu0 0.0
    %5024 = vmatprep.subr.mxu0 0.0
    %5025 = vmatpush1.msra.mxu0 0.0
    %5026 = vmatprep.subr.mxu0 0.0
    %5027 = vmatpush1.msra.mxu0 0.0
    %5028 = vmatprep.subr.mxu0 0.0
    %5029 = vmatpush1.msra.mxu0 0.0
    %5030 = vmatprep.subr.mxu0 0.0
    %5031 = vmatpush1.msra.mxu0 0.0
    %5032 = vmatprep.subr.mxu0 0.0
    %5033 = vmatpush1.msra.mxu0 0.0
    %5034 = vmatprep.subr.mxu0 0.0
    %5035 = vmatpush1.msra.mxu0 0.0
    %5036 = vmatprep.subr.mxu0 0.0
    %5037 = vmatpush1.msra.mxu0 0.0
    %5038 = vmatprep.subr.mxu0 0.0
    %5039 = vmatpush1.msra.mxu0 0.0
    %5040 = vmatprep.subr.mxu0 0.0
    %5041 = vmatpush1.msra.mxu0 0.0
    %5042 = vmatprep.subr.mxu0 0.0
    %5043 = vmatpush1.msra.mxu0 0.0
    %5044 = vmatprep.subr.mxu0 0.0
    %5045 = vmatpush1.msra.mxu0 0.0
    %5046 = vmatprep.subr.mxu0 0.0
    %5047 = vmatpush1.msra.mxu0 0.0
    %5048 = vmatprep.subr.mxu0 0.0
    %5049 = vmatpush1.msra.mxu0 0.0
    %5050 = vmatprep.subr.mxu0 0.0
    %5051 = vmatpush1.msra.mxu0 0.0
    %5052 = vmatprep.subr.mxu0 0.0
    %5053 = vmatpush1.msra.mxu0 0.0
    %5054 = vmatprep.subr.mxu0 0.0
    %5055 = vmatpush1.msra.mxu0 0.0
    %5056 = vmatprep.subr.mxu0 0.0
    %5057 = vmatpush1.msra.mxu0 0.0
    %5058 = vmatprep.subr.mxu0 0.0
    %5059 = vmatpush1.msra.mxu0 0.0
    %5060 = vmatprep.subr.mxu0 0.0
    %5061 = vmatpush1.msra.mxu0 0.0
    %5062 = vmatprep.subr.mxu0 0.0
    %5063 = vmatpush1.msra.mxu0 0.0
    %5064 = vmatprep.mubr.f32.mxu0 0.0
    %5065 = vmatmul.mubr.f32.gmra.mrb[0].mxu0 %v4977
    %v5066 = vpop.f32.mrb[0].mxu0
    %v5067 = vadd.f32 %v4974, %v5066
    %v5068 = vpop.f32.mrb[0].mxu0
    %5069 = vmatprep.mubr.f32.mxu0 0.0
    %5070 = vmatmul.mubr.f32.gmra.mrb[0].mxu0 %v4980
    %v5071 = vpop.f32.mrb[0].mxu0
    %v5072 = vadd.f32 %v4974, %v5071
    %v5073 = vpop.f32.mrb[0].mxu0
    %5074 = vmatprep.mubr.f32.mxu0 0.0
    %5075 = vmatmul.mubr.f32.gmra.mrb[0].mxu0 %v4983
    %v5076 = vpop.f32.mrb[0].mxu0
    %v5077 = vadd.f32 %v4974, %v5076
    %v5078 = vpop.f32.mrb[0].mxu0
    %5079 = vmatprep.mubr.f32.mxu0 0.0
    %5080 = vmatmul.mubr.f32.gmra.mrb[0].mxu0 %v4986
    %v5081 = vpop.f32.mrb[0].mxu0
    %v5082 = vadd.f32 %v4974, %v5081
    %v5083 = vpop.f32.mrb[0].mxu0
    %5084 = vmatprep.mubr.f32.mxu0 0.0
    %5085 = vmatmul.mubr.f32.gmra.mrb[0].mxu0 %v4989
    %v5086 = vpop.f32.mrb[0].mxu0
    %v5087 = vadd.f32 %v4974, %v5086
    %v5088 = vpop.f32.mrb[0].mxu0
    %5089 = vmatprep.mubr.f32.mxu0 0.0
    %5090 = vmatmul.mubr.f32.gmra.mrb[0].mxu0 %v4992
    %v5091 = vpop.f32.mrb[0].mxu0
    %v5092 = vadd.f32 %v4974, %v5091
    %v5093 = vpop.f32.mrb[0].mxu0
    %5094 = vmatprep.mubr.f32.mxu0 0.0
    %5095 = vmatmul.mubr.f32.gmra.mrb[0].mxu0 %v4995
    %v5096 = vpop.f32.mrb[0].mxu0
    %v5097 = vadd.f32 %v4974, %v5096
    %v5098 = vpop.f32.mrb[0].mxu0
    %5099 = vmatprep.mubr.f32.mxu0 0.0
    %5100 = vmatmul.mubr.f32.gmra.mrb[0].mxu0 %v4998
    %v5101 = vpop.f32.mrb[0].mxu0
    %v5102 = vadd.f32 %v4974, %v5101
    %v5103 = vpop.f32.mrb[0].mxu0
    %5104 = vdwg.mxu0
    %5105 = vst.msk [vmem:[#allocation2] sm:$0xff] %vm180, %v5067
    %5106 = vst.msk [vmem:[#allocation2 + $0x8] sm:$0xff] %vm180, %v5072
    %5107 = vst.msk [vmem:[#allocation2 + $0x10] sm:$0xff] %vm180, %v5077
    %5108 = vst.msk [vmem:[#allocation2 + $0x18] sm:$0xff] %vm180, %v5082
    %5109 = vst.msk [vmem:[#allocation2 + $0x20] sm:$0xff] %vm180, %v5087
    %5110 = vst.msk [vmem:[#allocation2 + $0x28] sm:$0xff] %vm180, %v5092
    %5111 = vst.msk [vmem:[#allocation2 + $0x30] sm:$0xff] %vm180, %v5097
    %5112 = vst.msk [vmem:[#allocation2 + $0x38] sm:$0xff] %vm180, %v5102
    %v5113 = vld [vmem:[#allocation2] sm:$0xff]
    %5114 = vmatprep.subr.mxu0 0.0
    %5115 = vmatpush1.msra.mxu0 %v4963
    %5116 = vmatprep.subr.mxu0 0.0
    %5117 = vmatpush1.msra.mxu0 %v4964
    %5118 = vmatprep.subr.mxu0 0.0
    %5119 = vmatpush1.msra.mxu0 0.0
    %5120 = vmatprep.subr.mxu0 0.0
    %5121 = vmatpush1.msra.mxu0 0.0
    %5122 = vmatprep.subr.mxu0 0.0
    %5123 = vmatpush1.msra.mxu0 0.0
    %5124 = vmatprep.subr.mxu0 0.0
    %5125 = vmatpush1.msra.mxu0 0.0
    %5126 = vmatprep.subr.mxu0 0.0
    %5127 = vmatpush1.msra.mxu0 0.0
    %5128 = vmatprep.subr.mxu0 0.0
    %5129 = vmatpush1.msra.mxu0 0.0
    %5130 = vmatprep.subr.mxu0 0.0
    %5131 = vmatpush1.msra.mxu0 0.0
    %5132 = vmatprep.subr.mxu0 0.0
    %5133 = vmatpush1.msra.mxu0 0.0
    %5134 = vmatprep.subr.mxu0 0.0
    %5135 = vmatpush1.msra.mxu0 0.0
    %5136 = vmatprep.subr.mxu0 0.0
    %5137 = vmatpush1.msra.mxu0 0.0
    %5138 = vmatprep.subr.mxu0 0.0
    %5139 = vmatpush1.msra.mxu0 0.0
    %5140 = vmatprep.subr.mxu0 0.0
    %5141 = vmatpush1.msra.mxu0 0.0
    %5142 = vmatprep.subr.mxu0 0.0
    %5143 = vmatpush1.msra.mxu0 0.0
    %5144 = vmatprep.subr.mxu0 0.0
    %5145 = vmatpush1.msra.mxu0 0.0
    %5146 = vmatprep.subr.mxu0 0.0
    %5147 = vmatpush1.msra.mxu0 0.0
    %5148 = vmatprep.subr.mxu0 0.0
    %5149 = vmatpush1.msra.mxu0 0.0
    %5150 = vmatprep.subr.mxu0 0.0
    %5151 = vmatpush1.msra.mxu0 0.0
    %5152 = vmatprep.subr.mxu0 0.0
    %5153 = vmatpush1.msra.mxu0 0.0
    %5154 = vmatprep.subr.mxu0 0.0
    %5155 = vmatpush1.msra.mxu0 0.0
    %5156 = vmatprep.subr.mxu0 0.0
    %5157 = vmatpush1.msra.mxu0 0.0
    %5158 = vmatprep.subr.mxu0 0.0
    %5159 = vmatpush1.msra.mxu0 0.0
    %5160 = vmatprep.subr.mxu0 0.0
    %5161 = vmatpush1.msra.mxu0 0.0
    %5162 = vmatprep.subr.mxu0 0.0
    %5163 = vmatpush1.msra.mxu0 0.0
    %5164 = vmatprep.subr.mxu0 0.0
    %5165 = vmatpush1.msra.mxu0 0.0
    %5166 = vmatprep.subr.mxu0 0.0
    %5167 = vmatpush1.msra.mxu0 0.0
    %5168 = vmatprep.subr.mxu0 0.0
    %5169 = vmatpush1.msra.mxu0 0.0
    %5170 = vmatprep.subr.mxu0 0.0
    %5171 = vmatpush1.msra.mxu0 0.0
    %5172 = vmatprep.subr.mxu0 0.0
    %5173 = vmatpush1.msra.mxu0 0.0
    %5174 = vmatprep.subr.mxu0 0.0
    %5175 = vmatpush1.msra.mxu0 0.0
    %5176 = vmatprep.subr.mxu0 0.0
    %5177 = vmatpush1.msra.mxu0 0.0
    %5178 = vmatprep.mubr.f32.mxu0 0.0
    %5179 = vmatmul.mubr.f32.gmra.mrb[0].mxu0 %v191
    %v5180 = vpop.f32.mrb[0].mxu0
    %v5181 = vadd.f32 0.0, %v5180
    %v5182 = vpop.f32.mrb[0].mxu0
    %5183 = vdwg.mxu0
    %v5184 = vadd.f32 %v5113, %v5181
    %v5185 = vxor.u32 %v5184, 2147483648
    %v5186 = vmul.f32 %v5185, 1.442695
    %v5187 = vpow.pop %v5186
    %v5188 = vadd.f32 %v5187, 1.0
    %v5189 = vrcp.pop %v5188
    %v5190 = vmul.f32 1.0, %v5189
    %v5191 = vtanh.pop %v5184
    %v5192 = vmul.f32 %v5190, 0.0
    %5194 = vrot.lane.b32.xlu0 %v5191, 96
    %v5195 = vpop.permute.xlu0 %5194
    %v5197 = vmul.f32 %v5190, %v5195
    %5199 = vrot.lane.b32.xlu0 %v5197, 16
    %v5200 = vpop.permute.xlu0 %5199
    %v5202 = vadd.f32 %v5192, %v5200
    %v5203 = vtanh.pop %v5202
    %5205 = vrot.lane.b32.xlu0 %v5203, 32
    %v5206 = vpop.permute.xlu0 %5205
    %v5208 = vmul.f32 %v5190, %v5206
    %5210 = vrot.lane.b32.xlu0 %v5208, 80
    %v5211 = vpop.permute.xlu0 %5210
    %5213 = vst.msk [vmem:[%s4] sm:$0xff] %vm50, %v5211
    %v5214 = vld [vmem:[%s293] sm:$0xff]
    %v5215 = vsel %vm50, %v5211, 0
    %5217 = vmatprep.subr.mxu0 0.0
    %5218 = vmatpush1.msra.mxu0 %v4963
    %5219 = vmatprep.subr.mxu0 0.0
    %5220 = vmatpush1.msra.mxu0 %v4964
    %5221 = vmatprep.subr.mxu0 0.0
    %5222 = vmatpush1.msra.mxu0 0.0
    %5223 = vmatprep.subr.mxu0 0.0
    %5224 = vmatpush1.msra.mxu0 0.0
    %5225 = vmatprep.subr.mxu0 0.0
    %5226 = vmatpush1.msra.mxu0 0.0
    %5227 = vmatprep.subr.mxu0 0.0
    %5228 = vmatpush1.msra.mxu0 0.0
    %5229 = vmatprep.subr.mxu0 0.0
    %5230 = vmatpush1.msra.mxu0 0.0
    %5231 = vmatprep.subr.mxu0 0.0
    %5232 = vmatpush1.msra.mxu0 0.0
    %5233 = vmatprep.subr.mxu0 0.0
    %5234 = vmatpush1.msra.mxu0 0.0
    %5235 = vmatprep.subr.mxu0 0.0
    %5236 = vmatpush1.msra.mxu0 0.0
    %5237 = vmatprep.subr.mxu0 0.0
    %5238 = vmatpush1.msra.mxu0 0.0
    %5239 = vmatprep.subr.mxu0 0.0
    %5240 = vmatpush1.msra.mxu0 0.0
    %5241 = vmatprep.subr.mxu0 0.0
    %5242 = vmatpush1.msra.mxu0 0.0
    %5243 = vmatprep.subr.mxu0 0.0
    %5244 = vmatpush1.msra.mxu0 0.0
    %5245 = vmatprep.subr.mxu0 0.0
    %5246 = vmatpush1.msra.mxu0 0.0
    %5247 = vmatprep.subr.mxu0 0.0
    %5248 = vmatpush1.msra.mxu0 0.0
    %5249 = vmatprep.subr.mxu0 0.0
    %5250 = vmatpush1.msra.mxu0 0.0
    %5251 = vmatprep.subr.mxu0 0.0
    %5252 = vmatpush1.msra.mxu0 0.0
    %5253 = vmatprep.subr.mxu0 0.0
    %5254 = vmatpush1.msra.mxu0 0.0
    %5255 = vmatprep.subr.mxu0 0.0
    %5256 = vmatpush1.msra.mxu0 0.0
    %5257 = vmatprep.subr.mxu0 0.0
    %5258 = vmatpush1.msra.mxu0 0.0
    %5259 = vmatprep.subr.mxu0 0.0
    %5260 = vmatpush1.msra.mxu0 0.0
    %5261 = vmatprep.subr.mxu0 0.0
    %5262 = vmatpush1.msra.mxu0 0.0
    %5263 = vmatprep.subr.mxu0 0.0
    %5264 = vmatpush1.msra.mxu0 0.0
    %5265 = vmatprep.subr.mxu0 0.0
    %5266 = vmatpush1.msra.mxu0 0.0
    %5267 = vmatprep.subr.mxu0 0.0
    %5268 = vmatpush1.msra.mxu0 0.0
    %5269 = vmatprep.subr.mxu0 0.0
    %5270 = vmatpush1.msra.mxu0 0.0
    %5271 = vmatprep.subr.mxu0 0.0
    %5272 = vmatpush1.msra.mxu0 0.0
    %5273 = vmatprep.subr.mxu0 0.0
    %5274 = vmatpush1.msra.mxu0 0.0
    %5275 = vmatprep.subr.mxu0 0.0
    %5276 = vmatpush1.msra.mxu0 0.0
    %5277 = vmatprep.subr.mxu0 0.0
    %5278 = vmatpush1.msra.mxu0 0.0
    %5279 = vmatprep.subr.mxu0 0.0
    %5280 = vmatpush1.msra.mxu0 0.0
    %5281 = vmatprep.mubr.f32.mxu0 0.0
    %5282 = vmatmul.mubr.f32.gmra.mrb[0].mxu0 %v5215
    %v5283 = vpop.f32.mrb[0].mxu0
    %v5284 = vadd.f32 0.0, %v5283
    %v5285 = vpop.f32.mrb[0].mxu0
    %5286 = vdwg.mxu0
    %v5287 = vadd.f32 %v5214, %v5284
    %v5288 = vxor.u32 %v5287, 2147483648
    %v5289 = vmul.f32 %v5288, 1.442695
    %v5290 = vpow.pop %v5289
    %v5291 = vadd.f32 %v5290, 1.0
    %v5292 = vrcp.pop %v5291
    %v5293 = vmul.f32 1.0, %v5292
    %v5294 = vtanh.pop %v5287
    %v5295 = vmul.f32 %v5293, %v5202
    %5297 = vrot.lane.b32.xlu0 %v5294, 96
    %v5298 = vpop.permute.xlu0 %5297
    %v5300 = vmul.f32 %v5293, %v5298
    %5302 = vrot.lane.b32.xlu0 %v5300, 16
    %v5303 = vpop.permute.xlu0 %5302
    %v5305 = vadd.f32 %v5295, %v5303
    %v5306 = vtanh.pop %v5305
    %5308 = vrot.lane.b32.xlu0 %v5306, 32
    %v5309 = vpop.permute.xlu0 %5308
    %v5311 = vmul.f32 %v5293, %v5309
    %5313 = vrot.lane.b32.xlu0 %v5311, 80
    %v5314 = vpop.permute.xlu0 %5313
    %5316 = vst.msk [vmem:[%s396] sm:$0xff] %vm50, %v5314
    %v5317 = vld [vmem:[%s398] sm:$0xff]
    %v5318 = vsel %vm50, %v5314, 0
    %5320 = vmatprep.subr.mxu0 0.0
    %5321 = vmatpush1.msra.mxu0 %v4963
    %5322 = vmatprep.subr.mxu0 0.0
    %5323 = vmatpush1.msra.mxu0 %v4964
    %5324 = vmatprep.subr.mxu0 0.0
    %5325 = vmatpush1.msra.mxu0 0.0
    %5326 = vmatprep.subr.mxu0 0.0
    %5327 = vmatpush1.msra.mxu0 0.0
    %5328 = vmatprep.subr.mxu0 0.0
    %5329 = vmatpush1.msra.mxu0 0.0
    %5330 = vmatprep.subr.mxu0 0.0
    %5331 = vmatpush1.msra.mxu0 0.0
    %5332 = vmatprep.subr.mxu0 0.0
    %5333 = vmatpush1.msra.mxu0 0.0
    %5334 = vmatprep.subr.mxu0 0.0
    %5335 = vmatpush1.msra.mxu0 0.0
    %5336 = vmatprep.subr.mxu0 0.0
    %5337 = vmatpush1.msra.mxu0 0.0
    %5338 = vmatprep.subr.mxu0 0.0
    %5339 = vmatpush1.msra.mxu0 0.0
    %5340 = vmatprep.subr.mxu0 0.0
    %5341 = vmatpush1.msra.mxu0 0.0
    %5342 = vmatprep.subr.mxu0 0.0
    %5343 = vmatpush1.msra.mxu0 0.0
    %5344 = vmatprep.subr.mxu0 0.0
    %5345 = vmatpush1.msra.mxu0 0.0
    %5346 = vmatprep.subr.mxu0 0.0
    %5347 = vmatpush1.msra.mxu0 0.0
    %5348 = vmatprep.subr.mxu0 0.0
    %5349 = vmatpush1.msra.mxu0 0.0
    %5350 = vmatprep.subr.mxu0 0.0
    %5351 = vmatpush1.msra.mxu0 0.0
    %5352 = vmatprep.subr.mxu0 0.0
    %5353 = vmatpush1.msra.mxu0 0.0
    %5354 = vmatprep.subr.mxu0 0.0
    %5355 = vmatpush1.msra.mxu0 0.0
    %5356 = vmatprep.subr.mxu0 0.0
    %5357 = vmatpush1.msra.mxu0 0.0
    %5358 = vmatprep.subr.mxu0 0.0
    %5359 = vmatpush1.msra.mxu0 0.0
    %5360 = vmatprep.subr.mxu0 0.0
    %5361 = vmatpush1.msra.mxu0 0.0
    %5362 = vmatprep.subr.mxu0 0.0
    %5363 = vmatpush1.msra.mxu0 0.0
    %5364 = vmatprep.subr.mxu0 0.0
    %5365 = vmatpush1.msra.mxu0 0.0
    %5366 = vmatprep.subr.mxu0 0.0
    %5367 = vmatpush1.msra.mxu0 0.0
    %5368 = vmatprep.subr.mxu0 0.0
    %5369 = vmatpush1.msra.mxu0 0.0
    %5370 = vmatprep.subr.mxu0 0.0
    %5371 = vmatpush1.msra.mxu0 0.0
    %5372 = vmatprep.subr.mxu0 0.0
    %5373 = vmatpush1.msra.mxu0 0.0
    %5374 = vmatprep.subr.mxu0 0.0
    %5375 = vmatpush1.msra.mxu0 0.0
    %5376 = vmatprep.subr.mxu0 0.0
    %5377 = vmatpush1.msra.mxu0 0.0
    %5378 = vmatprep.subr.mxu0 0.0
    %5379 = vmatpush1.msra.mxu0 0.0
    %5380 = vmatprep.subr.mxu0 0.0
    %5381 = vmatpush1.msra.mxu0 0.0
    %5382 = vmatprep.subr.mxu0 0.0
    %5383 = vmatpush1.msra.mxu0 0.0
    %5384 = vmatprep.mubr.f32.mxu0 0.0
    %5385 = vmatmul.mubr.f32.gmra.mrb[0].mxu0 %v5318
    %v5386 = vpop.f32.mrb[0].mxu0
    %v5387 = vadd.f32 0.0, %v5386
    %v5388 = vpop.f32.mrb[0].mxu0
    %5389 = vdwg.mxu0
    %v5390 = vadd.f32 %v5317, %v5387
    %v5391 = vxor.u32 %v5390, 2147483648
    %v5392 = vmul.f32 %v5391, 1.442695
    %v5393 = vpow.pop %v5392
    %v5394 = vadd.f32 %v5393, 1.0
    %v5395 = vrcp.pop %v5394
    %v5396 = vmul.f32 1.0, %v5395
    %v5397 = vtanh.pop %v5390
    %v5398 = vmul.f32 %v5396, %v5305
    %5400 = vrot.lane.b32.xlu0 %v5397, 96
    %v5401 = vpop.permute.xlu0 %5400
    %v5403 = vmul.f32 %v5396, %v5401
    %5405 = vrot.lane.b32.xlu0 %v5403, 16
    %v5406 = vpop.permute.xlu0 %5405
    %v5408 = vadd.f32 %v5398, %v5406
    %v5409 = vtanh.pop %v5408
    %5411 = vrot.lane.b32.xlu0 %v5409, 32
    %v5412 = vpop.permute.xlu0 %5411
    %v5414 = vmul.f32 %v5396, %v5412
    %5416 = vrot.lane.b32.xlu0 %v5414, 80
    %v5417 = vpop.permute.xlu0 %5416
    %5419 = vst.msk [vmem:[%s501] sm:$0xff] %vm50, %v5417
    %v5420 = vld [vmem:[%s503] sm:$0xff]
    %v5421 = vsel %vm50, %v5417, 0
    %5423 = vmatprep.subr.mxu0 0.0
    %5424 = vmatpush1.msra.mxu0 %v4963
    %5425 = vmatprep.subr.mxu0 0.0
    %5426 = vmatpush1.msra.mxu0 %v4964
    %5427 = vmatprep.subr.mxu0 0.0
    %5428 = vmatpush1.msra.mxu0 0.0
    %5429 = vmatprep.subr.mxu0 0.0
    %5430 = vmatpush1.msra.mxu0 0.0
    %5431 = vmatprep.subr.mxu0 0.0
    %5432 = vmatpush1.msra.mxu0 0.0
    %5433 = vmatprep.subr.mxu0 0.0
    %5434 = vmatpush1.msra.mxu0 0.0
    %5435 = vmatprep.subr.mxu0 0.0
    %5436 = vmatpush1.msra.mxu0 0.0
    %5437 = vmatprep.subr.mxu0 0.0
    %5438 = vmatpush1.msra.mxu0 0.0
    %5439 = vmatprep.subr.mxu0 0.0
    %5440 = vmatpush1.msra.mxu0 0.0
    %5441 = vmatprep.subr.mxu0 0.0
    %5442 = vmatpush1.msra.mxu0 0.0
    %5443 = vmatprep.subr.mxu0 0.0
    %5444 = vmatpush1.msra.mxu0 0.0
    %5445 = vmatprep.subr.mxu0 0.0
    %5446 = vmatpush1.msra.mxu0 0.0
    %5447 = vmatprep.subr.mxu0 0.0
    %5448 = vmatpush1.msra.mxu0 0.0
    %5449 = vmatprep.subr.mxu0 0.0
    %5450 = vmatpush1.msra.mxu0 0.0
    %5451 = vmatprep.subr.mxu0 0.0
    %5452 = vmatpush1.msra.mxu0 0.0
    %5453 = vmatprep.subr.mxu0 0.0
    %5454 = vmatpush1.msra.mxu0 0.0
    %5455 = vmatprep.subr.mxu0 0.0
    %5456 = vmatpush1.msra.mxu0 0.0
    %5457 = vmatprep.subr.mxu0 0.0
    %5458 = vmatpush1.msra.mxu0 0.0
    %5459 = vmatprep.subr.mxu0 0.0
    %5460 = vmatpush1.msra.mxu0 0.0
    %5461 = vmatprep.subr.mxu0 0.0
    %5462 = vmatpush1.msra.mxu0 0.0
    %5463 = vmatprep.subr.mxu0 0.0
    %5464 = vmatpush1.msra.mxu0 0.0
    %5465 = vmatprep.subr.mxu0 0.0
    %5466 = vmatpush1.msra.mxu0 0.0
    %5467 = vmatprep.subr.mxu0 0.0
    %5468 = vmatpush1.msra.mxu0 0.0
    %5469 = vmatprep.subr.mxu0 0.0
    %5470 = vmatpush1.msra.mxu0 0.0
    %5471 = vmatprep.subr.mxu0 0.0
    %5472 = vmatpush1.msra.mxu0 0.0
    %5473 = vmatprep.subr.mxu0 0.0
    %5474 = vmatpush1.msra.mxu0 0.0
    %5475 = vmatprep.subr.mxu0 0.0
    %5476 = vmatpush1.msra.mxu0 0.0
    %5477 = vmatprep.subr.mxu0 0.0
    %5478 = vmatpush1.msra.mxu0 0.0
    %5479 = vmatprep.subr.mxu0 0.0
    %5480 = vmatpush1.msra.mxu0 0.0
    %5481 = vmatprep.subr.mxu0 0.0
    %5482 = vmatpush1.msra.mxu0 0.0
    %5483 = vmatprep.subr.mxu0 0.0
    %5484 = vmatpush1.msra.mxu0 0.0
    %5485 = vmatprep.subr.mxu0 0.0
    %5486 = vmatpush1.msra.mxu0 0.0
    %5487 = vmatprep.mubr.f32.mxu0 0.0
    %5488 = vmatmul.mubr.f32.gmra.mrb[0].mxu0 %v5421
    %v5489 = vpop.f32.mrb[0].mxu0
    %v5490 = vadd.f32 0.0, %v5489
    %v5491 = vpop.f32.mrb[0].mxu0
    %5492 = vdwg.mxu0
    %v5493 = vadd.f32 %v5420, %v5490
    %v5494 = vxor.u32 %v5493, 2147483648
    %v5495 = vmul.f32 %v5494, 1.442695
    %v5496 = vpow.pop %v5495
    %v5497 = vadd.f32 %v5496, 1.0
    %v5498 = vrcp.pop %v5497
    %v5499 = vmul.f32 1.0, %v5498
    %v5500 = vtanh.pop %v5493
    %v5501 = vmul.f32 %v5499, %v5408
    %5503 = vrot.lane.b32.xlu0 %v5500, 96
    %v5504 = vpop.permute.xlu0 %5503
    %v5506 = vmul.f32 %v5499, %v5504
    %5508 = vrot.lane.b32.xlu0 %v5506, 16
    %v5509 = vpop.permute.xlu0 %5508
    %v5511 = vadd.f32 %v5501, %v5509
    %v5512 = vtanh.pop %v5511
    %5514 = vrot.lane.b32.xlu0 %v5512, 32
    %v5515 = vpop.permute.xlu0 %5514
    %v5517 = vmul.f32 %v5499, %v5515
    %5519 = vrot.lane.b32.xlu0 %v5517, 80
    %v5520 = vpop.permute.xlu0 %5519
    %5522 = vst.msk [vmem:[%s606] sm:$0xff] %vm50, %v5520
    %v5523 = vld [vmem:[%s608] sm:$0xff]
    %v5524 = vsel %vm50, %v5520, 0
    %5526 = vmatprep.subr.mxu0 0.0
    %5527 = vmatpush1.msra.mxu0 %v4963
    %5528 = vmatprep.subr.mxu0 0.0
    %5529 = vmatpush1.msra.mxu0 %v4964
    %5530 = vmatprep.subr.mxu0 0.0
    %5531 = vmatpush1.msra.mxu0 0.0
    %5532 = vmatprep.subr.mxu0 0.0
    %5533 = vmatpush1.msra.mxu0 0.0
    %5534 = vmatprep.subr.mxu0 0.0
    %5535 = vmatpush1.msra.mxu0 0.0
    %5536 = vmatprep.subr.mxu0 0.0
    %5537 = vmatpush1.msra.mxu0 0.0
    %5538 = vmatprep.subr.mxu0 0.0
    %5539 = vmatpush1.msra.mxu0 0.0
    %5540 = vmatprep.subr.mxu0 0.0
    %5541 = vmatpush1.msra.mxu0 0.0
    %5542 = vmatprep.subr.mxu0 0.0
    %5543 = vmatpush1.msra.mxu0 0.0
    %5544 = vmatprep.subr.mxu0 0.0
    %5545 = vmatpush1.msra.mxu0 0.0
    %5546 = vmatprep.subr.mxu0 0.0
    %5547 = vmatpush1.msra.mxu0 0.0
    %5548 = vmatprep.subr.mxu0 0.0
    %5549 = vmatpush1.msra.mxu0 0.0
    %5550 = vmatprep.subr.mxu0 0.0
    %5551 = vmatpush1.msra.mxu0 0.0
    %5552 = vmatprep.subr.mxu0 0.0
    %5553 = vmatpush1.msra.mxu0 0.0
    %5554 = vmatprep.subr.mxu0 0.0
    %5555 = vmatpush1.msra.mxu0 0.0
    %5556 = vmatprep.subr.mxu0 0.0
    %5557 = vmatpush1.msra.mxu0 0.0
    %5558 = vmatprep.subr.mxu0 0.0
    %5559 = vmatpush1.msra.mxu0 0.0
    %5560 = vmatprep.subr.mxu0 0.0
    %5561 = vmatpush1.msra.mxu0 0.0
    %5562 = vmatprep.subr.mxu0 0.0
    %5563 = vmatpush1.msra.mxu0 0.0
    %5564 = vmatprep.subr.mxu0 0.0
    %5565 = vmatpush1.msra.mxu0 0.0
    %5566 = vmatprep.subr.mxu0 0.0
    %5567 = vmatpush1.msra.mxu0 0.0
    %5568 = vmatprep.subr.mxu0 0.0
    %5569 = vmatpush1.msra.mxu0 0.0
    %5570 = vmatprep.subr.mxu0 0.0
    %5571 = vmatpush1.msra.mxu0 0.0
    %5572 = vmatprep.subr.mxu0 0.0
    %5573 = vmatpush1.msra.mxu0 0.0
    %5574 = vmatprep.subr.mxu0 0.0
    %5575 = vmatpush1.msra.mxu0 0.0
    %5576 = vmatprep.subr.mxu0 0.0
    %5577 = vmatpush1.msra.mxu0 0.0
    %5578 = vmatprep.subr.mxu0 0.0
    %5579 = vmatpush1.msra.mxu0 0.0
    %5580 = vmatprep.subr.mxu0 0.0
    %5581 = vmatpush1.msra.mxu0 0.0
    %5582 = vmatprep.subr.mxu0 0.0
    %5583 = vmatpush1.msra.mxu0 0.0
    %5584 = vmatprep.subr.mxu0 0.0
    %5585 = vmatpush1.msra.mxu0 0.0
    %5586 = vmatprep.subr.mxu0 0.0
    %5587 = vmatpush1.msra.mxu0 0.0
    %5588 = vmatprep.subr.mxu0 0.0
    %5589 = vmatpush1.msra.mxu0 0.0
    %5590 = vmatprep.mubr.f32.mxu0 0.0
    %5591 = vmatmul.mubr.f32.gmra.mrb[0].mxu0 %v5524
    %v5592 = vpop.f32.mrb[0].mxu0
    %v5593 = vadd.f32 0.0, %v5592
    %v5594 = vpop.f32.mrb[0].mxu0
    %5595 = vdwg.mxu0
    %v5596 = vadd.f32 %v5523, %v5593
    %v5597 = vxor.u32 %v5596, 2147483648
    %v5598 = vmul.f32 %v5597, 1.442695
    %v5599 = vpow.pop %v5598
    %v5600 = vadd.f32 %v5599, 1.0
    %v5601 = vrcp.pop %v5600
    %v5602 = vmul.f32 1.0, %v5601
    %v5603 = vtanh.pop %v5596
    %v5604 = vmul.f32 %v5602, %v5511
    %5606 = vrot.lane.b32.xlu0 %v5603, 96
    %v5607 = vpop.permute.xlu0 %5606
    %v5609 = vmul.f32 %v5602, %v5607
    %5611 = vrot.lane.b32.xlu0 %v5609, 16
    %v5612 = vpop.permute.xlu0 %5611
    %v5614 = vadd.f32 %v5604, %v5612
    %v5615 = vtanh.pop %v5614
    %5617 = vrot.lane.b32.xlu0 %v5615, 32
    %v5618 = vpop.permute.xlu0 %5617
    %v5620 = vmul.f32 %v5602, %v5618
    %5622 = vrot.lane.b32.xlu0 %v5620, 80
    %v5623 = vpop.permute.xlu0 %5622
    %5625 = vst.msk [vmem:[%s711] sm:$0xff] %vm50, %v5623
    %v5626 = vld [vmem:[%s713] sm:$0xff]
    %v5627 = vsel %vm50, %v5623, 0
    %5629 = vmatprep.subr.mxu0 0.0
    %5630 = vmatpush1.msra.mxu0 %v4963
    %5631 = vmatprep.subr.mxu0 0.0
    %5632 = vmatpush1.msra.mxu0 %v4964
    %5633 = vmatprep.subr.mxu0 0.0
    %5634 = vmatpush1.msra.mxu0 0.0
    %5635 = vmatprep.subr.mxu0 0.0
    %5636 = vmatpush1.msra.mxu0 0.0
    %5637 = vmatprep.subr.mxu0 0.0
    %5638 = vmatpush1.msra.mxu0 0.0
    %5639 = vmatprep.subr.mxu0 0.0
    %5640 = vmatpush1.msra.mxu0 0.0
    %5641 = vmatprep.subr.mxu0 0.0
    %5642 = vmatpush1.msra.mxu0 0.0
    %5643 = vmatprep.subr.mxu0 0.0
    %5644 = vmatpush1.msra.mxu0 0.0
    %5645 = vmatprep.subr.mxu0 0.0
    %5646 = vmatpush1.msra.mxu0 0.0
    %5647 = vmatprep.subr.mxu0 0.0
    %5648 = vmatpush1.msra.mxu0 0.0
    %5649 = vmatprep.subr.mxu0 0.0
    %5650 = vmatpush1.msra.mxu0 0.0
    %5651 = vmatprep.subr.mxu0 0.0
    %5652 = vmatpush1.msra.mxu0 0.0
    %5653 = vmatprep.subr.mxu0 0.0
    %5654 = vmatpush1.msra.mxu0 0.0
    %5655 = vmatprep.subr.mxu0 0.0
    %5656 = vmatpush1.msra.mxu0 0.0
    %5657 = vmatprep.subr.mxu0 0.0
    %5658 = vmatpush1.msra.mxu0 0.0
    %5659 = vmatprep.subr.mxu0 0.0
    %5660 = vmatpush1.msra.mxu0 0.0
    %5661 = vmatprep.subr.mxu0 0.0
    %5662 = vmatpush1.msra.mxu0 0.0
    %5663 = vmatprep.subr.mxu0 0.0
    %5664 = vmatpush1.msra.mxu0 0.0
    %5665 = vmatprep.subr.mxu0 0.0
    %5666 = vmatpush1.msra.mxu0 0.0
    %5667 = vmatprep.subr.mxu0 0.0
    %5668 = vmatpush1.msra.mxu0 0.0
    %5669 = vmatprep.subr.mxu0 0.0
    %5670 = vmatpush1.msra.mxu0 0.0
    %5671 = vmatprep.subr.mxu0 0.0
    %5672 = vmatpush1.msra.mxu0 0.0
    %5673 = vmatprep.subr.mxu0 0.0
    %5674 = vmatpush1.msra.mxu0 0.0
    %5675 = vmatprep.subr.mxu0 0.0
    %5676 = vmatpush1.msra.mxu0 0.0
    %5677 = vmatprep.subr.mxu0 0.0
    %5678 = vmatpush1.msra.mxu0 0.0
    %5679 = vmatprep.subr.mxu0 0.0
    %5680 = vmatpush1.msra.mxu0 0.0
    %5681 = vmatprep.subr.mxu0 0.0
    %5682 = vmatpush1.msra.mxu0 0.0
    %5683 = vmatprep.subr.mxu0 0.0
    %5684 = vmatpush1.msra.mxu0 0.0
    %5685 = vmatprep.subr.mxu0 0.0
    %5686 = vmatpush1.msra.mxu0 0.0
    %5687 = vmatprep.subr.mxu0 0.0
    %5688 = vmatpush1.msra.mxu0 0.0
    %5689 = vmatprep.subr.mxu0 0.0
    %5690 = vmatpush1.msra.mxu0 0.0
    %5691 = vmatprep.subr.mxu0 0.0
    %5692 = vmatpush1.msra.mxu0 0.0
    %5693 = vmatprep.mubr.f32.mxu0 0.0
    %5694 = vmatmul.mubr.f32.gmra.mrb[0].mxu0 %v5627
    %v5695 = vpop.f32.mrb[0].mxu0
    %v5696 = vadd.f32 0.0, %v5695
    %v5697 = vpop.f32.mrb[0].mxu0
    %5698 = vdwg.mxu0
    %v5699 = vadd.f32 %v5626, %v5696
    %v5700 = vxor.u32 %v5699, 2147483648
    %v5701 = vmul.f32 %v5700, 1.442695
    %v5702 = vpow.pop %v5701
    %v5703 = vadd.f32 %v5702, 1.0
    %v5704 = vrcp.pop %v5703
    %v5705 = vmul.f32 1.0, %v5704
    %v5706 = vtanh.pop %v5699
    %v5707 = vmul.f32 %v5705, %v5614
    %5709 = vrot.lane.b32.xlu0 %v5706, 96
    %v5710 = vpop.permute.xlu0 %5709
    %v5712 = vmul.f32 %v5705, %v5710
    %5714 = vrot.lane.b32.xlu0 %v5712, 16
    %v5715 = vpop.permute.xlu0 %5714
    %v5717 = vadd.f32 %v5707, %v5715
    %v5718 = vtanh.pop %v5717
    %5720 = vrot.lane.b32.xlu0 %v5718, 32
    %v5721 = vpop.permute.xlu0 %5720
    %v5723 = vmul.f32 %v5705, %v5721
    %5725 = vrot.lane.b32.xlu0 %v5723, 80
    %v5726 = vpop.permute.xlu0 %5725
    %5728 = vst.msk [vmem:[%s816] sm:$0xff] %vm50, %v5726
    %v5729 = vld [vmem:[%s818] sm:$0xff]
    %v5730 = vsel %vm50, %v5726, 0
    %5732 = vmatprep.subr.mxu0 0.0
    %5733 = vmatpush1.msra.mxu0 %v4963
    %5734 = vmatprep.subr.mxu0 0.0
    %5735 = vmatpush1.msra.mxu0 %v4964
    %5736 = vmatprep.subr.mxu0 0.0
    %5737 = vmatpush1.msra.mxu0 0.0
    %5738 = vmatprep.subr.mxu0 0.0
    %5739 = vmatpush1.msra.mxu0 0.0
    %5740 = vmatprep.subr.mxu0 0.0
    %5741 = vmatpush1.msra.mxu0 0.0
    %5742 = vmatprep.subr.mxu0 0.0
    %5743 = vmatpush1.msra.mxu0 0.0
    %5744 = vmatprep.subr.mxu0 0.0
    %5745 = vmatpush1.msra.mxu0 0.0
    %5746 = vmatprep.subr.mxu0 0.0
    %5747 = vmatpush1.msra.mxu0 0.0
    %5748 = vmatprep.subr.mxu0 0.0
    %5749 = vmatpush1.msra.mxu0 0.0
    %5750 = vmatprep.subr.mxu0 0.0
    %5751 = vmatpush1.msra.mxu0 0.0
    %5752 = vmatprep.subr.mxu0 0.0
    %5753 = vmatpush1.msra.mxu0 0.0
    %5754 = vmatprep.subr.mxu0 0.0
    %5755 = vmatpush1.msra.mxu0 0.0
    %5756 = vmatprep.subr.mxu0 0.0
    %5757 = vmatpush1.msra.mxu0 0.0
    %5758 = vmatprep.subr.mxu0 0.0
    %5759 = vmatpush1.msra.mxu0 0.0
    %5760 = vmatprep.subr.mxu0 0.0
    %5761 = vmatpush1.msra.mxu0 0.0
    %5762 = vmatprep.subr.mxu0 0.0
    %5763 = vmatpush1.msra.mxu0 0.0
    %5764 = vmatprep.subr.mxu0 0.0
    %5765 = vmatpush1.msra.mxu0 0.0
    %5766 = vmatprep.subr.mxu0 0.0
    %5767 = vmatpush1.msra.mxu0 0.0
    %5768 = vmatprep.subr.mxu0 0.0
    %5769 = vmatpush1.msra.mxu0 0.0
    %5770 = vmatprep.subr.mxu0 0.0
    %5771 = vmatpush1.msra.mxu0 0.0
    %5772 = vmatprep.subr.mxu0 0.0
    %5773 = vmatpush1.msra.mxu0 0.0
    %5774 = vmatprep.subr.mxu0 0.0
    %5775 = vmatpush1.msra.mxu0 0.0
    %5776 = vmatprep.subr.mxu0 0.0
    %5777 = vmatpush1.msra.mxu0 0.0
    %5778 = vmatprep.subr.mxu0 0.0
    %5779 = vmatpush1.msra.mxu0 0.0
    %5780 = vmatprep.subr.mxu0 0.0
    %5781 = vmatpush1.msra.mxu0 0.0
    %5782 = vmatprep.subr.mxu0 0.0
    %5783 = vmatpush1.msra.mxu0 0.0
    %5784 = vmatprep.subr.mxu0 0.0
    %5785 = vmatpush1.msra.mxu0 0.0
    %5786 = vmatprep.subr.mxu0 0.0
    %5787 = vmatpush1.msra.mxu0 0.0
    %5788 = vmatprep.subr.mxu0 0.0
    %5789 = vmatpush1.msra.mxu0 0.0
    %5790 = vmatprep.subr.mxu0 0.0
    %5791 = vmatpush1.msra.mxu0 0.0
    %5792 = vmatprep.subr.mxu0 0.0
    %5793 = vmatpush1.msra.mxu0 0.0
    %5794 = vmatprep.subr.mxu0 0.0
    %5795 = vmatpush1.msra.mxu0 0.0
    %5796 = vmatprep.mubr.f32.mxu0 0.0
    %5797 = vmatmul.mubr.f32.gmra.mrb[0].mxu0 %v5730
    %v5798 = vpop.f32.mrb[0].mxu0
    %v5799 = vadd.f32 0.0, %v5798
    %v5800 = vpop.f32.mrb[0].mxu0
    %5801 = vdwg.mxu0
    %v5802 = vadd.f32 %v5729, %v5799
    %v5803 = vxor.u32 %v5802, 2147483648
    %v5804 = vmul.f32 %v5803, 1.442695
    %v5805 = vpow.pop %v5804
    %v5806 = vadd.f32 %v5805, 1.0
    %v5807 = vrcp.pop %v5806
    %v5808 = vmul.f32 1.0, %v5807
    %v5809 = vtanh.pop %v5802
    %v5810 = vmul.f32 %v5808, %v5717
    %5812 = vrot.lane.b32.xlu0 %v5809, 96
    %v5813 = vpop.permute.xlu0 %5812
    %v5815 = vmul.f32 %v5808, %v5813
    %5817 = vrot.lane.b32.xlu0 %v5815, 16
    %v5818 = vpop.permute.xlu0 %5817
    %v5820 = vadd.f32 %v5810, %v5818
    %v5821 = vtanh.pop %v5820
    %5823 = vrot.lane.b32.xlu0 %v5821, 32
    %v5824 = vpop.permute.xlu0 %5823
    %v5826 = vmul.f32 %v5808, %v5824
    %5828 = vrot.lane.b32.xlu0 %v5826, 80
    %v5829 = vpop.permute.xlu0 %5828
    %5831 = vst.msk [vmem:[%s921] sm:$0xff] %vm50, %v5829
    %v5832 = vld [vmem:[%s923] sm:$0xff]
    %v5833 = vsel %vm50, %v5829, 0
    %5835 = vmatprep.subr.mxu0 0.0
    %5836 = vmatpush1.msra.mxu0 %v4963
    %5837 = vmatprep.subr.mxu0 0.0
    %5838 = vmatpush1.msra.mxu0 %v4964
    %5839 = vmatprep.subr.mxu0 0.0
    %5840 = vmatpush1.msra.mxu0 0.0
    %5841 = vmatprep.subr.mxu0 0.0
    %5842 = vmatpush1.msra.mxu0 0.0
    %5843 = vmatprep.subr.mxu0 0.0
    %5844 = vmatpush1.msra.mxu0 0.0
    %5845 = vmatprep.subr.mxu0 0.0
    %5846 = vmatpush1.msra.mxu0 0.0
    %5847 = vmatprep.subr.mxu0 0.0
    %5848 = vmatpush1.msra.mxu0 0.0
    %5849 = vmatprep.subr.mxu0 0.0
    %5850 = vmatpush1.msra.mxu0 0.0
    %5851 = vmatprep.subr.mxu0 0.0
    %5852 = vmatpush1.msra.mxu0 0.0
    %5853 = vmatprep.subr.mxu0 0.0
    %5854 = vmatpush1.msra.mxu0 0.0
    %5855 = vmatprep.subr.mxu0 0.0
    %5856 = vmatpush1.msra.mxu0 0.0
    %5857 = vmatprep.subr.mxu0 0.0
    %5858 = vmatpush1.msra.mxu0 0.0
    %5859 = vmatprep.subr.mxu0 0.0
    %5860 = vmatpush1.msra.mxu0 0.0
    %5861 = vmatprep.subr.mxu0 0.0
    %5862 = vmatpush1.msra.mxu0 0.0
    %5863 = vmatprep.subr.mxu0 0.0
    %5864 = vmatpush1.msra.mxu0 0.0
    %5865 = vmatprep.subr.mxu0 0.0
    %5866 = vmatpush1.msra.mxu0 0.0
    %5867 = vmatprep.subr.mxu0 0.0
    %5868 = vmatpush1.msra.mxu0 0.0
    %5869 = vmatprep.subr.mxu0 0.0
    %5870 = vmatpush1.msra.mxu0 0.0
    %5871 = vmatprep.subr.mxu0 0.0
    %5872 = vmatpush1.msra.mxu0 0.0
    %5873 = vmatprep.subr.mxu0 0.0
    %5874 = vmatpush1.msra.mxu0 0.0
    %5875 = vmatprep.subr.mxu0 0.0
    %5876 = vmatpush1.msra.mxu0 0.0
    %5877 = vmatprep.subr.mxu0 0.0
    %5878 = vmatpush1.msra.mxu0 0.0
    %5879 = vmatprep.subr.mxu0 0.0
    %5880 = vmatpush1.msra.mxu0 0.0
    %5881 = vmatprep.subr.mxu0 0.0
    %5882 = vmatpush1.msra.mxu0 0.0
    %5883 = vmatprep.subr.mxu0 0.0
    %5884 = vmatpush1.msra.mxu0 0.0
    %5885 = vmatprep.subr.mxu0 0.0
    %5886 = vmatpush1.msra.mxu0 0.0
    %5887 = vmatprep.subr.mxu0 0.0
    %5888 = vmatpush1.msra.mxu0 0.0
    %5889 = vmatprep.subr.mxu0 0.0
    %5890 = vmatpush1.msra.mxu0 0.0
    %5891 = vmatprep.subr.mxu0 0.0
    %5892 = vmatpush1.msra.mxu0 0.0
    %5893 = vmatprep.subr.mxu0 0.0
    %5894 = vmatpush1.msra.mxu0 0.0
    %5895 = vmatprep.subr.mxu0 0.0
    %5896 = vmatpush1.msra.mxu0 0.0
    %5897 = vmatprep.subr.mxu0 0.0
    %5898 = vmatpush1.msra.mxu0 0.0
    %5899 = vmatprep.mubr.f32.mxu0 0.0
    %5900 = vmatmul.mubr.f32.gmra.mrb[0].mxu0 %v5833
    %v5901 = vpop.f32.mrb[0].mxu0
    %v5902 = vadd.f32 0.0, %v5901
    %v5903 = vpop.f32.mrb[0].mxu0
    %5904 = vdwg.mxu0
    %v5905 = vadd.f32 %v5832, %v5902
    %v5906 = vxor.u32 %v5905, 2147483648
    %v5907 = vmul.f32 %v5906, 1.442695
    %v5908 = vpow.pop %v5907
    %v5909 = vadd.f32 %v5908, 1.0
    %v5910 = vrcp.pop %v5909
    %v5911 = vmul.f32 1.0, %v5910
    %v5912 = vtanh.pop %v5905
    %v5913 = vmul.f32 %v5911, %v5820
    %5915 = vrot.lane.b32.xlu0 %v5912, 96
    %v5916 = vpop.permute.xlu0 %5915
    %v5918 = vmul.f32 %v5911, %v5916
    %5920 = vrot.lane.b32.xlu0 %v5918, 16
    %v5921 = vpop.permute.xlu0 %5920
    %v5923 = vadd.f32 %v5913, %v5921
    %v5924 = vtanh.pop %v5923
    %5926 = vrot.lane.b32.xlu0 %v5924, 32
    %v5927 = vpop.permute.xlu0 %5926
    %v5929 = vmul.f32 %v5911, %v5927
    %5931 = vrot.lane.b32.xlu0 %v5929, 80
    %v5932 = vpop.permute.xlu0 %5931
    %5934 = vst.msk [vmem:[%s1026] sm:$0xff] %vm50, %v5932
    %v5935 = vld [vmem:[%s4] sm:$0xff]
    %v5936 = vld [vmem:[%s4 + $0x8] sm:$0xff]
    %v5937 = vld [vmem:[%s4 + $0x10] sm:$0xff]
    %v5938 = vld [vmem:[%s4 + $0x18] sm:$0xff]
    %v5939 = vld [vmem:[%s4 + $0x20] sm:$0xff]
    %v5940 = vld [vmem:[%s4 + $0x28] sm:$0xff]
    %v5941 = vld [vmem:[%s4 + $0x30] sm:$0xff]
    %v5942 = vld [vmem:[%s4 + $0x38] sm:$0xff]
    %s5943 = scalar_lea.vmem %s2, 96
    %v5944 = vld [vmem:[%s5943] sm:$0xff]
    %v5945 = vld [vmem:[%s5943 + $0x8] sm:$0xff]
    %s5946 = scalar_lea.vmem [#allocation3], 96
    %v5947 = vld [vmem:[%s5946] sm:$0xff]
    %v5948 = vld [vmem:[%s5946 + $0x8] sm:$0xff]
    %s5949 = scalar_lea.vmem %s3, 6
    %v5950 = vld [vmem:[%s5949] sm:$0x1]
    %v5952 = vlaneseq
    %v5953 = vshrl.u32 %v5952, 7
    %v5954 = vsub.s32 0, %v5953
    %v5955 = vrot.slane %v5950, %v5954
    %v5958 = vsel %vm50, %v5935, 0
    %v5961 = vsel %vm50, %v5936, 0
    %v5964 = vsel %vm50, %v5937, 0
    %v5967 = vsel %vm50, %v5938, 0
    %v5970 = vsel %vm50, %v5939, 0
    %v5973 = vsel %vm50, %v5940, 0
    %v5976 = vsel %vm50, %v5941, 0
    %v5979 = vsel %vm50, %v5942, 0
    %5981 = vmatprep.subr.mxu0 0.0
    %5982 = vmatpush1.msra.mxu0 %v5947
    %5983 = vmatprep.subr.mxu0 0.0
    %5984 = vmatpush1.msra.mxu0 %v5948
    %5985 = vmatprep.subr.mxu0 0.0
    %5986 = vmatpush1.msra.mxu0 0.0
    %5987 = vmatprep.subr.mxu0 0.0
    %5988 = vmatpush1.msra.mxu0 0.0
    %5989 = vmatprep.subr.mxu0 0.0
    %5990 = vmatpush1.msra.mxu0 0.0
    %5991 = vmatprep.subr.mxu0 0.0
    %5992 = vmatpush1.msra.mxu0 0.0
    %5993 = vmatprep.subr.mxu0 0.0
    %5994 = vmatpush1.msra.mxu0 0.0
    %5995 = vmatprep.subr.mxu0 0.0
    %5996 = vmatpush1.msra.mxu0 0.0
    %5997 = vmatprep.subr.mxu0 0.0
    %5998 = vmatpush1.msra.mxu0 0.0
    %5999 = vmatprep.subr.mxu0 0.0
    %6000 = vmatpush1.msra.mxu0 0.0
    %6001 = vmatprep.subr.mxu0 0.0
    %6002 = vmatpush1.msra.mxu0 0.0
    %6003 = vmatprep.subr.mxu0 0.0
    %6004 = vmatpush1.msra.mxu0 0.0
    %6005 = vmatprep.subr.mxu0 0.0
    %6006 = vmatpush1.msra.mxu0 0.0
    %6007 = vmatprep.subr.mxu0 0.0
    %6008 = vmatpush1.msra.mxu0 0.0
    %6009 = vmatprep.subr.mxu0 0.0
    %6010 = vmatpush1.msra.mxu0 0.0
    %6011 = vmatprep.subr.mxu0 0.0
    %6012 = vmatpush1.msra.mxu0 0.0
    %6013 = vmatprep.subr.mxu0 0.0
    %6014 = vmatpush1.msra.mxu0 0.0
    %6015 = vmatprep.subr.mxu0 0.0
    %6016 = vmatpush1.msra.mxu0 0.0
    %6017 = vmatprep.subr.mxu0 0.0
    %6018 = vmatpush1.msra.mxu0 0.0
    %6019 = vmatprep.subr.mxu0 0.0
    %6020 = vmatpush1.msra.mxu0 0.0
    %6021 = vmatprep.subr.mxu0 0.0
    %6022 = vmatpush1.msra.mxu0 0.0
    %6023 = vmatprep.subr.mxu0 0.0
    %6024 = vmatpush1.msra.mxu0 0.0
    %6025 = vmatprep.subr.mxu0 0.0
    %6026 = vmatpush1.msra.mxu0 0.0
    %6027 = vmatprep.subr.mxu0 0.0
    %6028 = vmatpush1.msra.mxu0 0.0
    %6029 = vmatprep.subr.mxu0 0.0
    %6030 = vmatpush1.msra.mxu0 0.0
    %6031 = vmatprep.subr.mxu0 0.0
    %6032 = vmatpush1.msra.mxu0 0.0
    %6033 = vmatprep.subr.mxu0 0.0
    %6034 = vmatpush1.msra.mxu0 0.0
    %6035 = vmatprep.subr.mxu0 0.0
    %6036 = vmatpush1.msra.mxu0 0.0
    %6037 = vmatprep.subr.mxu0 0.0
    %6038 = vmatpush1.msra.mxu0 0.0
    %6039 = vmatprep.subr.mxu0 0.0
    %6040 = vmatpush1.msra.mxu0 0.0
    %6041 = vmatprep.subr.mxu0 0.0
    %6042 = vmatpush1.msra.mxu0 0.0
    %6043 = vmatprep.subr.mxu0 0.0
    %6044 = vmatpush1.msra.mxu0 0.0
    %6045 = vmatprep.mubr.f32.mxu0 0.0
    %6046 = vmatmul.mubr.f32.gmra.mrb[0].mxu0 %v5958
    %v6047 = vpop.f32.mrb[0].mxu0
    %v6048 = vadd.f32 %v5955, %v6047
    %v6049 = vpop.f32.mrb[0].mxu0
    %6050 = vmatprep.mubr.f32.mxu0 0.0
    %6051 = vmatmul.mubr.f32.gmra.mrb[0].mxu0 %v5961
    %v6052 = vpop.f32.mrb[0].mxu0
    %v6053 = vadd.f32 %v5955, %v6052
    %v6054 = vpop.f32.mrb[0].mxu0
    %6055 = vmatprep.mubr.f32.mxu0 0.0
    %6056 = vmatmul.mubr.f32.gmra.mrb[0].mxu0 %v5964
    %v6057 = vpop.f32.mrb[0].mxu0
    %v6058 = vadd.f32 %v5955, %v6057
    %v6059 = vpop.f32.mrb[0].mxu0
    %6060 = vmatprep.mubr.f32.mxu0 0.0
    %6061 = vmatmul.mubr.f32.gmra.mrb[0].mxu0 %v5967
    %v6062 = vpop.f32.mrb[0].mxu0
    %v6063 = vadd.f32 %v5955, %v6062
    %v6064 = vpop.f32.mrb[0].mxu0
    %6065 = vmatprep.mubr.f32.mxu0 0.0
    %6066 = vmatmul.mubr.f32.gmra.mrb[0].mxu0 %v5970
    %v6067 = vpop.f32.mrb[0].mxu0
    %v6068 = vadd.f32 %v5955, %v6067
    %v6069 = vpop.f32.mrb[0].mxu0
    %6070 = vmatprep.mubr.f32.mxu0 0.0
    %6071 = vmatmul.mubr.f32.gmra.mrb[0].mxu0 %v5973
    %v6072 = vpop.f32.mrb[0].mxu0
    %v6073 = vadd.f32 %v5955, %v6072
    %v6074 = vpop.f32.mrb[0].mxu0
    %6075 = vmatprep.mubr.f32.mxu0 0.0
    %6076 = vmatmul.mubr.f32.gmra.mrb[0].mxu0 %v5976
    %v6077 = vpop.f32.mrb[0].mxu0
    %v6078 = vadd.f32 %v5955, %v6077
    %v6079 = vpop.f32.mrb[0].mxu0
    %6080 = vmatprep.mubr.f32.mxu0 0.0
    %6081 = vmatmul.mubr.f32.gmra.mrb[0].mxu0 %v5979
    %v6082 = vpop.f32.mrb[0].mxu0
    %v6083 = vadd.f32 %v5955, %v6082
    %v6084 = vpop.f32.mrb[0].mxu0
    %6085 = vdwg.mxu0
    %6086 = vst.msk [vmem:[#allocation2] sm:$0xff] %vm180, %v6048
    %6087 = vst.msk [vmem:[#allocation2 + $0x8] sm:$0xff] %vm180, %v6053
    %6088 = vst.msk [vmem:[#allocation2 + $0x10] sm:$0xff] %vm180, %v6058
    %6089 = vst.msk [vmem:[#allocation2 + $0x18] sm:$0xff] %vm180, %v6063
    %6090 = vst.msk [vmem:[#allocation2 + $0x20] sm:$0xff] %vm180, %v6068
    %6091 = vst.msk [vmem:[#allocation2 + $0x28] sm:$0xff] %vm180, %v6073
    %6092 = vst.msk [vmem:[#allocation2 + $0x30] sm:$0xff] %vm180, %v6078
    %6093 = vst.msk [vmem:[#allocation2 + $0x38] sm:$0xff] %vm180, %v6083
    %v6094 = vld [vmem:[#allocation2] sm:$0xff]
    %6095 = vmatprep.subr.mxu0 0.0
    %6096 = vmatpush1.msra.mxu0 %v5944
    %6097 = vmatprep.subr.mxu0 0.0
    %6098 = vmatpush1.msra.mxu0 %v5945
    %6099 = vmatprep.subr.mxu0 0.0
    %6100 = vmatpush1.msra.mxu0 0.0
    %6101 = vmatprep.subr.mxu0 0.0
    %6102 = vmatpush1.msra.mxu0 0.0
    %6103 = vmatprep.subr.mxu0 0.0
    %6104 = vmatpush1.msra.mxu0 0.0
    %6105 = vmatprep.subr.mxu0 0.0
    %6106 = vmatpush1.msra.mxu0 0.0
    %6107 = vmatprep.subr.mxu0 0.0
    %6108 = vmatpush1.msra.mxu0 0.0
    %6109 = vmatprep.subr.mxu0 0.0
    %6110 = vmatpush1.msra.mxu0 0.0
    %6111 = vmatprep.subr.mxu0 0.0
    %6112 = vmatpush1.msra.mxu0 0.0
    %6113 = vmatprep.subr.mxu0 0.0
    %6114 = vmatpush1.msra.mxu0 0.0
    %6115 = vmatprep.subr.mxu0 0.0
    %6116 = vmatpush1.msra.mxu0 0.0
    %6117 = vmatprep.subr.mxu0 0.0
    %6118 = vmatpush1.msra.mxu0 0.0
    %6119 = vmatprep.subr.mxu0 0.0
    %6120 = vmatpush1.msra.mxu0 0.0
    %6121 = vmatprep.subr.mxu0 0.0
    %6122 = vmatpush1.msra.mxu0 0.0
    %6123 = vmatprep.subr.mxu0 0.0
    %6124 = vmatpush1.msra.mxu0 0.0
    %6125 = vmatprep.subr.mxu0 0.0
    %6126 = vmatpush1.msra.mxu0 0.0
    %6127 = vmatprep.subr.mxu0 0.0
    %6128 = vmatpush1.msra.mxu0 0.0
    %6129 = vmatprep.subr.mxu0 0.0
    %6130 = vmatpush1.msra.mxu0 0.0
    %6131 = vmatprep.subr.mxu0 0.0
    %6132 = vmatpush1.msra.mxu0 0.0
    %6133 = vmatprep.subr.mxu0 0.0
    %6134 = vmatpush1.msra.mxu0 0.0
    %6135 = vmatprep.subr.mxu0 0.0
    %6136 = vmatpush1.msra.mxu0 0.0
    %6137 = vmatprep.subr.mxu0 0.0
    %6138 = vmatpush1.msra.mxu0 0.0
    %6139 = vmatprep.subr.mxu0 0.0
    %6140 = vmatpush1.msra.mxu0 0.0
    %6141 = vmatprep.subr.mxu0 0.0
    %6142 = vmatpush1.msra.mxu0 0.0
    %6143 = vmatprep.subr.mxu0 0.0
    %6144 = vmatpush1.msra.mxu0 0.0
    %6145 = vmatprep.subr.mxu0 0.0
    %6146 = vmatpush1.msra.mxu0 0.0
    %6147 = vmatprep.subr.mxu0 0.0
    %6148 = vmatpush1.msra.mxu0 0.0
    %6149 = vmatprep.subr.mxu0 0.0
    %6150 = vmatpush1.msra.mxu0 0.0
    %6151 = vmatprep.subr.mxu0 0.0
    %6152 = vmatpush1.msra.mxu0 0.0
    %6153 = vmatprep.subr.mxu0 0.0
    %6154 = vmatpush1.msra.mxu0 0.0
    %6155 = vmatprep.subr.mxu0 0.0
    %6156 = vmatpush1.msra.mxu0 0.0
    %6157 = vmatprep.subr.mxu0 0.0
    %6158 = vmatpush1.msra.mxu0 0.0
    %6159 = vmatprep.mubr.f32.mxu0 0.0
    %6160 = vmatmul.mubr.f32.gmra.mrb[0].mxu0 %v191
    %v6161 = vpop.f32.mrb[0].mxu0
    %v6162 = vadd.f32 0.0, %v6161
    %v6163 = vpop.f32.mrb[0].mxu0
    %6164 = vdwg.mxu0
    %v6165 = vadd.f32 %v6094, %v6162
    %v6166 = vxor.u32 %v6165, 2147483648
    %v6167 = vmul.f32 %v6166, 1.442695
    %v6168 = vpow.pop %v6167
    %v6169 = vadd.f32 %v6168, 1.0
    %v6170 = vrcp.pop %v6169
    %v6171 = vmul.f32 1.0, %v6170
    %v6172 = vtanh.pop %v6165
    %v6173 = vmul.f32 %v6171, 0.0
    %6175 = vrot.lane.b32.xlu0 %v6172, 96
    %v6176 = vpop.permute.xlu0 %6175
    %v6178 = vmul.f32 %v6171, %v6176
    %6180 = vrot.lane.b32.xlu0 %v6178, 16
    %v6181 = vpop.permute.xlu0 %6180
    %v6183 = vadd.f32 %v6173, %v6181
    %v6184 = vtanh.pop %v6183
    %6186 = vrot.lane.b32.xlu0 %v6184, 32
    %v6187 = vpop.permute.xlu0 %6186
    %v6189 = vmul.f32 %v6171, %v6187
    %6191 = vrot.lane.b32.xlu0 %v6189, 80
    %v6192 = vpop.permute.xlu0 %6191
    %6194 = vst.msk [vmem:[%s4] sm:$0xff] %vm50, %v6192
    %v6195 = vld [vmem:[%s293] sm:$0xff]
    %v6196 = vsel %vm50, %v6192, 0
    %6198 = vmatprep.subr.mxu0 0.0
    %6199 = vmatpush1.msra.mxu0 %v5944
    %6200 = vmatprep.subr.mxu0 0.0
    %6201 = vmatpush1.msra.mxu0 %v5945
    %6202 = vmatprep.subr.mxu0 0.0
    %6203 = vmatpush1.msra.mxu0 0.0
    %6204 = vmatprep.subr.mxu0 0.0
    %6205 = vmatpush1.msra.mxu0 0.0
    %6206 = vmatprep.subr.mxu0 0.0
    %6207 = vmatpush1.msra.mxu0 0.0
    %6208 = vmatprep.subr.mxu0 0.0
    %6209 = vmatpush1.msra.mxu0 0.0
    %6210 = vmatprep.subr.mxu0 0.0
    %6211 = vmatpush1.msra.mxu0 0.0
    %6212 = vmatprep.subr.mxu0 0.0
    %6213 = vmatpush1.msra.mxu0 0.0
    %6214 = vmatprep.subr.mxu0 0.0
    %6215 = vmatpush1.msra.mxu0 0.0
    %6216 = vmatprep.subr.mxu0 0.0
    %6217 = vmatpush1.msra.mxu0 0.0
    %6218 = vmatprep.subr.mxu0 0.0
    %6219 = vmatpush1.msra.mxu0 0.0
    %6220 = vmatprep.subr.mxu0 0.0
    %6221 = vmatpush1.msra.mxu0 0.0
    %6222 = vmatprep.subr.mxu0 0.0
    %6223 = vmatpush1.msra.mxu0 0.0
    %6224 = vmatprep.subr.mxu0 0.0
    %6225 = vmatpush1.msra.mxu0 0.0
    %6226 = vmatprep.subr.mxu0 0.0
    %6227 = vmatpush1.msra.mxu0 0.0
    %6228 = vmatprep.subr.mxu0 0.0
    %6229 = vmatpush1.msra.mxu0 0.0
    %6230 = vmatprep.subr.mxu0 0.0
    %6231 = vmatpush1.msra.mxu0 0.0
    %6232 = vmatprep.subr.mxu0 0.0
    %6233 = vmatpush1.msra.mxu0 0.0
    %6234 = vmatprep.subr.mxu0 0.0
    %6235 = vmatpush1.msra.mxu0 0.0
    %6236 = vmatprep.subr.mxu0 0.0
    %6237 = vmatpush1.msra.mxu0 0.0
    %6238 = vmatprep.subr.mxu0 0.0
    %6239 = vmatpush1.msra.mxu0 0.0
    %6240 = vmatprep.subr.mxu0 0.0
    %6241 = vmatpush1.msra.mxu0 0.0
    %6242 = vmatprep.subr.mxu0 0.0
    %6243 = vmatpush1.msra.mxu0 0.0
    %6244 = vmatprep.subr.mxu0 0.0
    %6245 = vmatpush1.msra.mxu0 0.0
    %6246 = vmatprep.subr.mxu0 0.0
    %6247 = vmatpush1.msra.mxu0 0.0
    %6248 = vmatprep.subr.mxu0 0.0
    %6249 = vmatpush1.msra.mxu0 0.0
    %6250 = vmatprep.subr.mxu0 0.0
    %6251 = vmatpush1.msra.mxu0 0.0
    %6252 = vmatprep.subr.mxu0 0.0
    %6253 = vmatpush1.msra.mxu0 0.0
    %6254 = vmatprep.subr.mxu0 0.0
    %6255 = vmatpush1.msra.mxu0 0.0
    %6256 = vmatprep.subr.mxu0 0.0
    %6257 = vmatpush1.msra.mxu0 0.0
    %6258 = vmatprep.subr.mxu0 0.0
    %6259 = vmatpush1.msra.mxu0 0.0
    %6260 = vmatprep.subr.mxu0 0.0
    %6261 = vmatpush1.msra.mxu0 0.0
    %6262 = vmatprep.mubr.f32.mxu0 0.0
    %6263 = vmatmul.mubr.f32.gmra.mrb[0].mxu0 %v6196
    %v6264 = vpop.f32.mrb[0].mxu0
    %v6265 = vadd.f32 0.0, %v6264
    %v6266 = vpop.f32.mrb[0].mxu0
    %6267 = vdwg.mxu0
    %v6268 = vadd.f32 %v6195, %v6265
    %v6269 = vxor.u32 %v6268, 2147483648
    %v6270 = vmul.f32 %v6269, 1.442695
    %v6271 = vpow.pop %v6270
    %v6272 = vadd.f32 %v6271, 1.0
    %v6273 = vrcp.pop %v6272
    %v6274 = vmul.f32 1.0, %v6273
    %v6275 = vtanh.pop %v6268
    %v6276 = vmul.f32 %v6274, %v6183
    %6278 = vrot.lane.b32.xlu0 %v6275, 96
    %v6279 = vpop.permute.xlu0 %6278
    %v6281 = vmul.f32 %v6274, %v6279
    %6283 = vrot.lane.b32.xlu0 %v6281, 16
    %v6284 = vpop.permute.xlu0 %6283
    %v6286 = vadd.f32 %v6276, %v6284
    %v6287 = vtanh.pop %v6286
    %6289 = vrot.lane.b32.xlu0 %v6287, 32
    %v6290 = vpop.permute.xlu0 %6289
    %v6292 = vmul.f32 %v6274, %v6290
    %6294 = vrot.lane.b32.xlu0 %v6292, 80
    %v6295 = vpop.permute.xlu0 %6294
    %6297 = vst.msk [vmem:[%s396] sm:$0xff] %vm50, %v6295
    %v6298 = vld [vmem:[%s398] sm:$0xff]
    %v6299 = vsel %vm50, %v6295, 0
    %6301 = vmatprep.subr.mxu0 0.0
    %6302 = vmatpush1.msra.mxu0 %v5944
    %6303 = vmatprep.subr.mxu0 0.0
    %6304 = vmatpush1.msra.mxu0 %v5945
    %6305 = vmatprep.subr.mxu0 0.0
    %6306 = vmatpush1.msra.mxu0 0.0
    %6307 = vmatprep.subr.mxu0 0.0
    %6308 = vmatpush1.msra.mxu0 0.0
    %6309 = vmatprep.subr.mxu0 0.0
    %6310 = vmatpush1.msra.mxu0 0.0
    %6311 = vmatprep.subr.mxu0 0.0
    %6312 = vmatpush1.msra.mxu0 0.0
    %6313 = vmatprep.subr.mxu0 0.0
    %6314 = vmatpush1.msra.mxu0 0.0
    %6315 = vmatprep.subr.mxu0 0.0
    %6316 = vmatpush1.msra.mxu0 0.0
    %6317 = vmatprep.subr.mxu0 0.0
    %6318 = vmatpush1.msra.mxu0 0.0
    %6319 = vmatprep.subr.mxu0 0.0
    %6320 = vmatpush1.msra.mxu0 0.0
    %6321 = vmatprep.subr.mxu0 0.0
    %6322 = vmatpush1.msra.mxu0 0.0
    %6323 = vmatprep.subr.mxu0 0.0
    %6324 = vmatpush1.msra.mxu0 0.0
    %6325 = vmatprep.subr.mxu0 0.0
    %6326 = vmatpush1.msra.mxu0 0.0
    %6327 = vmatprep.subr.mxu0 0.0
    %6328 = vmatpush1.msra.mxu0 0.0
    %6329 = vmatprep.subr.mxu0 0.0
    %6330 = vmatpush1.msra.mxu0 0.0
    %6331 = vmatprep.subr.mxu0 0.0
    %6332 = vmatpush1.msra.mxu0 0.0
    %6333 = vmatprep.subr.mxu0 0.0
    %6334 = vmatpush1.msra.mxu0 0.0
    %6335 = vmatprep.subr.mxu0 0.0
    %6336 = vmatpush1.msra.mxu0 0.0
    %6337 = vmatprep.subr.mxu0 0.0
    %6338 = vmatpush1.msra.mxu0 0.0
    %6339 = vmatprep.subr.mxu0 0.0
    %6340 = vmatpush1.msra.mxu0 0.0
    %6341 = vmatprep.subr.mxu0 0.0
    %6342 = vmatpush1.msra.mxu0 0.0
    %6343 = vmatprep.subr.mxu0 0.0
    %6344 = vmatpush1.msra.mxu0 0.0
    %6345 = vmatprep.subr.mxu0 0.0
    %6346 = vmatpush1.msra.mxu0 0.0
    %6347 = vmatprep.subr.mxu0 0.0
    %6348 = vmatpush1.msra.mxu0 0.0
    %6349 = vmatprep.subr.mxu0 0.0
    %6350 = vmatpush1.msra.mxu0 0.0
    %6351 = vmatprep.subr.mxu0 0.0
    %6352 = vmatpush1.msra.mxu0 0.0
    %6353 = vmatprep.subr.mxu0 0.0
    %6354 = vmatpush1.msra.mxu0 0.0
    %6355 = vmatprep.subr.mxu0 0.0
    %6356 = vmatpush1.msra.mxu0 0.0
    %6357 = vmatprep.subr.mxu0 0.0
    %6358 = vmatpush1.msra.mxu0 0.0
    %6359 = vmatprep.subr.mxu0 0.0
    %6360 = vmatpush1.msra.mxu0 0.0
    %6361 = vmatprep.subr.mxu0 0.0
    %6362 = vmatpush1.msra.mxu0 0.0
    %6363 = vmatprep.subr.mxu0 0.0
    %6364 = vmatpush1.msra.mxu0 0.0
    %6365 = vmatprep.mubr.f32.mxu0 0.0
    %6366 = vmatmul.mubr.f32.gmra.mrb[0].mxu0 %v6299
    %v6367 = vpop.f32.mrb[0].mxu0
    %v6368 = vadd.f32 0.0, %v6367
    %v6369 = vpop.f32.mrb[0].mxu0
    %6370 = vdwg.mxu0
    %v6371 = vadd.f32 %v6298, %v6368
    %v6372 = vxor.u32 %v6371, 2147483648
    %v6373 = vmul.f32 %v6372, 1.442695
    %v6374 = vpow.pop %v6373
    %v6375 = vadd.f32 %v6374, 1.0
    %v6376 = vrcp.pop %v6375
    %v6377 = vmul.f32 1.0, %v6376
    %v6378 = vtanh.pop %v6371
    %v6379 = vmul.f32 %v6377, %v6286
    %6381 = vrot.lane.b32.xlu0 %v6378, 96
    %v6382 = vpop.permute.xlu0 %6381
    %v6384 = vmul.f32 %v6377, %v6382
    %6386 = vrot.lane.b32.xlu0 %v6384, 16
    %v6387 = vpop.permute.xlu0 %6386
    %v6389 = vadd.f32 %v6379, %v6387
    %v6390 = vtanh.pop %v6389
    %6392 = vrot.lane.b32.xlu0 %v6390, 32
    %v6393 = vpop.permute.xlu0 %6392
    %v6395 = vmul.f32 %v6377, %v6393
    %6397 = vrot.lane.b32.xlu0 %v6395, 80
    %v6398 = vpop.permute.xlu0 %6397
    %6400 = vst.msk [vmem:[%s501] sm:$0xff] %vm50, %v6398
    %v6401 = vld [vmem:[%s503] sm:$0xff]
    %v6402 = vsel %vm50, %v6398, 0
    %6404 = vmatprep.subr.mxu0 0.0
    %6405 = vmatpush1.msra.mxu0 %v5944
    %6406 = vmatprep.subr.mxu0 0.0
    %6407 = vmatpush1.msra.mxu0 %v5945
    %6408 = vmatprep.subr.mxu0 0.0
    %6409 = vmatpush1.msra.mxu0 0.0
    %6410 = vmatprep.subr.mxu0 0.0
    %6411 = vmatpush1.msra.mxu0 0.0
    %6412 = vmatprep.subr.mxu0 0.0
    %6413 = vmatpush1.msra.mxu0 0.0
    %6414 = vmatprep.subr.mxu0 0.0
    %6415 = vmatpush1.msra.mxu0 0.0
    %6416 = vmatprep.subr.mxu0 0.0
    %6417 = vmatpush1.msra.mxu0 0.0
    %6418 = vmatprep.subr.mxu0 0.0
    %6419 = vmatpush1.msra.mxu0 0.0
    %6420 = vmatprep.subr.mxu0 0.0
    %6421 = vmatpush1.msra.mxu0 0.0
    %6422 = vmatprep.subr.mxu0 0.0
    %6423 = vmatpush1.msra.mxu0 0.0
    %6424 = vmatprep.subr.mxu0 0.0
    %6425 = vmatpush1.msra.mxu0 0.0
    %6426 = vmatprep.subr.mxu0 0.0
    %6427 = vmatpush1.msra.mxu0 0.0
    %6428 = vmatprep.subr.mxu0 0.0
    %6429 = vmatpush1.msra.mxu0 0.0
    %6430 = vmatprep.subr.mxu0 0.0
    %6431 = vmatpush1.msra.mxu0 0.0
    %6432 = vmatprep.subr.mxu0 0.0
    %6433 = vmatpush1.msra.mxu0 0.0
    %6434 = vmatprep.subr.mxu0 0.0
    %6435 = vmatpush1.msra.mxu0 0.0
    %6436 = vmatprep.subr.mxu0 0.0
    %6437 = vmatpush1.msra.mxu0 0.0
    %6438 = vmatprep.subr.mxu0 0.0
    %6439 = vmatpush1.msra.mxu0 0.0
    %6440 = vmatprep.subr.mxu0 0.0
    %6441 = vmatpush1.msra.mxu0 0.0
    %6442 = vmatprep.subr.mxu0 0.0
    %6443 = vmatpush1.msra.mxu0 0.0
    %6444 = vmatprep.subr.mxu0 0.0
    %6445 = vmatpush1.msra.mxu0 0.0
    %6446 = vmatprep.subr.mxu0 0.0
    %6447 = vmatpush1.msra.mxu0 0.0
    %6448 = vmatprep.subr.mxu0 0.0
    %6449 = vmatpush1.msra.mxu0 0.0
    %6450 = vmatprep.subr.mxu0 0.0
    %6451 = vmatpush1.msra.mxu0 0.0
    %6452 = vmatprep.subr.mxu0 0.0
    %6453 = vmatpush1.msra.mxu0 0.0
    %6454 = vmatprep.subr.mxu0 0.0
    %6455 = vmatpush1.msra.mxu0 0.0
    %6456 = vmatprep.subr.mxu0 0.0
    %6457 = vmatpush1.msra.mxu0 0.0
    %6458 = vmatprep.subr.mxu0 0.0
    %6459 = vmatpush1.msra.mxu0 0.0
    %6460 = vmatprep.subr.mxu0 0.0
    %6461 = vmatpush1.msra.mxu0 0.0
    %6462 = vmatprep.subr.mxu0 0.0
    %6463 = vmatpush1.msra.mxu0 0.0
    %6464 = vmatprep.subr.mxu0 0.0
    %6465 = vmatpush1.msra.mxu0 0.0
    %6466 = vmatprep.subr.mxu0 0.0
    %6467 = vmatpush1.msra.mxu0 0.0
    %6468 = vmatprep.mubr.f32.mxu0 0.0
    %6469 = vmatmul.mubr.f32.gmra.mrb[0].mxu0 %v6402
    %v6470 = vpop.f32.mrb[0].mxu0
    %v6471 = vadd.f32 0.0, %v6470
    %v6472 = vpop.f32.mrb[0].mxu0
    %6473 = vdwg.mxu0
    %v6474 = vadd.f32 %v6401, %v6471
    %v6475 = vxor.u32 %v6474, 2147483648
    %v6476 = vmul.f32 %v6475, 1.442695
    %v6477 = vpow.pop %v6476
    %v6478 = vadd.f32 %v6477, 1.0
    %v6479 = vrcp.pop %v6478
    %v6480 = vmul.f32 1.0, %v6479
    %v6481 = vtanh.pop %v6474
    %v6482 = vmul.f32 %v6480, %v6389
    %6484 = vrot.lane.b32.xlu0 %v6481, 96
    %v6485 = vpop.permute.xlu0 %6484
    %v6487 = vmul.f32 %v6480, %v6485
    %6489 = vrot.lane.b32.xlu0 %v6487, 16
    %v6490 = vpop.permute.xlu0 %6489
    %v6492 = vadd.f32 %v6482, %v6490
    %v6493 = vtanh.pop %v6492
    %6495 = vrot.lane.b32.xlu0 %v6493, 32
    %v6496 = vpop.permute.xlu0 %6495
    %v6498 = vmul.f32 %v6480, %v6496
    %6500 = vrot.lane.b32.xlu0 %v6498, 80
    %v6501 = vpop.permute.xlu0 %6500
    %6503 = vst.msk [vmem:[%s606] sm:$0xff] %vm50, %v6501
    %v6504 = vld [vmem:[%s608] sm:$0xff]
    %v6505 = vsel %vm50, %v6501, 0
    %6507 = vmatprep.subr.mxu0 0.0
    %6508 = vmatpush1.msra.mxu0 %v5944
    %6509 = vmatprep.subr.mxu0 0.0
    %6510 = vmatpush1.msra.mxu0 %v5945
    %6511 = vmatprep.subr.mxu0 0.0
    %6512 = vmatpush1.msra.mxu0 0.0
    %6513 = vmatprep.subr.mxu0 0.0
    %6514 = vmatpush1.msra.mxu0 0.0
    %6515 = vmatprep.subr.mxu0 0.0
    %6516 = vmatpush1.msra.mxu0 0.0
    %6517 = vmatprep.subr.mxu0 0.0
    %6518 = vmatpush1.msra.mxu0 0.0
    %6519 = vmatprep.subr.mxu0 0.0
    %6520 = vmatpush1.msra.mxu0 0.0
    %6521 = vmatprep.subr.mxu0 0.0
    %6522 = vmatpush1.msra.mxu0 0.0
    %6523 = vmatprep.subr.mxu0 0.0
    %6524 = vmatpush1.msra.mxu0 0.0
    %6525 = vmatprep.subr.mxu0 0.0
    %6526 = vmatpush1.msra.mxu0 0.0
    %6527 = vmatprep.subr.mxu0 0.0
    %6528 = vmatpush1.msra.mxu0 0.0
    %6529 = vmatprep.subr.mxu0 0.0
    %6530 = vmatpush1.msra.mxu0 0.0
    %6531 = vmatprep.subr.mxu0 0.0
    %6532 = vmatpush1.msra.mxu0 0.0
    %6533 = vmatprep.subr.mxu0 0.0
    %6534 = vmatpush1.msra.mxu0 0.0
    %6535 = vmatprep.subr.mxu0 0.0
    %6536 = vmatpush1.msra.mxu0 0.0
    %6537 = vmatprep.subr.mxu0 0.0
    %6538 = vmatpush1.msra.mxu0 0.0
    %6539 = vmatprep.subr.mxu0 0.0
    %6540 = vmatpush1.msra.mxu0 0.0
    %6541 = vmatprep.subr.mxu0 0.0
    %6542 = vmatpush1.msra.mxu0 0.0
    %6543 = vmatprep.subr.mxu0 0.0
    %6544 = vmatpush1.msra.mxu0 0.0
    %6545 = vmatprep.subr.mxu0 0.0
    %6546 = vmatpush1.msra.mxu0 0.0
    %6547 = vmatprep.subr.mxu0 0.0
    %6548 = vmatpush1.msra.mxu0 0.0
    %6549 = vmatprep.subr.mxu0 0.0
    %6550 = vmatpush1.msra.mxu0 0.0
    %6551 = vmatprep.subr.mxu0 0.0
    %6552 = vmatpush1.msra.mxu0 0.0
    %6553 = vmatprep.subr.mxu0 0.0
    %6554 = vmatpush1.msra.mxu0 0.0
    %6555 = vmatprep.subr.mxu0 0.0
    %6556 = vmatpush1.msra.mxu0 0.0
    %6557 = vmatprep.subr.mxu0 0.0
    %6558 = vmatpush1.msra.mxu0 0.0
    %6559 = vmatprep.subr.mxu0 0.0
    %6560 = vmatpush1.msra.mxu0 0.0
    %6561 = vmatprep.subr.mxu0 0.0
    %6562 = vmatpush1.msra.mxu0 0.0
    %6563 = vmatprep.subr.mxu0 0.0
    %6564 = vmatpush1.msra.mxu0 0.0
    %6565 = vmatprep.subr.mxu0 0.0
    %6566 = vmatpush1.msra.mxu0 0.0
    %6567 = vmatprep.subr.mxu0 0.0
    %6568 = vmatpush1.msra.mxu0 0.0
    %6569 = vmatprep.subr.mxu0 0.0
    %6570 = vmatpush1.msra.mxu0 0.0
    %6571 = vmatprep.mubr.f32.mxu0 0.0
    %6572 = vmatmul.mubr.f32.gmra.mrb[0].mxu0 %v6505
    %v6573 = vpop.f32.mrb[0].mxu0
    %v6574 = vadd.f32 0.0, %v6573
    %v6575 = vpop.f32.mrb[0].mxu0
    %6576 = vdwg.mxu0
    %v6577 = vadd.f32 %v6504, %v6574
    %v6578 = vxor.u32 %v6577, 2147483648
    %v6579 = vmul.f32 %v6578, 1.442695
    %v6580 = vpow.pop %v6579
    %v6581 = vadd.f32 %v6580, 1.0
    %v6582 = vrcp.pop %v6581
    %v6583 = vmul.f32 1.0, %v6582
    %v6584 = vtanh.pop %v6577
    %v6585 = vmul.f32 %v6583, %v6492
    %6587 = vrot.lane.b32.xlu0 %v6584, 96
    %v6588 = vpop.permute.xlu0 %6587
    %v6590 = vmul.f32 %v6583, %v6588
    %6592 = vrot.lane.b32.xlu0 %v6590, 16
    %v6593 = vpop.permute.xlu0 %6592
    %v6595 = vadd.f32 %v6585, %v6593
    %v6596 = vtanh.pop %v6595
    %6598 = vrot.lane.b32.xlu0 %v6596, 32
    %v6599 = vpop.permute.xlu0 %6598
    %v6601 = vmul.f32 %v6583, %v6599
    %6603 = vrot.lane.b32.xlu0 %v6601, 80
    %v6604 = vpop.permute.xlu0 %6603
    %6606 = vst.msk [vmem:[%s711] sm:$0xff] %vm50, %v6604
    %v6607 = vld [vmem:[%s713] sm:$0xff]
    %v6608 = vsel %vm50, %v6604, 0
    %6610 = vmatprep.subr.mxu0 0.0
    %6611 = vmatpush1.msra.mxu0 %v5944
    %6612 = vmatprep.subr.mxu0 0.0
    %6613 = vmatpush1.msra.mxu0 %v5945
    %6614 = vmatprep.subr.mxu0 0.0
    %6615 = vmatpush1.msra.mxu0 0.0
    %6616 = vmatprep.subr.mxu0 0.0
    %6617 = vmatpush1.msra.mxu0 0.0
    %6618 = vmatprep.subr.mxu0 0.0
    %6619 = vmatpush1.msra.mxu0 0.0
    %6620 = vmatprep.subr.mxu0 0.0
    %6621 = vmatpush1.msra.mxu0 0.0
    %6622 = vmatprep.subr.mxu0 0.0
    %6623 = vmatpush1.msra.mxu0 0.0
    %6624 = vmatprep.subr.mxu0 0.0
    %6625 = vmatpush1.msra.mxu0 0.0
    %6626 = vmatprep.subr.mxu0 0.0
    %6627 = vmatpush1.msra.mxu0 0.0
    %6628 = vmatprep.subr.mxu0 0.0
    %6629 = vmatpush1.msra.mxu0 0.0
    %6630 = vmatprep.subr.mxu0 0.0
    %6631 = vmatpush1.msra.mxu0 0.0
    %6632 = vmatprep.subr.mxu0 0.0
    %6633 = vmatpush1.msra.mxu0 0.0
    %6634 = vmatprep.subr.mxu0 0.0
    %6635 = vmatpush1.msra.mxu0 0.0
    %6636 = vmatprep.subr.mxu0 0.0
    %6637 = vmatpush1.msra.mxu0 0.0
    %6638 = vmatprep.subr.mxu0 0.0
    %6639 = vmatpush1.msra.mxu0 0.0
    %6640 = vmatprep.subr.mxu0 0.0
    %6641 = vmatpush1.msra.mxu0 0.0
    %6642 = vmatprep.subr.mxu0 0.0
    %6643 = vmatpush1.msra.mxu0 0.0
    %6644 = vmatprep.subr.mxu0 0.0
    %6645 = vmatpush1.msra.mxu0 0.0
    %6646 = vmatprep.subr.mxu0 0.0
    %6647 = vmatpush1.msra.mxu0 0.0
    %6648 = vmatprep.subr.mxu0 0.0
    %6649 = vmatpush1.msra.mxu0 0.0
    %6650 = vmatprep.subr.mxu0 0.0
    %6651 = vmatpush1.msra.mxu0 0.0
    %6652 = vmatprep.subr.mxu0 0.0
    %6653 = vmatpush1.msra.mxu0 0.0
    %6654 = vmatprep.subr.mxu0 0.0
    %6655 = vmatpush1.msra.mxu0 0.0
    %6656 = vmatprep.subr.mxu0 0.0
    %6657 = vmatpush1.msra.mxu0 0.0
    %6658 = vmatprep.subr.mxu0 0.0
    %6659 = vmatpush1.msra.mxu0 0.0
    %6660 = vmatprep.subr.mxu0 0.0
    %6661 = vmatpush1.msra.mxu0 0.0
    %6662 = vmatprep.subr.mxu0 0.0
    %6663 = vmatpush1.msra.mxu0 0.0
    %6664 = vmatprep.subr.mxu0 0.0
    %6665 = vmatpush1.msra.mxu0 0.0
    %6666 = vmatprep.subr.mxu0 0.0
    %6667 = vmatpush1.msra.mxu0 0.0
    %6668 = vmatprep.subr.mxu0 0.0
    %6669 = vmatpush1.msra.mxu0 0.0
    %6670 = vmatprep.subr.mxu0 0.0
    %6671 = vmatpush1.msra.mxu0 0.0
    %6672 = vmatprep.subr.mxu0 0.0
    %6673 = vmatpush1.msra.mxu0 0.0
    %6674 = vmatprep.mubr.f32.mxu0 0.0
    %6675 = vmatmul.mubr.f32.gmra.mrb[0].mxu0 %v6608
    %v6676 = vpop.f32.mrb[0].mxu0
    %v6677 = vadd.f32 0.0, %v6676
    %v6678 = vpop.f32.mrb[0].mxu0
    %6679 = vdwg.mxu0
    %v6680 = vadd.f32 %v6607, %v6677
    %v6681 = vxor.u32 %v6680, 2147483648
    %v6682 = vmul.f32 %v6681, 1.442695
    %v6683 = vpow.pop %v6682
    %v6684 = vadd.f32 %v6683, 1.0
    %v6685 = vrcp.pop %v6684
    %v6686 = vmul.f32 1.0, %v6685
    %v6687 = vtanh.pop %v6680
    %v6688 = vmul.f32 %v6686, %v6595
    %6690 = vrot.lane.b32.xlu0 %v6687, 96
    %v6691 = vpop.permute.xlu0 %6690
    %v6693 = vmul.f32 %v6686, %v6691
    %6695 = vrot.lane.b32.xlu0 %v6693, 16
    %v6696 = vpop.permute.xlu0 %6695
    %v6698 = vadd.f32 %v6688, %v6696
    %v6699 = vtanh.pop %v6698
    %6701 = vrot.lane.b32.xlu0 %v6699, 32
    %v6702 = vpop.permute.xlu0 %6701
    %v6704 = vmul.f32 %v6686, %v6702
    %6706 = vrot.lane.b32.xlu0 %v6704, 80
    %v6707 = vpop.permute.xlu0 %6706
    %6709 = vst.msk [vmem:[%s816] sm:$0xff] %vm50, %v6707
    %v6710 = vld [vmem:[%s818] sm:$0xff]
    %v6711 = vsel %vm50, %v6707, 0
    %6713 = vmatprep.subr.mxu0 0.0
    %6714 = vmatpush1.msra.mxu0 %v5944
    %6715 = vmatprep.subr.mxu0 0.0
    %6716 = vmatpush1.msra.mxu0 %v5945
    %6717 = vmatprep.subr.mxu0 0.0
    %6718 = vmatpush1.msra.mxu0 0.0
    %6719 = vmatprep.subr.mxu0 0.0
    %6720 = vmatpush1.msra.mxu0 0.0
    %6721 = vmatprep.subr.mxu0 0.0
    %6722 = vmatpush1.msra.mxu0 0.0
    %6723 = vmatprep.subr.mxu0 0.0
    %6724 = vmatpush1.msra.mxu0 0.0
    %6725 = vmatprep.subr.mxu0 0.0
    %6726 = vmatpush1.msra.mxu0 0.0
    %6727 = vmatprep.subr.mxu0 0.0
    %6728 = vmatpush1.msra.mxu0 0.0
    %6729 = vmatprep.subr.mxu0 0.0
    %6730 = vmatpush1.msra.mxu0 0.0
    %6731 = vmatprep.subr.mxu0 0.0
    %6732 = vmatpush1.msra.mxu0 0.0
    %6733 = vmatprep.subr.mxu0 0.0
    %6734 = vmatpush1.msra.mxu0 0.0
    %6735 = vmatprep.subr.mxu0 0.0
    %6736 = vmatpush1.msra.mxu0 0.0
    %6737 = vmatprep.subr.mxu0 0.0
    %6738 = vmatpush1.msra.mxu0 0.0
    %6739 = vmatprep.subr.mxu0 0.0
    %6740 = vmatpush1.msra.mxu0 0.0
    %6741 = vmatprep.subr.mxu0 0.0
    %6742 = vmatpush1.msra.mxu0 0.0
    %6743 = vmatprep.subr.mxu0 0.0
    %6744 = vmatpush1.msra.mxu0 0.0
    %6745 = vmatprep.subr.mxu0 0.0
    %6746 = vmatpush1.msra.mxu0 0.0
    %6747 = vmatprep.subr.mxu0 0.0
    %6748 = vmatpush1.msra.mxu0 0.0
    %6749 = vmatprep.subr.mxu0 0.0
    %6750 = vmatpush1.msra.mxu0 0.0
    %6751 = vmatprep.subr.mxu0 0.0
    %6752 = vmatpush1.msra.mxu0 0.0
    %6753 = vmatprep.subr.mxu0 0.0
    %6754 = vmatpush1.msra.mxu0 0.0
    %6755 = vmatprep.subr.mxu0 0.0
    %6756 = vmatpush1.msra.mxu0 0.0
    %6757 = vmatprep.subr.mxu0 0.0
    %6758 = vmatpush1.msra.mxu0 0.0
    %6759 = vmatprep.subr.mxu0 0.0
    %6760 = vmatpush1.msra.mxu0 0.0
    %6761 = vmatprep.subr.mxu0 0.0
    %6762 = vmatpush1.msra.mxu0 0.0
    %6763 = vmatprep.subr.mxu0 0.0
    %6764 = vmatpush1.msra.mxu0 0.0
    %6765 = vmatprep.subr.mxu0 0.0
    %6766 = vmatpush1.msra.mxu0 0.0
    %6767 = vmatprep.subr.mxu0 0.0
    %6768 = vmatpush1.msra.mxu0 0.0
    %6769 = vmatprep.subr.mxu0 0.0
    %6770 = vmatpush1.msra.mxu0 0.0
    %6771 = vmatprep.subr.mxu0 0.0
    %6772 = vmatpush1.msra.mxu0 0.0
    %6773 = vmatprep.subr.mxu0 0.0
    %6774 = vmatpush1.msra.mxu0 0.0
    %6775 = vmatprep.subr.mxu0 0.0
    %6776 = vmatpush1.msra.mxu0 0.0
    %6777 = vmatprep.mubr.f32.mxu0 0.0
    %6778 = vmatmul.mubr.f32.gmra.mrb[0].mxu0 %v6711
    %v6779 = vpop.f32.mrb[0].mxu0
    %v6780 = vadd.f32 0.0, %v6779
    %v6781 = vpop.f32.mrb[0].mxu0
    %6782 = vdwg.mxu0
    %v6783 = vadd.f32 %v6710, %v6780
    %v6784 = vxor.u32 %v6783, 2147483648
    %v6785 = vmul.f32 %v6784, 1.442695
    %v6786 = vpow.pop %v6785
    %v6787 = vadd.f32 %v6786, 1.0
    %v6788 = vrcp.pop %v6787
    %v6789 = vmul.f32 1.0, %v6788
    %v6790 = vtanh.pop %v6783
    %v6791 = vmul.f32 %v6789, %v6698
    %6793 = vrot.lane.b32.xlu0 %v6790, 96
    %v6794 = vpop.permute.xlu0 %6793
    %v6796 = vmul.f32 %v6789, %v6794
    %6798 = vrot.lane.b32.xlu0 %v6796, 16
    %v6799 = vpop.permute.xlu0 %6798
    %v6801 = vadd.f32 %v6791, %v6799
    %v6802 = vtanh.pop %v6801
    %6804 = vrot.lane.b32.xlu0 %v6802, 32
    %v6805 = vpop.permute.xlu0 %6804
    %v6807 = vmul.f32 %v6789, %v6805
    %6809 = vrot.lane.b32.xlu0 %v6807, 80
    %v6810 = vpop.permute.xlu0 %6809
    %6812 = vst.msk [vmem:[%s921] sm:$0xff] %vm50, %v6810
    %v6813 = vld [vmem:[%s923] sm:$0xff]
    %v6814 = vsel %vm50, %v6810, 0
    %6816 = vmatprep.subr.mxu0 0.0
    %6817 = vmatpush1.msra.mxu0 %v5944
    %6818 = vmatprep.subr.mxu0 0.0
    %6819 = vmatpush1.msra.mxu0 %v5945
    %6820 = vmatprep.subr.mxu0 0.0
    %6821 = vmatpush1.msra.mxu0 0.0
    %6822 = vmatprep.subr.mxu0 0.0
    %6823 = vmatpush1.msra.mxu0 0.0
    %6824 = vmatprep.subr.mxu0 0.0
    %6825 = vmatpush1.msra.mxu0 0.0
    %6826 = vmatprep.subr.mxu0 0.0
    %6827 = vmatpush1.msra.mxu0 0.0
    %6828 = vmatprep.subr.mxu0 0.0
    %6829 = vmatpush1.msra.mxu0 0.0
    %6830 = vmatprep.subr.mxu0 0.0
    %6831 = vmatpush1.msra.mxu0 0.0
    %6832 = vmatprep.subr.mxu0 0.0
    %6833 = vmatpush1.msra.mxu0 0.0
    %6834 = vmatprep.subr.mxu0 0.0
    %6835 = vmatpush1.msra.mxu0 0.0
    %6836 = vmatprep.subr.mxu0 0.0
    %6837 = vmatpush1.msra.mxu0 0.0
    %6838 = vmatprep.subr.mxu0 0.0
    %6839 = vmatpush1.msra.mxu0 0.0
    %6840 = vmatprep.subr.mxu0 0.0
    %6841 = vmatpush1.msra.mxu0 0.0
    %6842 = vmatprep.subr.mxu0 0.0
    %6843 = vmatpush1.msra.mxu0 0.0
    %6844 = vmatprep.subr.mxu0 0.0
    %6845 = vmatpush1.msra.mxu0 0.0
    %6846 = vmatprep.subr.mxu0 0.0
    %6847 = vmatpush1.msra.mxu0 0.0
    %6848 = vmatprep.subr.mxu0 0.0
    %6849 = vmatpush1.msra.mxu0 0.0
    %6850 = vmatprep.subr.mxu0 0.0
    %6851 = vmatpush1.msra.mxu0 0.0
    %6852 = vmatprep.subr.mxu0 0.0
    %6853 = vmatpush1.msra.mxu0 0.0
    %6854 = vmatprep.subr.mxu0 0.0
    %6855 = vmatpush1.msra.mxu0 0.0
    %6856 = vmatprep.subr.mxu0 0.0
    %6857 = vmatpush1.msra.mxu0 0.0
    %6858 = vmatprep.subr.mxu0 0.0
    %6859 = vmatpush1.msra.mxu0 0.0
    %6860 = vmatprep.subr.mxu0 0.0
    %6861 = vmatpush1.msra.mxu0 0.0
    %6862 = vmatprep.subr.mxu0 0.0
    %6863 = vmatpush1.msra.mxu0 0.0
    %6864 = vmatprep.subr.mxu0 0.0
    %6865 = vmatpush1.msra.mxu0 0.0
    %6866 = vmatprep.subr.mxu0 0.0
    %6867 = vmatpush1.msra.mxu0 0.0
    %6868 = vmatprep.subr.mxu0 0.0
    %6869 = vmatpush1.msra.mxu0 0.0
    %6870 = vmatprep.subr.mxu0 0.0
    %6871 = vmatpush1.msra.mxu0 0.0
    %6872 = vmatprep.subr.mxu0 0.0
    %6873 = vmatpush1.msra.mxu0 0.0
    %6874 = vmatprep.subr.mxu0 0.0
    %6875 = vmatpush1.msra.mxu0 0.0
    %6876 = vmatprep.subr.mxu0 0.0
    %6877 = vmatpush1.msra.mxu0 0.0
    %6878 = vmatprep.subr.mxu0 0.0
    %6879 = vmatpush1.msra.mxu0 0.0
    %6880 = vmatprep.mubr.f32.mxu0 0.0
    %6881 = vmatmul.mubr.f32.gmra.mrb[0].mxu0 %v6814
    %v6882 = vpop.f32.mrb[0].mxu0
    %v6883 = vadd.f32 0.0, %v6882
    %v6884 = vpop.f32.mrb[0].mxu0
    %6885 = vdwg.mxu0
    %v6886 = vadd.f32 %v6813, %v6883
    %v6887 = vxor.u32 %v6886, 2147483648
    %v6888 = vmul.f32 %v6887, 1.442695
    %v6889 = vpow.pop %v6888
    %v6890 = vadd.f32 %v6889, 1.0
    %v6891 = vrcp.pop %v6890
    %v6892 = vmul.f32 1.0, %v6891
    %v6893 = vtanh.pop %v6886
    %v6894 = vmul.f32 %v6892, %v6801
    %6896 = vrot.lane.b32.xlu0 %v6893, 96
    %v6897 = vpop.permute.xlu0 %6896
    %v6899 = vmul.f32 %v6892, %v6897
    %6901 = vrot.lane.b32.xlu0 %v6899, 16
    %v6902 = vpop.permute.xlu0 %6901
    %v6904 = vadd.f32 %v6894, %v6902
    %v6905 = vtanh.pop %v6904
    %6907 = vrot.lane.b32.xlu0 %v6905, 32
    %v6908 = vpop.permute.xlu0 %6907
    %v6910 = vmul.f32 %v6892, %v6908
    %6912 = vrot.lane.b32.xlu0 %v6910, 80
    %v6913 = vpop.permute.xlu0 %6912
    %6915 = vst.msk [vmem:[%s1026] sm:$0xff] %vm50, %v6913
    // Predicated region
    $region22: #{_lambda_.1} parent=1 // pred_check
      _
    $region23: #{_lambda_.1} parent=1 // pred_check_branch
      %6917 = sbr.rel (0) target = $region25
    $region24: #{_lambda_.1} parent=1 // pred_region
      _
    $region25: #{_lambda_.1} parent=1 // pred_fallthru
      _
    // Predicated region
    $region26: #{_lambda_.1} parent=1 // pred_check
      _
    $region27: #{_lambda_.1} parent=1 // pred_check_branch
      %6919 = sbr.rel (0) target = $region29
    $region28: #{_lambda_.1} parent=1 // pred_region
      _
    $region29: #{_lambda_.1} parent=1 // pred_fallthru
      _
    %6920 = vsyncpa [#allocation4], 1

</llo_original>
